<compile_context>
chip_gen: v7x
topology: tpu7x:2x2x1
jax: 0.10.0
libtpu: 0.0.40
codegen_flags: <defaults>
</compile_context>

<pallas_src>
import functools

import jax
import jax.numpy as jnp
from jax.experimental import pallas as pl
from jax.experimental.pallas import tpu as pltpu


def _round_up(x, m):
    return (x + m - 1) // m * m


def _tile_m(M):
    # Tile M at 256 (MXU-friendly on v6e/v7x); small M uses one 8-aligned block.
    return 256 if M > 256 else _round_up(M, 8)


# ----------------------------------------------------------------------------
# Pallas kernels
# ----------------------------------------------------------------------------
def _matmul_bias_kernel(a_ref, w_ref, b_ref, o_ref, *, apply_relu):
    # bf16 x bf16 -> f32 accumulation on the MXU; bias+ReLU epilogue in f32.
    acc = jnp.dot(a_ref[...], w_ref[...], preferred_element_type=jnp.float32)
    acc = acc + b_ref[...]                      # (1, N) bias broadcasts over rows
    if apply_relu:
        acc = jnp.maximum(acc, 0.0)
    o_ref[...] = acc.astype(o_ref.dtype)


def _fc_fused_kernel(x_ref, w1_ref, b1_ref, w2_ref, b2_ref, o_ref):
    # fc1 (no activation in the torch model) followed by fc2, in one call.
    h = jnp.dot(x_ref[...], w1_ref[...], preferred_element_type=jnp.float32)
    h = (h + b1_ref[...]).astype(w1_ref.dtype)  # back to bf16 for second matmul
    o = jnp.dot(h, w2_ref[...], preferred_element_type=jnp.float32)
    o_ref[...] = (o + b2_ref[...]).astype(o_ref.dtype)


# ----------------------------------------------------------------------------
# Pallas wrappers
# ----------------------------------------------------------------------------
def matmul_bias_act(a, w, b, apply_relu, out_dtype):
    """a: (M, K) bf16; w: (K, N) bf16; b: (1, N) f32. Returns (M, N) out_dtype."""
    M, K = a.shape
    N = w.shape[1]
    tm = _tile_m(M)
    Mp = _round_up(M, tm)
    if Mp != M:
        a = jnp.pad(a, ((0, Mp - M), (0, 0)))   # ragged M tail only; K never padded

    out = pl.pallas_call(
        functools.partial(_matmul_bias_kernel, apply_relu=apply_relu),
        out_shape=jax.ShapeDtypeStruct((Mp, N), out_dtype),
        grid=(Mp // tm,),
        in_specs=[
            pl.BlockSpec((tm, K), lambda i: (i, 0)),   # A: tiled over M (pipelined)
            pl.BlockSpec((K, N), lambda i: (0, 0)),    # W: resident
            pl.BlockSpec((1, N), lambda i: (0, 0)),    # bias: resident
        ],
        out_specs=pl.BlockSpec((tm, N), lambda i: (i, 0)),
        compiler_params=pltpu.CompilerParams(
            dimension_semantics=("parallel",)),
    )(a, w, b)
    return out[:M] if Mp != M else out


def fc1_fc2_fused(x, w1, b1, w2, b2):
    """x: (M, 2048) bf16. Returns (M, 128) f32 (first 10 lanes are the logits)."""
    M, K = x.shape
    H = w1.shape[1]
    N = w2.shape[1]
    tm = _tile_m(M)
    Mp = _round_up(M, tm)
    if Mp != M:
        x = jnp.pad(x, ((0, Mp - M), (0, 0)))

    out = pl.pallas_call(
        _fc_fused_kernel,
        out_shape=jax.ShapeDtypeStruct((Mp, N), jnp.float32),
        grid=(Mp // tm,),
        in_specs=[
            pl.BlockSpec((tm, K), lambda i: (i, 0)),
            pl.BlockSpec((K, H), lambda i: (0, 0)),
            pl.BlockSpec((1, H), lambda i: (0, 0)),
            pl.BlockSpec((H, N), lambda i: (0, 0)),
            pl.BlockSpec((1, N), lambda i: (0, 0)),
        ],
        out_specs=pl.BlockSpec((tm, N), lambda i: (i, 0)),
        compiler_params=pltpu.CompilerParams(
            dimension_semantics=("parallel",)),
    )(x, w1, b1, w2, b2)
    return out[:M] if Mp != M else out


# ----------------------------------------------------------------------------
# Conv glue (NHWC, bf16)
# ----------------------------------------------------------------------------
def _extract_patches_nhwc(x, kh, kw, stride):
    """x: (N, H, W, C) -> (N*Ho*Wo, kh*kw*C); feature order (di, dj, c)."""
    N, H, W, C = x.shape
    Ho = (H - kh) // stride + 1
    Wo = (W - kw) // stride + 1
    taps = []
    for di in range(kh):
        for dj in range(kw):
            taps.append(x[:, di:di + stride * Ho:stride,
                          dj:dj + stride * Wo:stride, :])
    p = jnp.concatenate(taps, axis=-1)          # (N, Ho, Wo, kh*kw*C)
    return p.reshape(N * Ho * Wo, kh * kw * C), (N, Ho, Wo)


# TODO(synk): fuse the patch gather into the Pallas kernel (grid axis over the
# kh*kw taps + f32 VMEM accumulator) so the im2col expansion is never
# materialized in HBM.
def conv2d_nhwc(x, wm, b, kh, kw, stride, apply_relu):
    """x: (N,H,W,Cin) bf16; wm: (kh*kw*Cin, Cout) bf16; b: (1, Cout) f32."""
    a, (N, Ho, Wo) = _extract_patches_nhwc(x, kh, kw, stride)
    y = matmul_bias_act(a, wm, b, apply_relu, out_dtype=jnp.bfloat16)
    return y.reshape(N, Ho, Wo, wm.shape[1])


# ----------------------------------------------------------------------------
# Model
# ----------------------------------------------------------------------------
def init_params(key, in_channels=1):
    """PyTorch-layout parameters (same shapes as the nn.Module)."""
    ks = jax.random.split(key, 10)
    s = 0.05
    return {
        "conv1_w": s * jax.random.normal(ks[0], (64, in_channels, 8, 8), jnp.float32),
        "conv1_b": s * jax.random.normal(ks[1], (64,), jnp.float32),
        "conv2_w": s * jax.random.normal(ks[2], (128, 64, 6, 6), jnp.float32),
        "conv2_b": s * jax.random.normal(ks[3], (128,), jnp.float32),
        "conv3_w": s * jax.random.normal(ks[4], (128, 128, 5, 5), jnp.float32),
        "conv3_b": s * jax.random.normal(ks[5], (128,), jnp.float32),
        "fc1_w": s * jax.random.normal(ks[6], (128, 128 * 4 * 4), jnp.float32),
        "fc1_b": s * jax.random.normal(ks[7], (128,), jnp.float32),
        "fc2_w": s * jax.random.normal(ks[8], (10, 128), jnp.float32),
        "fc2_b": s * jax.random.normal(ks[9], (10,), jnp.float32),
    }


def prepare_params(params):
    """One-time weight re-layout: matmul-ready, bf16, lane-padded where needed."""
    def conv_w(w):  # (Cout, Cin, kh, kw) -> (kh*kw*Cin, Cout); order (di, dj, c)
        Cout, Cin, kh, kw = w.shape
        return jnp.transpose(w, (2, 3, 1, 0)).reshape(kh * kw * Cin, Cout).astype(jnp.bfloat16)

    def bias(b):
        return b.astype(jnp.float32).reshape(1, -1)

    # fc1 columns remapped from torch's NCHW flatten (c,h,w) to our NHWC
    # flatten (h,w,c) so no activation transpose is needed at runtime.
    w1 = params["fc1_w"].reshape(128, 128, 4, 4)              # (out, c, h, w)
    w1 = jnp.transpose(w1, (2, 3, 1, 0)).reshape(4 * 4 * 128, 128)

    w2 = params["fc2_w"].T                                    # (128, 10)
    pad_n = 128 - w2.shape[1]
    w2 = jnp.pad(w2, ((0, 0), (0, pad_n)))                    # pad logits to 128 lanes
    b2 = jnp.pad(params["fc2_b"], (0, pad_n))

    return {
        "conv1_w": conv_w(params["conv1_w"]), "conv1_b": bias(params["conv1_b"]),
        "conv2_w": conv_w(params["conv2_w"]), "conv2_b": bias(params["conv2_b"]),
        "conv3_w": conv_w(params["conv3_w"]), "conv3_b": bias(params["conv3_b"]),
        "fc1_w": w1.astype(jnp.bfloat16), "fc1_b": bias(params["fc1_b"]),
        "fc2_w": w2.astype(jnp.bfloat16), "fc2_b": bias(b2),
    }


def mnist_cnn_forward(prep, x):
    """x: (N, Cin, 28, 28) NCHW f32 -> (N, 10) f32 logits."""
    x = jnp.transpose(x, (0, 2, 3, 1)).astype(jnp.bfloat16)               # NHWC, bf16
    x = conv2d_nhwc(x, prep["conv1_w"], prep["conv1_b"], 8, 8, 1, True)   # (N,21,21,64)
    x = conv2d_nhwc(x, prep["conv2_w"], prep["conv2_b"], 6, 6, 2, True)   # (N,8,8,128)
    x = conv2d_nhwc(x, prep["conv3_w"], prep["conv3_b"], 5, 5, 1, True)   # (N,4,4,128)
    x = x.reshape(x.shape[0], 4 * 4 * 128)          # NHWC flatten; fc1 weights remapped to match
    logits = fc1_fc2_fused(x, prep["fc1_w"], prep["fc1_b"],
                           prep["fc2_w"], prep["fc2_b"])                  # (N,128)
    return logits[:, :10]


if __name__ == "__main__":
    key = jax.random.PRNGKey(0)
    pkey, xkey = jax.random.split(key)
    params = init_params(pkey, in_channels=1)
    prep = prepare_params(params)          # one-time weight prep (outside the jitted forward)

    # MNIST-shaped input (batch=2, 1 channel, 28x28) so the 128*4*4 flatten
    # matches the torch forward exactly.
    x = jax.random.normal(xkey, (2, 1, 28, 28), jnp.float32)

    fwd = jax.jit(mnist_cnn_forward)
    out = jax.block_until_ready(fwd(prep, x))
    assert out.shape == (2, 10), out.shape
    print("KERNEL_OK")
</pallas_src>

<mosaic_0001>
module attributes {stable_mosaic.version = 11 : i64} {
  func.func @_matmul_bias_kernel(%arg0: i32, %arg1: memref<256x64xbf16, #tpu.memory_space<vmem>>, %arg2: memref<64x64xbf16, #tpu.memory_space<vmem>>, %arg3: memref<1x64xf32, #tpu.memory_space<vmem>>, %arg4: memref<256x64xbf16, #tpu.memory_space<vmem>>) attributes {dimension_semantics = [#tpu.dimension_semantics<parallel>], iteration_bounds = array<i64: 4>, scalar_prefetch = 0 : i64, scratch_operands = 0 : i64, tpu.core_type = #tpu.core_type<tc>, window_params = [{transform_indices = @transform_0, window_bounds = array<i64: 256, 64>}, {pipeline_mode = #tpu.pipeline_mode<synchronous>, transform_indices = @transform_1, window_bounds = array<i64: 64, 64>}, {pipeline_mode = #tpu.pipeline_mode<synchronous>, transform_indices = @transform_2, window_bounds = array<i64: 1, 64>}, {transform_indices = @transform_3, window_bounds = array<i64: 256, 64>}]} {
    %c0 = arith.constant 0 : index
    %c0_0 = arith.constant 0 : index
    %0 = vector.load %arg1[%c0, %c0_0] : memref<256x64xbf16, #tpu.memory_space<vmem>>, vector<256x64xbf16>
    %c0_1 = arith.constant 0 : index
    %c0_2 = arith.constant 0 : index
    %1 = vector.load %arg2[%c0_1, %c0_2] : memref<64x64xbf16, #tpu.memory_space<vmem>>, vector<64x64xbf16>
    %cst = arith.constant dense<0.000000e+00> : vector<256x64xf32>
    %2 = tpu.matmul %0, %1, %cst {dimension_numbers = #tpu.dot_dimension_numbers<[1], [0], [0], [1], [0, 0, 1, 1], [], []>} : vector<256x64xbf16>, vector<64x64xbf16>, vector<256x64xf32> -> vector<256x64xf32>
    %c0_3 = arith.constant 0 : index
    %c0_4 = arith.constant 0 : index
    %3 = vector.load %arg3[%c0_3, %c0_4] : memref<1x64xf32, #tpu.memory_space<vmem>>, vector<1x64xf32>
    %4 = vector.broadcast %3 : vector<1x64xf32> to vector<256x64xf32>
    %5 = arith.addf %2, %4 : vector<256x64xf32>
    %cst_5 = arith.constant 0.000000e+00 : f32
    %6 = vector.broadcast %cst_5 : f32 to vector<256x64xf32>
    %7 = arith.maximumf %5, %6 : vector<256x64xf32>
    %8 = arith.truncf %7 : vector<256x64xf32> to vector<256x64xbf16>
    %c0_6 = arith.constant 0 : index
    %c0_7 = arith.constant 0 : index
    %9 = vector.load %arg4[%c0_6, %c0_7] : memref<256x64xbf16, #tpu.memory_space<vmem>>, vector<256x64xbf16>
    tpu.vector_store %arg4[%c0_6, %c0_7], %8 {strides = array<i32>} : memref<256x64xbf16, #tpu.memory_space<vmem>>, vector<256x64xbf16>,
    return
  }
  func.func @transform_0(%arg0: i32) -> (i32, i32) {
    %c0_i32 = arith.constant 0 : i32
    %c0_i32_0 = arith.constant 0 : i32
    return %arg0, %c0_i32 : i32, i32
  }
  func.func @transform_1(%arg0: i32) -> (i32, i32) {
    %c0_i32 = arith.constant 0 : i32
    %c0_i32_0 = arith.constant 0 : i32
    %c0_i32_1 = arith.constant 0 : i32
    return %c0_i32, %c0_i32_0 : i32, i32
  }
  func.func @transform_2(%arg0: i32) -> (i32, i32) {
    %c0_i32 = arith.constant 0 : i32
    %c0_i32_0 = arith.constant 0 : i32
    %c0_i32_1 = arith.constant 0 : i32
    return %c0_i32, %c0_i32_0 : i32, i32
  }
  func.func @transform_3(%arg0: i32) -> (i32, i32) {
    %c0_i32 = arith.constant 0 : i32
    %c0_i32_0 = arith.constant 0 : i32
    return %arg0, %c0_i32 : i32, i32
  }
}

module attributes {stable_mosaic.version = 11 : i64} {
  func.func @_matmul_bias_kernel(%arg0: i32, %arg1: memref<128x2304xbf16, #tpu.memory_space<vmem>>, %arg2: memref<2304x128xbf16, #tpu.memory_space<vmem>>, %arg3: memref<1x128xf32, #tpu.memory_space<vmem>>, %arg4: memref<128x128xbf16, #tpu.memory_space<vmem>>) attributes {dimension_semantics = [#tpu.dimension_semantics<parallel>], iteration_bounds = array<i64: 1>, scalar_prefetch = 0 : i64, scratch_operands = 0 : i64, tpu.core_type = #tpu.core_type<tc>, window_params = [{transform_indices = @transform_0, window_bounds = array<i64: 128, 2304>}, {pipeline_mode = #tpu.pipeline_mode<synchronous>, transform_indices = @transform_1, window_bounds = array<i64: 2304, 128>}, {pipeline_mode = #tpu.pipeline_mode<synchronous>, transform_indices = @transform_2, window_bounds = array<i64: 1, 128>}, {transform_indices = @transform_3, window_bounds = array<i64: 128, 128>}]} {
    %c0 = arith.constant 0 : index
    %c0_0 = arith.constant 0 : index
    %0 = vector.load %arg1[%c0, %c0_0] : memref<128x2304xbf16, #tpu.memory_space<vmem>>, vector<128x2304xbf16>
    %c0_1 = arith.constant 0 : index
    %c0_2 = arith.constant 0 : index
    %1 = vector.load %arg2[%c0_1, %c0_2] : memref<2304x128xbf16, #tpu.memory_space<vmem>>, vector<2304x128xbf16>
    %cst = arith.constant dense<0.000000e+00> : vector<128x128xf32>
    %2 = tpu.matmul %0, %1, %cst {dimension_numbers = #tpu.dot_dimension_numbers<[1], [0], [0], [1], [0, 0, 1, 1], [], []>} : vector<128x2304xbf16>, vector<2304x128xbf16>, vector<128x128xf32> -> vector<128x128xf32>
    %c0_3 = arith.constant 0 : index
    %c0_4 = arith.constant 0 : index
    %3 = vector.load %arg3[%c0_3, %c0_4] : memref<1x128xf32, #tpu.memory_space<vmem>>, vector<1x128xf32>
    %4 = vector.broadcast %3 : vector<1x128xf32> to vector<128x128xf32>
    %5 = arith.addf %2, %4 : vector<128x128xf32>
    %cst_5 = arith.constant 0.000000e+00 : f32
    %6 = vector.broadcast %cst_5 : f32 to vector<128x128xf32>
    %7 = arith.maximumf %5, %6 : vector<128x128xf32>
    %8 = arith.truncf %7 : vector<128x128xf32> to vector<128x128xbf16>
    %c0_6 = arith.constant 0 : index
    %c0_7 = arith.constant 0 : index
    %9 = vector.load %arg4[%c0_6, %c0_7] : memref<128x128xbf16, #tpu.memory_space<vmem>>, vector<128x128xbf16>
    tpu.vector_store %arg4[%c0_6, %c0_7], %8 {strides = array<i32>} : memref<128x128xbf16, #tpu.memory_space<vmem>>, vector<128x128xbf16>,
    return
  }
  func.func @transform_0(%arg0: i32) -> (i32, i32) {
    %c0_i32 = arith.constant 0 : i32
    %c0_i32_0 = arith.constant 0 : i32
    return %arg0, %c0_i32 : i32, i32
  }
  func.func @transform_1(%arg0: i32) -> (i32, i32) {
    %c0_i32 = arith.constant 0 : i32
    %c0_i32_0 = arith.constant 0 : i32
    %c0_i32_1 = arith.constant 0 : i32
    return %c0_i32, %c0_i32_0 : i32, i32
  }
  func.func @transform_2(%arg0: i32) -> (i32, i32) {
    %c0_i32 = arith.constant 0 : i32
    %c0_i32_0 = arith.constant 0 : i32
    %c0_i32_1 = arith.constant 0 : i32
    return %c0_i32, %c0_i32_0 : i32, i32
  }
  func.func @transform_3(%arg0: i32) -> (i32, i32) {
    %c0_i32 = arith.constant 0 : i32
    %c0_i32_0 = arith.constant 0 : i32
    return %arg0, %c0_i32 : i32, i32
  }
}

module attributes {stable_mosaic.version = 11 : i64} {
  func.func @_matmul_bias_kernel(%arg0: i32, %arg1: memref<32x3200xbf16, #tpu.memory_space<vmem>>, %arg2: memref<3200x128xbf16, #tpu.memory_space<vmem>>, %arg3: memref<1x128xf32, #tpu.memory_space<vmem>>, %arg4: memref<32x128xbf16, #tpu.memory_space<vmem>>) attributes {dimension_semantics = [#tpu.dimension_semantics<parallel>], iteration_bounds = array<i64: 1>, scalar_prefetch = 0 : i64, scratch_operands = 0 : i64, tpu.core_type = #tpu.core_type<tc>, window_params = [{transform_indices = @transform_0, window_bounds = array<i64: 32, 3200>}, {pipeline_mode = #tpu.pipeline_mode<synchronous>, transform_indices = @transform_1, window_bounds = array<i64: 3200, 128>}, {pipeline_mode = #tpu.pipeline_mode<synchronous>, transform_indices = @transform_2, window_bounds = array<i64: 1, 128>}, {transform_indices = @transform_3, window_bounds = array<i64: 32, 128>}]} {
    %c0 = arith.constant 0 : index
    %c0_0 = arith.constant 0 : index
    %0 = vector.load %arg1[%c0, %c0_0] : memref<32x3200xbf16, #tpu.memory_space<vmem>>, vector<32x3200xbf16>
    %c0_1 = arith.constant 0 : index
    %c0_2 = arith.constant 0 : index
    %1 = vector.load %arg2[%c0_1, %c0_2] : memref<3200x128xbf16, #tpu.memory_space<vmem>>, vector<3200x128xbf16>
    %cst = arith.constant dense<0.000000e+00> : vector<32x128xf32>
    %2 = tpu.matmul %0, %1, %cst {dimension_numbers = #tpu.dot_dimension_numbers<[1], [0], [0], [1], [0, 0, 1, 1], [], []>} : vector<32x3200xbf16>, vector<3200x128xbf16>, vector<32x128xf32> -> vector<32x128xf32>
    %c0_3 = arith.constant 0 : index
    %c0_4 = arith.constant 0 : index
    %3 = vector.load %arg3[%c0_3, %c0_4] : memref<1x128xf32, #tpu.memory_space<vmem>>, vector<1x128xf32>
    %4 = vector.broadcast %3 : vector<1x128xf32> to vector<32x128xf32>
    %5 = arith.addf %2, %4 : vector<32x128xf32>
    %cst_5 = arith.constant 0.000000e+00 : f32
    %6 = vector.broadcast %cst_5 : f32 to vector<32x128xf32>
    %7 = arith.maximumf %5, %6 : vector<32x128xf32>
    %8 = arith.truncf %7 : vector<32x128xf32> to vector<32x128xbf16>
    %c0_6 = arith.constant 0 : index
    %c0_7 = arith.constant 0 : index
    %9 = vector.load %arg4[%c0_6, %c0_7] : memref<32x128xbf16, #tpu.memory_space<vmem>>, vector<32x128xbf16>
    tpu.vector_store %arg4[%c0_6, %c0_7], %8 {strides = array<i32>} : memref<32x128xbf16, #tpu.memory_space<vmem>>, vector<32x128xbf16>,
    return
  }
  func.func @transform_0(%arg0: i32) -> (i32, i32) {
    %c0_i32 = arith.constant 0 : i32
    %c0_i32_0 = arith.constant 0 : i32
    return %arg0, %c0_i32 : i32, i32
  }
  func.func @transform_1(%arg0: i32) -> (i32, i32) {
    %c0_i32 = arith.constant 0 : i32
    %c0_i32_0 = arith.constant 0 : i32
    %c0_i32_1 = arith.constant 0 : i32
    return %c0_i32, %c0_i32_0 : i32, i32
  }
  func.func @transform_2(%arg0: i32) -> (i32, i32) {
    %c0_i32 = arith.constant 0 : i32
    %c0_i32_0 = arith.constant 0 : i32
    %c0_i32_1 = arith.constant 0 : i32
    return %c0_i32, %c0_i32_0 : i32, i32
  }
  func.func @transform_3(%arg0: i32) -> (i32, i32) {
    %c0_i32 = arith.constant 0 : i32
    %c0_i32_0 = arith.constant 0 : i32
    return %arg0, %c0_i32 : i32, i32
  }
}

module attributes {stable_mosaic.version = 11 : i64} {
  func.func @_fc_fused_kernel(%arg0: i32, %arg1: memref<8x2048xbf16, #tpu.memory_space<vmem>>, %arg2: memref<2048x128xbf16, #tpu.memory_space<vmem>>, %arg3: memref<1x128xf32, #tpu.memory_space<vmem>>, %arg4: memref<128x128xbf16, #tpu.memory_space<vmem>>, %arg5: memref<1x128xf32, #tpu.memory_space<vmem>>, %arg6: memref<8x128xf32, #tpu.memory_space<vmem>>) attributes {dimension_semantics = [#tpu.dimension_semantics<parallel>], iteration_bounds = array<i64: 1>, scalar_prefetch = 0 : i64, scratch_operands = 0 : i64, tpu.core_type = #tpu.core_type<tc>, window_params = [{transform_indices = @transform_0, window_bounds = array<i64: 8, 2048>}, {pipeline_mode = #tpu.pipeline_mode<synchronous>, transform_indices = @transform_1, window_bounds = array<i64: 2048, 128>}, {pipeline_mode = #tpu.pipeline_mode<synchronous>, transform_indices = @transform_2, window_bounds = array<i64: 1, 128>}, {pipeline_mode = #tpu.pipeline_mode<synchronous>, transform_indices = @transform_3, window_bounds = array<i64: 128, 128>}, {pipeline_mode = #tpu.pipeline_mode<synchronous>, transform_indices = @transform_4, window_bounds = array<i64: 1, 128>}, {transform_indices = @transform_5, window_bounds = array<i64: 8, 128>}]} {
    %c0 = arith.constant 0 : index
    %c0_0 = arith.constant 0 : index
    %0 = vector.load %arg1[%c0, %c0_0] : memref<8x2048xbf16, #tpu.memory_space<vmem>>, vector<8x2048xbf16>
    %c0_1 = arith.constant 0 : index
    %c0_2 = arith.constant 0 : index
    %1 = vector.load %arg2[%c0_1, %c0_2] : memref<2048x128xbf16, #tpu.memory_space<vmem>>, vector<2048x128xbf16>
    %cst = arith.constant dense<0.000000e+00> : vector<8x128xf32>
    %2 = tpu.matmul %0, %1, %cst {dimension_numbers = #tpu.dot_dimension_numbers<[1], [0], [0], [1], [0, 0, 1, 1], [], []>} : vector<8x2048xbf16>, vector<2048x128xbf16>, vector<8x128xf32> -> vector<8x128xf32>
    %c0_3 = arith.constant 0 : index
    %c0_4 = arith.constant 0 : index
    %3 = vector.load %arg3[%c0_3, %c0_4] : memref<1x128xf32, #tpu.memory_space<vmem>>, vector<1x128xf32>
    %4 = vector.broadcast %3 : vector<1x128xf32> to vector<8x128xf32>
    %5 = arith.addf %2, %4 : vector<8x128xf32>
    %6 = arith.truncf %5 : vector<8x128xf32> to vector<8x128xbf16>
    %c0_5 = arith.constant 0 : index
    %c0_6 = arith.constant 0 : index
    %7 = vector.load %arg4[%c0_5, %c0_6] : memref<128x128xbf16, #tpu.memory_space<vmem>>, vector<128x128xbf16>
    %cst_7 = arith.constant dense<0.000000e+00> : vector<8x128xf32>
    %8 = tpu.matmul %6, %7, %cst_7 {dimension_numbers = #tpu.dot_dimension_numbers<[1], [0], [0], [1], [0, 0, 1, 1], [], []>} : vector<8x128xbf16>, vector<128x128xbf16>, vector<8x128xf32> -> vector<8x128xf32>
    %c0_8 = arith.constant 0 : index
    %c0_9 = arith.constant 0 : index
    %9 = vector.load %arg5[%c0_8, %c0_9] : memref<1x128xf32, #tpu.memory_space<vmem>>, vector<1x128xf32>
    %10 = vector.broadcast %9 : vector<1x128xf32> to vector<8x128xf32>
    %11 = arith.addf %8, %10 : vector<8x128xf32>
    %c0_10 = arith.constant 0 : index
    %c0_11 = arith.constant 0 : index
    %12 = vector.load %arg6[%c0_10, %c0_11] : memref<8x128xf32, #tpu.memory_space<vmem>>, vector<8x128xf32>
    tpu.vector_store %arg6[%c0_10, %c0_11], %11 {strides = array<i32>} : memref<8x128xf32, #tpu.memory_space<vmem>>, vector<8x128xf32>,
    return
  }
  func.func @transform_0(%arg0: i32) -> (i32, i32) {
    %c0_i32 = arith.constant 0 : i32
    %c0_i32_0 = arith.constant 0 : i32
    return %arg0, %c0_i32 : i32, i32
  }
  func.func @transform_1(%arg0: i32) -> (i32, i32) {
    %c0_i32 = arith.constant 0 : i32
    %c0_i32_0 = arith.constant 0 : i32
    %c0_i32_1 = arith.constant 0 : i32
    return %c0_i32, %c0_i32_0 : i32, i32
  }
  func.func @transform_2(%arg0: i32) -> (i32, i32) {
    %c0_i32 = arith.constant 0 : i32
    %c0_i32_0 = arith.constant 0 : i32
    %c0_i32_1 = arith.constant 0 : i32
    return %c0_i32, %c0_i32_0 : i32, i32
  }
  func.func @transform_3(%arg0: i32) -> (i32, i32) {
    %c0_i32 = arith.constant 0 : i32
    %c0_i32_0 = arith.constant 0 : i32
    %c0_i32_1 = arith.constant 0 : i32
    return %c0_i32, %c0_i32_0 : i32, i32
  }
  func.func @transform_4(%arg0: i32) -> (i32, i32) {
    %c0_i32 = arith.constant 0 : i32
    %c0_i32_0 = arith.constant 0 : i32
    %c0_i32_1 = arith.constant 0 : i32
    return %c0_i32, %c0_i32_0 : i32, i32
  }
  func.func @transform_5(%arg0: i32) -> (i32, i32) {
    %c0_i32 = arith.constant 0 : i32
    %c0_i32_0 = arith.constant 0 : i32
    return %arg0, %c0_i32 : i32, i32
  }
}

</mosaic_0001>

<llo_original>
// kernel: mnist_cnn_forward.4
$region0: #{mnist_cnn_forward.4}
  #allocation0 [shape = 'u32[]', space=smem, size = 0x4, offset = 0x4, fixed_abs, tag = 'smem constant byte address 0x4 - core index']
  #allocation1 [shape = 'u32[144,128]{1,0:T(1,128)}', space=vmem, size = 0x12000, scoped, tag = 'internal scratch']
  %s0 = inlined_call_operand.vmem [shape: bf16[1024,64], index: 0, kind: input, shape index: {}]
  %s1 = inlined_call_operand.vmem [shape: bf16[64,64], index: 1, kind: input, shape index: {}]
  %s2 = inlined_call_operand.vmem [shape: f32[1,64], index: 2, kind: input, shape index: {}]
  %s3 = inlined_call_operand.vmem [shape: bf16[1024,64], index: 3, kind: output, shape index: {}]
  %s4 = sld [smem:[#allocation0]]
  $region45: #{mnist_cnn_forward.4} parent=0
    _
  %s6 = ssub.s32 1, %s4
  %s7 = scalar_select 0, %s6, %s4
  loop: start=0, step=1, limit=6
  $region2: #{mnist_cnn_forward.4} parent=0 // loop_pre_header
    _
  $region3: #{mnist_cnn_forward.4} parent=0 // loop_header
    %s9 = sphi 0, %s13
    %p10 = scmp.ge.s32.totalorder %s9, 6
    %s19 = sphi 0, %s21
    %s22 = sphi 0, %s19
    %s23 = sphi 0, %s22
    %s39 = sphi 0, %s23
    %s43 = sphi 0, %s43
    %s45 = sphi 0, %s43
    %s46 = sphi 0, %s45
    %s60 = sphi 0, %s46
    %s64 = sphi 0, %s64
    %s66 = sphi 0, %s64
    %s67 = sphi 0, %s66
    %s81 = sphi 0, %s67
    %s87 = sphi 0, %s89
    %s90 = sphi 0, %s87
    %s91 = sphi 0, %s90
    %s107 = sphi 0, %s91
  $region4: #{mnist_cnn_forward.4} parent=0 // loop_header_branch
    %12 = sbr.rel (%p10) target = $region8
  $region5: #{mnist_cnn_forward.4} parent=0 // loop_body
    %s14 = ssub.s32 %s9, 1
    %s15 = ssub.s32 %s9, 2
    %s16 = sadd.s32 %s9, 1
    %s17 = ssub.s32 %s9, %s16
    %p18 = scmp.eq.s32.totalorder %s17, 0
    %s20 = sadd.s32 %s19, 1
    %s21 = scalar_select %p18, %s19, %s20
    %p24 = pneg %p18
    %p25 = scmp.eq.s32.totalorder %s9, 3
    %p26 = por %p24, %p25
    %p27 = scmp.ne.s32.totalorder %s19, %s22
    %p28 = scmp.eq.s32.totalorder %s9, 0
    %p29 = por %p27, %p28
    %p30 = scmp.ne.s32.totalorder %s19, %s22
    %p31 = scmp.eq.s32.totalorder %s14, 3
    %p32 = por %p30, %p31
    %p33 = scmp.ne.s32.totalorder %s22, %s23
    %p34 = scmp.eq.s32.totalorder %s14, 0
    %p35 = por %p33, %p34
    %p36 = scmp.ne.s32.totalorder %s22, %s23
    %p37 = scmp.eq.s32.totalorder %s15, 3
    %p38 = por %p36, %p37
    %p40 = scmp.ne.s32.totalorder %s23, %s39
    %p41 = scmp.eq.s32.totalorder %s15, 0
    %p42 = por %p40, %p41
    %s44 = sadd.s32 %s43, 1
    %p47 = scmp.eq.s32.totalorder %s9, 3
    %p48 = scmp.ne.s32.totalorder %s43, %s45
    %p49 = scmp.eq.s32.totalorder %s9, 0
    %p50 = por %p48, %p49
    %p51 = scmp.ne.s32.totalorder %s43, %s45
    %p52 = scmp.eq.s32.totalorder %s14, 3
    %p53 = por %p51, %p52
    %p54 = scmp.ne.s32.totalorder %s45, %s46
    %p55 = scmp.eq.s32.totalorder %s14, 0
    %p56 = por %p54, %p55
    %p57 = scmp.ne.s32.totalorder %s45, %s46
    %p58 = scmp.eq.s32.totalorder %s15, 3
    %p59 = por %p57, %p58
    %p61 = scmp.ne.s32.totalorder %s46, %s60
    %p62 = scmp.eq.s32.totalorder %s15, 0
    %p63 = por %p61, %p62
    %s65 = sadd.s32 %s64, 1
    %p68 = scmp.eq.s32.totalorder %s9, 3
    %p69 = scmp.ne.s32.totalorder %s64, %s66
    %p70 = scmp.eq.s32.totalorder %s9, 0
    %p71 = por %p69, %p70
    %p72 = scmp.ne.s32.totalorder %s64, %s66
    %p73 = scmp.eq.s32.totalorder %s14, 3
    %p74 = por %p72, %p73
    %p75 = scmp.ne.s32.totalorder %s66, %s67
    %p76 = scmp.eq.s32.totalorder %s14, 0
    %p77 = por %p75, %p76
    %p78 = scmp.ne.s32.totalorder %s66, %s67
    %p79 = scmp.eq.s32.totalorder %s15, 3
    %p80 = por %p78, %p79
    %p82 = scmp.ne.s32.totalorder %s67, %s81
    %p83 = scmp.eq.s32.totalorder %s15, 0
    %p84 = por %p82, %p83
    %s85 = ssub.s32 %s9, %s16
    %p86 = scmp.eq.s32.totalorder %s85, 0
    %s88 = sadd.s32 %s87, 1
    %s89 = scalar_select %p86, %s87, %s88
    %p92 = pneg %p86
    %p93 = scmp.eq.s32.totalorder %s9, 3
    %p94 = por %p92, %p93
    %p95 = scmp.ne.s32.totalorder %s87, %s90
    %p96 = scmp.eq.s32.totalorder %s9, 0
    %p97 = por %p95, %p96
    %p98 = scmp.ne.s32.totalorder %s87, %s90
    %p99 = scmp.eq.s32.totalorder %s14, 3
    %p100 = por %p98, %p99
    %p101 = scmp.ne.s32.totalorder %s90, %s91
    %p102 = scmp.eq.s32.totalorder %s14, 0
    %p103 = por %p101, %p102
    %p104 = scmp.ne.s32.totalorder %s90, %s91
    %p105 = scmp.eq.s32.totalorder %s15, 3
    %p106 = por %p104, %p105
    %p108 = scmp.ne.s32.totalorder %s91, %s107
    %p109 = scmp.eq.s32.totalorder %s15, 0
    %p110 = por %p108, %p109
    %p111 = scmp.le.s32.totalorder 1, %s9
    %p112 = scmp.lt.s32.totalorder %s9, 5
    %p113 = pnand %p111, %p112
    %p114 = pneg %p113
    // Predicated region
    $region9: #{mnist_cnn_forward.4} parent=5 // pred_check
      _
    $region10: #{mnist_cnn_forward.4} parent=5 // pred_check_branch
      %116 = sbr.rel (%p113) target = $region12
    $region11: #{mnist_cnn_forward.4} parent=5 // pred_region
      %s117 = ssub.s32 %s9, 1
      // Predicated region
      $region13: #{mnist_cnn_forward.4} parent=11 // pred_check
        %p118 = pneg %p56
      $region14: #{mnist_cnn_forward.4} parent=11 // pred_check_branch
        %120 = sbr.rel (%p118) target = $region16
      $region15: #{mnist_cnn_forward.4} parent=11 // pred_region
        _
      $region16: #{mnist_cnn_forward.4} parent=11 // pred_fallthru
        _
      // Predicated region
      $region17: #{mnist_cnn_forward.4} parent=11 // pred_check
        %p121 = pneg %p77
      $region18: #{mnist_cnn_forward.4} parent=11 // pred_check_branch
        %123 = sbr.rel (%p121) target = $region20
      $region19: #{mnist_cnn_forward.4} parent=11 // pred_region
        _
      $region20: #{mnist_cnn_forward.4} parent=11 // pred_fallthru
        _
    $region12: #{mnist_cnn_forward.4} parent=5 // pred_fallthru
      _
    %p124 = scmp.lt.s32.totalorder %s9, 4
    // Predicated region
    $region21: #{mnist_cnn_forward.4} parent=5 // pred_check
      %p125 = pneg %p124
    $region22: #{mnist_cnn_forward.4} parent=5 // pred_check_branch
      %127 = sbr.rel (%p125) target = $region24
    $region23: #{mnist_cnn_forward.4} parent=5 // pred_region
      // Predicated region
      $region25: #{mnist_cnn_forward.4} parent=23 // pred_check
        %p128 = pneg %p29
      $region26: #{mnist_cnn_forward.4} parent=23 // pred_check_branch
        %130 = sbr.rel (%p128) target = $region28
      $region27: #{mnist_cnn_forward.4} parent=23 // pred_region
        %s131 = smul.u32 32, %s9
        %p132 = scmp.lt.s32.totalorder %s131, 127
        %s133 = scalar_select %p132, %s131, 127
        %s134 = smul.addr %s133, 4
        %s135 = scalar_lea.vmem %s0, %s134
        %s136 = smul.u32 32, %s9
      $region28: #{mnist_cnn_forward.4} parent=23 // pred_fallthru
        _
    $region24: #{mnist_cnn_forward.4} parent=5 // pred_fallthru
      _
    %p137 = scmp.le.s32.totalorder 1, %s9
    %p138 = scmp.lt.s32.totalorder %s9, 5
    %p139 = pnand %p137, %p138
    %p140 = pneg %p139
    // Predicated region
    $region29: #{mnist_cnn_forward.4} parent=5 // pred_check
      _
    $region30: #{mnist_cnn_forward.4} parent=5 // pred_check_branch
      %142 = sbr.rel (%p139) target = $region32
    $region31: #{mnist_cnn_forward.4} parent=5 // pred_region
      %s143 = ssub.s32 %s9, 1
      %s144 = smul.u32 32, %s14
      %p145 = scmp.lt.s32.totalorder %s144, 127
      %s146 = scalar_select %p145, %s144, 127
      %s147 = smul.addr %s146, 4
      %s148 = scalar_lea.vmem %s0, %s147
      %p149 = pneg %p35
      %p150 = pneg %p32
      %p151 = pneg %p56
      %p152 = pneg %p53
      %p153 = pneg %p77
      %p154 = pneg %p74
      %p155 = pneg %p103
      %p156 = pneg %p100
      %s157 = smul.u32 32, %s14
      %p158 = scmp.lt.s32.totalorder %s157, 127
      %s159 = scalar_select %p158, %s157, 127
      %s160 = smul.addr %s159, 4
      %s161 = scalar_lea.vmem %s3, %s160
      %s162 = smul.u32 32, %s14
      %p163 = scmp.lt.s32.totalorder %s162, 127
      %s164 = scalar_select %p163, %s162, 127
      %s165 = smul.addr %s164, 4
      %s166 = scalar_lea.vmem %s0, %s165
      %s167 = smul.u32 32, %s14
      %s168 = smul.u32 32, %s14
      %p169 = scmp.lt.s32.totalorder %s168, 127
      %s170 = scalar_select %p169, %s168, 127
      %s171 = smul.addr %s170, 4
      %s172 = scalar_lea.vmem %s3, %s171
      %s173 = smul.u32 32, %s14
      %v175 = vld [vmem:[%s166] sm:$0xf]
      %v176 = vld [vmem:[%s166 + $0x4] sm:$0xf]
      %v177 = vld [vmem:[%s166 + $0x8] sm:$0xf]
      %v178 = vld [vmem:[%s166 + $0xc] sm:$0xf]
      %v179 = vld [vmem:[%s166 + $0x10] sm:$0xf]
      %v180 = vld [vmem:[%s166 + $0x14] sm:$0xf]
      %v181 = vld [vmem:[%s166 + $0x18] sm:$0xf]
      %v182 = vld [vmem:[%s166 + $0x1c] sm:$0xf]
      %v183 = vld [vmem:[%s166 + $0x20] sm:$0xf]
      %v184 = vld [vmem:[%s166 + $0x24] sm:$0xf]
      %v185 = vld [vmem:[%s166 + $0x28] sm:$0xf]
      %v186 = vld [vmem:[%s166 + $0x2c] sm:$0xf]
      %v187 = vld [vmem:[%s166 + $0x30] sm:$0xf]
      %v188 = vld [vmem:[%s166 + $0x34] sm:$0xf]
      %v189 = vld [vmem:[%s166 + $0x38] sm:$0xf]
      %v190 = vld [vmem:[%s166 + $0x3c] sm:$0xf]
      %v191 = vld [vmem:[%s166 + $0x40] sm:$0xf]
      %v192 = vld [vmem:[%s166 + $0x44] sm:$0xf]
      %v193 = vld [vmem:[%s166 + $0x48] sm:$0xf]
      %v194 = vld [vmem:[%s166 + $0x4c] sm:$0xf]
      %v195 = vld [vmem:[%s166 + $0x50] sm:$0xf]
      %v196 = vld [vmem:[%s166 + $0x54] sm:$0xf]
      %v197 = vld [vmem:[%s166 + $0x58] sm:$0xf]
      %v198 = vld [vmem:[%s166 + $0x5c] sm:$0xf]
      %v199 = vld [vmem:[%s166 + $0x60] sm:$0xf]
      %v200 = vld [vmem:[%s166 + $0x64] sm:$0xf]
      %v201 = vld [vmem:[%s166 + $0x68] sm:$0xf]
      %v202 = vld [vmem:[%s166 + $0x6c] sm:$0xf]
      %v203 = vld [vmem:[%s166 + $0x70] sm:$0xf]
      %v204 = vld [vmem:[%s166 + $0x74] sm:$0xf]
      %v205 = vld [vmem:[%s166 + $0x78] sm:$0xf]
      %v206 = vld [vmem:[%s166 + $0x7c] sm:$0xf]
      %v207 = vld [vmem:[%s1] sm:$0xf]
      %v208 = vld [vmem:[%s1 + $0x4] sm:$0xf]
      %v209 = vld [vmem:[%s1 + $0x8] sm:$0xf]
      %v210 = vld [vmem:[%s1 + $0xc] sm:$0xf]
      %v211 = vld [vmem:[%s1 + $0x10] sm:$0xf]
      %v212 = vld [vmem:[%s1 + $0x14] sm:$0xf]
      %v213 = vld [vmem:[%s1 + $0x18] sm:$0xf]
      %v214 = vld [vmem:[%s1 + $0x1c] sm:$0xf]
      %v215 = vld [vmem:[%s2] sm:$0x1]
      %v217 = vlaneseq
      %v218 = vshrl.u32 %v217, 7
      %v219 = vsub.s32 0, %v218
      %v220 = vrot.slane %v215, %v219
      %v254 = vunpack.c.l.b16 %v175
      %v255 = vunpack.c.l.b16 %v176
      %v256 = vunpack.c.l.b16 %v177
      %v257 = vunpack.c.l.b16 %v178
      %v258 = vunpack.c.l.b16 %v179
      %v259 = vunpack.c.l.b16 %v180
      %v260 = vunpack.c.l.b16 %v181
      %v261 = vunpack.c.l.b16 %v182
      %v262 = vunpack.c.l.b16 %v183
      %v263 = vunpack.c.l.b16 %v184
      %v264 = vunpack.c.l.b16 %v185
      %v265 = vunpack.c.l.b16 %v186
      %v266 = vunpack.c.l.b16 %v187
      %v267 = vunpack.c.l.b16 %v188
      %v268 = vunpack.c.l.b16 %v189
      %v269 = vunpack.c.l.b16 %v190
      %v270 = vunpack.c.l.b16 %v191
      %v271 = vunpack.c.l.b16 %v192
      %v272 = vunpack.c.l.b16 %v193
      %v273 = vunpack.c.l.b16 %v194
      %v274 = vunpack.c.l.b16 %v195
      %v275 = vunpack.c.l.b16 %v196
      %v276 = vunpack.c.l.b16 %v197
      %v277 = vunpack.c.l.b16 %v198
      %v278 = vunpack.c.l.b16 %v199
      %v279 = vunpack.c.l.b16 %v200
      %v280 = vunpack.c.l.b16 %v201
      %v281 = vunpack.c.l.b16 %v202
      %v282 = vunpack.c.l.b16 %v203
      %v283 = vunpack.c.l.b16 %v204
      %v284 = vunpack.c.l.b16 %v205
      %v285 = vunpack.c.l.b16 %v206
      %v286 = vpack.c.b16 %v255, %v254
      %v287 = vpack.c.b16 %v257, %v256
      %v288 = vpack.c.b16 %v259, %v258
      %v289 = vpack.c.b16 %v261, %v260
      %v290 = vpack.c.b16 %v263, %v262
      %v291 = vpack.c.b16 %v265, %v264
      %v292 = vpack.c.b16 %v267, %v266
      %v293 = vpack.c.b16 %v269, %v268
      %v294 = vpack.c.b16 %v271, %v270
      %v295 = vpack.c.b16 %v273, %v272
      %v296 = vpack.c.b16 %v275, %v274
      %v297 = vpack.c.b16 %v277, %v276
      %v298 = vpack.c.b16 %v279, %v278
      %v299 = vpack.c.b16 %v281, %v280
      %v300 = vpack.c.b16 %v283, %v282
      %v301 = vpack.c.b16 %v285, %v284
      %v310 = vunpack.c.l.b16 %v207
      %v311 = vunpack.c.l.b16 %v208
      %v312 = vunpack.c.l.b16 %v209
      %v313 = vunpack.c.l.b16 %v210
      %v314 = vunpack.c.l.b16 %v211
      %v315 = vunpack.c.l.b16 %v212
      %v316 = vunpack.c.l.b16 %v213
      %v317 = vunpack.c.l.b16 %v214
      %v318 = vpack.c.b16 %v311, %v310
      %v319 = vpack.c.b16 %v313, %v312
      %v320 = vpack.c.b16 %v315, %v314
      %v321 = vpack.c.b16 %v317, %v316
      %vm326 = vcmask 523264
      %v328 = vsel %vm326, %v286, 0
      %v331 = vsel %vm326, %v287, 0
      %v334 = vsel %vm326, %v288, 0
      %v337 = vsel %vm326, %v289, 0
      %v340 = vsel %vm326, %v290, 0
      %v343 = vsel %vm326, %v291, 0
      %v346 = vsel %vm326, %v292, 0
      %v349 = vsel %vm326, %v293, 0
      %v352 = vsel %vm326, %v294, 0
      %v355 = vsel %vm326, %v295, 0
      %v358 = vsel %vm326, %v296, 0
      %v361 = vsel %vm326, %v297, 0
      %v364 = vsel %vm326, %v298, 0
      %v367 = vsel %vm326, %v299, 0
      %v370 = vsel %vm326, %v300, 0
      %v373 = vsel %vm326, %v301, 0
      %375 = vmatprep.subr.bf16.mxu0 0
      %376 = vmatpush1.bf16.msra.mxu0 %v318
      %377 = vmatprep.subr.bf16.mxu0 0
      %378 = vmatpush1.bf16.msra.mxu0 %v319
      %379 = vmatprep.subr.bf16.mxu0 0
      %380 = vmatpush1.bf16.msra.mxu0 %v320
      %381 = vmatprep.subr.bf16.mxu0 0
      %382 = vmatpush1.bf16.msra.mxu0 %v321
      %383 = vmatprep.subr.bf16.mxu0 0
      %384 = vmatpush1.bf16.msra.mxu0 0
      %385 = vmatprep.subr.bf16.mxu0 0
      %386 = vmatpush1.bf16.msra.mxu0 0
      %387 = vmatprep.subr.bf16.mxu0 0
      %388 = vmatpush1.bf16.msra.mxu0 0
      %389 = vmatprep.subr.bf16.mxu0 0
      %390 = vmatpush1.bf16.msra.mxu0 0
      %391 = vmatprep.subr.bf16.mxu0 0
      %392 = vmatpush1.bf16.msra.mxu0 0
      %393 = vmatprep.subr.bf16.mxu0 0
      %394 = vmatpush1.bf16.msra.mxu0 0
      %395 = vmatprep.subr.bf16.mxu0 0
      %396 = vmatpush1.bf16.msra.mxu0 0
      %397 = vmatprep.subr.bf16.mxu0 0
      %398 = vmatpush1.bf16.msra.mxu0 0
      %399 = vmatprep.subr.bf16.mxu0 0
      %400 = vmatpush1.bf16.msra.mxu0 0
      %401 = vmatprep.subr.bf16.mxu0 0
      %402 = vmatpush1.bf16.msra.mxu0 0
      %403 = vmatprep.subr.bf16.mxu0 0
      %404 = vmatpush1.bf16.msra.mxu0 0
      %405 = vmatprep.subr.bf16.mxu0 0
      %406 = vmatpush1.bf16.msra.mxu0 0
      %407 = vmatprep.mubr.bf16.mxu0 0
      %408 = vmatmul.mubr.bf16.gmra.mrb[0].mxu0 %v328
      %v409 = vpop.f32.mrb[0].mxu0
      %v410 = vadd.f32 %v220, %v409
      %v411 = vpop.f32.mrb[0].mxu0
      %v412 = vpop.f32.mrb[0].mxu0
      %v413 = vadd.f32 %v220, %v412
      %v414 = vpop.f32.mrb[0].mxu0
      %415 = vmatprep.mubr.bf16.mxu0 0
      %416 = vmatmul.mubr.bf16.gmra.mrb[0].mxu0 %v331
      %v417 = vpop.f32.mrb[0].mxu0
      %v418 = vadd.f32 %v220, %v417
      %v419 = vpop.f32.mrb[0].mxu0
      %v420 = vpop.f32.mrb[0].mxu0
      %v421 = vadd.f32 %v220, %v420
      %v422 = vpop.f32.mrb[0].mxu0
      %423 = vmatprep.mubr.bf16.mxu0 0
      %424 = vmatmul.mubr.bf16.gmra.mrb[0].mxu0 %v334
      %v425 = vpop.f32.mrb[0].mxu0
      %v426 = vadd.f32 %v220, %v425
      %v427 = vpop.f32.mrb[0].mxu0
      %v428 = vpop.f32.mrb[0].mxu0
      %v429 = vadd.f32 %v220, %v428
      %v430 = vpop.f32.mrb[0].mxu0
      %431 = vmatprep.mubr.bf16.mxu0 0
      %432 = vmatmul.mubr.bf16.gmra.mrb[0].mxu0 %v337
      %v433 = vpop.f32.mrb[0].mxu0
      %v434 = vadd.f32 %v220, %v433
      %v435 = vpop.f32.mrb[0].mxu0
      %v436 = vpop.f32.mrb[0].mxu0
      %v437 = vadd.f32 %v220, %v436
      %v438 = vpop.f32.mrb[0].mxu0
      %439 = vmatprep.mubr.bf16.mxu0 0
      %440 = vmatmul.mubr.bf16.gmra.mrb[0].mxu0 %v340
      %v441 = vpop.f32.mrb[0].mxu0
      %v442 = vadd.f32 %v220, %v441
      %v443 = vpop.f32.mrb[0].mxu0
      %v444 = vpop.f32.mrb[0].mxu0
      %v445 = vadd.f32 %v220, %v444
      %v446 = vpop.f32.mrb[0].mxu0
      %447 = vmatprep.mubr.bf16.mxu0 0
      %448 = vmatmul.mubr.bf16.gmra.mrb[0].mxu0 %v343
      %v449 = vpop.f32.mrb[0].mxu0
      %v450 = vadd.f32 %v220, %v449
      %v451 = vpop.f32.mrb[0].mxu0
      %v452 = vpop.f32.mrb[0].mxu0
      %v453 = vadd.f32 %v220, %v452
      %v454 = vpop.f32.mrb[0].mxu0
      %455 = vmatprep.mubr.bf16.mxu0 0
      %456 = vmatmul.mubr.bf16.gmra.mrb[0].mxu0 %v346
      %v457 = vpop.f32.mrb[0].mxu0
      %v458 = vadd.f32 %v220, %v457
      %v459 = vpop.f32.mrb[0].mxu0
      %v460 = vpop.f32.mrb[0].mxu0
      %v461 = vadd.f32 %v220, %v460
      %v462 = vpop.f32.mrb[0].mxu0
      %463 = vmatprep.mubr.bf16.mxu0 0
      %464 = vmatmul.mubr.bf16.gmra.mrb[0].mxu0 %v349
      %v465 = vpop.f32.mrb[0].mxu0
      %v466 = vadd.f32 %v220, %v465
      %v467 = vpop.f32.mrb[0].mxu0
      %v468 = vpop.f32.mrb[0].mxu0
      %v469 = vadd.f32 %v220, %v468
      %v470 = vpop.f32.mrb[0].mxu0
      %471 = vmatprep.mubr.bf16.mxu0 0
      %472 = vmatmul.mubr.bf16.gmra.mrb[0].mxu0 %v352
      %v473 = vpop.f32.mrb[0].mxu0
      %v474 = vadd.f32 %v220, %v473
      %v475 = vpop.f32.mrb[0].mxu0
      %v476 = vpop.f32.mrb[0].mxu0
      %v477 = vadd.f32 %v220, %v476
      %v478 = vpop.f32.mrb[0].mxu0
      %479 = vmatprep.mubr.bf16.mxu0 0
      %480 = vmatmul.mubr.bf16.gmra.mrb[0].mxu0 %v355
      %v481 = vpop.f32.mrb[0].mxu0
      %v482 = vadd.f32 %v220, %v481
      %v483 = vpop.f32.mrb[0].mxu0
      %v484 = vpop.f32.mrb[0].mxu0
      %v485 = vadd.f32 %v220, %v484
      %v486 = vpop.f32.mrb[0].mxu0
      %487 = vmatprep.mubr.bf16.mxu0 0
      %488 = vmatmul.mubr.bf16.gmra.mrb[0].mxu0 %v358
      %v489 = vpop.f32.mrb[0].mxu0
      %v490 = vadd.f32 %v220, %v489
      %v491 = vpop.f32.mrb[0].mxu0
      %v492 = vpop.f32.mrb[0].mxu0
      %v493 = vadd.f32 %v220, %v492
      %v494 = vpop.f32.mrb[0].mxu0
      %495 = vmatprep.mubr.bf16.mxu0 0
      %496 = vmatmul.mubr.bf16.gmra.mrb[0].mxu0 %v361
      %v497 = vpop.f32.mrb[0].mxu0
      %v498 = vadd.f32 %v220, %v497
      %v499 = vpop.f32.mrb[0].mxu0
      %v500 = vpop.f32.mrb[0].mxu0
      %v501 = vadd.f32 %v220, %v500
      %v502 = vpop.f32.mrb[0].mxu0
      %503 = vmatprep.mubr.bf16.mxu0 0
      %504 = vmatmul.mubr.bf16.gmra.mrb[0].mxu0 %v364
      %v505 = vpop.f32.mrb[0].mxu0
      %v506 = vadd.f32 %v220, %v505
      %v507 = vpop.f32.mrb[0].mxu0
      %v508 = vpop.f32.mrb[0].mxu0
      %v509 = vadd.f32 %v220, %v508
      %v510 = vpop.f32.mrb[0].mxu0
      %511 = vmatprep.mubr.bf16.mxu0 0
      %512 = vmatmul.mubr.bf16.gmra.mrb[0].mxu0 %v367
      %v513 = vpop.f32.mrb[0].mxu0
      %v514 = vadd.f32 %v220, %v513
      %v515 = vpop.f32.mrb[0].mxu0
      %v516 = vpop.f32.mrb[0].mxu0
      %v517 = vadd.f32 %v220, %v516
      %v518 = vpop.f32.mrb[0].mxu0
      %519 = vmatprep.mubr.bf16.mxu0 0
      %520 = vmatmul.mubr.bf16.gmra.mrb[0].mxu0 %v370
      %v521 = vpop.f32.mrb[0].mxu0
      %v522 = vadd.f32 %v220, %v521
      %v523 = vpop.f32.mrb[0].mxu0
      %v524 = vpop.f32.mrb[0].mxu0
      %v525 = vadd.f32 %v220, %v524
      %v526 = vpop.f32.mrb[0].mxu0
      %527 = vmatprep.mubr.bf16.mxu0 0
      %528 = vmatmul.mubr.bf16.gmra.mrb[0].mxu0 %v373
      %v529 = vpop.f32.mrb[0].mxu0
      %v530 = vadd.f32 %v220, %v529
      %v531 = vpop.f32.mrb[0].mxu0
      %v532 = vpop.f32.mrb[0].mxu0
      %v533 = vadd.f32 %v220, %v532
      %v534 = vpop.f32.mrb[0].mxu0
      %535 = vdwg.mxu0
      %v536 = vmax.f32 %v410, 0.0
      %v537 = vmax.f32 %v413, 0.0
      %v538 = vmax.f32 %v418, 0.0
      %v539 = vmax.f32 %v421, 0.0
      %v540 = vmax.f32 %v426, 0.0
      %v541 = vmax.f32 %v429, 0.0
      %v542 = vmax.f32 %v434, 0.0
      %v543 = vmax.f32 %v437, 0.0
      %v544 = vmax.f32 %v442, 0.0
      %v545 = vmax.f32 %v445, 0.0
      %v546 = vmax.f32 %v450, 0.0
      %v547 = vmax.f32 %v453, 0.0
      %v548 = vmax.f32 %v458, 0.0
      %v549 = vmax.f32 %v461, 0.0
      %v550 = vmax.f32 %v466, 0.0
      %v551 = vmax.f32 %v469, 0.0
      %v552 = vmax.f32 %v474, 0.0
      %v553 = vmax.f32 %v477, 0.0
      %v554 = vmax.f32 %v482, 0.0
      %v555 = vmax.f32 %v485, 0.0
      %v556 = vmax.f32 %v490, 0.0
      %v557 = vmax.f32 %v493, 0.0
      %v558 = vmax.f32 %v498, 0.0
      %v559 = vmax.f32 %v501, 0.0
      %v560 = vmax.f32 %v506, 0.0
      %v561 = vmax.f32 %v509, 0.0
      %v562 = vmax.f32 %v514, 0.0
      %v563 = vmax.f32 %v517, 0.0
      %v564 = vmax.f32 %v522, 0.0
      %v565 = vmax.f32 %v525, 0.0
      %v566 = vmax.f32 %v530, 0.0
      %v567 = vmax.f32 %v533, 0.0
      %v568 = vpack.c.bf16 %v537, %v536
      %v569 = vpack.c.bf16 %v539, %v538
      %v570 = vpack.c.bf16 %v541, %v540
      %v571 = vpack.c.bf16 %v543, %v542
      %v572 = vpack.c.bf16 %v545, %v544
      %v573 = vpack.c.bf16 %v547, %v546
      %v574 = vpack.c.bf16 %v549, %v548
      %v575 = vpack.c.bf16 %v551, %v550
      %v576 = vpack.c.bf16 %v553, %v552
      %v577 = vpack.c.bf16 %v555, %v554
      %v578 = vpack.c.bf16 %v557, %v556
      %v579 = vpack.c.bf16 %v559, %v558
      %v580 = vpack.c.bf16 %v561, %v560
      %v581 = vpack.c.bf16 %v563, %v562
      %v582 = vpack.c.bf16 %v565, %v564
      %v583 = vpack.c.bf16 %v567, %v566
      %v600 = vunpack.c.l.b16 %v568
      %v601 = vunpack.c.h.b16 %v568
      %v602 = vunpack.c.l.b16 %v569
      %v603 = vunpack.c.h.b16 %v569
      %v604 = vunpack.c.l.b16 %v570
      %v605 = vunpack.c.h.b16 %v570
      %v606 = vunpack.c.l.b16 %v571
      %v607 = vunpack.c.h.b16 %v571
      %v608 = vunpack.c.l.b16 %v572
      %v609 = vunpack.c.h.b16 %v572
      %v610 = vunpack.c.l.b16 %v573
      %v611 = vunpack.c.h.b16 %v573
      %v612 = vunpack.c.l.b16 %v574
      %v613 = vunpack.c.h.b16 %v574
      %v614 = vunpack.c.l.b16 %v575
      %v615 = vunpack.c.h.b16 %v575
      %v616 = vunpack.c.l.b16 %v576
      %v617 = vunpack.c.h.b16 %v576
      %v618 = vunpack.c.l.b16 %v577
      %v619 = vunpack.c.h.b16 %v577
      %v620 = vunpack.c.l.b16 %v578
      %v621 = vunpack.c.h.b16 %v578
      %v622 = vunpack.c.l.b16 %v579
      %v623 = vunpack.c.h.b16 %v579
      %v624 = vunpack.c.l.b16 %v580
      %v625 = vunpack.c.h.b16 %v580
      %v626 = vunpack.c.l.b16 %v581
      %v627 = vunpack.c.h.b16 %v581
      %v628 = vunpack.c.l.b16 %v582
      %v629 = vunpack.c.h.b16 %v582
      %v630 = vunpack.c.l.b16 %v583
      %v631 = vunpack.c.h.b16 %v583
      %v632 = vpack.c.b16 %v600, %v600
      %v633 = vpack.c.b16 %v601, %v601
      %v634 = vpack.c.b16 %v602, %v602
      %v635 = vpack.c.b16 %v603, %v603
      %v636 = vpack.c.b16 %v604, %v604
      %v637 = vpack.c.b16 %v605, %v605
      %v638 = vpack.c.b16 %v606, %v606
      %v639 = vpack.c.b16 %v607, %v607
      %v640 = vpack.c.b16 %v608, %v608
      %v641 = vpack.c.b16 %v609, %v609
      %v642 = vpack.c.b16 %v610, %v610
      %v643 = vpack.c.b16 %v611, %v611
      %v644 = vpack.c.b16 %v612, %v612
      %v645 = vpack.c.b16 %v613, %v613
      %v646 = vpack.c.b16 %v614, %v614
      %v647 = vpack.c.b16 %v615, %v615
      %v648 = vpack.c.b16 %v616, %v616
      %v649 = vpack.c.b16 %v617, %v617
      %v650 = vpack.c.b16 %v618, %v618
      %v651 = vpack.c.b16 %v619, %v619
      %v652 = vpack.c.b16 %v620, %v620
      %v653 = vpack.c.b16 %v621, %v621
      %v654 = vpack.c.b16 %v622, %v622
      %v655 = vpack.c.b16 %v623, %v623
      %v656 = vpack.c.b16 %v624, %v624
      %v657 = vpack.c.b16 %v625, %v625
      %v658 = vpack.c.b16 %v626, %v626
      %v659 = vpack.c.b16 %v627, %v627
      %v660 = vpack.c.b16 %v628, %v628
      %v661 = vpack.c.b16 %v629, %v629
      %v662 = vpack.c.b16 %v630, %v630
      %v663 = vpack.c.b16 %v631, %v631
      %vm696 = vcmask 519168
      %697 = vst.msk [vmem:[%s172] sm:$0xf] %vm696, %v632
      %698 = vst.msk [vmem:[%s172 + $0x4] sm:$0xf] %vm696, %v633
      %699 = vst.msk [vmem:[%s172 + $0x8] sm:$0xf] %vm696, %v634
      %700 = vst.msk [vmem:[%s172 + $0xc] sm:$0xf] %vm696, %v635
      %701 = vst.msk [vmem:[%s172 + $0x10] sm:$0xf] %vm696, %v636
      %702 = vst.msk [vmem:[%s172 + $0x14] sm:$0xf] %vm696, %v637
      %703 = vst.msk [vmem:[%s172 + $0x18] sm:$0xf] %vm696, %v638
      %704 = vst.msk [vmem:[%s172 + $0x1c] sm:$0xf] %vm696, %v639
      %705 = vst.msk [vmem:[%s172 + $0x20] sm:$0xf] %vm696, %v640
      %706 = vst.msk [vmem:[%s172 + $0x24] sm:$0xf] %vm696, %v641
      %707 = vst.msk [vmem:[%s172 + $0x28] sm:$0xf] %vm696, %v642
      %708 = vst.msk [vmem:[%s172 + $0x2c] sm:$0xf] %vm696, %v643
      %709 = vst.msk [vmem:[%s172 + $0x30] sm:$0xf] %vm696, %v644
      %710 = vst.msk [vmem:[%s172 + $0x34] sm:$0xf] %vm696, %v645
      %711 = vst.msk [vmem:[%s172 + $0x38] sm:$0xf] %vm696, %v646
      %712 = vst.msk [vmem:[%s172 + $0x3c] sm:$0xf] %vm696, %v647
      %713 = vst.msk [vmem:[%s172 + $0x40] sm:$0xf] %vm696, %v648
      %714 = vst.msk [vmem:[%s172 + $0x44] sm:$0xf] %vm696, %v649
      %715 = vst.msk [vmem:[%s172 + $0x48] sm:$0xf] %vm696, %v650
      %716 = vst.msk [vmem:[%s172 + $0x4c] sm:$0xf] %vm696, %v651
      %717 = vst.msk [vmem:[%s172 + $0x50] sm:$0xf] %vm696, %v652
      %718 = vst.msk [vmem:[%s172 + $0x54] sm:$0xf] %vm696, %v653
      %719 = vst.msk [vmem:[%s172 + $0x58] sm:$0xf] %vm696, %v654
      %720 = vst.msk [vmem:[%s172 + $0x5c] sm:$0xf] %vm696, %v655
      %721 = vst.msk [vmem:[%s172 + $0x60] sm:$0xf] %vm696, %v656
      %722 = vst.msk [vmem:[%s172 + $0x64] sm:$0xf] %vm696, %v657
      %723 = vst.msk [vmem:[%s172 + $0x68] sm:$0xf] %vm696, %v658
      %724 = vst.msk [vmem:[%s172 + $0x6c] sm:$0xf] %vm696, %v659
      %725 = vst.msk [vmem:[%s172 + $0x70] sm:$0xf] %vm696, %v660
      %726 = vst.msk [vmem:[%s172 + $0x74] sm:$0xf] %vm696, %v661
      %727 = vst.msk [vmem:[%s172 + $0x78] sm:$0xf] %vm696, %v662
      %728 = vst.msk [vmem:[%s172 + $0x7c] sm:$0xf] %vm696, %v663
      %s729 = smul.u32 32, %s14
      %p730 = scmp.lt.s32.totalorder %s729, 127
      %s731 = scalar_select %p730, %s729, 127
      %s732 = smul.addr %s731, 4
      %s733 = scalar_lea.vmem %s3, %s732
      // Predicated region
      $region33: #{mnist_cnn_forward.4} parent=31 // pred_check
        %p734 = pneg %p100
      $region34: #{mnist_cnn_forward.4} parent=31 // pred_check_branch
        %736 = sbr.rel (%p734) target = $region36
      $region35: #{mnist_cnn_forward.4} parent=31 // pred_region
        %s737 = smul.u32 32, %s14
      $region36: #{mnist_cnn_forward.4} parent=31 // pred_fallthru
        _
    $region32: #{mnist_cnn_forward.4} parent=5 // pred_fallthru
      _
    %p738 = scmp.le.s32.totalorder 2, %s9
    // Predicated region
    $region37: #{mnist_cnn_forward.4} parent=5 // pred_check
      %p739 = pneg %p738
    $region38: #{mnist_cnn_forward.4} parent=5 // pred_check_branch
      %741 = sbr.rel (%p739) target = $region40
    $region39: #{mnist_cnn_forward.4} parent=5 // pred_region
      %s742 = ssub.s32 %s9, 2
      // Predicated region
      $region41: #{mnist_cnn_forward.4} parent=39 // pred_check
        %p743 = pneg %p106
      $region42: #{mnist_cnn_forward.4} parent=39 // pred_check_branch
        %745 = sbr.rel (%p743) target = $region44
      $region43: #{mnist_cnn_forward.4} parent=39 // pred_region
        %s746 = smul.u32 32, %s15
        %p747 = scmp.lt.s32.totalorder %s746, 127
        %s748 = scalar_select %p747, %s746, 127
        %s749 = smul.addr %s748, 4
        %s750 = scalar_lea.vmem %s3, %s749
      $region44: #{mnist_cnn_forward.4} parent=39 // pred_fallthru
        _
    $region40: #{mnist_cnn_forward.4} parent=5 // pred_fallthru
      _
  $region6: #{mnist_cnn_forward.4} parent=0 // loop_footer
    %s13 = sadd.s32 1, %s9
  $region7: #{mnist_cnn_forward.4} parent=0 // loop_footer_branch
    %8 = sbr.rel target = $region3
  $region8: #{mnist_cnn_forward.4} parent=0 // loop_exit
    _

// kernel: mnist_cnn_forward.5
$region0: #{mnist_cnn_forward.5}
  #allocation0 [shape = 'u32[]', space=smem, size = 0x4, offset = 0x4, fixed_abs, tag = 'smem constant byte address 0x4 - core index']
  #allocation1 [shape = 'u32[144,128]{1,0:T(1,128)}', space=vmem, size = 0x12000, scoped, tag = 'internal scratch']
  %s0 = inlined_call_operand.vmem [shape: bf16[128,2304], index: 0, kind: input, shape index: {}]
  %s1 = inlined_call_operand.vmem [shape: bf16[2304,128], index: 1, kind: input, shape index: {}]
  %s2 = inlined_call_operand.vmem [shape: f32[1,128], index: 2, kind: input, shape index: {}]
  %s3 = inlined_call_operand.vmem [shape: bf16[128,128], index: 3, kind: output, shape index: {}]
  %s4 = sld [smem:[#allocation0]]
  $region22: #{mnist_cnn_forward.5} parent=0
    _
  %s6 = ssub.s32 1, %s4
  %s7 = scalar_select 0, %s6, %s4
  // Predicated region
  $region2: #{mnist_cnn_forward.5} parent=0 // pred_check
    _
  $region3: #{mnist_cnn_forward.5} parent=0 // pred_check_branch
    %9 = sbr.rel (0) target = $region5
  $region4: #{mnist_cnn_forward.5} parent=0 // pred_region
    _
  $region5: #{mnist_cnn_forward.5} parent=0 // pred_fallthru
    _
  // Predicated region
  $region6: #{mnist_cnn_forward.5} parent=0 // pred_check
    _
  $region7: #{mnist_cnn_forward.5} parent=0 // pred_check_branch
    %11 = sbr.rel (0) target = $region9
  $region8: #{mnist_cnn_forward.5} parent=0 // pred_region
    _
  $region9: #{mnist_cnn_forward.5} parent=0 // pred_fallthru
    _
  // Predicated region
  $region10: #{mnist_cnn_forward.5} parent=0 // pred_check
    _
  $region11: #{mnist_cnn_forward.5} parent=0 // pred_check_branch
    %13 = sbr.rel (0) target = $region13
  $region12: #{mnist_cnn_forward.5} parent=0 // pred_region
    _
  $region13: #{mnist_cnn_forward.5} parent=0 // pred_fallthru
    _
  %v15 = vld [vmem:[%s0] sm:$0xff]
  %v16 = vld [vmem:[%s0 + $0x8] sm:$0xff]
  %v17 = vld [vmem:[%s0 + $0x10] sm:$0xff]
  %v18 = vld [vmem:[%s0 + $0x18] sm:$0xff]
  %v19 = vld [vmem:[%s0 + $0x20] sm:$0xff]
  %v20 = vld [vmem:[%s0 + $0x28] sm:$0xff]
  %v21 = vld [vmem:[%s0 + $0x30] sm:$0xff]
  %v22 = vld [vmem:[%s0 + $0x38] sm:$0xff]
  %v23 = vld [vmem:[%s0 + $0x40] sm:$0xff]
  %v24 = vld [vmem:[%s0 + $0x48] sm:$0xff]
  %v25 = vld [vmem:[%s0 + $0x50] sm:$0xff]
  %v26 = vld [vmem:[%s0 + $0x58] sm:$0xff]
  %v27 = vld [vmem:[%s0 + $0x60] sm:$0xff]
  %v28 = vld [vmem:[%s0 + $0x68] sm:$0xff]
  %v29 = vld [vmem:[%s0 + $0x70] sm:$0xff]
  %v30 = vld [vmem:[%s0 + $0x78] sm:$0xff]
  %v31 = vld [vmem:[%s0 + $0x80] sm:$0xff]
  %v32 = vld [vmem:[%s0 + $0x88] sm:$0xff]
  %v33 = vld [vmem:[%s0 + $0x90] sm:$0xff]
  %v34 = vld [vmem:[%s0 + $0x98] sm:$0xff]
  %v35 = vld [vmem:[%s0 + $0xa0] sm:$0xff]
  %v36 = vld [vmem:[%s0 + $0xa8] sm:$0xff]
  %v37 = vld [vmem:[%s0 + $0xb0] sm:$0xff]
  %v38 = vld [vmem:[%s0 + $0xb8] sm:$0xff]
  %v39 = vld [vmem:[%s0 + $0xc0] sm:$0xff]
  %v40 = vld [vmem:[%s0 + $0xc8] sm:$0xff]
  %v41 = vld [vmem:[%s0 + $0xd0] sm:$0xff]
  %v42 = vld [vmem:[%s0 + $0xd8] sm:$0xff]
  %v43 = vld [vmem:[%s0 + $0xe0] sm:$0xff]
  %v44 = vld [vmem:[%s0 + $0xe8] sm:$0xff]
  %v45 = vld [vmem:[%s0 + $0xf0] sm:$0xff]
  %v46 = vld [vmem:[%s0 + $0xf8] sm:$0xff]
  %v47 = vld [vmem:[%s0 + $0x100] sm:$0xff]
  %v48 = vld [vmem:[%s0 + $0x108] sm:$0xff]
  %v49 = vld [vmem:[%s0 + $0x110] sm:$0xff]
  %v50 = vld [vmem:[%s0 + $0x118] sm:$0xff]
  %v51 = vld [vmem:[%s0 + $0x120] sm:$0xff]
  %v52 = vld [vmem:[%s0 + $0x128] sm:$0xff]
  %v53 = vld [vmem:[%s0 + $0x130] sm:$0xff]
  %v54 = vld [vmem:[%s0 + $0x138] sm:$0xff]
  %v55 = vld [vmem:[%s0 + $0x140] sm:$0xff]
  %v56 = vld [vmem:[%s0 + $0x148] sm:$0xff]
  %v57 = vld [vmem:[%s0 + $0x150] sm:$0xff]
  %v58 = vld [vmem:[%s0 + $0x158] sm:$0xff]
  %v59 = vld [vmem:[%s0 + $0x160] sm:$0xff]
  %v60 = vld [vmem:[%s0 + $0x168] sm:$0xff]
  %v61 = vld [vmem:[%s0 + $0x170] sm:$0xff]
  %v62 = vld [vmem:[%s0 + $0x178] sm:$0xff]
  %v63 = vld [vmem:[%s0 + $0x180] sm:$0xff]
  %v64 = vld [vmem:[%s0 + $0x188] sm:$0xff]
  %v65 = vld [vmem:[%s0 + $0x190] sm:$0xff]
  %v66 = vld [vmem:[%s0 + $0x198] sm:$0xff]
  %v67 = vld [vmem:[%s0 + $0x1a0] sm:$0xff]
  %v68 = vld [vmem:[%s0 + $0x1a8] sm:$0xff]
  %v69 = vld [vmem:[%s0 + $0x1b0] sm:$0xff]
  %v70 = vld [vmem:[%s0 + $0x1b8] sm:$0xff]
  %v71 = vld [vmem:[%s0 + $0x1c0] sm:$0xff]
  %v72 = vld [vmem:[%s0 + $0x1c8] sm:$0xff]
  %v73 = vld [vmem:[%s0 + $0x1d0] sm:$0xff]
  %v74 = vld [vmem:[%s0 + $0x1d8] sm:$0xff]
  %v75 = vld [vmem:[%s0 + $0x1e0] sm:$0xff]
  %v76 = vld [vmem:[%s0 + $0x1e8] sm:$0xff]
  %v77 = vld [vmem:[%s0 + $0x1f0] sm:$0xff]
  %v78 = vld [vmem:[%s0 + $0x1f8] sm:$0xff]
  %v79 = vld [vmem:[%s0 + $0x200] sm:$0xff]
  %v80 = vld [vmem:[%s0 + $0x208] sm:$0xff]
  %v81 = vld [vmem:[%s0 + $0x210] sm:$0xff]
  %v82 = vld [vmem:[%s0 + $0x218] sm:$0xff]
  %v83 = vld [vmem:[%s0 + $0x220] sm:$0xff]
  %v84 = vld [vmem:[%s0 + $0x228] sm:$0xff]
  %v85 = vld [vmem:[%s0 + $0x230] sm:$0xff]
  %v86 = vld [vmem:[%s0 + $0x238] sm:$0xff]
  %v87 = vld [vmem:[%s0 + $0x240] sm:$0xff]
  %v88 = vld [vmem:[%s0 + $0x248] sm:$0xff]
  %v89 = vld [vmem:[%s0 + $0x250] sm:$0xff]
  %v90 = vld [vmem:[%s0 + $0x258] sm:$0xff]
  %v91 = vld [vmem:[%s0 + $0x260] sm:$0xff]
  %v92 = vld [vmem:[%s0 + $0x268] sm:$0xff]
  %v93 = vld [vmem:[%s0 + $0x270] sm:$0xff]
  %v94 = vld [vmem:[%s0 + $0x278] sm:$0xff]
  %v95 = vld [vmem:[%s0 + $0x280] sm:$0xff]
  %v96 = vld [vmem:[%s0 + $0x288] sm:$0xff]
  %v97 = vld [vmem:[%s0 + $0x290] sm:$0xff]
  %v98 = vld [vmem:[%s0 + $0x298] sm:$0xff]
  %v99 = vld [vmem:[%s0 + $0x2a0] sm:$0xff]
  %v100 = vld [vmem:[%s0 + $0x2a8] sm:$0xff]
  %v101 = vld [vmem:[%s0 + $0x2b0] sm:$0xff]
  %v102 = vld [vmem:[%s0 + $0x2b8] sm:$0xff]
  %v103 = vld [vmem:[%s0 + $0x2c0] sm:$0xff]
  %v104 = vld [vmem:[%s0 + $0x2c8] sm:$0xff]
  %v105 = vld [vmem:[%s0 + $0x2d0] sm:$0xff]
  %v106 = vld [vmem:[%s0 + $0x2d8] sm:$0xff]
  %v107 = vld [vmem:[%s0 + $0x2e0] sm:$0xff]
  %v108 = vld [vmem:[%s0 + $0x2e8] sm:$0xff]
  %v109 = vld [vmem:[%s0 + $0x2f0] sm:$0xff]
  %v110 = vld [vmem:[%s0 + $0x2f8] sm:$0xff]
  %v111 = vld [vmem:[%s0 + $0x300] sm:$0xff]
  %v112 = vld [vmem:[%s0 + $0x308] sm:$0xff]
  %v113 = vld [vmem:[%s0 + $0x310] sm:$0xff]
  %v114 = vld [vmem:[%s0 + $0x318] sm:$0xff]
  %v115 = vld [vmem:[%s0 + $0x320] sm:$0xff]
  %v116 = vld [vmem:[%s0 + $0x328] sm:$0xff]
  %v117 = vld [vmem:[%s0 + $0x330] sm:$0xff]
  %v118 = vld [vmem:[%s0 + $0x338] sm:$0xff]
  %v119 = vld [vmem:[%s0 + $0x340] sm:$0xff]
  %v120 = vld [vmem:[%s0 + $0x348] sm:$0xff]
  %v121 = vld [vmem:[%s0 + $0x350] sm:$0xff]
  %v122 = vld [vmem:[%s0 + $0x358] sm:$0xff]
  %v123 = vld [vmem:[%s0 + $0x360] sm:$0xff]
  %v124 = vld [vmem:[%s0 + $0x368] sm:$0xff]
  %v125 = vld [vmem:[%s0 + $0x370] sm:$0xff]
  %v126 = vld [vmem:[%s0 + $0x378] sm:$0xff]
  %v127 = vld [vmem:[%s0 + $0x380] sm:$0xff]
  %v128 = vld [vmem:[%s0 + $0x388] sm:$0xff]
  %v129 = vld [vmem:[%s0 + $0x390] sm:$0xff]
  %v130 = vld [vmem:[%s0 + $0x398] sm:$0xff]
  %v131 = vld [vmem:[%s0 + $0x3a0] sm:$0xff]
  %v132 = vld [vmem:[%s0 + $0x3a8] sm:$0xff]
  %v133 = vld [vmem:[%s0 + $0x3b0] sm:$0xff]
  %v134 = vld [vmem:[%s0 + $0x3b8] sm:$0xff]
  %v135 = vld [vmem:[%s0 + $0x3c0] sm:$0xff]
  %v136 = vld [vmem:[%s0 + $0x3c8] sm:$0xff]
  %v137 = vld [vmem:[%s0 + $0x3d0] sm:$0xff]
  %v138 = vld [vmem:[%s0 + $0x3d8] sm:$0xff]
  %v139 = vld [vmem:[%s0 + $0x3e0] sm:$0xff]
  %v140 = vld [vmem:[%s0 + $0x3e8] sm:$0xff]
  %v141 = vld [vmem:[%s0 + $0x3f0] sm:$0xff]
  %v142 = vld [vmem:[%s0 + $0x3f8] sm:$0xff]
  %v143 = vld [vmem:[%s0 + $0x400] sm:$0xff]
  %v144 = vld [vmem:[%s0 + $0x408] sm:$0xff]
  %v145 = vld [vmem:[%s0 + $0x410] sm:$0xff]
  %v146 = vld [vmem:[%s0 + $0x418] sm:$0xff]
  %v147 = vld [vmem:[%s0 + $0x420] sm:$0xff]
  %v148 = vld [vmem:[%s0 + $0x428] sm:$0xff]
  %v149 = vld [vmem:[%s0 + $0x430] sm:$0xff]
  %v150 = vld [vmem:[%s0 + $0x438] sm:$0xff]
  %v151 = vld [vmem:[%s0 + $0x440] sm:$0xff]
  %v152 = vld [vmem:[%s0 + $0x448] sm:$0xff]
  %v153 = vld [vmem:[%s0 + $0x450] sm:$0xff]
  %v154 = vld [vmem:[%s0 + $0x458] sm:$0xff]
  %v155 = vld [vmem:[%s0 + $0x460] sm:$0xff]
  %v156 = vld [vmem:[%s0 + $0x468] sm:$0xff]
  %v157 = vld [vmem:[%s0 + $0x470] sm:$0xff]
  %v158 = vld [vmem:[%s0 + $0x478] sm:$0xff]
  %v159 = vld [vmem:[%s1] sm:$0xf]
  %v160 = vld [vmem:[%s1 + $0x4] sm:$0xf]
  %v161 = vld [vmem:[%s1 + $0x8] sm:$0xf]
  %v162 = vld [vmem:[%s1 + $0xc] sm:$0xf]
  %v163 = vld [vmem:[%s1 + $0x10] sm:$0xf]
  %v164 = vld [vmem:[%s1 + $0x14] sm:$0xf]
  %v165 = vld [vmem:[%s1 + $0x18] sm:$0xf]
  %v166 = vld [vmem:[%s1 + $0x1c] sm:$0xf]
  %v167 = vld [vmem:[%s1 + $0x20] sm:$0xf]
  %v168 = vld [vmem:[%s1 + $0x24] sm:$0xf]
  %v169 = vld [vmem:[%s1 + $0x28] sm:$0xf]
  %v170 = vld [vmem:[%s1 + $0x2c] sm:$0xf]
  %v171 = vld [vmem:[%s1 + $0x30] sm:$0xf]
  %v172 = vld [vmem:[%s1 + $0x34] sm:$0xf]
  %v173 = vld [vmem:[%s1 + $0x38] sm:$0xf]
  %v174 = vld [vmem:[%s1 + $0x3c] sm:$0xf]
  %v175 = vld [vmem:[%s1 + $0x40] sm:$0xf]
  %v176 = vld [vmem:[%s1 + $0x44] sm:$0xf]
  %v177 = vld [vmem:[%s1 + $0x48] sm:$0xf]
  %v178 = vld [vmem:[%s1 + $0x4c] sm:$0xf]
  %v179 = vld [vmem:[%s1 + $0x50] sm:$0xf]
  %v180 = vld [vmem:[%s1 + $0x54] sm:$0xf]
  %v181 = vld [vmem:[%s1 + $0x58] sm:$0xf]
  %v182 = vld [vmem:[%s1 + $0x5c] sm:$0xf]
  %v183 = vld [vmem:[%s1 + $0x60] sm:$0xf]
  %v184 = vld [vmem:[%s1 + $0x64] sm:$0xf]
  %v185 = vld [vmem:[%s1 + $0x68] sm:$0xf]
  %v186 = vld [vmem:[%s1 + $0x6c] sm:$0xf]
  %v187 = vld [vmem:[%s1 + $0x70] sm:$0xf]
  %v188 = vld [vmem:[%s1 + $0x74] sm:$0xf]
  %v189 = vld [vmem:[%s1 + $0x78] sm:$0xf]
  %v190 = vld [vmem:[%s1 + $0x7c] sm:$0xf]
  %v191 = vld [vmem:[%s1 + $0x80] sm:$0xf]
  %v192 = vld [vmem:[%s1 + $0x84] sm:$0xf]
  %v193 = vld [vmem:[%s1 + $0x88] sm:$0xf]
  %v194 = vld [vmem:[%s1 + $0x8c] sm:$0xf]
  %v195 = vld [vmem:[%s1 + $0x90] sm:$0xf]
  %v196 = vld [vmem:[%s1 + $0x94] sm:$0xf]
  %v197 = vld [vmem:[%s1 + $0x98] sm:$0xf]
  %v198 = vld [vmem:[%s1 + $0x9c] sm:$0xf]
  %v199 = vld [vmem:[%s1 + $0xa0] sm:$0xf]
  %v200 = vld [vmem:[%s1 + $0xa4] sm:$0xf]
  %v201 = vld [vmem:[%s1 + $0xa8] sm:$0xf]
  %v202 = vld [vmem:[%s1 + $0xac] sm:$0xf]
  %v203 = vld [vmem:[%s1 + $0xb0] sm:$0xf]
  %v204 = vld [vmem:[%s1 + $0xb4] sm:$0xf]
  %v205 = vld [vmem:[%s1 + $0xb8] sm:$0xf]
  %v206 = vld [vmem:[%s1 + $0xbc] sm:$0xf]
  %v207 = vld [vmem:[%s1 + $0xc0] sm:$0xf]
  %v208 = vld [vmem:[%s1 + $0xc4] sm:$0xf]
  %v209 = vld [vmem:[%s1 + $0xc8] sm:$0xf]
  %v210 = vld [vmem:[%s1 + $0xcc] sm:$0xf]
  %v211 = vld [vmem:[%s1 + $0xd0] sm:$0xf]
  %v212 = vld [vmem:[%s1 + $0xd4] sm:$0xf]
  %v213 = vld [vmem:[%s1 + $0xd8] sm:$0xf]
  %v214 = vld [vmem:[%s1 + $0xdc] sm:$0xf]
  %v215 = vld [vmem:[%s1 + $0xe0] sm:$0xf]
  %v216 = vld [vmem:[%s1 + $0xe4] sm:$0xf]
  %v217 = vld [vmem:[%s1 + $0xe8] sm:$0xf]
  %v218 = vld [vmem:[%s1 + $0xec] sm:$0xf]
  %v219 = vld [vmem:[%s1 + $0xf0] sm:$0xf]
  %v220 = vld [vmem:[%s1 + $0xf4] sm:$0xf]
  %v221 = vld [vmem:[%s1 + $0xf8] sm:$0xf]
  %v222 = vld [vmem:[%s1 + $0xfc] sm:$0xf]
  %v223 = vld [vmem:[%s1 + $0x100] sm:$0xf]
  %v224 = vld [vmem:[%s1 + $0x104] sm:$0xf]
  %v225 = vld [vmem:[%s1 + $0x108] sm:$0xf]
  %v226 = vld [vmem:[%s1 + $0x10c] sm:$0xf]
  %v227 = vld [vmem:[%s1 + $0x110] sm:$0xf]
  %v228 = vld [vmem:[%s1 + $0x114] sm:$0xf]
  %v229 = vld [vmem:[%s1 + $0x118] sm:$0xf]
  %v230 = vld [vmem:[%s1 + $0x11c] sm:$0xf]
  %v231 = vld [vmem:[%s1 + $0x120] sm:$0xf]
  %v232 = vld [vmem:[%s1 + $0x124] sm:$0xf]
  %v233 = vld [vmem:[%s1 + $0x128] sm:$0xf]
  %v234 = vld [vmem:[%s1 + $0x12c] sm:$0xf]
  %v235 = vld [vmem:[%s1 + $0x130] sm:$0xf]
  %v236 = vld [vmem:[%s1 + $0x134] sm:$0xf]
  %v237 = vld [vmem:[%s1 + $0x138] sm:$0xf]
  %v238 = vld [vmem:[%s1 + $0x13c] sm:$0xf]
  %v239 = vld [vmem:[%s1 + $0x140] sm:$0xf]
  %v240 = vld [vmem:[%s1 + $0x144] sm:$0xf]
  %v241 = vld [vmem:[%s1 + $0x148] sm:$0xf]
  %v242 = vld [vmem:[%s1 + $0x14c] sm:$0xf]
  %v243 = vld [vmem:[%s1 + $0x150] sm:$0xf]
  %v244 = vld [vmem:[%s1 + $0x154] sm:$0xf]
  %v245 = vld [vmem:[%s1 + $0x158] sm:$0xf]
  %v246 = vld [vmem:[%s1 + $0x15c] sm:$0xf]
  %v247 = vld [vmem:[%s1 + $0x160] sm:$0xf]
  %v248 = vld [vmem:[%s1 + $0x164] sm:$0xf]
  %v249 = vld [vmem:[%s1 + $0x168] sm:$0xf]
  %v250 = vld [vmem:[%s1 + $0x16c] sm:$0xf]
  %v251 = vld [vmem:[%s1 + $0x170] sm:$0xf]
  %v252 = vld [vmem:[%s1 + $0x174] sm:$0xf]
  %v253 = vld [vmem:[%s1 + $0x178] sm:$0xf]
  %v254 = vld [vmem:[%s1 + $0x17c] sm:$0xf]
  %v255 = vld [vmem:[%s1 + $0x180] sm:$0xf]
  %v256 = vld [vmem:[%s1 + $0x184] sm:$0xf]
  %v257 = vld [vmem:[%s1 + $0x188] sm:$0xf]
  %v258 = vld [vmem:[%s1 + $0x18c] sm:$0xf]
  %v259 = vld [vmem:[%s1 + $0x190] sm:$0xf]
  %v260 = vld [vmem:[%s1 + $0x194] sm:$0xf]
  %v261 = vld [vmem:[%s1 + $0x198] sm:$0xf]
  %v262 = vld [vmem:[%s1 + $0x19c] sm:$0xf]
  %v263 = vld [vmem:[%s1 + $0x1a0] sm:$0xf]
  %v264 = vld [vmem:[%s1 + $0x1a4] sm:$0xf]
  %v265 = vld [vmem:[%s1 + $0x1a8] sm:$0xf]
  %v266 = vld [vmem:[%s1 + $0x1ac] sm:$0xf]
  %v267 = vld [vmem:[%s1 + $0x1b0] sm:$0xf]
  %v268 = vld [vmem:[%s1 + $0x1b4] sm:$0xf]
  %v269 = vld [vmem:[%s1 + $0x1b8] sm:$0xf]
  %v270 = vld [vmem:[%s1 + $0x1bc] sm:$0xf]
  %v271 = vld [vmem:[%s1 + $0x1c0] sm:$0xf]
  %v272 = vld [vmem:[%s1 + $0x1c4] sm:$0xf]
  %v273 = vld [vmem:[%s1 + $0x1c8] sm:$0xf]
  %v274 = vld [vmem:[%s1 + $0x1cc] sm:$0xf]
  %v275 = vld [vmem:[%s1 + $0x1d0] sm:$0xf]
  %v276 = vld [vmem:[%s1 + $0x1d4] sm:$0xf]
  %v277 = vld [vmem:[%s1 + $0x1d8] sm:$0xf]
  %v278 = vld [vmem:[%s1 + $0x1dc] sm:$0xf]
  %v279 = vld [vmem:[%s1 + $0x1e0] sm:$0xf]
  %v280 = vld [vmem:[%s1 + $0x1e4] sm:$0xf]
  %v281 = vld [vmem:[%s1 + $0x1e8] sm:$0xf]
  %v282 = vld [vmem:[%s1 + $0x1ec] sm:$0xf]
  %v283 = vld [vmem:[%s1 + $0x1f0] sm:$0xf]
  %v284 = vld [vmem:[%s1 + $0x1f4] sm:$0xf]
  %v285 = vld [vmem:[%s1 + $0x1f8] sm:$0xf]
  %v286 = vld [vmem:[%s1 + $0x1fc] sm:$0xf]
  %v287 = vld [vmem:[%s1 + $0x200] sm:$0xf]
  %v288 = vld [vmem:[%s1 + $0x204] sm:$0xf]
  %v289 = vld [vmem:[%s1 + $0x208] sm:$0xf]
  %v290 = vld [vmem:[%s1 + $0x20c] sm:$0xf]
  %v291 = vld [vmem:[%s1 + $0x210] sm:$0xf]
  %v292 = vld [vmem:[%s1 + $0x214] sm:$0xf]
  %v293 = vld [vmem:[%s1 + $0x218] sm:$0xf]
  %v294 = vld [vmem:[%s1 + $0x21c] sm:$0xf]
  %v295 = vld [vmem:[%s1 + $0x220] sm:$0xf]
  %v296 = vld [vmem:[%s1 + $0x224] sm:$0xf]
  %v297 = vld [vmem:[%s1 + $0x228] sm:$0xf]
  %v298 = vld [vmem:[%s1 + $0x22c] sm:$0xf]
  %v299 = vld [vmem:[%s1 + $0x230] sm:$0xf]
  %v300 = vld [vmem:[%s1 + $0x234] sm:$0xf]
  %v301 = vld [vmem:[%s1 + $0x238] sm:$0xf]
  %v302 = vld [vmem:[%s1 + $0x23c] sm:$0xf]
  %v303 = vld [vmem:[%s1 + $0x240] sm:$0xf]
  %v304 = vld [vmem:[%s1 + $0x244] sm:$0xf]
  %v305 = vld [vmem:[%s1 + $0x248] sm:$0xf]
  %v306 = vld [vmem:[%s1 + $0x24c] sm:$0xf]
  %v307 = vld [vmem:[%s1 + $0x250] sm:$0xf]
  %v308 = vld [vmem:[%s1 + $0x254] sm:$0xf]
  %v309 = vld [vmem:[%s1 + $0x258] sm:$0xf]
  %v310 = vld [vmem:[%s1 + $0x25c] sm:$0xf]
  %v311 = vld [vmem:[%s1 + $0x260] sm:$0xf]
  %v312 = vld [vmem:[%s1 + $0x264] sm:$0xf]
  %v313 = vld [vmem:[%s1 + $0x268] sm:$0xf]
  %v314 = vld [vmem:[%s1 + $0x26c] sm:$0xf]
  %v315 = vld [vmem:[%s1 + $0x270] sm:$0xf]
  %v316 = vld [vmem:[%s1 + $0x274] sm:$0xf]
  %v317 = vld [vmem:[%s1 + $0x278] sm:$0xf]
  %v318 = vld [vmem:[%s1 + $0x27c] sm:$0xf]
  %v319 = vld [vmem:[%s1 + $0x280] sm:$0xf]
  %v320 = vld [vmem:[%s1 + $0x284] sm:$0xf]
  %v321 = vld [vmem:[%s1 + $0x288] sm:$0xf]
  %v322 = vld [vmem:[%s1 + $0x28c] sm:$0xf]
  %v323 = vld [vmem:[%s1 + $0x290] sm:$0xf]
  %v324 = vld [vmem:[%s1 + $0x294] sm:$0xf]
  %v325 = vld [vmem:[%s1 + $0x298] sm:$0xf]
  %v326 = vld [vmem:[%s1 + $0x29c] sm:$0xf]
  %v327 = vld [vmem:[%s1 + $0x2a0] sm:$0xf]
  %v328 = vld [vmem:[%s1 + $0x2a4] sm:$0xf]
  %v329 = vld [vmem:[%s1 + $0x2a8] sm:$0xf]
  %v330 = vld [vmem:[%s1 + $0x2ac] sm:$0xf]
  %v331 = vld [vmem:[%s1 + $0x2b0] sm:$0xf]
  %v332 = vld [vmem:[%s1 + $0x2b4] sm:$0xf]
  %v333 = vld [vmem:[%s1 + $0x2b8] sm:$0xf]
  %v334 = vld [vmem:[%s1 + $0x2bc] sm:$0xf]
  %v335 = vld [vmem:[%s1 + $0x2c0] sm:$0xf]
  %v336 = vld [vmem:[%s1 + $0x2c4] sm:$0xf]
  %v337 = vld [vmem:[%s1 + $0x2c8] sm:$0xf]
  %v338 = vld [vmem:[%s1 + $0x2cc] sm:$0xf]
  %v339 = vld [vmem:[%s1 + $0x2d0] sm:$0xf]
  %v340 = vld [vmem:[%s1 + $0x2d4] sm:$0xf]
  %v341 = vld [vmem:[%s1 + $0x2d8] sm:$0xf]
  %v342 = vld [vmem:[%s1 + $0x2dc] sm:$0xf]
  %v343 = vld [vmem:[%s1 + $0x2e0] sm:$0xf]
  %v344 = vld [vmem:[%s1 + $0x2e4] sm:$0xf]
  %v345 = vld [vmem:[%s1 + $0x2e8] sm:$0xf]
  %v346 = vld [vmem:[%s1 + $0x2ec] sm:$0xf]
  %v347 = vld [vmem:[%s1 + $0x2f0] sm:$0xf]
  %v348 = vld [vmem:[%s1 + $0x2f4] sm:$0xf]
  %v349 = vld [vmem:[%s1 + $0x2f8] sm:$0xf]
  %v350 = vld [vmem:[%s1 + $0x2fc] sm:$0xf]
  %v351 = vld [vmem:[%s1 + $0x300] sm:$0xf]
  %v352 = vld [vmem:[%s1 + $0x304] sm:$0xf]
  %v353 = vld [vmem:[%s1 + $0x308] sm:$0xf]
  %v354 = vld [vmem:[%s1 + $0x30c] sm:$0xf]
  %v355 = vld [vmem:[%s1 + $0x310] sm:$0xf]
  %v356 = vld [vmem:[%s1 + $0x314] sm:$0xf]
  %v357 = vld [vmem:[%s1 + $0x318] sm:$0xf]
  %v358 = vld [vmem:[%s1 + $0x31c] sm:$0xf]
  %v359 = vld [vmem:[%s1 + $0x320] sm:$0xf]
  %v360 = vld [vmem:[%s1 + $0x324] sm:$0xf]
  %v361 = vld [vmem:[%s1 + $0x328] sm:$0xf]
  %v362 = vld [vmem:[%s1 + $0x32c] sm:$0xf]
  %v363 = vld [vmem:[%s1 + $0x330] sm:$0xf]
  %v364 = vld [vmem:[%s1 + $0x334] sm:$0xf]
  %v365 = vld [vmem:[%s1 + $0x338] sm:$0xf]
  %v366 = vld [vmem:[%s1 + $0x33c] sm:$0xf]
  %v367 = vld [vmem:[%s1 + $0x340] sm:$0xf]
  %v368 = vld [vmem:[%s1 + $0x344] sm:$0xf]
  %v369 = vld [vmem:[%s1 + $0x348] sm:$0xf]
  %v370 = vld [vmem:[%s1 + $0x34c] sm:$0xf]
  %v371 = vld [vmem:[%s1 + $0x350] sm:$0xf]
  %v372 = vld [vmem:[%s1 + $0x354] sm:$0xf]
  %v373 = vld [vmem:[%s1 + $0x358] sm:$0xf]
  %v374 = vld [vmem:[%s1 + $0x35c] sm:$0xf]
  %v375 = vld [vmem:[%s1 + $0x360] sm:$0xf]
  %v376 = vld [vmem:[%s1 + $0x364] sm:$0xf]
  %v377 = vld [vmem:[%s1 + $0x368] sm:$0xf]
  %v378 = vld [vmem:[%s1 + $0x36c] sm:$0xf]
  %v379 = vld [vmem:[%s1 + $0x370] sm:$0xf]
  %v380 = vld [vmem:[%s1 + $0x374] sm:$0xf]
  %v381 = vld [vmem:[%s1 + $0x378] sm:$0xf]
  %v382 = vld [vmem:[%s1 + $0x37c] sm:$0xf]
  %v383 = vld [vmem:[%s1 + $0x380] sm:$0xf]
  %v384 = vld [vmem:[%s1 + $0x384] sm:$0xf]
  %v385 = vld [vmem:[%s1 + $0x388] sm:$0xf]
  %v386 = vld [vmem:[%s1 + $0x38c] sm:$0xf]
  %v387 = vld [vmem:[%s1 + $0x390] sm:$0xf]
  %v388 = vld [vmem:[%s1 + $0x394] sm:$0xf]
  %v389 = vld [vmem:[%s1 + $0x398] sm:$0xf]
  %v390 = vld [vmem:[%s1 + $0x39c] sm:$0xf]
  %v391 = vld [vmem:[%s1 + $0x3a0] sm:$0xf]
  %v392 = vld [vmem:[%s1 + $0x3a4] sm:$0xf]
  %v393 = vld [vmem:[%s1 + $0x3a8] sm:$0xf]
  %v394 = vld [vmem:[%s1 + $0x3ac] sm:$0xf]
  %v395 = vld [vmem:[%s1 + $0x3b0] sm:$0xf]
  %v396 = vld [vmem:[%s1 + $0x3b4] sm:$0xf]
  %v397 = vld [vmem:[%s1 + $0x3b8] sm:$0xf]
  %v398 = vld [vmem:[%s1 + $0x3bc] sm:$0xf]
  %v399 = vld [vmem:[%s1 + $0x3c0] sm:$0xf]
  %v400 = vld [vmem:[%s1 + $0x3c4] sm:$0xf]
  %v401 = vld [vmem:[%s1 + $0x3c8] sm:$0xf]
  %v402 = vld [vmem:[%s1 + $0x3cc] sm:$0xf]
  %v403 = vld [vmem:[%s1 + $0x3d0] sm:$0xf]
  %v404 = vld [vmem:[%s1 + $0x3d4] sm:$0xf]
  %v405 = vld [vmem:[%s1 + $0x3d8] sm:$0xf]
  %v406 = vld [vmem:[%s1 + $0x3dc] sm:$0xf]
  %v407 = vld [vmem:[%s1 + $0x3e0] sm:$0xf]
  %v408 = vld [vmem:[%s1 + $0x3e4] sm:$0xf]
  %v409 = vld [vmem:[%s1 + $0x3e8] sm:$0xf]
  %v410 = vld [vmem:[%s1 + $0x3ec] sm:$0xf]
  %v411 = vld [vmem:[%s1 + $0x3f0] sm:$0xf]
  %v412 = vld [vmem:[%s1 + $0x3f4] sm:$0xf]
  %v413 = vld [vmem:[%s1 + $0x3f8] sm:$0xf]
  %v414 = vld [vmem:[%s1 + $0x3fc] sm:$0xf]
  %v415 = vld [vmem:[%s1 + $0x400] sm:$0xf]
  %v416 = vld [vmem:[%s1 + $0x404] sm:$0xf]
  %v417 = vld [vmem:[%s1 + $0x408] sm:$0xf]
  %v418 = vld [vmem:[%s1 + $0x40c] sm:$0xf]
  %v419 = vld [vmem:[%s1 + $0x410] sm:$0xf]
  %v420 = vld [vmem:[%s1 + $0x414] sm:$0xf]
  %v421 = vld [vmem:[%s1 + $0x418] sm:$0xf]
  %v422 = vld [vmem:[%s1 + $0x41c] sm:$0xf]
  %v423 = vld [vmem:[%s1 + $0x420] sm:$0xf]
  %v424 = vld [vmem:[%s1 + $0x424] sm:$0xf]
  %v425 = vld [vmem:[%s1 + $0x428] sm:$0xf]
  %v426 = vld [vmem:[%s1 + $0x42c] sm:$0xf]
  %v427 = vld [vmem:[%s1 + $0x430] sm:$0xf]
  %v428 = vld [vmem:[%s1 + $0x434] sm:$0xf]
  %v429 = vld [vmem:[%s1 + $0x438] sm:$0xf]
  %v430 = vld [vmem:[%s1 + $0x43c] sm:$0xf]
  %v431 = vld [vmem:[%s1 + $0x440] sm:$0xf]
  %v432 = vld [vmem:[%s1 + $0x444] sm:$0xf]
  %v433 = vld [vmem:[%s1 + $0x448] sm:$0xf]
  %v434 = vld [vmem:[%s1 + $0x44c] sm:$0xf]
  %v435 = vld [vmem:[%s1 + $0x450] sm:$0xf]
  %v436 = vld [vmem:[%s1 + $0x454] sm:$0xf]
  %v437 = vld [vmem:[%s1 + $0x458] sm:$0xf]
  %v438 = vld [vmem:[%s1 + $0x45c] sm:$0xf]
  %v439 = vld [vmem:[%s1 + $0x460] sm:$0xf]
  %v440 = vld [vmem:[%s1 + $0x464] sm:$0xf]
  %v441 = vld [vmem:[%s1 + $0x468] sm:$0xf]
  %v442 = vld [vmem:[%s1 + $0x46c] sm:$0xf]
  %v443 = vld [vmem:[%s1 + $0x470] sm:$0xf]
  %v444 = vld [vmem:[%s1 + $0x474] sm:$0xf]
  %v445 = vld [vmem:[%s1 + $0x478] sm:$0xf]
  %v446 = vld [vmem:[%s1 + $0x47c] sm:$0xf]
  %v447 = vld [vmem:[%s2] sm:$0x1]
  %v449 = vlaneseq
  %v450 = vshrl.u32 %v449, 7
  %v451 = vsub.s32 0, %v450
  %v452 = vrot.slane %v447, %v451
  %v598 = vunpack.c.l.b16 %v15
  %v599 = vunpack.c.h.b16 %v15
  %v600 = vunpack.c.l.b16 %v16
  %v601 = vunpack.c.h.b16 %v16
  %v602 = vunpack.c.l.b16 %v17
  %v603 = vunpack.c.h.b16 %v17
  %v604 = vunpack.c.l.b16 %v18
  %v605 = vunpack.c.h.b16 %v18
  %v606 = vunpack.c.l.b16 %v19
  %v607 = vunpack.c.h.b16 %v19
  %v608 = vunpack.c.l.b16 %v20
  %v609 = vunpack.c.h.b16 %v20
  %v610 = vunpack.c.l.b16 %v21
  %v611 = vunpack.c.h.b16 %v21
  %v612 = vunpack.c.l.b16 %v22
  %v613 = vunpack.c.h.b16 %v22
  %v614 = vunpack.c.l.b16 %v23
  %v615 = vunpack.c.h.b16 %v23
  %v616 = vunpack.c.l.b16 %v24
  %v617 = vunpack.c.h.b16 %v24
  %v618 = vunpack.c.l.b16 %v25
  %v619 = vunpack.c.h.b16 %v25
  %v620 = vunpack.c.l.b16 %v26
  %v621 = vunpack.c.h.b16 %v26
  %v622 = vunpack.c.l.b16 %v27
  %v623 = vunpack.c.h.b16 %v27
  %v624 = vunpack.c.l.b16 %v28
  %v625 = vunpack.c.h.b16 %v28
  %v626 = vunpack.c.l.b16 %v29
  %v627 = vunpack.c.h.b16 %v29
  %v628 = vunpack.c.l.b16 %v30
  %v629 = vunpack.c.h.b16 %v30
  %v630 = vunpack.c.l.b16 %v31
  %v631 = vunpack.c.h.b16 %v31
  %v632 = vunpack.c.l.b16 %v32
  %v633 = vunpack.c.h.b16 %v32
  %v634 = vunpack.c.l.b16 %v33
  %v635 = vunpack.c.h.b16 %v33
  %v636 = vunpack.c.l.b16 %v34
  %v637 = vunpack.c.h.b16 %v34
  %v638 = vunpack.c.l.b16 %v35
  %v639 = vunpack.c.h.b16 %v35
  %v640 = vunpack.c.l.b16 %v36
  %v641 = vunpack.c.h.b16 %v36
  %v642 = vunpack.c.l.b16 %v37
  %v643 = vunpack.c.h.b16 %v37
  %v644 = vunpack.c.l.b16 %v38
  %v645 = vunpack.c.h.b16 %v38
  %v646 = vunpack.c.l.b16 %v39
  %v647 = vunpack.c.h.b16 %v39
  %v648 = vunpack.c.l.b16 %v40
  %v649 = vunpack.c.h.b16 %v40
  %v650 = vunpack.c.l.b16 %v41
  %v651 = vunpack.c.h.b16 %v41
  %v652 = vunpack.c.l.b16 %v42
  %v653 = vunpack.c.h.b16 %v42
  %v654 = vunpack.c.l.b16 %v43
  %v655 = vunpack.c.h.b16 %v43
  %v656 = vunpack.c.l.b16 %v44
  %v657 = vunpack.c.h.b16 %v44
  %v658 = vunpack.c.l.b16 %v45
  %v659 = vunpack.c.h.b16 %v45
  %v660 = vunpack.c.l.b16 %v46
  %v661 = vunpack.c.h.b16 %v46
  %v662 = vunpack.c.l.b16 %v47
  %v663 = vunpack.c.h.b16 %v47
  %v664 = vunpack.c.l.b16 %v48
  %v665 = vunpack.c.h.b16 %v48
  %v666 = vunpack.c.l.b16 %v49
  %v667 = vunpack.c.h.b16 %v49
  %v668 = vunpack.c.l.b16 %v50
  %v669 = vunpack.c.h.b16 %v50
  %v670 = vunpack.c.l.b16 %v51
  %v671 = vunpack.c.h.b16 %v51
  %v672 = vunpack.c.l.b16 %v52
  %v673 = vunpack.c.h.b16 %v52
  %v674 = vunpack.c.l.b16 %v53
  %v675 = vunpack.c.h.b16 %v53
  %v676 = vunpack.c.l.b16 %v54
  %v677 = vunpack.c.h.b16 %v54
  %v678 = vunpack.c.l.b16 %v55
  %v679 = vunpack.c.h.b16 %v55
  %v680 = vunpack.c.l.b16 %v56
  %v681 = vunpack.c.h.b16 %v56
  %v682 = vunpack.c.l.b16 %v57
  %v683 = vunpack.c.h.b16 %v57
  %v684 = vunpack.c.l.b16 %v58
  %v685 = vunpack.c.h.b16 %v58
  %v686 = vunpack.c.l.b16 %v59
  %v687 = vunpack.c.h.b16 %v59
  %v688 = vunpack.c.l.b16 %v60
  %v689 = vunpack.c.h.b16 %v60
  %v690 = vunpack.c.l.b16 %v61
  %v691 = vunpack.c.h.b16 %v61
  %v692 = vunpack.c.l.b16 %v62
  %v693 = vunpack.c.h.b16 %v62
  %v694 = vunpack.c.l.b16 %v63
  %v695 = vunpack.c.h.b16 %v63
  %v696 = vunpack.c.l.b16 %v64
  %v697 = vunpack.c.h.b16 %v64
  %v698 = vunpack.c.l.b16 %v65
  %v699 = vunpack.c.h.b16 %v65
  %v700 = vunpack.c.l.b16 %v66
  %v701 = vunpack.c.h.b16 %v66
  %v702 = vunpack.c.l.b16 %v67
  %v703 = vunpack.c.h.b16 %v67
  %v704 = vunpack.c.l.b16 %v68
  %v705 = vunpack.c.h.b16 %v68
  %v706 = vunpack.c.l.b16 %v69
  %v707 = vunpack.c.h.b16 %v69
  %v708 = vunpack.c.l.b16 %v70
  %v709 = vunpack.c.h.b16 %v70
  %v710 = vunpack.c.l.b16 %v71
  %v711 = vunpack.c.h.b16 %v71
  %v712 = vunpack.c.l.b16 %v72
  %v713 = vunpack.c.h.b16 %v72
  %v714 = vunpack.c.l.b16 %v73
  %v715 = vunpack.c.h.b16 %v73
  %v716 = vunpack.c.l.b16 %v74
  %v717 = vunpack.c.h.b16 %v74
  %v718 = vunpack.c.l.b16 %v75
  %v719 = vunpack.c.h.b16 %v75
  %v720 = vunpack.c.l.b16 %v76
  %v721 = vunpack.c.h.b16 %v76
  %v722 = vunpack.c.l.b16 %v77
  %v723 = vunpack.c.h.b16 %v77
  %v724 = vunpack.c.l.b16 %v78
  %v725 = vunpack.c.h.b16 %v78
  %v726 = vunpack.c.l.b16 %v79
  %v727 = vunpack.c.h.b16 %v79
  %v728 = vunpack.c.l.b16 %v80
  %v729 = vunpack.c.h.b16 %v80
  %v730 = vunpack.c.l.b16 %v81
  %v731 = vunpack.c.h.b16 %v81
  %v732 = vunpack.c.l.b16 %v82
  %v733 = vunpack.c.h.b16 %v82
  %v734 = vunpack.c.l.b16 %v83
  %v735 = vunpack.c.h.b16 %v83
  %v736 = vunpack.c.l.b16 %v84
  %v737 = vunpack.c.h.b16 %v84
  %v738 = vunpack.c.l.b16 %v85
  %v739 = vunpack.c.h.b16 %v85
  %v740 = vunpack.c.l.b16 %v86
  %v741 = vunpack.c.h.b16 %v86
  %v742 = vunpack.c.l.b16 %v87
  %v743 = vunpack.c.h.b16 %v87
  %v744 = vunpack.c.l.b16 %v88
  %v745 = vunpack.c.h.b16 %v88
  %v746 = vunpack.c.l.b16 %v89
  %v747 = vunpack.c.h.b16 %v89
  %v748 = vunpack.c.l.b16 %v90
  %v749 = vunpack.c.h.b16 %v90
  %v750 = vunpack.c.l.b16 %v91
  %v751 = vunpack.c.h.b16 %v91
  %v752 = vunpack.c.l.b16 %v92
  %v753 = vunpack.c.h.b16 %v92
  %v754 = vunpack.c.l.b16 %v93
  %v755 = vunpack.c.h.b16 %v93
  %v756 = vunpack.c.l.b16 %v94
  %v757 = vunpack.c.h.b16 %v94
  %v758 = vunpack.c.l.b16 %v95
  %v759 = vunpack.c.h.b16 %v95
  %v760 = vunpack.c.l.b16 %v96
  %v761 = vunpack.c.h.b16 %v96
  %v762 = vunpack.c.l.b16 %v97
  %v763 = vunpack.c.h.b16 %v97
  %v764 = vunpack.c.l.b16 %v98
  %v765 = vunpack.c.h.b16 %v98
  %v766 = vunpack.c.l.b16 %v99
  %v767 = vunpack.c.h.b16 %v99
  %v768 = vunpack.c.l.b16 %v100
  %v769 = vunpack.c.h.b16 %v100
  %v770 = vunpack.c.l.b16 %v101
  %v771 = vunpack.c.h.b16 %v101
  %v772 = vunpack.c.l.b16 %v102
  %v773 = vunpack.c.h.b16 %v102
  %v774 = vunpack.c.l.b16 %v103
  %v775 = vunpack.c.h.b16 %v103
  %v776 = vunpack.c.l.b16 %v104
  %v777 = vunpack.c.h.b16 %v104
  %v778 = vunpack.c.l.b16 %v105
  %v779 = vunpack.c.h.b16 %v105
  %v780 = vunpack.c.l.b16 %v106
  %v781 = vunpack.c.h.b16 %v106
  %v782 = vunpack.c.l.b16 %v107
  %v783 = vunpack.c.h.b16 %v107
  %v784 = vunpack.c.l.b16 %v108
  %v785 = vunpack.c.h.b16 %v108
  %v786 = vunpack.c.l.b16 %v109
  %v787 = vunpack.c.h.b16 %v109
  %v788 = vunpack.c.l.b16 %v110
  %v789 = vunpack.c.h.b16 %v110
  %v790 = vunpack.c.l.b16 %v111
  %v791 = vunpack.c.h.b16 %v111
  %v792 = vunpack.c.l.b16 %v112
  %v793 = vunpack.c.h.b16 %v112
  %v794 = vunpack.c.l.b16 %v113
  %v795 = vunpack.c.h.b16 %v113
  %v796 = vunpack.c.l.b16 %v114
  %v797 = vunpack.c.h.b16 %v114
  %v798 = vunpack.c.l.b16 %v115
  %v799 = vunpack.c.h.b16 %v115
  %v800 = vunpack.c.l.b16 %v116
  %v801 = vunpack.c.h.b16 %v116
  %v802 = vunpack.c.l.b16 %v117
  %v803 = vunpack.c.h.b16 %v117
  %v804 = vunpack.c.l.b16 %v118
  %v805 = vunpack.c.h.b16 %v118
  %v806 = vunpack.c.l.b16 %v119
  %v807 = vunpack.c.h.b16 %v119
  %v808 = vunpack.c.l.b16 %v120
  %v809 = vunpack.c.h.b16 %v120
  %v810 = vunpack.c.l.b16 %v121
  %v811 = vunpack.c.h.b16 %v121
  %v812 = vunpack.c.l.b16 %v122
  %v813 = vunpack.c.h.b16 %v122
  %v814 = vunpack.c.l.b16 %v123
  %v815 = vunpack.c.h.b16 %v123
  %v816 = vunpack.c.l.b16 %v124
  %v817 = vunpack.c.h.b16 %v124
  %v818 = vunpack.c.l.b16 %v125
  %v819 = vunpack.c.h.b16 %v125
  %v820 = vunpack.c.l.b16 %v126
  %v821 = vunpack.c.h.b16 %v126
  %v822 = vunpack.c.l.b16 %v127
  %v823 = vunpack.c.h.b16 %v127
  %v824 = vunpack.c.l.b16 %v128
  %v825 = vunpack.c.h.b16 %v128
  %v826 = vunpack.c.l.b16 %v129
  %v827 = vunpack.c.h.b16 %v129
  %v828 = vunpack.c.l.b16 %v130
  %v829 = vunpack.c.h.b16 %v130
  %v830 = vunpack.c.l.b16 %v131
  %v831 = vunpack.c.h.b16 %v131
  %v832 = vunpack.c.l.b16 %v132
  %v833 = vunpack.c.h.b16 %v132
  %v834 = vunpack.c.l.b16 %v133
  %v835 = vunpack.c.h.b16 %v133
  %v836 = vunpack.c.l.b16 %v134
  %v837 = vunpack.c.h.b16 %v134
  %v838 = vunpack.c.l.b16 %v135
  %v839 = vunpack.c.h.b16 %v135
  %v840 = vunpack.c.l.b16 %v136
  %v841 = vunpack.c.h.b16 %v136
  %v842 = vunpack.c.l.b16 %v137
  %v843 = vunpack.c.h.b16 %v137
  %v844 = vunpack.c.l.b16 %v138
  %v845 = vunpack.c.h.b16 %v138
  %v846 = vunpack.c.l.b16 %v139
  %v847 = vunpack.c.h.b16 %v139
  %v848 = vunpack.c.l.b16 %v140
  %v849 = vunpack.c.h.b16 %v140
  %v850 = vunpack.c.l.b16 %v141
  %v851 = vunpack.c.h.b16 %v141
  %v852 = vunpack.c.l.b16 %v142
  %v853 = vunpack.c.h.b16 %v142
  %v854 = vunpack.c.l.b16 %v143
  %v855 = vunpack.c.h.b16 %v143
  %v856 = vunpack.c.l.b16 %v144
  %v857 = vunpack.c.h.b16 %v144
  %v858 = vunpack.c.l.b16 %v145
  %v859 = vunpack.c.h.b16 %v145
  %v860 = vunpack.c.l.b16 %v146
  %v861 = vunpack.c.h.b16 %v146
  %v862 = vunpack.c.l.b16 %v147
  %v863 = vunpack.c.h.b16 %v147
  %v864 = vunpack.c.l.b16 %v148
  %v865 = vunpack.c.h.b16 %v148
  %v866 = vunpack.c.l.b16 %v149
  %v867 = vunpack.c.h.b16 %v149
  %v868 = vunpack.c.l.b16 %v150
  %v869 = vunpack.c.h.b16 %v150
  %v870 = vunpack.c.l.b16 %v151
  %v871 = vunpack.c.h.b16 %v151
  %v872 = vunpack.c.l.b16 %v152
  %v873 = vunpack.c.h.b16 %v152
  %v874 = vunpack.c.l.b16 %v153
  %v875 = vunpack.c.h.b16 %v153
  %v876 = vunpack.c.l.b16 %v154
  %v877 = vunpack.c.h.b16 %v154
  %v878 = vunpack.c.l.b16 %v155
  %v879 = vunpack.c.h.b16 %v155
  %v880 = vunpack.c.l.b16 %v156
  %v881 = vunpack.c.h.b16 %v156
  %v882 = vunpack.c.l.b16 %v157
  %v883 = vunpack.c.h.b16 %v157
  %v884 = vunpack.c.l.b16 %v158
  %v885 = vunpack.c.h.b16 %v158
  %v886 = vpack.c.b16 %v616, %v598
  %v887 = vpack.c.b16 %v617, %v599
  %v888 = vpack.c.b16 %v618, %v600
  %v889 = vpack.c.b16 %v619, %v601
  %v890 = vpack.c.b16 %v620, %v602
  %v891 = vpack.c.b16 %v621, %v603
  %v892 = vpack.c.b16 %v622, %v604
  %v893 = vpack.c.b16 %v623, %v605
  %v894 = vpack.c.b16 %v624, %v606
  %v895 = vpack.c.b16 %v625, %v607
  %v896 = vpack.c.b16 %v626, %v608
  %v897 = vpack.c.b16 %v627, %v609
  %v898 = vpack.c.b16 %v628, %v610
  %v899 = vpack.c.b16 %v629, %v611
  %v900 = vpack.c.b16 %v630, %v612
  %v901 = vpack.c.b16 %v631, %v613
  %v902 = vpack.c.b16 %v632, %v614
  %v903 = vpack.c.b16 %v633, %v615
  %v904 = vpack.c.b16 %v652, %v634
  %v905 = vpack.c.b16 %v653, %v635
  %v906 = vpack.c.b16 %v654, %v636
  %v907 = vpack.c.b16 %v655, %v637
  %v908 = vpack.c.b16 %v656, %v638
  %v909 = vpack.c.b16 %v657, %v639
  %v910 = vpack.c.b16 %v658, %v640
  %v911 = vpack.c.b16 %v659, %v641
  %v912 = vpack.c.b16 %v660, %v642
  %v913 = vpack.c.b16 %v661, %v643
  %v914 = vpack.c.b16 %v662, %v644
  %v915 = vpack.c.b16 %v663, %v645
  %v916 = vpack.c.b16 %v664, %v646
  %v917 = vpack.c.b16 %v665, %v647
  %v918 = vpack.c.b16 %v666, %v648
  %v919 = vpack.c.b16 %v667, %v649
  %v920 = vpack.c.b16 %v668, %v650
  %v921 = vpack.c.b16 %v669, %v651
  %v922 = vpack.c.b16 %v688, %v670
  %v923 = vpack.c.b16 %v689, %v671
  %v924 = vpack.c.b16 %v690, %v672
  %v925 = vpack.c.b16 %v691, %v673
  %v926 = vpack.c.b16 %v692, %v674
  %v927 = vpack.c.b16 %v693, %v675
  %v928 = vpack.c.b16 %v694, %v676
  %v929 = vpack.c.b16 %v695, %v677
  %v930 = vpack.c.b16 %v696, %v678
  %v931 = vpack.c.b16 %v697, %v679
  %v932 = vpack.c.b16 %v698, %v680
  %v933 = vpack.c.b16 %v699, %v681
  %v934 = vpack.c.b16 %v700, %v682
  %v935 = vpack.c.b16 %v701, %v683
  %v936 = vpack.c.b16 %v702, %v684
  %v937 = vpack.c.b16 %v703, %v685
  %v938 = vpack.c.b16 %v704, %v686
  %v939 = vpack.c.b16 %v705, %v687
  %v940 = vpack.c.b16 %v724, %v706
  %v941 = vpack.c.b16 %v725, %v707
  %v942 = vpack.c.b16 %v726, %v708
  %v943 = vpack.c.b16 %v727, %v709
  %v944 = vpack.c.b16 %v728, %v710
  %v945 = vpack.c.b16 %v729, %v711
  %v946 = vpack.c.b16 %v730, %v712
  %v947 = vpack.c.b16 %v731, %v713
  %v948 = vpack.c.b16 %v732, %v714
  %v949 = vpack.c.b16 %v733, %v715
  %v950 = vpack.c.b16 %v734, %v716
  %v951 = vpack.c.b16 %v735, %v717
  %v952 = vpack.c.b16 %v736, %v718
  %v953 = vpack.c.b16 %v737, %v719
  %v954 = vpack.c.b16 %v738, %v720
  %v955 = vpack.c.b16 %v739, %v721
  %v956 = vpack.c.b16 %v740, %v722
  %v957 = vpack.c.b16 %v741, %v723
  %v958 = vpack.c.b16 %v760, %v742
  %v959 = vpack.c.b16 %v761, %v743
  %v960 = vpack.c.b16 %v762, %v744
  %v961 = vpack.c.b16 %v763, %v745
  %v962 = vpack.c.b16 %v764, %v746
  %v963 = vpack.c.b16 %v765, %v747
  %v964 = vpack.c.b16 %v766, %v748
  %v965 = vpack.c.b16 %v767, %v749
  %v966 = vpack.c.b16 %v768, %v750
  %v967 = vpack.c.b16 %v769, %v751
  %v968 = vpack.c.b16 %v770, %v752
  %v969 = vpack.c.b16 %v771, %v753
  %v970 = vpack.c.b16 %v772, %v754
  %v971 = vpack.c.b16 %v773, %v755
  %v972 = vpack.c.b16 %v774, %v756
  %v973 = vpack.c.b16 %v775, %v757
  %v974 = vpack.c.b16 %v776, %v758
  %v975 = vpack.c.b16 %v777, %v759
  %v976 = vpack.c.b16 %v796, %v778
  %v977 = vpack.c.b16 %v797, %v779
  %v978 = vpack.c.b16 %v798, %v780
  %v979 = vpack.c.b16 %v799, %v781
  %v980 = vpack.c.b16 %v800, %v782
  %v981 = vpack.c.b16 %v801, %v783
  %v982 = vpack.c.b16 %v802, %v784
  %v983 = vpack.c.b16 %v803, %v785
  %v984 = vpack.c.b16 %v804, %v786
  %v985 = vpack.c.b16 %v805, %v787
  %v986 = vpack.c.b16 %v806, %v788
  %v987 = vpack.c.b16 %v807, %v789
  %v988 = vpack.c.b16 %v808, %v790
  %v989 = vpack.c.b16 %v809, %v791
  %v990 = vpack.c.b16 %v810, %v792
  %v991 = vpack.c.b16 %v811, %v793
  %v992 = vpack.c.b16 %v812, %v794
  %v993 = vpack.c.b16 %v813, %v795
  %v994 = vpack.c.b16 %v832, %v814
  %v995 = vpack.c.b16 %v833, %v815
  %v996 = vpack.c.b16 %v834, %v816
  %v997 = vpack.c.b16 %v835, %v817
  %v998 = vpack.c.b16 %v836, %v818
  %v999 = vpack.c.b16 %v837, %v819
  %v1000 = vpack.c.b16 %v838, %v820
  %v1001 = vpack.c.b16 %v839, %v821
  %v1002 = vpack.c.b16 %v840, %v822
  %v1003 = vpack.c.b16 %v841, %v823
  %v1004 = vpack.c.b16 %v842, %v824
  %v1005 = vpack.c.b16 %v843, %v825
  %v1006 = vpack.c.b16 %v844, %v826
  %v1007 = vpack.c.b16 %v845, %v827
  %v1008 = vpack.c.b16 %v846, %v828
  %v1009 = vpack.c.b16 %v847, %v829
  %v1010 = vpack.c.b16 %v848, %v830
  %v1011 = vpack.c.b16 %v849, %v831
  %v1012 = vpack.c.b16 %v868, %v850
  %v1013 = vpack.c.b16 %v869, %v851
  %v1014 = vpack.c.b16 %v870, %v852
  %v1015 = vpack.c.b16 %v871, %v853
  %v1016 = vpack.c.b16 %v872, %v854
  %v1017 = vpack.c.b16 %v873, %v855
  %v1018 = vpack.c.b16 %v874, %v856
  %v1019 = vpack.c.b16 %v875, %v857
  %v1020 = vpack.c.b16 %v876, %v858
  %v1021 = vpack.c.b16 %v877, %v859
  %v1022 = vpack.c.b16 %v878, %v860
  %v1023 = vpack.c.b16 %v879, %v861
  %v1024 = vpack.c.b16 %v880, %v862
  %v1025 = vpack.c.b16 %v881, %v863
  %v1026 = vpack.c.b16 %v882, %v864
  %v1027 = vpack.c.b16 %v883, %v865
  %v1028 = vpack.c.b16 %v884, %v866
  %v1029 = vpack.c.b16 %v885, %v867
  %v1462 = vunpack.c.l.b16 %v159
  %v1463 = vunpack.c.l.b16 %v160
  %v1464 = vunpack.c.l.b16 %v161
  %v1465 = vunpack.c.l.b16 %v162
  %v1466 = vunpack.c.l.b16 %v163
  %v1467 = vunpack.c.l.b16 %v164
  %v1468 = vunpack.c.l.b16 %v165
  %v1469 = vunpack.c.l.b16 %v166
  %v1470 = vunpack.c.l.b16 %v167
  %v1471 = vunpack.c.l.b16 %v168
  %v1472 = vunpack.c.l.b16 %v169
  %v1473 = vunpack.c.l.b16 %v170
  %v1474 = vunpack.c.l.b16 %v171
  %v1475 = vunpack.c.l.b16 %v172
  %v1476 = vunpack.c.l.b16 %v173
  %v1477 = vunpack.c.l.b16 %v174
  %v1478 = vunpack.c.l.b16 %v175
  %v1479 = vunpack.c.l.b16 %v176
  %v1480 = vunpack.c.l.b16 %v177
  %v1481 = vunpack.c.l.b16 %v178
  %v1482 = vunpack.c.l.b16 %v179
  %v1483 = vunpack.c.l.b16 %v180
  %v1484 = vunpack.c.l.b16 %v181
  %v1485 = vunpack.c.l.b16 %v182
  %v1486 = vunpack.c.l.b16 %v183
  %v1487 = vunpack.c.l.b16 %v184
  %v1488 = vunpack.c.l.b16 %v185
  %v1489 = vunpack.c.l.b16 %v186
  %v1490 = vunpack.c.l.b16 %v187
  %v1491 = vunpack.c.l.b16 %v188
  %v1492 = vunpack.c.l.b16 %v189
  %v1493 = vunpack.c.l.b16 %v190
  %v1494 = vunpack.c.l.b16 %v191
  %v1495 = vunpack.c.l.b16 %v192
  %v1496 = vunpack.c.l.b16 %v193
  %v1497 = vunpack.c.l.b16 %v194
  %v1498 = vunpack.c.l.b16 %v195
  %v1499 = vunpack.c.l.b16 %v196
  %v1500 = vunpack.c.l.b16 %v197
  %v1501 = vunpack.c.l.b16 %v198
  %v1502 = vunpack.c.l.b16 %v199
  %v1503 = vunpack.c.l.b16 %v200
  %v1504 = vunpack.c.l.b16 %v201
  %v1505 = vunpack.c.l.b16 %v202
  %v1506 = vunpack.c.l.b16 %v203
  %v1507 = vunpack.c.l.b16 %v204
  %v1508 = vunpack.c.l.b16 %v205
  %v1509 = vunpack.c.l.b16 %v206
  %v1510 = vunpack.c.l.b16 %v207
  %v1511 = vunpack.c.l.b16 %v208
  %v1512 = vunpack.c.l.b16 %v209
  %v1513 = vunpack.c.l.b16 %v210
  %v1514 = vunpack.c.l.b16 %v211
  %v1515 = vunpack.c.l.b16 %v212
  %v1516 = vunpack.c.l.b16 %v213
  %v1517 = vunpack.c.l.b16 %v214
  %v1518 = vunpack.c.l.b16 %v215
  %v1519 = vunpack.c.l.b16 %v216
  %v1520 = vunpack.c.l.b16 %v217
  %v1521 = vunpack.c.l.b16 %v218
  %v1522 = vunpack.c.l.b16 %v219
  %v1523 = vunpack.c.l.b16 %v220
  %v1524 = vunpack.c.l.b16 %v221
  %v1525 = vunpack.c.l.b16 %v222
  %v1526 = vunpack.c.l.b16 %v223
  %v1527 = vunpack.c.l.b16 %v224
  %v1528 = vunpack.c.l.b16 %v225
  %v1529 = vunpack.c.l.b16 %v226
  %v1530 = vunpack.c.l.b16 %v227
  %v1531 = vunpack.c.l.b16 %v228
  %v1532 = vunpack.c.l.b16 %v229
  %v1533 = vunpack.c.l.b16 %v230
  %v1534 = vunpack.c.l.b16 %v231
  %v1535 = vunpack.c.l.b16 %v232
  %v1536 = vunpack.c.l.b16 %v233
  %v1537 = vunpack.c.l.b16 %v234
  %v1538 = vunpack.c.l.b16 %v235
  %v1539 = vunpack.c.l.b16 %v236
  %v1540 = vunpack.c.l.b16 %v237
  %v1541 = vunpack.c.l.b16 %v238
  %v1542 = vunpack.c.l.b16 %v239
  %v1543 = vunpack.c.l.b16 %v240
  %v1544 = vunpack.c.l.b16 %v241
  %v1545 = vunpack.c.l.b16 %v242
  %v1546 = vunpack.c.l.b16 %v243
  %v1547 = vunpack.c.l.b16 %v244
  %v1548 = vunpack.c.l.b16 %v245
  %v1549 = vunpack.c.l.b16 %v246
  %v1550 = vunpack.c.l.b16 %v247
  %v1551 = vunpack.c.l.b16 %v248
  %v1552 = vunpack.c.l.b16 %v249
  %v1553 = vunpack.c.l.b16 %v250
  %v1554 = vunpack.c.l.b16 %v251
  %v1555 = vunpack.c.l.b16 %v252
  %v1556 = vunpack.c.l.b16 %v253
  %v1557 = vunpack.c.l.b16 %v254
  %v1558 = vunpack.c.l.b16 %v255
  %v1559 = vunpack.c.l.b16 %v256
  %v1560 = vunpack.c.l.b16 %v257
  %v1561 = vunpack.c.l.b16 %v258
  %v1562 = vunpack.c.l.b16 %v259
  %v1563 = vunpack.c.l.b16 %v260
  %v1564 = vunpack.c.l.b16 %v261
  %v1565 = vunpack.c.l.b16 %v262
  %v1566 = vunpack.c.l.b16 %v263
  %v1567 = vunpack.c.l.b16 %v264
  %v1568 = vunpack.c.l.b16 %v265
  %v1569 = vunpack.c.l.b16 %v266
  %v1570 = vunpack.c.l.b16 %v267
  %v1571 = vunpack.c.l.b16 %v268
  %v1572 = vunpack.c.l.b16 %v269
  %v1573 = vunpack.c.l.b16 %v270
  %v1574 = vunpack.c.l.b16 %v271
  %v1575 = vunpack.c.l.b16 %v272
  %v1576 = vunpack.c.l.b16 %v273
  %v1577 = vunpack.c.l.b16 %v274
  %v1578 = vunpack.c.l.b16 %v275
  %v1579 = vunpack.c.l.b16 %v276
  %v1580 = vunpack.c.l.b16 %v277
  %v1581 = vunpack.c.l.b16 %v278
  %v1582 = vunpack.c.l.b16 %v279
  %v1583 = vunpack.c.l.b16 %v280
  %v1584 = vunpack.c.l.b16 %v281
  %v1585 = vunpack.c.l.b16 %v282
  %v1586 = vunpack.c.l.b16 %v283
  %v1587 = vunpack.c.l.b16 %v284
  %v1588 = vunpack.c.l.b16 %v285
  %v1589 = vunpack.c.l.b16 %v286
  %v1590 = vunpack.c.l.b16 %v287
  %v1591 = vunpack.c.l.b16 %v288
  %v1592 = vunpack.c.l.b16 %v289
  %v1593 = vunpack.c.l.b16 %v290
  %v1594 = vunpack.c.l.b16 %v291
  %v1595 = vunpack.c.l.b16 %v292
  %v1596 = vunpack.c.l.b16 %v293
  %v1597 = vunpack.c.l.b16 %v294
  %v1598 = vunpack.c.l.b16 %v295
  %v1599 = vunpack.c.l.b16 %v296
  %v1600 = vunpack.c.l.b16 %v297
  %v1601 = vunpack.c.l.b16 %v298
  %v1602 = vunpack.c.l.b16 %v299
  %v1603 = vunpack.c.l.b16 %v300
  %v1604 = vunpack.c.l.b16 %v301
  %v1605 = vunpack.c.l.b16 %v302
  %v1606 = vunpack.c.l.b16 %v303
  %v1607 = vunpack.c.l.b16 %v304
  %v1608 = vunpack.c.l.b16 %v305
  %v1609 = vunpack.c.l.b16 %v306
  %v1610 = vunpack.c.l.b16 %v307
  %v1611 = vunpack.c.l.b16 %v308
  %v1612 = vunpack.c.l.b16 %v309
  %v1613 = vunpack.c.l.b16 %v310
  %v1614 = vunpack.c.l.b16 %v311
  %v1615 = vunpack.c.l.b16 %v312
  %v1616 = vunpack.c.l.b16 %v313
  %v1617 = vunpack.c.l.b16 %v314
  %v1618 = vunpack.c.l.b16 %v315
  %v1619 = vunpack.c.l.b16 %v316
  %v1620 = vunpack.c.l.b16 %v317
  %v1621 = vunpack.c.l.b16 %v318
  %v1622 = vunpack.c.l.b16 %v319
  %v1623 = vunpack.c.l.b16 %v320
  %v1624 = vunpack.c.l.b16 %v321
  %v1625 = vunpack.c.l.b16 %v322
  %v1626 = vunpack.c.l.b16 %v323
  %v1627 = vunpack.c.l.b16 %v324
  %v1628 = vunpack.c.l.b16 %v325
  %v1629 = vunpack.c.l.b16 %v326
  %v1630 = vunpack.c.l.b16 %v327
  %v1631 = vunpack.c.l.b16 %v328
  %v1632 = vunpack.c.l.b16 %v329
  %v1633 = vunpack.c.l.b16 %v330
  %v1634 = vunpack.c.l.b16 %v331
  %v1635 = vunpack.c.l.b16 %v332
  %v1636 = vunpack.c.l.b16 %v333
  %v1637 = vunpack.c.l.b16 %v334
  %v1638 = vunpack.c.l.b16 %v335
  %v1639 = vunpack.c.l.b16 %v336
  %v1640 = vunpack.c.l.b16 %v337
  %v1641 = vunpack.c.l.b16 %v338
  %v1642 = vunpack.c.l.b16 %v339
  %v1643 = vunpack.c.l.b16 %v340
  %v1644 = vunpack.c.l.b16 %v341
  %v1645 = vunpack.c.l.b16 %v342
  %v1646 = vunpack.c.l.b16 %v343
  %v1647 = vunpack.c.l.b16 %v344
  %v1648 = vunpack.c.l.b16 %v345
  %v1649 = vunpack.c.l.b16 %v346
  %v1650 = vunpack.c.l.b16 %v347
  %v1651 = vunpack.c.l.b16 %v348
  %v1652 = vunpack.c.l.b16 %v349
  %v1653 = vunpack.c.l.b16 %v350
  %v1654 = vunpack.c.l.b16 %v351
  %v1655 = vunpack.c.l.b16 %v352
  %v1656 = vunpack.c.l.b16 %v353
  %v1657 = vunpack.c.l.b16 %v354
  %v1658 = vunpack.c.l.b16 %v355
  %v1659 = vunpack.c.l.b16 %v356
  %v1660 = vunpack.c.l.b16 %v357
  %v1661 = vunpack.c.l.b16 %v358
  %v1662 = vunpack.c.l.b16 %v359
  %v1663 = vunpack.c.l.b16 %v360
  %v1664 = vunpack.c.l.b16 %v361
  %v1665 = vunpack.c.l.b16 %v362
  %v1666 = vunpack.c.l.b16 %v363
  %v1667 = vunpack.c.l.b16 %v364
  %v1668 = vunpack.c.l.b16 %v365
  %v1669 = vunpack.c.l.b16 %v366
  %v1670 = vunpack.c.l.b16 %v367
  %v1671 = vunpack.c.l.b16 %v368
  %v1672 = vunpack.c.l.b16 %v369
  %v1673 = vunpack.c.l.b16 %v370
  %v1674 = vunpack.c.l.b16 %v371
  %v1675 = vunpack.c.l.b16 %v372
  %v1676 = vunpack.c.l.b16 %v373
  %v1677 = vunpack.c.l.b16 %v374
  %v1678 = vunpack.c.l.b16 %v375
  %v1679 = vunpack.c.l.b16 %v376
  %v1680 = vunpack.c.l.b16 %v377
  %v1681 = vunpack.c.l.b16 %v378
  %v1682 = vunpack.c.l.b16 %v379
  %v1683 = vunpack.c.l.b16 %v380
  %v1684 = vunpack.c.l.b16 %v381
  %v1685 = vunpack.c.l.b16 %v382
  %v1686 = vunpack.c.l.b16 %v383
  %v1687 = vunpack.c.l.b16 %v384
  %v1688 = vunpack.c.l.b16 %v385
  %v1689 = vunpack.c.l.b16 %v386
  %v1690 = vunpack.c.l.b16 %v387
  %v1691 = vunpack.c.l.b16 %v388
  %v1692 = vunpack.c.l.b16 %v389
  %v1693 = vunpack.c.l.b16 %v390
  %v1694 = vunpack.c.l.b16 %v391
  %v1695 = vunpack.c.l.b16 %v392
  %v1696 = vunpack.c.l.b16 %v393
  %v1697 = vunpack.c.l.b16 %v394
  %v1698 = vunpack.c.l.b16 %v395
  %v1699 = vunpack.c.l.b16 %v396
  %v1700 = vunpack.c.l.b16 %v397
  %v1701 = vunpack.c.l.b16 %v398
  %v1702 = vunpack.c.l.b16 %v399
  %v1703 = vunpack.c.l.b16 %v400
  %v1704 = vunpack.c.l.b16 %v401
  %v1705 = vunpack.c.l.b16 %v402
  %v1706 = vunpack.c.l.b16 %v403
  %v1707 = vunpack.c.l.b16 %v404
  %v1708 = vunpack.c.l.b16 %v405
  %v1709 = vunpack.c.l.b16 %v406
  %v1710 = vunpack.c.l.b16 %v407
  %v1711 = vunpack.c.l.b16 %v408
  %v1712 = vunpack.c.l.b16 %v409
  %v1713 = vunpack.c.l.b16 %v410
  %v1714 = vunpack.c.l.b16 %v411
  %v1715 = vunpack.c.l.b16 %v412
  %v1716 = vunpack.c.l.b16 %v413
  %v1717 = vunpack.c.l.b16 %v414
  %v1718 = vunpack.c.l.b16 %v415
  %v1719 = vunpack.c.l.b16 %v416
  %v1720 = vunpack.c.l.b16 %v417
  %v1721 = vunpack.c.l.b16 %v418
  %v1722 = vunpack.c.l.b16 %v419
  %v1723 = vunpack.c.l.b16 %v420
  %v1724 = vunpack.c.l.b16 %v421
  %v1725 = vunpack.c.l.b16 %v422
  %v1726 = vunpack.c.l.b16 %v423
  %v1727 = vunpack.c.l.b16 %v424
  %v1728 = vunpack.c.l.b16 %v425
  %v1729 = vunpack.c.l.b16 %v426
  %v1730 = vunpack.c.l.b16 %v427
  %v1731 = vunpack.c.l.b16 %v428
  %v1732 = vunpack.c.l.b16 %v429
  %v1733 = vunpack.c.l.b16 %v430
  %v1734 = vunpack.c.l.b16 %v431
  %v1735 = vunpack.c.l.b16 %v432
  %v1736 = vunpack.c.l.b16 %v433
  %v1737 = vunpack.c.l.b16 %v434
  %v1738 = vunpack.c.l.b16 %v435
  %v1739 = vunpack.c.l.b16 %v436
  %v1740 = vunpack.c.l.b16 %v437
  %v1741 = vunpack.c.l.b16 %v438
  %v1742 = vunpack.c.l.b16 %v439
  %v1743 = vunpack.c.l.b16 %v440
  %v1744 = vunpack.c.l.b16 %v441
  %v1745 = vunpack.c.l.b16 %v442
  %v1746 = vunpack.c.l.b16 %v443
  %v1747 = vunpack.c.l.b16 %v444
  %v1748 = vunpack.c.l.b16 %v445
  %v1749 = vunpack.c.l.b16 %v446
  %v1750 = vpack.c.b16 %v1463, %v1462
  %v1751 = vpack.c.b16 %v1465, %v1464
  %v1752 = vpack.c.b16 %v1467, %v1466
  %v1753 = vpack.c.b16 %v1469, %v1468
  %v1754 = vpack.c.b16 %v1471, %v1470
  %v1755 = vpack.c.b16 %v1473, %v1472
  %v1756 = vpack.c.b16 %v1475, %v1474
  %v1757 = vpack.c.b16 %v1477, %v1476
  %v1758 = vpack.c.b16 %v1479, %v1478
  %v1759 = vpack.c.b16 %v1481, %v1480
  %v1760 = vpack.c.b16 %v1483, %v1482
  %v1761 = vpack.c.b16 %v1485, %v1484
  %v1762 = vpack.c.b16 %v1487, %v1486
  %v1763 = vpack.c.b16 %v1489, %v1488
  %v1764 = vpack.c.b16 %v1491, %v1490
  %v1765 = vpack.c.b16 %v1493, %v1492
  %v1766 = vpack.c.b16 %v1495, %v1494
  %v1767 = vpack.c.b16 %v1497, %v1496
  %v1768 = vpack.c.b16 %v1499, %v1498
  %v1769 = vpack.c.b16 %v1501, %v1500
  %v1770 = vpack.c.b16 %v1503, %v1502
  %v1771 = vpack.c.b16 %v1505, %v1504
  %v1772 = vpack.c.b16 %v1507, %v1506
  %v1773 = vpack.c.b16 %v1509, %v1508
  %v1774 = vpack.c.b16 %v1511, %v1510
  %v1775 = vpack.c.b16 %v1513, %v1512
  %v1776 = vpack.c.b16 %v1515, %v1514
  %v1777 = vpack.c.b16 %v1517, %v1516
  %v1778 = vpack.c.b16 %v1519, %v1518
  %v1779 = vpack.c.b16 %v1521, %v1520
  %v1780 = vpack.c.b16 %v1523, %v1522
  %v1781 = vpack.c.b16 %v1525, %v1524
  %v1782 = vpack.c.b16 %v1527, %v1526
  %v1783 = vpack.c.b16 %v1529, %v1528
  %v1784 = vpack.c.b16 %v1531, %v1530
  %v1785 = vpack.c.b16 %v1533, %v1532
  %v1786 = vpack.c.b16 %v1535, %v1534
  %v1787 = vpack.c.b16 %v1537, %v1536
  %v1788 = vpack.c.b16 %v1539, %v1538
  %v1789 = vpack.c.b16 %v1541, %v1540
  %v1790 = vpack.c.b16 %v1543, %v1542
  %v1791 = vpack.c.b16 %v1545, %v1544
  %v1792 = vpack.c.b16 %v1547, %v1546
  %v1793 = vpack.c.b16 %v1549, %v1548
  %v1794 = vpack.c.b16 %v1551, %v1550
  %v1795 = vpack.c.b16 %v1553, %v1552
  %v1796 = vpack.c.b16 %v1555, %v1554
  %v1797 = vpack.c.b16 %v1557, %v1556
  %v1798 = vpack.c.b16 %v1559, %v1558
  %v1799 = vpack.c.b16 %v1561, %v1560
  %v1800 = vpack.c.b16 %v1563, %v1562
  %v1801 = vpack.c.b16 %v1565, %v1564
  %v1802 = vpack.c.b16 %v1567, %v1566
  %v1803 = vpack.c.b16 %v1569, %v1568
  %v1804 = vpack.c.b16 %v1571, %v1570
  %v1805 = vpack.c.b16 %v1573, %v1572
  %v1806 = vpack.c.b16 %v1575, %v1574
  %v1807 = vpack.c.b16 %v1577, %v1576
  %v1808 = vpack.c.b16 %v1579, %v1578
  %v1809 = vpack.c.b16 %v1581, %v1580
  %v1810 = vpack.c.b16 %v1583, %v1582
  %v1811 = vpack.c.b16 %v1585, %v1584
  %v1812 = vpack.c.b16 %v1587, %v1586
  %v1813 = vpack.c.b16 %v1589, %v1588
  %v1814 = vpack.c.b16 %v1591, %v1590
  %v1815 = vpack.c.b16 %v1593, %v1592
  %v1816 = vpack.c.b16 %v1595, %v1594
  %v1817 = vpack.c.b16 %v1597, %v1596
  %v1818 = vpack.c.b16 %v1599, %v1598
  %v1819 = vpack.c.b16 %v1601, %v1600
  %v1820 = vpack.c.b16 %v1603, %v1602
  %v1821 = vpack.c.b16 %v1605, %v1604
  %v1822 = vpack.c.b16 %v1607, %v1606
  %v1823 = vpack.c.b16 %v1609, %v1608
  %v1824 = vpack.c.b16 %v1611, %v1610
  %v1825 = vpack.c.b16 %v1613, %v1612
  %v1826 = vpack.c.b16 %v1615, %v1614
  %v1827 = vpack.c.b16 %v1617, %v1616
  %v1828 = vpack.c.b16 %v1619, %v1618
  %v1829 = vpack.c.b16 %v1621, %v1620
  %v1830 = vpack.c.b16 %v1623, %v1622
  %v1831 = vpack.c.b16 %v1625, %v1624
  %v1832 = vpack.c.b16 %v1627, %v1626
  %v1833 = vpack.c.b16 %v1629, %v1628
  %v1834 = vpack.c.b16 %v1631, %v1630
  %v1835 = vpack.c.b16 %v1633, %v1632
  %v1836 = vpack.c.b16 %v1635, %v1634
  %v1837 = vpack.c.b16 %v1637, %v1636
  %v1838 = vpack.c.b16 %v1639, %v1638
  %v1839 = vpack.c.b16 %v1641, %v1640
  %v1840 = vpack.c.b16 %v1643, %v1642
  %v1841 = vpack.c.b16 %v1645, %v1644
  %v1842 = vpack.c.b16 %v1647, %v1646
  %v1843 = vpack.c.b16 %v1649, %v1648
  %v1844 = vpack.c.b16 %v1651, %v1650
  %v1845 = vpack.c.b16 %v1653, %v1652
  %v1846 = vpack.c.b16 %v1655, %v1654
  %v1847 = vpack.c.b16 %v1657, %v1656
  %v1848 = vpack.c.b16 %v1659, %v1658
  %v1849 = vpack.c.b16 %v1661, %v1660
  %v1850 = vpack.c.b16 %v1663, %v1662
  %v1851 = vpack.c.b16 %v1665, %v1664
  %v1852 = vpack.c.b16 %v1667, %v1666
  %v1853 = vpack.c.b16 %v1669, %v1668
  %v1854 = vpack.c.b16 %v1671, %v1670
  %v1855 = vpack.c.b16 %v1673, %v1672
  %v1856 = vpack.c.b16 %v1675, %v1674
  %v1857 = vpack.c.b16 %v1677, %v1676
  %v1858 = vpack.c.b16 %v1679, %v1678
  %v1859 = vpack.c.b16 %v1681, %v1680
  %v1860 = vpack.c.b16 %v1683, %v1682
  %v1861 = vpack.c.b16 %v1685, %v1684
  %v1862 = vpack.c.b16 %v1687, %v1686
  %v1863 = vpack.c.b16 %v1689, %v1688
  %v1864 = vpack.c.b16 %v1691, %v1690
  %v1865 = vpack.c.b16 %v1693, %v1692
  %v1866 = vpack.c.b16 %v1695, %v1694
  %v1867 = vpack.c.b16 %v1697, %v1696
  %v1868 = vpack.c.b16 %v1699, %v1698
  %v1869 = vpack.c.b16 %v1701, %v1700
  %v1870 = vpack.c.b16 %v1703, %v1702
  %v1871 = vpack.c.b16 %v1705, %v1704
  %v1872 = vpack.c.b16 %v1707, %v1706
  %v1873 = vpack.c.b16 %v1709, %v1708
  %v1874 = vpack.c.b16 %v1711, %v1710
  %v1875 = vpack.c.b16 %v1713, %v1712
  %v1876 = vpack.c.b16 %v1715, %v1714
  %v1877 = vpack.c.b16 %v1717, %v1716
  %v1878 = vpack.c.b16 %v1719, %v1718
  %v1879 = vpack.c.b16 %v1721, %v1720
  %v1880 = vpack.c.b16 %v1723, %v1722
  %v1881 = vpack.c.b16 %v1725, %v1724
  %v1882 = vpack.c.b16 %v1727, %v1726
  %v1883 = vpack.c.b16 %v1729, %v1728
  %v1884 = vpack.c.b16 %v1731, %v1730
  %v1885 = vpack.c.b16 %v1733, %v1732
  %v1886 = vpack.c.b16 %v1735, %v1734
  %v1887 = vpack.c.b16 %v1737, %v1736
  %v1888 = vpack.c.b16 %v1739, %v1738
  %v1889 = vpack.c.b16 %v1741, %v1740
  %v1890 = vpack.c.b16 %v1743, %v1742
  %v1891 = vpack.c.b16 %v1745, %v1744
  %v1892 = vpack.c.b16 %v1747, %v1746
  %v1893 = vpack.c.b16 %v1749, %v1748
  %2038 = vmatprep.subr.bf16.mxu0 0
  %2039 = vmatpush1.bf16.msra.mxu0 %v1750
  %2040 = vmatprep.subr.bf16.mxu0 0
  %2041 = vmatpush1.bf16.msra.mxu0 %v1751
  %2042 = vmatprep.subr.bf16.mxu0 0
  %2043 = vmatpush1.bf16.msra.mxu0 %v1752
  %2044 = vmatprep.subr.bf16.mxu0 0
  %2045 = vmatpush1.bf16.msra.mxu0 %v1753
  %2046 = vmatprep.subr.bf16.mxu0 0
  %2047 = vmatpush1.bf16.msra.mxu0 %v1754
  %2048 = vmatprep.subr.bf16.mxu0 0
  %2049 = vmatpush1.bf16.msra.mxu0 %v1755
  %2050 = vmatprep.subr.bf16.mxu0 0
  %2051 = vmatpush1.bf16.msra.mxu0 %v1756
  %2052 = vmatprep.subr.bf16.mxu0 0
  %2053 = vmatpush1.bf16.msra.mxu0 %v1757
  %2054 = vmatprep.subr.bf16.mxu0 0
  %2055 = vmatpush1.bf16.msra.mxu0 %v1758
  %2056 = vmatprep.subr.bf16.mxu0 0
  %2057 = vmatpush1.bf16.msra.mxu0 %v1759
  %2058 = vmatprep.subr.bf16.mxu0 0
  %2059 = vmatpush1.bf16.msra.mxu0 %v1760
  %2060 = vmatprep.subr.bf16.mxu0 0
  %2061 = vmatpush1.bf16.msra.mxu0 %v1761
  %2062 = vmatprep.subr.bf16.mxu0 0
  %2063 = vmatpush1.bf16.msra.mxu0 %v1762
  %2064 = vmatprep.subr.bf16.mxu0 0
  %2065 = vmatpush1.bf16.msra.mxu0 %v1763
  %2066 = vmatprep.subr.bf16.mxu0 0
  %2067 = vmatpush1.bf16.msra.mxu0 %v1764
  %2068 = vmatprep.subr.bf16.mxu0 0
  %2069 = vmatpush1.bf16.msra.mxu0 %v1765
  %2070 = vmatprep.mubr.bf16.mxu0 %v887
  %2071 = vmatmul.mubr.bf16.gmra.mrb[0].mxu0 %v886
  %v2072 = vpop.f32.mrb[0].mxu0
  %v2073 = vadd.f32 %v452, %v2072
  %v2074 = vpop.f32.mrb[0].mxu0
  %v2075 = vpop.f32.mrb[0].mxu0
  %v2076 = vadd.f32 %v452, %v2075
  %v2077 = vpop.f32.mrb[0].mxu0
  %2078 = vmatprep.mubr.bf16.mxu0 %v905
  %2079 = vmatmul.mubr.bf16.gmra.mrb[0].mxu0 %v904
  %v2080 = vpop.f32.mrb[0].mxu0
  %v2081 = vadd.f32 %v452, %v2080
  %v2082 = vpop.f32.mrb[0].mxu0
  %v2083 = vpop.f32.mrb[0].mxu0
  %v2084 = vadd.f32 %v452, %v2083
  %v2085 = vpop.f32.mrb[0].mxu0
  %2086 = vmatprep.mubr.bf16.mxu0 %v923
  %2087 = vmatmul.mubr.bf16.gmra.mrb[0].mxu0 %v922
  %v2088 = vpop.f32.mrb[0].mxu0
  %v2089 = vadd.f32 %v452, %v2088
  %v2090 = vpop.f32.mrb[0].mxu0
  %v2091 = vpop.f32.mrb[0].mxu0
  %v2092 = vadd.f32 %v452, %v2091
  %v2093 = vpop.f32.mrb[0].mxu0
  %2094 = vmatprep.mubr.bf16.mxu0 %v941
  %2095 = vmatmul.mubr.bf16.gmra.mrb[0].mxu0 %v940
  %v2096 = vpop.f32.mrb[0].mxu0
  %v2097 = vadd.f32 %v452, %v2096
  %v2098 = vpop.f32.mrb[0].mxu0
  %v2099 = vpop.f32.mrb[0].mxu0
  %v2100 = vadd.f32 %v452, %v2099
  %v2101 = vpop.f32.mrb[0].mxu0
  %2102 = vmatprep.mubr.bf16.mxu0 %v959
  %2103 = vmatmul.mubr.bf16.gmra.mrb[0].mxu0 %v958
  %v2104 = vpop.f32.mrb[0].mxu0
  %v2105 = vadd.f32 %v452, %v2104
  %v2106 = vpop.f32.mrb[0].mxu0
  %v2107 = vpop.f32.mrb[0].mxu0
  %v2108 = vadd.f32 %v452, %v2107
  %v2109 = vpop.f32.mrb[0].mxu0
  %2110 = vmatprep.mubr.bf16.mxu0 %v977
  %2111 = vmatmul.mubr.bf16.gmra.mrb[0].mxu0 %v976
  %v2112 = vpop.f32.mrb[0].mxu0
  %v2113 = vadd.f32 %v452, %v2112
  %v2114 = vpop.f32.mrb[0].mxu0
  %v2115 = vpop.f32.mrb[0].mxu0
  %v2116 = vadd.f32 %v452, %v2115
  %v2117 = vpop.f32.mrb[0].mxu0
  %2118 = vmatprep.mubr.bf16.mxu0 %v995
  %2119 = vmatmul.mubr.bf16.gmra.mrb[0].mxu0 %v994
  %v2120 = vpop.f32.mrb[0].mxu0
  %v2121 = vadd.f32 %v452, %v2120
  %v2122 = vpop.f32.mrb[0].mxu0
  %v2123 = vpop.f32.mrb[0].mxu0
  %v2124 = vadd.f32 %v452, %v2123
  %v2125 = vpop.f32.mrb[0].mxu0
  %2126 = vmatprep.mubr.bf16.mxu0 %v1013
  %2127 = vmatmul.mubr.bf16.gmra.mrb[0].mxu0 %v1012
  %v2128 = vpop.f32.mrb[0].mxu0
  %v2129 = vadd.f32 %v452, %v2128
  %v2130 = vpop.f32.mrb[0].mxu0
  %v2131 = vpop.f32.mrb[0].mxu0
  %v2132 = vadd.f32 %v452, %v2131
  %v2133 = vpop.f32.mrb[0].mxu0
  %2134 = vdwg.mxu0
  %2135 = vmatprep.subr.bf16.mxu0 0
  %2136 = vmatpush1.bf16.msra.mxu0 %v1766
  %2137 = vmatprep.subr.bf16.mxu0 0
  %2138 = vmatpush1.bf16.msra.mxu0 %v1767
  %2139 = vmatprep.subr.bf16.mxu0 0
  %2140 = vmatpush1.bf16.msra.mxu0 %v1768
  %2141 = vmatprep.subr.bf16.mxu0 0
  %2142 = vmatpush1.bf16.msra.mxu0 %v1769
  %2143 = vmatprep.subr.bf16.mxu0 0
  %2144 = vmatpush1.bf16.msra.mxu0 %v1770
  %2145 = vmatprep.subr.bf16.mxu0 0
  %2146 = vmatpush1.bf16.msra.mxu0 %v1771
  %2147 = vmatprep.subr.bf16.mxu0 0
  %2148 = vmatpush1.bf16.msra.mxu0 %v1772
  %2149 = vmatprep.subr.bf16.mxu0 0
  %2150 = vmatpush1.bf16.msra.mxu0 %v1773
  %2151 = vmatprep.subr.bf16.mxu0 0
  %2152 = vmatpush1.bf16.msra.mxu0 %v1774
  %2153 = vmatprep.subr.bf16.mxu0 0
  %2154 = vmatpush1.bf16.msra.mxu0 %v1775
  %2155 = vmatprep.subr.bf16.mxu0 0
  %2156 = vmatpush1.bf16.msra.mxu0 %v1776
  %2157 = vmatprep.subr.bf16.mxu0 0
  %2158 = vmatpush1.bf16.msra.mxu0 %v1777
  %2159 = vmatprep.subr.bf16.mxu0 0
  %2160 = vmatpush1.bf16.msra.mxu0 %v1778
  %2161 = vmatprep.subr.bf16.mxu0 0
  %2162 = vmatpush1.bf16.msra.mxu0 %v1779
  %2163 = vmatprep.subr.bf16.mxu0 0
  %2164 = vmatpush1.bf16.msra.mxu0 %v1780
  %2165 = vmatprep.subr.bf16.mxu0 0
  %2166 = vmatpush1.bf16.msra.mxu0 %v1781
  %2167 = vmatprep.mubr.bf16.mxu0 %v889
  %2168 = vmatmul.mubr.bf16.gmra.mrb[0].mxu0 %v888
  %v2169 = vpop.f32.mrb[0].mxu0
  %v2170 = vadd.f32 %v2073, %v2169
  %v2171 = vpop.f32.mrb[0].mxu0
  %v2172 = vpop.f32.mrb[0].mxu0
  %v2173 = vadd.f32 %v2076, %v2172
  %v2174 = vpop.f32.mrb[0].mxu0
  %2175 = vmatprep.mubr.bf16.mxu0 %v907
  %2176 = vmatmul.mubr.bf16.gmra.mrb[0].mxu0 %v906
  %v2177 = vpop.f32.mrb[0].mxu0
  %v2178 = vadd.f32 %v2081, %v2177
  %v2179 = vpop.f32.mrb[0].mxu0
  %v2180 = vpop.f32.mrb[0].mxu0
  %v2181 = vadd.f32 %v2084, %v2180
  %v2182 = vpop.f32.mrb[0].mxu0
  %2183 = vmatprep.mubr.bf16.mxu0 %v925
  %2184 = vmatmul.mubr.bf16.gmra.mrb[0].mxu0 %v924
  %v2185 = vpop.f32.mrb[0].mxu0
  %v2186 = vadd.f32 %v2089, %v2185
  %v2187 = vpop.f32.mrb[0].mxu0
  %v2188 = vpop.f32.mrb[0].mxu0
  %v2189 = vadd.f32 %v2092, %v2188
  %v2190 = vpop.f32.mrb[0].mxu0
  %2191 = vmatprep.mubr.bf16.mxu0 %v943
  %2192 = vmatmul.mubr.bf16.gmra.mrb[0].mxu0 %v942
  %v2193 = vpop.f32.mrb[0].mxu0
  %v2194 = vadd.f32 %v2097, %v2193
  %v2195 = vpop.f32.mrb[0].mxu0
  %v2196 = vpop.f32.mrb[0].mxu0
  %v2197 = vadd.f32 %v2100, %v2196
  %v2198 = vpop.f32.mrb[0].mxu0
  %2199 = vmatprep.mubr.bf16.mxu0 %v961
  %2200 = vmatmul.mubr.bf16.gmra.mrb[0].mxu0 %v960
  %v2201 = vpop.f32.mrb[0].mxu0
  %v2202 = vadd.f32 %v2105, %v2201
  %v2203 = vpop.f32.mrb[0].mxu0
  %v2204 = vpop.f32.mrb[0].mxu0
  %v2205 = vadd.f32 %v2108, %v2204
  %v2206 = vpop.f32.mrb[0].mxu0
  %2207 = vmatprep.mubr.bf16.mxu0 %v979
  %2208 = vmatmul.mubr.bf16.gmra.mrb[0].mxu0 %v978
  %v2209 = vpop.f32.mrb[0].mxu0
  %v2210 = vadd.f32 %v2113, %v2209
  %v2211 = vpop.f32.mrb[0].mxu0
  %v2212 = vpop.f32.mrb[0].mxu0
  %v2213 = vadd.f32 %v2116, %v2212
  %v2214 = vpop.f32.mrb[0].mxu0
  %2215 = vmatprep.mubr.bf16.mxu0 %v997
  %2216 = vmatmul.mubr.bf16.gmra.mrb[0].mxu0 %v996
  %v2217 = vpop.f32.mrb[0].mxu0
  %v2218 = vadd.f32 %v2121, %v2217
  %v2219 = vpop.f32.mrb[0].mxu0
  %v2220 = vpop.f32.mrb[0].mxu0
  %v2221 = vadd.f32 %v2124, %v2220
  %v2222 = vpop.f32.mrb[0].mxu0
  %2223 = vmatprep.mubr.bf16.mxu0 %v1015
  %2224 = vmatmul.mubr.bf16.gmra.mrb[0].mxu0 %v1014
  %v2225 = vpop.f32.mrb[0].mxu0
  %v2226 = vadd.f32 %v2129, %v2225
  %v2227 = vpop.f32.mrb[0].mxu0
  %v2228 = vpop.f32.mrb[0].mxu0
  %v2229 = vadd.f32 %v2132, %v2228
  %v2230 = vpop.f32.mrb[0].mxu0
  %2231 = vdwg.mxu0
  %2232 = vmatprep.subr.bf16.mxu0 0
  %2233 = vmatpush1.bf16.msra.mxu0 %v1782
  %2234 = vmatprep.subr.bf16.mxu0 0
  %2235 = vmatpush1.bf16.msra.mxu0 %v1783
  %2236 = vmatprep.subr.bf16.mxu0 0
  %2237 = vmatpush1.bf16.msra.mxu0 %v1784
  %2238 = vmatprep.subr.bf16.mxu0 0
  %2239 = vmatpush1.bf16.msra.mxu0 %v1785
  %2240 = vmatprep.subr.bf16.mxu0 0
  %2241 = vmatpush1.bf16.msra.mxu0 %v1786
  %2242 = vmatprep.subr.bf16.mxu0 0
  %2243 = vmatpush1.bf16.msra.mxu0 %v1787
  %2244 = vmatprep.subr.bf16.mxu0 0
  %2245 = vmatpush1.bf16.msra.mxu0 %v1788
  %2246 = vmatprep.subr.bf16.mxu0 0
  %2247 = vmatpush1.bf16.msra.mxu0 %v1789
  %2248 = vmatprep.subr.bf16.mxu0 0
  %2249 = vmatpush1.bf16.msra.mxu0 %v1790
  %2250 = vmatprep.subr.bf16.mxu0 0
  %2251 = vmatpush1.bf16.msra.mxu0 %v1791
  %2252 = vmatprep.subr.bf16.mxu0 0
  %2253 = vmatpush1.bf16.msra.mxu0 %v1792
  %2254 = vmatprep.subr.bf16.mxu0 0
  %2255 = vmatpush1.bf16.msra.mxu0 %v1793
  %2256 = vmatprep.subr.bf16.mxu0 0
  %2257 = vmatpush1.bf16.msra.mxu0 %v1794
  %2258 = vmatprep.subr.bf16.mxu0 0
  %2259 = vmatpush1.bf16.msra.mxu0 %v1795
  %2260 = vmatprep.subr.bf16.mxu0 0
  %2261 = vmatpush1.bf16.msra.mxu0 %v1796
  %2262 = vmatprep.subr.bf16.mxu0 0
  %2263 = vmatpush1.bf16.msra.mxu0 %v1797
  %2264 = vmatprep.mubr.bf16.mxu0 %v891
  %2265 = vmatmul.mubr.bf16.gmra.mrb[0].mxu0 %v890
  %v2266 = vpop.f32.mrb[0].mxu0
  %v2267 = vadd.f32 %v2170, %v2266
  %v2268 = vpop.f32.mrb[0].mxu0
  %v2269 = vpop.f32.mrb[0].mxu0
  %v2270 = vadd.f32 %v2173, %v2269
  %v2271 = vpop.f32.mrb[0].mxu0
  %2272 = vmatprep.mubr.bf16.mxu0 %v909
  %2273 = vmatmul.mubr.bf16.gmra.mrb[0].mxu0 %v908
  %v2274 = vpop.f32.mrb[0].mxu0
  %v2275 = vadd.f32 %v2178, %v2274
  %v2276 = vpop.f32.mrb[0].mxu0
  %v2277 = vpop.f32.mrb[0].mxu0
  %v2278 = vadd.f32 %v2181, %v2277
  %v2279 = vpop.f32.mrb[0].mxu0
  %2280 = vmatprep.mubr.bf16.mxu0 %v927
  %2281 = vmatmul.mubr.bf16.gmra.mrb[0].mxu0 %v926
  %v2282 = vpop.f32.mrb[0].mxu0
  %v2283 = vadd.f32 %v2186, %v2282
  %v2284 = vpop.f32.mrb[0].mxu0
  %v2285 = vpop.f32.mrb[0].mxu0
  %v2286 = vadd.f32 %v2189, %v2285
  %v2287 = vpop.f32.mrb[0].mxu0
  %2288 = vmatprep.mubr.bf16.mxu0 %v945
  %2289 = vmatmul.mubr.bf16.gmra.mrb[0].mxu0 %v944
  %v2290 = vpop.f32.mrb[0].mxu0
  %v2291 = vadd.f32 %v2194, %v2290
  %v2292 = vpop.f32.mrb[0].mxu0
  %v2293 = vpop.f32.mrb[0].mxu0
  %v2294 = vadd.f32 %v2197, %v2293
  %v2295 = vpop.f32.mrb[0].mxu0
  %2296 = vmatprep.mubr.bf16.mxu0 %v963
  %2297 = vmatmul.mubr.bf16.gmra.mrb[0].mxu0 %v962
  %v2298 = vpop.f32.mrb[0].mxu0
  %v2299 = vadd.f32 %v2202, %v2298
  %v2300 = vpop.f32.mrb[0].mxu0
  %v2301 = vpop.f32.mrb[0].mxu0
  %v2302 = vadd.f32 %v2205, %v2301
  %v2303 = vpop.f32.mrb[0].mxu0
  %2304 = vmatprep.mubr.bf16.mxu0 %v981
  %2305 = vmatmul.mubr.bf16.gmra.mrb[0].mxu0 %v980
  %v2306 = vpop.f32.mrb[0].mxu0
  %v2307 = vadd.f32 %v2210, %v2306
  %v2308 = vpop.f32.mrb[0].mxu0
  %v2309 = vpop.f32.mrb[0].mxu0
  %v2310 = vadd.f32 %v2213, %v2309
  %v2311 = vpop.f32.mrb[0].mxu0
  %2312 = vmatprep.mubr.bf16.mxu0 %v999
  %2313 = vmatmul.mubr.bf16.gmra.mrb[0].mxu0 %v998
  %v2314 = vpop.f32.mrb[0].mxu0
  %v2315 = vadd.f32 %v2218, %v2314
  %v2316 = vpop.f32.mrb[0].mxu0
  %v2317 = vpop.f32.mrb[0].mxu0
  %v2318 = vadd.f32 %v2221, %v2317
  %v2319 = vpop.f32.mrb[0].mxu0
  %2320 = vmatprep.mubr.bf16.mxu0 %v1017
  %2321 = vmatmul.mubr.bf16.gmra.mrb[0].mxu0 %v1016
  %v2322 = vpop.f32.mrb[0].mxu0
  %v2323 = vadd.f32 %v2226, %v2322
  %v2324 = vpop.f32.mrb[0].mxu0
  %v2325 = vpop.f32.mrb[0].mxu0
  %v2326 = vadd.f32 %v2229, %v2325
  %v2327 = vpop.f32.mrb[0].mxu0
  %2328 = vdwg.mxu0
  %2329 = vmatprep.subr.bf16.mxu0 0
  %2330 = vmatpush1.bf16.msra.mxu0 %v1798
  %2331 = vmatprep.subr.bf16.mxu0 0
  %2332 = vmatpush1.bf16.msra.mxu0 %v1799
  %2333 = vmatprep.subr.bf16.mxu0 0
  %2334 = vmatpush1.bf16.msra.mxu0 %v1800
  %2335 = vmatprep.subr.bf16.mxu0 0
  %2336 = vmatpush1.bf16.msra.mxu0 %v1801
  %2337 = vmatprep.subr.bf16.mxu0 0
  %2338 = vmatpush1.bf16.msra.mxu0 %v1802
  %2339 = vmatprep.subr.bf16.mxu0 0
  %2340 = vmatpush1.bf16.msra.mxu0 %v1803
  %2341 = vmatprep.subr.bf16.mxu0 0
  %2342 = vmatpush1.bf16.msra.mxu0 %v1804
  %2343 = vmatprep.subr.bf16.mxu0 0
  %2344 = vmatpush1.bf16.msra.mxu0 %v1805
  %2345 = vmatprep.subr.bf16.mxu0 0
  %2346 = vmatpush1.bf16.msra.mxu0 %v1806
  %2347 = vmatprep.subr.bf16.mxu0 0
  %2348 = vmatpush1.bf16.msra.mxu0 %v1807
  %2349 = vmatprep.subr.bf16.mxu0 0
  %2350 = vmatpush1.bf16.msra.mxu0 %v1808
  %2351 = vmatprep.subr.bf16.mxu0 0
  %2352 = vmatpush1.bf16.msra.mxu0 %v1809
  %2353 = vmatprep.subr.bf16.mxu0 0
  %2354 = vmatpush1.bf16.msra.mxu0 %v1810
  %2355 = vmatprep.subr.bf16.mxu0 0
  %2356 = vmatpush1.bf16.msra.mxu0 %v1811
  %2357 = vmatprep.subr.bf16.mxu0 0
  %2358 = vmatpush1.bf16.msra.mxu0 %v1812
  %2359 = vmatprep.subr.bf16.mxu0 0
  %2360 = vmatpush1.bf16.msra.mxu0 %v1813
  %2361 = vmatprep.mubr.bf16.mxu0 %v893
  %2362 = vmatmul.mubr.bf16.gmra.mrb[0].mxu0 %v892
  %v2363 = vpop.f32.mrb[0].mxu0
  %v2364 = vadd.f32 %v2267, %v2363
  %v2365 = vpop.f32.mrb[0].mxu0
  %v2366 = vpop.f32.mrb[0].mxu0
  %v2367 = vadd.f32 %v2270, %v2366
  %v2368 = vpop.f32.mrb[0].mxu0
  %2369 = vmatprep.mubr.bf16.mxu0 %v911
  %2370 = vmatmul.mubr.bf16.gmra.mrb[0].mxu0 %v910
  %v2371 = vpop.f32.mrb[0].mxu0
  %v2372 = vadd.f32 %v2275, %v2371
  %v2373 = vpop.f32.mrb[0].mxu0
  %v2374 = vpop.f32.mrb[0].mxu0
  %v2375 = vadd.f32 %v2278, %v2374
  %v2376 = vpop.f32.mrb[0].mxu0
  %2377 = vmatprep.mubr.bf16.mxu0 %v929
  %2378 = vmatmul.mubr.bf16.gmra.mrb[0].mxu0 %v928
  %v2379 = vpop.f32.mrb[0].mxu0
  %v2380 = vadd.f32 %v2283, %v2379
  %v2381 = vpop.f32.mrb[0].mxu0
  %v2382 = vpop.f32.mrb[0].mxu0
  %v2383 = vadd.f32 %v2286, %v2382
  %v2384 = vpop.f32.mrb[0].mxu0
  %2385 = vmatprep.mubr.bf16.mxu0 %v947
  %2386 = vmatmul.mubr.bf16.gmra.mrb[0].mxu0 %v946
  %v2387 = vpop.f32.mrb[0].mxu0
  %v2388 = vadd.f32 %v2291, %v2387
  %v2389 = vpop.f32.mrb[0].mxu0
  %v2390 = vpop.f32.mrb[0].mxu0
  %v2391 = vadd.f32 %v2294, %v2390
  %v2392 = vpop.f32.mrb[0].mxu0
  %2393 = vmatprep.mubr.bf16.mxu0 %v965
  %2394 = vmatmul.mubr.bf16.gmra.mrb[0].mxu0 %v964
  %v2395 = vpop.f32.mrb[0].mxu0
  %v2396 = vadd.f32 %v2299, %v2395
  %v2397 = vpop.f32.mrb[0].mxu0
  %v2398 = vpop.f32.mrb[0].mxu0
  %v2399 = vadd.f32 %v2302, %v2398
  %v2400 = vpop.f32.mrb[0].mxu0
  %2401 = vmatprep.mubr.bf16.mxu0 %v983
  %2402 = vmatmul.mubr.bf16.gmra.mrb[0].mxu0 %v982
  %v2403 = vpop.f32.mrb[0].mxu0
  %v2404 = vadd.f32 %v2307, %v2403
  %v2405 = vpop.f32.mrb[0].mxu0
  %v2406 = vpop.f32.mrb[0].mxu0
  %v2407 = vadd.f32 %v2310, %v2406
  %v2408 = vpop.f32.mrb[0].mxu0
  %2409 = vmatprep.mubr.bf16.mxu0 %v1001
  %2410 = vmatmul.mubr.bf16.gmra.mrb[0].mxu0 %v1000
  %v2411 = vpop.f32.mrb[0].mxu0
  %v2412 = vadd.f32 %v2315, %v2411
  %v2413 = vpop.f32.mrb[0].mxu0
  %v2414 = vpop.f32.mrb[0].mxu0
  %v2415 = vadd.f32 %v2318, %v2414
  %v2416 = vpop.f32.mrb[0].mxu0
  %2417 = vmatprep.mubr.bf16.mxu0 %v1019
  %2418 = vmatmul.mubr.bf16.gmra.mrb[0].mxu0 %v1018
  %v2419 = vpop.f32.mrb[0].mxu0
  %v2420 = vadd.f32 %v2323, %v2419
  %v2421 = vpop.f32.mrb[0].mxu0
  %v2422 = vpop.f32.mrb[0].mxu0
  %v2423 = vadd.f32 %v2326, %v2422
  %v2424 = vpop.f32.mrb[0].mxu0
  %2425 = vdwg.mxu0
  %2426 = vmatprep.subr.bf16.mxu0 0
  %2427 = vmatpush1.bf16.msra.mxu0 %v1814
  %2428 = vmatprep.subr.bf16.mxu0 0
  %2429 = vmatpush1.bf16.msra.mxu0 %v1815
  %2430 = vmatprep.subr.bf16.mxu0 0
  %2431 = vmatpush1.bf16.msra.mxu0 %v1816
  %2432 = vmatprep.subr.bf16.mxu0 0
  %2433 = vmatpush1.bf16.msra.mxu0 %v1817
  %2434 = vmatprep.subr.bf16.mxu0 0
  %2435 = vmatpush1.bf16.msra.mxu0 %v1818
  %2436 = vmatprep.subr.bf16.mxu0 0
  %2437 = vmatpush1.bf16.msra.mxu0 %v1819
  %2438 = vmatprep.subr.bf16.mxu0 0
  %2439 = vmatpush1.bf16.msra.mxu0 %v1820
  %2440 = vmatprep.subr.bf16.mxu0 0
  %2441 = vmatpush1.bf16.msra.mxu0 %v1821
  %2442 = vmatprep.subr.bf16.mxu0 0
  %2443 = vmatpush1.bf16.msra.mxu0 %v1822
  %2444 = vmatprep.subr.bf16.mxu0 0
  %2445 = vmatpush1.bf16.msra.mxu0 %v1823
  %2446 = vmatprep.subr.bf16.mxu0 0
  %2447 = vmatpush1.bf16.msra.mxu0 %v1824
  %2448 = vmatprep.subr.bf16.mxu0 0
  %2449 = vmatpush1.bf16.msra.mxu0 %v1825
  %2450 = vmatprep.subr.bf16.mxu0 0
  %2451 = vmatpush1.bf16.msra.mxu0 %v1826
  %2452 = vmatprep.subr.bf16.mxu0 0
  %2453 = vmatpush1.bf16.msra.mxu0 %v1827
  %2454 = vmatprep.subr.bf16.mxu0 0
  %2455 = vmatpush1.bf16.msra.mxu0 %v1828
  %2456 = vmatprep.subr.bf16.mxu0 0
  %2457 = vmatpush1.bf16.msra.mxu0 %v1829
  %2458 = vmatprep.mubr.bf16.mxu0 %v895
  %2459 = vmatmul.mubr.bf16.gmra.mrb[0].mxu0 %v894
  %v2460 = vpop.f32.mrb[0].mxu0
  %v2461 = vadd.f32 %v2364, %v2460
  %v2462 = vpop.f32.mrb[0].mxu0
  %v2463 = vpop.f32.mrb[0].mxu0
  %v2464 = vadd.f32 %v2367, %v2463
  %v2465 = vpop.f32.mrb[0].mxu0
  %2466 = vmatprep.mubr.bf16.mxu0 %v913
  %2467 = vmatmul.mubr.bf16.gmra.mrb[0].mxu0 %v912
  %v2468 = vpop.f32.mrb[0].mxu0
  %v2469 = vadd.f32 %v2372, %v2468
  %v2470 = vpop.f32.mrb[0].mxu0
  %v2471 = vpop.f32.mrb[0].mxu0
  %v2472 = vadd.f32 %v2375, %v2471
  %v2473 = vpop.f32.mrb[0].mxu0
  %2474 = vmatprep.mubr.bf16.mxu0 %v931
  %2475 = vmatmul.mubr.bf16.gmra.mrb[0].mxu0 %v930
  %v2476 = vpop.f32.mrb[0].mxu0
  %v2477 = vadd.f32 %v2380, %v2476
  %v2478 = vpop.f32.mrb[0].mxu0
  %v2479 = vpop.f32.mrb[0].mxu0
  %v2480 = vadd.f32 %v2383, %v2479
  %v2481 = vpop.f32.mrb[0].mxu0
  %2482 = vmatprep.mubr.bf16.mxu0 %v949
  %2483 = vmatmul.mubr.bf16.gmra.mrb[0].mxu0 %v948
  %v2484 = vpop.f32.mrb[0].mxu0
  %v2485 = vadd.f32 %v2388, %v2484
  %v2486 = vpop.f32.mrb[0].mxu0
  %v2487 = vpop.f32.mrb[0].mxu0
  %v2488 = vadd.f32 %v2391, %v2487
  %v2489 = vpop.f32.mrb[0].mxu0
  %2490 = vmatprep.mubr.bf16.mxu0 %v967
  %2491 = vmatmul.mubr.bf16.gmra.mrb[0].mxu0 %v966
  %v2492 = vpop.f32.mrb[0].mxu0
  %v2493 = vadd.f32 %v2396, %v2492
  %v2494 = vpop.f32.mrb[0].mxu0
  %v2495 = vpop.f32.mrb[0].mxu0
  %v2496 = vadd.f32 %v2399, %v2495
  %v2497 = vpop.f32.mrb[0].mxu0
  %2498 = vmatprep.mubr.bf16.mxu0 %v985
  %2499 = vmatmul.mubr.bf16.gmra.mrb[0].mxu0 %v984
  %v2500 = vpop.f32.mrb[0].mxu0
  %v2501 = vadd.f32 %v2404, %v2500
  %v2502 = vpop.f32.mrb[0].mxu0
  %v2503 = vpop.f32.mrb[0].mxu0
  %v2504 = vadd.f32 %v2407, %v2503
  %v2505 = vpop.f32.mrb[0].mxu0
  %2506 = vmatprep.mubr.bf16.mxu0 %v1003
  %2507 = vmatmul.mubr.bf16.gmra.mrb[0].mxu0 %v1002
  %v2508 = vpop.f32.mrb[0].mxu0
  %v2509 = vadd.f32 %v2412, %v2508
  %v2510 = vpop.f32.mrb[0].mxu0
  %v2511 = vpop.f32.mrb[0].mxu0
  %v2512 = vadd.f32 %v2415, %v2511
  %v2513 = vpop.f32.mrb[0].mxu0
  %2514 = vmatprep.mubr.bf16.mxu0 %v1021
  %2515 = vmatmul.mubr.bf16.gmra.mrb[0].mxu0 %v1020
  %v2516 = vpop.f32.mrb[0].mxu0
  %v2517 = vadd.f32 %v2420, %v2516
  %v2518 = vpop.f32.mrb[0].mxu0
  %v2519 = vpop.f32.mrb[0].mxu0
  %v2520 = vadd.f32 %v2423, %v2519
  %v2521 = vpop.f32.mrb[0].mxu0
  %2522 = vdwg.mxu0
  %2523 = vmatprep.subr.bf16.mxu0 0
  %2524 = vmatpush1.bf16.msra.mxu0 %v1830
  %2525 = vmatprep.subr.bf16.mxu0 0
  %2526 = vmatpush1.bf16.msra.mxu0 %v1831
  %2527 = vmatprep.subr.bf16.mxu0 0
  %2528 = vmatpush1.bf16.msra.mxu0 %v1832
  %2529 = vmatprep.subr.bf16.mxu0 0
  %2530 = vmatpush1.bf16.msra.mxu0 %v1833
  %2531 = vmatprep.subr.bf16.mxu0 0
  %2532 = vmatpush1.bf16.msra.mxu0 %v1834
  %2533 = vmatprep.subr.bf16.mxu0 0
  %2534 = vmatpush1.bf16.msra.mxu0 %v1835
  %2535 = vmatprep.subr.bf16.mxu0 0
  %2536 = vmatpush1.bf16.msra.mxu0 %v1836
  %2537 = vmatprep.subr.bf16.mxu0 0
  %2538 = vmatpush1.bf16.msra.mxu0 %v1837
  %2539 = vmatprep.subr.bf16.mxu0 0
  %2540 = vmatpush1.bf16.msra.mxu0 %v1838
  %2541 = vmatprep.subr.bf16.mxu0 0
  %2542 = vmatpush1.bf16.msra.mxu0 %v1839
  %2543 = vmatprep.subr.bf16.mxu0 0
  %2544 = vmatpush1.bf16.msra.mxu0 %v1840
  %2545 = vmatprep.subr.bf16.mxu0 0
  %2546 = vmatpush1.bf16.msra.mxu0 %v1841
  %2547 = vmatprep.subr.bf16.mxu0 0
  %2548 = vmatpush1.bf16.msra.mxu0 %v1842
  %2549 = vmatprep.subr.bf16.mxu0 0
  %2550 = vmatpush1.bf16.msra.mxu0 %v1843
  %2551 = vmatprep.subr.bf16.mxu0 0
  %2552 = vmatpush1.bf16.msra.mxu0 %v1844
  %2553 = vmatprep.subr.bf16.mxu0 0
  %2554 = vmatpush1.bf16.msra.mxu0 %v1845
  %2555 = vmatprep.mubr.bf16.mxu0 %v897
  %2556 = vmatmul.mubr.bf16.gmra.mrb[0].mxu0 %v896
  %v2557 = vpop.f32.mrb[0].mxu0
  %v2558 = vadd.f32 %v2461, %v2557
  %v2559 = vpop.f32.mrb[0].mxu0
  %v2560 = vpop.f32.mrb[0].mxu0
  %v2561 = vadd.f32 %v2464, %v2560
  %v2562 = vpop.f32.mrb[0].mxu0
  %2563 = vmatprep.mubr.bf16.mxu0 %v915
  %2564 = vmatmul.mubr.bf16.gmra.mrb[0].mxu0 %v914
  %v2565 = vpop.f32.mrb[0].mxu0
  %v2566 = vadd.f32 %v2469, %v2565
  %v2567 = vpop.f32.mrb[0].mxu0
  %v2568 = vpop.f32.mrb[0].mxu0
  %v2569 = vadd.f32 %v2472, %v2568
  %v2570 = vpop.f32.mrb[0].mxu0
  %2571 = vmatprep.mubr.bf16.mxu0 %v933
  %2572 = vmatmul.mubr.bf16.gmra.mrb[0].mxu0 %v932
  %v2573 = vpop.f32.mrb[0].mxu0
  %v2574 = vadd.f32 %v2477, %v2573
  %v2575 = vpop.f32.mrb[0].mxu0
  %v2576 = vpop.f32.mrb[0].mxu0
  %v2577 = vadd.f32 %v2480, %v2576
  %v2578 = vpop.f32.mrb[0].mxu0
  %2579 = vmatprep.mubr.bf16.mxu0 %v951
  %2580 = vmatmul.mubr.bf16.gmra.mrb[0].mxu0 %v950
  %v2581 = vpop.f32.mrb[0].mxu0
  %v2582 = vadd.f32 %v2485, %v2581
  %v2583 = vpop.f32.mrb[0].mxu0
  %v2584 = vpop.f32.mrb[0].mxu0
  %v2585 = vadd.f32 %v2488, %v2584
  %v2586 = vpop.f32.mrb[0].mxu0
  %2587 = vmatprep.mubr.bf16.mxu0 %v969
  %2588 = vmatmul.mubr.bf16.gmra.mrb[0].mxu0 %v968
  %v2589 = vpop.f32.mrb[0].mxu0
  %v2590 = vadd.f32 %v2493, %v2589
  %v2591 = vpop.f32.mrb[0].mxu0
  %v2592 = vpop.f32.mrb[0].mxu0
  %v2593 = vadd.f32 %v2496, %v2592
  %v2594 = vpop.f32.mrb[0].mxu0
  %2595 = vmatprep.mubr.bf16.mxu0 %v987
  %2596 = vmatmul.mubr.bf16.gmra.mrb[0].mxu0 %v986
  %v2597 = vpop.f32.mrb[0].mxu0
  %v2598 = vadd.f32 %v2501, %v2597
  %v2599 = vpop.f32.mrb[0].mxu0
  %v2600 = vpop.f32.mrb[0].mxu0
  %v2601 = vadd.f32 %v2504, %v2600
  %v2602 = vpop.f32.mrb[0].mxu0
  %2603 = vmatprep.mubr.bf16.mxu0 %v1005
  %2604 = vmatmul.mubr.bf16.gmra.mrb[0].mxu0 %v1004
  %v2605 = vpop.f32.mrb[0].mxu0
  %v2606 = vadd.f32 %v2509, %v2605
  %v2607 = vpop.f32.mrb[0].mxu0
  %v2608 = vpop.f32.mrb[0].mxu0
  %v2609 = vadd.f32 %v2512, %v2608
  %v2610 = vpop.f32.mrb[0].mxu0
  %2611 = vmatprep.mubr.bf16.mxu0 %v1023
  %2612 = vmatmul.mubr.bf16.gmra.mrb[0].mxu0 %v1022
  %v2613 = vpop.f32.mrb[0].mxu0
  %v2614 = vadd.f32 %v2517, %v2613
  %v2615 = vpop.f32.mrb[0].mxu0
  %v2616 = vpop.f32.mrb[0].mxu0
  %v2617 = vadd.f32 %v2520, %v2616
  %v2618 = vpop.f32.mrb[0].mxu0
  %2619 = vdwg.mxu0
  %2620 = vmatprep.subr.bf16.mxu0 0
  %2621 = vmatpush1.bf16.msra.mxu0 %v1846
  %2622 = vmatprep.subr.bf16.mxu0 0
  %2623 = vmatpush1.bf16.msra.mxu0 %v1847
  %2624 = vmatprep.subr.bf16.mxu0 0
  %2625 = vmatpush1.bf16.msra.mxu0 %v1848
  %2626 = vmatprep.subr.bf16.mxu0 0
  %2627 = vmatpush1.bf16.msra.mxu0 %v1849
  %2628 = vmatprep.subr.bf16.mxu0 0
  %2629 = vmatpush1.bf16.msra.mxu0 %v1850
  %2630 = vmatprep.subr.bf16.mxu0 0
  %2631 = vmatpush1.bf16.msra.mxu0 %v1851
  %2632 = vmatprep.subr.bf16.mxu0 0
  %2633 = vmatpush1.bf16.msra.mxu0 %v1852
  %2634 = vmatprep.subr.bf16.mxu0 0
  %2635 = vmatpush1.bf16.msra.mxu0 %v1853
  %2636 = vmatprep.subr.bf16.mxu0 0
  %2637 = vmatpush1.bf16.msra.mxu0 %v1854
  %2638 = vmatprep.subr.bf16.mxu0 0
  %2639 = vmatpush1.bf16.msra.mxu0 %v1855
  %2640 = vmatprep.subr.bf16.mxu0 0
  %2641 = vmatpush1.bf16.msra.mxu0 %v1856
  %2642 = vmatprep.subr.bf16.mxu0 0
  %2643 = vmatpush1.bf16.msra.mxu0 %v1857
  %2644 = vmatprep.subr.bf16.mxu0 0
  %2645 = vmatpush1.bf16.msra.mxu0 %v1858
  %2646 = vmatprep.subr.bf16.mxu0 0
  %2647 = vmatpush1.bf16.msra.mxu0 %v1859
  %2648 = vmatprep.subr.bf16.mxu0 0
  %2649 = vmatpush1.bf16.msra.mxu0 %v1860
  %2650 = vmatprep.subr.bf16.mxu0 0
  %2651 = vmatpush1.bf16.msra.mxu0 %v1861
  %2652 = vmatprep.mubr.bf16.mxu0 %v899
  %2653 = vmatmul.mubr.bf16.gmra.mrb[0].mxu0 %v898
  %v2654 = vpop.f32.mrb[0].mxu0
  %v2655 = vadd.f32 %v2558, %v2654
  %v2656 = vpop.f32.mrb[0].mxu0
  %v2657 = vpop.f32.mrb[0].mxu0
  %v2658 = vadd.f32 %v2561, %v2657
  %v2659 = vpop.f32.mrb[0].mxu0
  %2660 = vmatprep.mubr.bf16.mxu0 %v917
  %2661 = vmatmul.mubr.bf16.gmra.mrb[0].mxu0 %v916
  %v2662 = vpop.f32.mrb[0].mxu0
  %v2663 = vadd.f32 %v2566, %v2662
  %v2664 = vpop.f32.mrb[0].mxu0
  %v2665 = vpop.f32.mrb[0].mxu0
  %v2666 = vadd.f32 %v2569, %v2665
  %v2667 = vpop.f32.mrb[0].mxu0
  %2668 = vmatprep.mubr.bf16.mxu0 %v935
  %2669 = vmatmul.mubr.bf16.gmra.mrb[0].mxu0 %v934
  %v2670 = vpop.f32.mrb[0].mxu0
  %v2671 = vadd.f32 %v2574, %v2670
  %v2672 = vpop.f32.mrb[0].mxu0
  %v2673 = vpop.f32.mrb[0].mxu0
  %v2674 = vadd.f32 %v2577, %v2673
  %v2675 = vpop.f32.mrb[0].mxu0
  %2676 = vmatprep.mubr.bf16.mxu0 %v953
  %2677 = vmatmul.mubr.bf16.gmra.mrb[0].mxu0 %v952
  %v2678 = vpop.f32.mrb[0].mxu0
  %v2679 = vadd.f32 %v2582, %v2678
  %v2680 = vpop.f32.mrb[0].mxu0
  %v2681 = vpop.f32.mrb[0].mxu0
  %v2682 = vadd.f32 %v2585, %v2681
  %v2683 = vpop.f32.mrb[0].mxu0
  %2684 = vmatprep.mubr.bf16.mxu0 %v971
  %2685 = vmatmul.mubr.bf16.gmra.mrb[0].mxu0 %v970
  %v2686 = vpop.f32.mrb[0].mxu0
  %v2687 = vadd.f32 %v2590, %v2686
  %v2688 = vpop.f32.mrb[0].mxu0
  %v2689 = vpop.f32.mrb[0].mxu0
  %v2690 = vadd.f32 %v2593, %v2689
  %v2691 = vpop.f32.mrb[0].mxu0
  %2692 = vmatprep.mubr.bf16.mxu0 %v989
  %2693 = vmatmul.mubr.bf16.gmra.mrb[0].mxu0 %v988
  %v2694 = vpop.f32.mrb[0].mxu0
  %v2695 = vadd.f32 %v2598, %v2694
  %v2696 = vpop.f32.mrb[0].mxu0
  %v2697 = vpop.f32.mrb[0].mxu0
  %v2698 = vadd.f32 %v2601, %v2697
  %v2699 = vpop.f32.mrb[0].mxu0
  %2700 = vmatprep.mubr.bf16.mxu0 %v1007
  %2701 = vmatmul.mubr.bf16.gmra.mrb[0].mxu0 %v1006
  %v2702 = vpop.f32.mrb[0].mxu0
  %v2703 = vadd.f32 %v2606, %v2702
  %v2704 = vpop.f32.mrb[0].mxu0
  %v2705 = vpop.f32.mrb[0].mxu0
  %v2706 = vadd.f32 %v2609, %v2705
  %v2707 = vpop.f32.mrb[0].mxu0
  %2708 = vmatprep.mubr.bf16.mxu0 %v1025
  %2709 = vmatmul.mubr.bf16.gmra.mrb[0].mxu0 %v1024
  %v2710 = vpop.f32.mrb[0].mxu0
  %v2711 = vadd.f32 %v2614, %v2710
  %v2712 = vpop.f32.mrb[0].mxu0
  %v2713 = vpop.f32.mrb[0].mxu0
  %v2714 = vadd.f32 %v2617, %v2713
  %v2715 = vpop.f32.mrb[0].mxu0
  %2716 = vdwg.mxu0
  %2717 = vmatprep.subr.bf16.mxu0 0
  %2718 = vmatpush1.bf16.msra.mxu0 %v1862
  %2719 = vmatprep.subr.bf16.mxu0 0
  %2720 = vmatpush1.bf16.msra.mxu0 %v1863
  %2721 = vmatprep.subr.bf16.mxu0 0
  %2722 = vmatpush1.bf16.msra.mxu0 %v1864
  %2723 = vmatprep.subr.bf16.mxu0 0
  %2724 = vmatpush1.bf16.msra.mxu0 %v1865
  %2725 = vmatprep.subr.bf16.mxu0 0
  %2726 = vmatpush1.bf16.msra.mxu0 %v1866
  %2727 = vmatprep.subr.bf16.mxu0 0
  %2728 = vmatpush1.bf16.msra.mxu0 %v1867
  %2729 = vmatprep.subr.bf16.mxu0 0
  %2730 = vmatpush1.bf16.msra.mxu0 %v1868
  %2731 = vmatprep.subr.bf16.mxu0 0
  %2732 = vmatpush1.bf16.msra.mxu0 %v1869
  %2733 = vmatprep.subr.bf16.mxu0 0
  %2734 = vmatpush1.bf16.msra.mxu0 %v1870
  %2735 = vmatprep.subr.bf16.mxu0 0
  %2736 = vmatpush1.bf16.msra.mxu0 %v1871
  %2737 = vmatprep.subr.bf16.mxu0 0
  %2738 = vmatpush1.bf16.msra.mxu0 %v1872
  %2739 = vmatprep.subr.bf16.mxu0 0
  %2740 = vmatpush1.bf16.msra.mxu0 %v1873
  %2741 = vmatprep.subr.bf16.mxu0 0
  %2742 = vmatpush1.bf16.msra.mxu0 %v1874
  %2743 = vmatprep.subr.bf16.mxu0 0
  %2744 = vmatpush1.bf16.msra.mxu0 %v1875
  %2745 = vmatprep.subr.bf16.mxu0 0
  %2746 = vmatpush1.bf16.msra.mxu0 %v1876
  %2747 = vmatprep.subr.bf16.mxu0 0
  %2748 = vmatpush1.bf16.msra.mxu0 %v1877
  %2749 = vmatprep.mubr.bf16.mxu0 %v901
  %2750 = vmatmul.mubr.bf16.gmra.mrb[0].mxu0 %v900
  %v2751 = vpop.f32.mrb[0].mxu0
  %v2752 = vadd.f32 %v2655, %v2751
  %v2753 = vpop.f32.mrb[0].mxu0
  %v2754 = vpop.f32.mrb[0].mxu0
  %v2755 = vadd.f32 %v2658, %v2754
  %v2756 = vpop.f32.mrb[0].mxu0
  %2757 = vmatprep.mubr.bf16.mxu0 %v919
  %2758 = vmatmul.mubr.bf16.gmra.mrb[0].mxu0 %v918
  %v2759 = vpop.f32.mrb[0].mxu0
  %v2760 = vadd.f32 %v2663, %v2759
  %v2761 = vpop.f32.mrb[0].mxu0
  %v2762 = vpop.f32.mrb[0].mxu0
  %v2763 = vadd.f32 %v2666, %v2762
  %v2764 = vpop.f32.mrb[0].mxu0
  %2765 = vmatprep.mubr.bf16.mxu0 %v937
  %2766 = vmatmul.mubr.bf16.gmra.mrb[0].mxu0 %v936
  %v2767 = vpop.f32.mrb[0].mxu0
  %v2768 = vadd.f32 %v2671, %v2767
  %v2769 = vpop.f32.mrb[0].mxu0
  %v2770 = vpop.f32.mrb[0].mxu0
  %v2771 = vadd.f32 %v2674, %v2770
  %v2772 = vpop.f32.mrb[0].mxu0
  %2773 = vmatprep.mubr.bf16.mxu0 %v955
  %2774 = vmatmul.mubr.bf16.gmra.mrb[0].mxu0 %v954
  %v2775 = vpop.f32.mrb[0].mxu0
  %v2776 = vadd.f32 %v2679, %v2775
  %v2777 = vpop.f32.mrb[0].mxu0
  %v2778 = vpop.f32.mrb[0].mxu0
  %v2779 = vadd.f32 %v2682, %v2778
  %v2780 = vpop.f32.mrb[0].mxu0
  %2781 = vmatprep.mubr.bf16.mxu0 %v973
  %2782 = vmatmul.mubr.bf16.gmra.mrb[0].mxu0 %v972
  %v2783 = vpop.f32.mrb[0].mxu0
  %v2784 = vadd.f32 %v2687, %v2783
  %v2785 = vpop.f32.mrb[0].mxu0
  %v2786 = vpop.f32.mrb[0].mxu0
  %v2787 = vadd.f32 %v2690, %v2786
  %v2788 = vpop.f32.mrb[0].mxu0
  %2789 = vmatprep.mubr.bf16.mxu0 %v991
  %2790 = vmatmul.mubr.bf16.gmra.mrb[0].mxu0 %v990
  %v2791 = vpop.f32.mrb[0].mxu0
  %v2792 = vadd.f32 %v2695, %v2791
  %v2793 = vpop.f32.mrb[0].mxu0
  %v2794 = vpop.f32.mrb[0].mxu0
  %v2795 = vadd.f32 %v2698, %v2794
  %v2796 = vpop.f32.mrb[0].mxu0
  %2797 = vmatprep.mubr.bf16.mxu0 %v1009
  %2798 = vmatmul.mubr.bf16.gmra.mrb[0].mxu0 %v1008
  %v2799 = vpop.f32.mrb[0].mxu0
  %v2800 = vadd.f32 %v2703, %v2799
  %v2801 = vpop.f32.mrb[0].mxu0
  %v2802 = vpop.f32.mrb[0].mxu0
  %v2803 = vadd.f32 %v2706, %v2802
  %v2804 = vpop.f32.mrb[0].mxu0
  %2805 = vmatprep.mubr.bf16.mxu0 %v1027
  %2806 = vmatmul.mubr.bf16.gmra.mrb[0].mxu0 %v1026
  %v2807 = vpop.f32.mrb[0].mxu0
  %v2808 = vadd.f32 %v2711, %v2807
  %v2809 = vpop.f32.mrb[0].mxu0
  %v2810 = vpop.f32.mrb[0].mxu0
  %v2811 = vadd.f32 %v2714, %v2810
  %v2812 = vpop.f32.mrb[0].mxu0
  %2813 = vdwg.mxu0
  %2814 = vmatprep.subr.bf16.mxu0 0
  %2815 = vmatpush1.bf16.msra.mxu0 %v1878
  %2816 = vmatprep.subr.bf16.mxu0 0
  %2817 = vmatpush1.bf16.msra.mxu0 %v1879
  %2818 = vmatprep.subr.bf16.mxu0 0
  %2819 = vmatpush1.bf16.msra.mxu0 %v1880
  %2820 = vmatprep.subr.bf16.mxu0 0
  %2821 = vmatpush1.bf16.msra.mxu0 %v1881
  %2822 = vmatprep.subr.bf16.mxu0 0
  %2823 = vmatpush1.bf16.msra.mxu0 %v1882
  %2824 = vmatprep.subr.bf16.mxu0 0
  %2825 = vmatpush1.bf16.msra.mxu0 %v1883
  %2826 = vmatprep.subr.bf16.mxu0 0
  %2827 = vmatpush1.bf16.msra.mxu0 %v1884
  %2828 = vmatprep.subr.bf16.mxu0 0
  %2829 = vmatpush1.bf16.msra.mxu0 %v1885
  %2830 = vmatprep.subr.bf16.mxu0 0
  %2831 = vmatpush1.bf16.msra.mxu0 %v1886
  %2832 = vmatprep.subr.bf16.mxu0 0
  %2833 = vmatpush1.bf16.msra.mxu0 %v1887
  %2834 = vmatprep.subr.bf16.mxu0 0
  %2835 = vmatpush1.bf16.msra.mxu0 %v1888
  %2836 = vmatprep.subr.bf16.mxu0 0
  %2837 = vmatpush1.bf16.msra.mxu0 %v1889
  %2838 = vmatprep.subr.bf16.mxu0 0
  %2839 = vmatpush1.bf16.msra.mxu0 %v1890
  %2840 = vmatprep.subr.bf16.mxu0 0
  %2841 = vmatpush1.bf16.msra.mxu0 %v1891
  %2842 = vmatprep.subr.bf16.mxu0 0
  %2843 = vmatpush1.bf16.msra.mxu0 %v1892
  %2844 = vmatprep.subr.bf16.mxu0 0
  %2845 = vmatpush1.bf16.msra.mxu0 %v1893
  %2846 = vmatprep.mubr.bf16.mxu0 %v903
  %2847 = vmatmul.mubr.bf16.gmra.mrb[0].mxu0 %v902
  %v2848 = vpop.f32.mrb[0].mxu0
  %v2849 = vadd.f32 %v2752, %v2848
  %v2850 = vpop.f32.mrb[0].mxu0
  %v2851 = vpop.f32.mrb[0].mxu0
  %v2852 = vadd.f32 %v2755, %v2851
  %v2853 = vpop.f32.mrb[0].mxu0
  %2854 = vmatprep.mubr.bf16.mxu0 %v921
  %2855 = vmatmul.mubr.bf16.gmra.mrb[0].mxu0 %v920
  %v2856 = vpop.f32.mrb[0].mxu0
  %v2857 = vadd.f32 %v2760, %v2856
  %v2858 = vpop.f32.mrb[0].mxu0
  %v2859 = vpop.f32.mrb[0].mxu0
  %v2860 = vadd.f32 %v2763, %v2859
  %v2861 = vpop.f32.mrb[0].mxu0
  %2862 = vmatprep.mubr.bf16.mxu0 %v939
  %2863 = vmatmul.mubr.bf16.gmra.mrb[0].mxu0 %v938
  %v2864 = vpop.f32.mrb[0].mxu0
  %v2865 = vadd.f32 %v2768, %v2864
  %v2866 = vpop.f32.mrb[0].mxu0
  %v2867 = vpop.f32.mrb[0].mxu0
  %v2868 = vadd.f32 %v2771, %v2867
  %v2869 = vpop.f32.mrb[0].mxu0
  %2870 = vmatprep.mubr.bf16.mxu0 %v957
  %2871 = vmatmul.mubr.bf16.gmra.mrb[0].mxu0 %v956
  %v2872 = vpop.f32.mrb[0].mxu0
  %v2873 = vadd.f32 %v2776, %v2872
  %v2874 = vpop.f32.mrb[0].mxu0
  %v2875 = vpop.f32.mrb[0].mxu0
  %v2876 = vadd.f32 %v2779, %v2875
  %v2877 = vpop.f32.mrb[0].mxu0
  %2878 = vmatprep.mubr.bf16.mxu0 %v975
  %2879 = vmatmul.mubr.bf16.gmra.mrb[0].mxu0 %v974
  %v2880 = vpop.f32.mrb[0].mxu0
  %v2881 = vadd.f32 %v2784, %v2880
  %v2882 = vpop.f32.mrb[0].mxu0
  %v2883 = vpop.f32.mrb[0].mxu0
  %v2884 = vadd.f32 %v2787, %v2883
  %v2885 = vpop.f32.mrb[0].mxu0
  %2886 = vmatprep.mubr.bf16.mxu0 %v993
  %2887 = vmatmul.mubr.bf16.gmra.mrb[0].mxu0 %v992
  %v2888 = vpop.f32.mrb[0].mxu0
  %v2889 = vadd.f32 %v2792, %v2888
  %v2890 = vpop.f32.mrb[0].mxu0
  %v2891 = vpop.f32.mrb[0].mxu0
  %v2892 = vadd.f32 %v2795, %v2891
  %v2893 = vpop.f32.mrb[0].mxu0
  %2894 = vmatprep.mubr.bf16.mxu0 %v1011
  %2895 = vmatmul.mubr.bf16.gmra.mrb[0].mxu0 %v1010
  %v2896 = vpop.f32.mrb[0].mxu0
  %v2897 = vadd.f32 %v2800, %v2896
  %v2898 = vpop.f32.mrb[0].mxu0
  %v2899 = vpop.f32.mrb[0].mxu0
  %v2900 = vadd.f32 %v2803, %v2899
  %v2901 = vpop.f32.mrb[0].mxu0
  %2902 = vmatprep.mubr.bf16.mxu0 %v1029
  %2903 = vmatmul.mubr.bf16.gmra.mrb[0].mxu0 %v1028
  %v2904 = vpop.f32.mrb[0].mxu0
  %v2905 = vadd.f32 %v2808, %v2904
  %v2906 = vpop.f32.mrb[0].mxu0
  %v2907 = vpop.f32.mrb[0].mxu0
  %v2908 = vadd.f32 %v2811, %v2907
  %v2909 = vpop.f32.mrb[0].mxu0
  %2910 = vdwg.mxu0
  %v2911 = vmax.f32 %v2849, 0.0
  %v2912 = vmax.f32 %v2852, 0.0
  %v2913 = vmax.f32 %v2857, 0.0
  %v2914 = vmax.f32 %v2860, 0.0
  %v2915 = vmax.f32 %v2865, 0.0
  %v2916 = vmax.f32 %v2868, 0.0
  %v2917 = vmax.f32 %v2873, 0.0
  %v2918 = vmax.f32 %v2876, 0.0
  %v2919 = vmax.f32 %v2881, 0.0
  %v2920 = vmax.f32 %v2884, 0.0
  %v2921 = vmax.f32 %v2889, 0.0
  %v2922 = vmax.f32 %v2892, 0.0
  %v2923 = vmax.f32 %v2897, 0.0
  %v2924 = vmax.f32 %v2900, 0.0
  %v2925 = vmax.f32 %v2905, 0.0
  %v2926 = vmax.f32 %v2908, 0.0
  %v2927 = vpack.c.bf16 %v2912, %v2911
  %v2928 = vpack.c.bf16 %v2914, %v2913
  %v2929 = vpack.c.bf16 %v2916, %v2915
  %v2930 = vpack.c.bf16 %v2918, %v2917
  %v2931 = vpack.c.bf16 %v2920, %v2919
  %v2932 = vpack.c.bf16 %v2922, %v2921
  %v2933 = vpack.c.bf16 %v2924, %v2923
  %v2934 = vpack.c.bf16 %v2926, %v2925
  %v2943 = vunpack.c.l.b16 %v2927
  %v2944 = vunpack.c.h.b16 %v2927
  %v2945 = vunpack.c.l.b16 %v2928
  %v2946 = vunpack.c.h.b16 %v2928
  %v2947 = vunpack.c.l.b16 %v2929
  %v2948 = vunpack.c.h.b16 %v2929
  %v2949 = vunpack.c.l.b16 %v2930
  %v2950 = vunpack.c.h.b16 %v2930
  %v2951 = vunpack.c.l.b16 %v2931
  %v2952 = vunpack.c.h.b16 %v2931
  %v2953 = vunpack.c.l.b16 %v2932
  %v2954 = vunpack.c.h.b16 %v2932
  %v2955 = vunpack.c.l.b16 %v2933
  %v2956 = vunpack.c.h.b16 %v2933
  %v2957 = vunpack.c.l.b16 %v2934
  %v2958 = vunpack.c.h.b16 %v2934
  %v2959 = vpack.c.b16 %v2943, %v2943
  %v2960 = vpack.c.b16 %v2944, %v2944
  %v2961 = vpack.c.b16 %v2945, %v2945
  %v2962 = vpack.c.b16 %v2946, %v2946
  %v2963 = vpack.c.b16 %v2947, %v2947
  %v2964 = vpack.c.b16 %v2948, %v2948
  %v2965 = vpack.c.b16 %v2949, %v2949
  %v2966 = vpack.c.b16 %v2950, %v2950
  %v2967 = vpack.c.b16 %v2951, %v2951
  %v2968 = vpack.c.b16 %v2952, %v2952
  %v2969 = vpack.c.b16 %v2953, %v2953
  %v2970 = vpack.c.b16 %v2954, %v2954
  %v2971 = vpack.c.b16 %v2955, %v2955
  %v2972 = vpack.c.b16 %v2956, %v2956
  %v2973 = vpack.c.b16 %v2957, %v2957
  %v2974 = vpack.c.b16 %v2958, %v2958
  %2991 = vst [vmem:[%s3] sm:$0xf] %v2959
  %2992 = vst [vmem:[%s3 + $0x4] sm:$0xf] %v2960
  %2993 = vst [vmem:[%s3 + $0x8] sm:$0xf] %v2961
  %2994 = vst [vmem:[%s3 + $0xc] sm:$0xf] %v2962
  %2995 = vst [vmem:[%s3 + $0x10] sm:$0xf] %v2963
  %2996 = vst [vmem:[%s3 + $0x14] sm:$0xf] %v2964
  %2997 = vst [vmem:[%s3 + $0x18] sm:$0xf] %v2965
  %2998 = vst [vmem:[%s3 + $0x1c] sm:$0xf] %v2966
  %2999 = vst [vmem:[%s3 + $0x20] sm:$0xf] %v2967
  %3000 = vst [vmem:[%s3 + $0x24] sm:$0xf] %v2968
  %3001 = vst [vmem:[%s3 + $0x28] sm:$0xf] %v2969
  %3002 = vst [vmem:[%s3 + $0x2c] sm:$0xf] %v2970
  %3003 = vst [vmem:[%s3 + $0x30] sm:$0xf] %v2971
  %3004 = vst [vmem:[%s3 + $0x34] sm:$0xf] %v2972
  %3005 = vst [vmem:[%s3 + $0x38] sm:$0xf] %v2973
  %3006 = vst [vmem:[%s3 + $0x3c] sm:$0xf] %v2974
  // Predicated region
  $region14: #{mnist_cnn_forward.5} parent=0 // pred_check
    _
  $region15: #{mnist_cnn_forward.5} parent=0 // pred_check_branch
    %3008 = sbr.rel (0) target = $region17
  $region16: #{mnist_cnn_forward.5} parent=0 // pred_region
    _
  $region17: #{mnist_cnn_forward.5} parent=0 // pred_fallthru
    _
  // Predicated region
  $region18: #{mnist_cnn_forward.5} parent=0 // pred_check
    _
  $region19: #{mnist_cnn_forward.5} parent=0 // pred_check_branch
    %3010 = sbr.rel (0) target = $region21
  $region20: #{mnist_cnn_forward.5} parent=0 // pred_region
    _
  $region21: #{mnist_cnn_forward.5} parent=0 // pred_fallthru
    _

// kernel: mnist_cnn_forward.7
$region0: #{mnist_cnn_forward.7}
  #allocation0 [shape = 'u32[]', space=smem, size = 0x4, offset = 0x4, fixed_abs, tag = 'smem constant byte address 0x4 - core index']
  #allocation1 [shape = 'u32[144,128]{1,0:T(1,128)}', space=vmem, size = 0x12000, scoped, tag = 'internal scratch']
  %s0 = inlined_call_operand.vmem [shape: bf16[8,2048], index: 0, kind: input, shape index: {}]
  %s1 = inlined_call_operand.vmem [shape: bf16[2048,128], index: 1, kind: input, shape index: {}]
  %s2 = inlined_call_operand.vmem [shape: f32[1,128], index: 2, kind: input, shape index: {}]
  %s3 = inlined_call_operand.vmem [shape: bf16[128,128], index: 3, kind: input, shape index: {}]
  %s4 = inlined_call_operand.vmem [shape: f32[1,128], index: 4, kind: input, shape index: {}]
  %s5 = inlined_call_operand.vmem [shape: f32[8,128], index: 5, kind: output, shape index: {}]
  %s6 = sld [smem:[#allocation0]]
  $region30: #{mnist_cnn_forward.7} parent=0
    _
  %s8 = ssub.s32 1, %s6
  %s9 = scalar_select 0, %s8, %s6
  // Predicated region
  $region2: #{mnist_cnn_forward.7} parent=0 // pred_check
    _
  $region3: #{mnist_cnn_forward.7} parent=0 // pred_check_branch
    %11 = sbr.rel (0) target = $region5
  $region4: #{mnist_cnn_forward.7} parent=0 // pred_region
    _
  $region5: #{mnist_cnn_forward.7} parent=0 // pred_fallthru
    _
  // Predicated region
  $region6: #{mnist_cnn_forward.7} parent=0 // pred_check
    _
  $region7: #{mnist_cnn_forward.7} parent=0 // pred_check_branch
    %13 = sbr.rel (0) target = $region9
  $region8: #{mnist_cnn_forward.7} parent=0 // pred_region
    _
  $region9: #{mnist_cnn_forward.7} parent=0 // pred_fallthru
    _
  // Predicated region
  $region10: #{mnist_cnn_forward.7} parent=0 // pred_check
    _
  $region11: #{mnist_cnn_forward.7} parent=0 // pred_check_branch
    %15 = sbr.rel (0) target = $region13
  $region12: #{mnist_cnn_forward.7} parent=0 // pred_region
    _
  $region13: #{mnist_cnn_forward.7} parent=0 // pred_fallthru
    _
  // Predicated region
  $region14: #{mnist_cnn_forward.7} parent=0 // pred_check
    _
  $region15: #{mnist_cnn_forward.7} parent=0 // pred_check_branch
    %17 = sbr.rel (0) target = $region17
  $region16: #{mnist_cnn_forward.7} parent=0 // pred_region
    _
  $region17: #{mnist_cnn_forward.7} parent=0 // pred_fallthru
    _
  // Predicated region
  $region18: #{mnist_cnn_forward.7} parent=0 // pred_check
    _
  $region19: #{mnist_cnn_forward.7} parent=0 // pred_check_branch
    %19 = sbr.rel (0) target = $region21
  $region20: #{mnist_cnn_forward.7} parent=0 // pred_region
    _
  $region21: #{mnist_cnn_forward.7} parent=0 // pred_fallthru
    _
  %v21 = vld [vmem:[%s0] sm:$0xff]
  %v22 = vld [vmem:[%s0 + $0x8] sm:$0xff]
  %v23 = vld [vmem:[%s0 + $0x10] sm:$0xff]
  %v24 = vld [vmem:[%s0 + $0x18] sm:$0xff]
  %v25 = vld [vmem:[%s0 + $0x20] sm:$0xff]
  %v26 = vld [vmem:[%s0 + $0x28] sm:$0xff]
  %v27 = vld [vmem:[%s0 + $0x30] sm:$0xff]
  %v28 = vld [vmem:[%s0 + $0x38] sm:$0xff]
  %v29 = vld [vmem:[%s1] sm:$0xf]
  %v30 = vld [vmem:[%s1 + $0x4] sm:$0xf]
  %v31 = vld [vmem:[%s1 + $0x8] sm:$0xf]
  %v32 = vld [vmem:[%s1 + $0xc] sm:$0xf]
  %v33 = vld [vmem:[%s1 + $0x10] sm:$0xf]
  %v34 = vld [vmem:[%s1 + $0x14] sm:$0xf]
  %v35 = vld [vmem:[%s1 + $0x18] sm:$0xf]
  %v36 = vld [vmem:[%s1 + $0x1c] sm:$0xf]
  %v37 = vld [vmem:[%s1 + $0x20] sm:$0xf]
  %v38 = vld [vmem:[%s1 + $0x24] sm:$0xf]
  %v39 = vld [vmem:[%s1 + $0x28] sm:$0xf]
  %v40 = vld [vmem:[%s1 + $0x2c] sm:$0xf]
  %v41 = vld [vmem:[%s1 + $0x30] sm:$0xf]
  %v42 = vld [vmem:[%s1 + $0x34] sm:$0xf]
  %v43 = vld [vmem:[%s1 + $0x38] sm:$0xf]
  %v44 = vld [vmem:[%s1 + $0x3c] sm:$0xf]
  %v45 = vld [vmem:[%s1 + $0x40] sm:$0xf]
  %v46 = vld [vmem:[%s1 + $0x44] sm:$0xf]
  %v47 = vld [vmem:[%s1 + $0x48] sm:$0xf]
  %v48 = vld [vmem:[%s1 + $0x4c] sm:$0xf]
  %v49 = vld [vmem:[%s1 + $0x50] sm:$0xf]
  %v50 = vld [vmem:[%s1 + $0x54] sm:$0xf]
  %v51 = vld [vmem:[%s1 + $0x58] sm:$0xf]
  %v52 = vld [vmem:[%s1 + $0x5c] sm:$0xf]
  %v53 = vld [vmem:[%s1 + $0x60] sm:$0xf]
  %v54 = vld [vmem:[%s1 + $0x64] sm:$0xf]
  %v55 = vld [vmem:[%s1 + $0x68] sm:$0xf]
  %v56 = vld [vmem:[%s1 + $0x6c] sm:$0xf]
  %v57 = vld [vmem:[%s1 + $0x70] sm:$0xf]
  %v58 = vld [vmem:[%s1 + $0x74] sm:$0xf]
  %v59 = vld [vmem:[%s1 + $0x78] sm:$0xf]
  %v60 = vld [vmem:[%s1 + $0x7c] sm:$0xf]
  %v61 = vld [vmem:[%s1 + $0x80] sm:$0xf]
  %v62 = vld [vmem:[%s1 + $0x84] sm:$0xf]
  %v63 = vld [vmem:[%s1 + $0x88] sm:$0xf]
  %v64 = vld [vmem:[%s1 + $0x8c] sm:$0xf]
  %v65 = vld [vmem:[%s1 + $0x90] sm:$0xf]
  %v66 = vld [vmem:[%s1 + $0x94] sm:$0xf]
  %v67 = vld [vmem:[%s1 + $0x98] sm:$0xf]
  %v68 = vld [vmem:[%s1 + $0x9c] sm:$0xf]
  %v69 = vld [vmem:[%s1 + $0xa0] sm:$0xf]
  %v70 = vld [vmem:[%s1 + $0xa4] sm:$0xf]
  %v71 = vld [vmem:[%s1 + $0xa8] sm:$0xf]
  %v72 = vld [vmem:[%s1 + $0xac] sm:$0xf]
  %v73 = vld [vmem:[%s1 + $0xb0] sm:$0xf]
  %v74 = vld [vmem:[%s1 + $0xb4] sm:$0xf]
  %v75 = vld [vmem:[%s1 + $0xb8] sm:$0xf]
  %v76 = vld [vmem:[%s1 + $0xbc] sm:$0xf]
  %v77 = vld [vmem:[%s1 + $0xc0] sm:$0xf]
  %v78 = vld [vmem:[%s1 + $0xc4] sm:$0xf]
  %v79 = vld [vmem:[%s1 + $0xc8] sm:$0xf]
  %v80 = vld [vmem:[%s1 + $0xcc] sm:$0xf]
  %v81 = vld [vmem:[%s1 + $0xd0] sm:$0xf]
  %v82 = vld [vmem:[%s1 + $0xd4] sm:$0xf]
  %v83 = vld [vmem:[%s1 + $0xd8] sm:$0xf]
  %v84 = vld [vmem:[%s1 + $0xdc] sm:$0xf]
  %v85 = vld [vmem:[%s1 + $0xe0] sm:$0xf]
  %v86 = vld [vmem:[%s1 + $0xe4] sm:$0xf]
  %v87 = vld [vmem:[%s1 + $0xe8] sm:$0xf]
  %v88 = vld [vmem:[%s1 + $0xec] sm:$0xf]
  %v89 = vld [vmem:[%s1 + $0xf0] sm:$0xf]
  %v90 = vld [vmem:[%s1 + $0xf4] sm:$0xf]
  %v91 = vld [vmem:[%s1 + $0xf8] sm:$0xf]
  %v92 = vld [vmem:[%s1 + $0xfc] sm:$0xf]
  %v93 = vld [vmem:[%s1 + $0x100] sm:$0xf]
  %v94 = vld [vmem:[%s1 + $0x104] sm:$0xf]
  %v95 = vld [vmem:[%s1 + $0x108] sm:$0xf]
  %v96 = vld [vmem:[%s1 + $0x10c] sm:$0xf]
  %v97 = vld [vmem:[%s1 + $0x110] sm:$0xf]
  %v98 = vld [vmem:[%s1 + $0x114] sm:$0xf]
  %v99 = vld [vmem:[%s1 + $0x118] sm:$0xf]
  %v100 = vld [vmem:[%s1 + $0x11c] sm:$0xf]
  %v101 = vld [vmem:[%s1 + $0x120] sm:$0xf]
  %v102 = vld [vmem:[%s1 + $0x124] sm:$0xf]
  %v103 = vld [vmem:[%s1 + $0x128] sm:$0xf]
  %v104 = vld [vmem:[%s1 + $0x12c] sm:$0xf]
  %v105 = vld [vmem:[%s1 + $0x130] sm:$0xf]
  %v106 = vld [vmem:[%s1 + $0x134] sm:$0xf]
  %v107 = vld [vmem:[%s1 + $0x138] sm:$0xf]
  %v108 = vld [vmem:[%s1 + $0x13c] sm:$0xf]
  %v109 = vld [vmem:[%s1 + $0x140] sm:$0xf]
  %v110 = vld [vmem:[%s1 + $0x144] sm:$0xf]
  %v111 = vld [vmem:[%s1 + $0x148] sm:$0xf]
  %v112 = vld [vmem:[%s1 + $0x14c] sm:$0xf]
  %v113 = vld [vmem:[%s1 + $0x150] sm:$0xf]
  %v114 = vld [vmem:[%s1 + $0x154] sm:$0xf]
  %v115 = vld [vmem:[%s1 + $0x158] sm:$0xf]
  %v116 = vld [vmem:[%s1 + $0x15c] sm:$0xf]
  %v117 = vld [vmem:[%s1 + $0x160] sm:$0xf]
  %v118 = vld [vmem:[%s1 + $0x164] sm:$0xf]
  %v119 = vld [vmem:[%s1 + $0x168] sm:$0xf]
  %v120 = vld [vmem:[%s1 + $0x16c] sm:$0xf]
  %v121 = vld [vmem:[%s1 + $0x170] sm:$0xf]
  %v122 = vld [vmem:[%s1 + $0x174] sm:$0xf]
  %v123 = vld [vmem:[%s1 + $0x178] sm:$0xf]
  %v124 = vld [vmem:[%s1 + $0x17c] sm:$0xf]
  %v125 = vld [vmem:[%s1 + $0x180] sm:$0xf]
  %v126 = vld [vmem:[%s1 + $0x184] sm:$0xf]
  %v127 = vld [vmem:[%s1 + $0x188] sm:$0xf]
  %v128 = vld [vmem:[%s1 + $0x18c] sm:$0xf]
  %v129 = vld [vmem:[%s1 + $0x190] sm:$0xf]
  %v130 = vld [vmem:[%s1 + $0x194] sm:$0xf]
  %v131 = vld [vmem:[%s1 + $0x198] sm:$0xf]
  %v132 = vld [vmem:[%s1 + $0x19c] sm:$0xf]
  %v133 = vld [vmem:[%s1 + $0x1a0] sm:$0xf]
  %v134 = vld [vmem:[%s1 + $0x1a4] sm:$0xf]
  %v135 = vld [vmem:[%s1 + $0x1a8] sm:$0xf]
  %v136 = vld [vmem:[%s1 + $0x1ac] sm:$0xf]
  %v137 = vld [vmem:[%s1 + $0x1b0] sm:$0xf]
  %v138 = vld [vmem:[%s1 + $0x1b4] sm:$0xf]
  %v139 = vld [vmem:[%s1 + $0x1b8] sm:$0xf]
  %v140 = vld [vmem:[%s1 + $0x1bc] sm:$0xf]
  %v141 = vld [vmem:[%s1 + $0x1c0] sm:$0xf]
  %v142 = vld [vmem:[%s1 + $0x1c4] sm:$0xf]
  %v143 = vld [vmem:[%s1 + $0x1c8] sm:$0xf]
  %v144 = vld [vmem:[%s1 + $0x1cc] sm:$0xf]
  %v145 = vld [vmem:[%s1 + $0x1d0] sm:$0xf]
  %v146 = vld [vmem:[%s1 + $0x1d4] sm:$0xf]
  %v147 = vld [vmem:[%s1 + $0x1d8] sm:$0xf]
  %v148 = vld [vmem:[%s1 + $0x1dc] sm:$0xf]
  %v149 = vld [vmem:[%s1 + $0x1e0] sm:$0xf]
  %v150 = vld [vmem:[%s1 + $0x1e4] sm:$0xf]
  %v151 = vld [vmem:[%s1 + $0x1e8] sm:$0xf]
  %v152 = vld [vmem:[%s1 + $0x1ec] sm:$0xf]
  %v153 = vld [vmem:[%s1 + $0x1f0] sm:$0xf]
  %v154 = vld [vmem:[%s1 + $0x1f4] sm:$0xf]
  %v155 = vld [vmem:[%s1 + $0x1f8] sm:$0xf]
  %v156 = vld [vmem:[%s1 + $0x1fc] sm:$0xf]
  %v157 = vld [vmem:[%s1 + $0x200] sm:$0xf]
  %v158 = vld [vmem:[%s1 + $0x204] sm:$0xf]
  %v159 = vld [vmem:[%s1 + $0x208] sm:$0xf]
  %v160 = vld [vmem:[%s1 + $0x20c] sm:$0xf]
  %v161 = vld [vmem:[%s1 + $0x210] sm:$0xf]
  %v162 = vld [vmem:[%s1 + $0x214] sm:$0xf]
  %v163 = vld [vmem:[%s1 + $0x218] sm:$0xf]
  %v164 = vld [vmem:[%s1 + $0x21c] sm:$0xf]
  %v165 = vld [vmem:[%s1 + $0x220] sm:$0xf]
  %v166 = vld [vmem:[%s1 + $0x224] sm:$0xf]
  %v167 = vld [vmem:[%s1 + $0x228] sm:$0xf]
  %v168 = vld [vmem:[%s1 + $0x22c] sm:$0xf]
  %v169 = vld [vmem:[%s1 + $0x230] sm:$0xf]
  %v170 = vld [vmem:[%s1 + $0x234] sm:$0xf]
  %v171 = vld [vmem:[%s1 + $0x238] sm:$0xf]
  %v172 = vld [vmem:[%s1 + $0x23c] sm:$0xf]
  %v173 = vld [vmem:[%s1 + $0x240] sm:$0xf]
  %v174 = vld [vmem:[%s1 + $0x244] sm:$0xf]
  %v175 = vld [vmem:[%s1 + $0x248] sm:$0xf]
  %v176 = vld [vmem:[%s1 + $0x24c] sm:$0xf]
  %v177 = vld [vmem:[%s1 + $0x250] sm:$0xf]
  %v178 = vld [vmem:[%s1 + $0x254] sm:$0xf]
  %v179 = vld [vmem:[%s1 + $0x258] sm:$0xf]
  %v180 = vld [vmem:[%s1 + $0x25c] sm:$0xf]
  %v181 = vld [vmem:[%s1 + $0x260] sm:$0xf]
  %v182 = vld [vmem:[%s1 + $0x264] sm:$0xf]
  %v183 = vld [vmem:[%s1 + $0x268] sm:$0xf]
  %v184 = vld [vmem:[%s1 + $0x26c] sm:$0xf]
  %v185 = vld [vmem:[%s1 + $0x270] sm:$0xf]
  %v186 = vld [vmem:[%s1 + $0x274] sm:$0xf]
  %v187 = vld [vmem:[%s1 + $0x278] sm:$0xf]
  %v188 = vld [vmem:[%s1 + $0x27c] sm:$0xf]
  %v189 = vld [vmem:[%s1 + $0x280] sm:$0xf]
  %v190 = vld [vmem:[%s1 + $0x284] sm:$0xf]
  %v191 = vld [vmem:[%s1 + $0x288] sm:$0xf]
  %v192 = vld [vmem:[%s1 + $0x28c] sm:$0xf]
  %v193 = vld [vmem:[%s1 + $0x290] sm:$0xf]
  %v194 = vld [vmem:[%s1 + $0x294] sm:$0xf]
  %v195 = vld [vmem:[%s1 + $0x298] sm:$0xf]
  %v196 = vld [vmem:[%s1 + $0x29c] sm:$0xf]
  %v197 = vld [vmem:[%s1 + $0x2a0] sm:$0xf]
  %v198 = vld [vmem:[%s1 + $0x2a4] sm:$0xf]
  %v199 = vld [vmem:[%s1 + $0x2a8] sm:$0xf]
  %v200 = vld [vmem:[%s1 + $0x2ac] sm:$0xf]
  %v201 = vld [vmem:[%s1 + $0x2b0] sm:$0xf]
  %v202 = vld [vmem:[%s1 + $0x2b4] sm:$0xf]
  %v203 = vld [vmem:[%s1 + $0x2b8] sm:$0xf]
  %v204 = vld [vmem:[%s1 + $0x2bc] sm:$0xf]
  %v205 = vld [vmem:[%s1 + $0x2c0] sm:$0xf]
  %v206 = vld [vmem:[%s1 + $0x2c4] sm:$0xf]
  %v207 = vld [vmem:[%s1 + $0x2c8] sm:$0xf]
  %v208 = vld [vmem:[%s1 + $0x2cc] sm:$0xf]
  %v209 = vld [vmem:[%s1 + $0x2d0] sm:$0xf]
  %v210 = vld [vmem:[%s1 + $0x2d4] sm:$0xf]
  %v211 = vld [vmem:[%s1 + $0x2d8] sm:$0xf]
  %v212 = vld [vmem:[%s1 + $0x2dc] sm:$0xf]
  %v213 = vld [vmem:[%s1 + $0x2e0] sm:$0xf]
  %v214 = vld [vmem:[%s1 + $0x2e4] sm:$0xf]
  %v215 = vld [vmem:[%s1 + $0x2e8] sm:$0xf]
  %v216 = vld [vmem:[%s1 + $0x2ec] sm:$0xf]
  %v217 = vld [vmem:[%s1 + $0x2f0] sm:$0xf]
  %v218 = vld [vmem:[%s1 + $0x2f4] sm:$0xf]
  %v219 = vld [vmem:[%s1 + $0x2f8] sm:$0xf]
  %v220 = vld [vmem:[%s1 + $0x2fc] sm:$0xf]
  %v221 = vld [vmem:[%s1 + $0x300] sm:$0xf]
  %v222 = vld [vmem:[%s1 + $0x304] sm:$0xf]
  %v223 = vld [vmem:[%s1 + $0x308] sm:$0xf]
  %v224 = vld [vmem:[%s1 + $0x30c] sm:$0xf]
  %v225 = vld [vmem:[%s1 + $0x310] sm:$0xf]
  %v226 = vld [vmem:[%s1 + $0x314] sm:$0xf]
  %v227 = vld [vmem:[%s1 + $0x318] sm:$0xf]
  %v228 = vld [vmem:[%s1 + $0x31c] sm:$0xf]
  %v229 = vld [vmem:[%s1 + $0x320] sm:$0xf]
  %v230 = vld [vmem:[%s1 + $0x324] sm:$0xf]
  %v231 = vld [vmem:[%s1 + $0x328] sm:$0xf]
  %v232 = vld [vmem:[%s1 + $0x32c] sm:$0xf]
  %v233 = vld [vmem:[%s1 + $0x330] sm:$0xf]
  %v234 = vld [vmem:[%s1 + $0x334] sm:$0xf]
  %v235 = vld [vmem:[%s1 + $0x338] sm:$0xf]
  %v236 = vld [vmem:[%s1 + $0x33c] sm:$0xf]
  %v237 = vld [vmem:[%s1 + $0x340] sm:$0xf]
  %v238 = vld [vmem:[%s1 + $0x344] sm:$0xf]
  %v239 = vld [vmem:[%s1 + $0x348] sm:$0xf]
  %v240 = vld [vmem:[%s1 + $0x34c] sm:$0xf]
  %v241 = vld [vmem:[%s1 + $0x350] sm:$0xf]
  %v242 = vld [vmem:[%s1 + $0x354] sm:$0xf]
  %v243 = vld [vmem:[%s1 + $0x358] sm:$0xf]
  %v244 = vld [vmem:[%s1 + $0x35c] sm:$0xf]
  %v245 = vld [vmem:[%s1 + $0x360] sm:$0xf]
  %v246 = vld [vmem:[%s1 + $0x364] sm:$0xf]
  %v247 = vld [vmem:[%s1 + $0x368] sm:$0xf]
  %v248 = vld [vmem:[%s1 + $0x36c] sm:$0xf]
  %v249 = vld [vmem:[%s1 + $0x370] sm:$0xf]
  %v250 = vld [vmem:[%s1 + $0x374] sm:$0xf]
  %v251 = vld [vmem:[%s1 + $0x378] sm:$0xf]
  %v252 = vld [vmem:[%s1 + $0x37c] sm:$0xf]
  %v253 = vld [vmem:[%s1 + $0x380] sm:$0xf]
  %v254 = vld [vmem:[%s1 + $0x384] sm:$0xf]
  %v255 = vld [vmem:[%s1 + $0x388] sm:$0xf]
  %v256 = vld [vmem:[%s1 + $0x38c] sm:$0xf]
  %v257 = vld [vmem:[%s1 + $0x390] sm:$0xf]
  %v258 = vld [vmem:[%s1 + $0x394] sm:$0xf]
  %v259 = vld [vmem:[%s1 + $0x398] sm:$0xf]
  %v260 = vld [vmem:[%s1 + $0x39c] sm:$0xf]
  %v261 = vld [vmem:[%s1 + $0x3a0] sm:$0xf]
  %v262 = vld [vmem:[%s1 + $0x3a4] sm:$0xf]
  %v263 = vld [vmem:[%s1 + $0x3a8] sm:$0xf]
  %v264 = vld [vmem:[%s1 + $0x3ac] sm:$0xf]
  %v265 = vld [vmem:[%s1 + $0x3b0] sm:$0xf]
  %v266 = vld [vmem:[%s1 + $0x3b4] sm:$0xf]
  %v267 = vld [vmem:[%s1 + $0x3b8] sm:$0xf]
  %v268 = vld [vmem:[%s1 + $0x3bc] sm:$0xf]
  %v269 = vld [vmem:[%s1 + $0x3c0] sm:$0xf]
  %v270 = vld [vmem:[%s1 + $0x3c4] sm:$0xf]
  %v271 = vld [vmem:[%s1 + $0x3c8] sm:$0xf]
  %v272 = vld [vmem:[%s1 + $0x3cc] sm:$0xf]
  %v273 = vld [vmem:[%s1 + $0x3d0] sm:$0xf]
  %v274 = vld [vmem:[%s1 + $0x3d4] sm:$0xf]
  %v275 = vld [vmem:[%s1 + $0x3d8] sm:$0xf]
  %v276 = vld [vmem:[%s1 + $0x3dc] sm:$0xf]
  %v277 = vld [vmem:[%s1 + $0x3e0] sm:$0xf]
  %v278 = vld [vmem:[%s1 + $0x3e4] sm:$0xf]
  %v279 = vld [vmem:[%s1 + $0x3e8] sm:$0xf]
  %v280 = vld [vmem:[%s1 + $0x3ec] sm:$0xf]
  %v281 = vld [vmem:[%s1 + $0x3f0] sm:$0xf]
  %v282 = vld [vmem:[%s1 + $0x3f4] sm:$0xf]
  %v283 = vld [vmem:[%s1 + $0x3f8] sm:$0xf]
  %v284 = vld [vmem:[%s1 + $0x3fc] sm:$0xf]
  %v285 = vld [vmem:[%s2] sm:$0x1]
  %v287 = vlaneseq
  %v288 = vshrl.u32 %v287, 7
  %v289 = vsub.s32 0, %v288
  %v290 = vrot.slane %v285, %v289
  %v300 = vunpack.c.l.b16 %v21
  %v301 = vunpack.c.h.b16 %v21
  %v302 = vunpack.c.l.b16 %v22
  %v303 = vunpack.c.h.b16 %v22
  %v304 = vunpack.c.l.b16 %v23
  %v305 = vunpack.c.h.b16 %v23
  %v306 = vunpack.c.l.b16 %v24
  %v307 = vunpack.c.h.b16 %v24
  %v308 = vunpack.c.l.b16 %v25
  %v309 = vunpack.c.h.b16 %v25
  %v310 = vunpack.c.l.b16 %v26
  %v311 = vunpack.c.h.b16 %v26
  %v312 = vunpack.c.l.b16 %v27
  %v313 = vunpack.c.h.b16 %v27
  %v314 = vunpack.c.l.b16 %v28
  %v315 = vunpack.c.h.b16 %v28
  %v316 = vpack.c.b16 %v300, %v300
  %v317 = vpack.c.b16 %v301, %v301
  %v318 = vpack.c.b16 %v302, %v302
  %v319 = vpack.c.b16 %v303, %v303
  %v320 = vpack.c.b16 %v304, %v304
  %v321 = vpack.c.b16 %v305, %v305
  %v322 = vpack.c.b16 %v306, %v306
  %v323 = vpack.c.b16 %v307, %v307
  %v324 = vpack.c.b16 %v308, %v308
  %v325 = vpack.c.b16 %v309, %v309
  %v326 = vpack.c.b16 %v310, %v310
  %v327 = vpack.c.b16 %v311, %v311
  %v328 = vpack.c.b16 %v312, %v312
  %v329 = vpack.c.b16 %v313, %v313
  %v330 = vpack.c.b16 %v314, %v314
  %v331 = vpack.c.b16 %v315, %v315
  %v604 = vunpack.c.l.b16 %v29
  %v605 = vunpack.c.l.b16 %v30
  %v606 = vunpack.c.l.b16 %v31
  %v607 = vunpack.c.l.b16 %v32
  %v608 = vunpack.c.l.b16 %v33
  %v609 = vunpack.c.l.b16 %v34
  %v610 = vunpack.c.l.b16 %v35
  %v611 = vunpack.c.l.b16 %v36
  %v612 = vunpack.c.l.b16 %v37
  %v613 = vunpack.c.l.b16 %v38
  %v614 = vunpack.c.l.b16 %v39
  %v615 = vunpack.c.l.b16 %v40
  %v616 = vunpack.c.l.b16 %v41
  %v617 = vunpack.c.l.b16 %v42
  %v618 = vunpack.c.l.b16 %v43
  %v619 = vunpack.c.l.b16 %v44
  %v620 = vunpack.c.l.b16 %v45
  %v621 = vunpack.c.l.b16 %v46
  %v622 = vunpack.c.l.b16 %v47
  %v623 = vunpack.c.l.b16 %v48
  %v624 = vunpack.c.l.b16 %v49
  %v625 = vunpack.c.l.b16 %v50
  %v626 = vunpack.c.l.b16 %v51
  %v627 = vunpack.c.l.b16 %v52
  %v628 = vunpack.c.l.b16 %v53
  %v629 = vunpack.c.l.b16 %v54
  %v630 = vunpack.c.l.b16 %v55
  %v631 = vunpack.c.l.b16 %v56
  %v632 = vunpack.c.l.b16 %v57
  %v633 = vunpack.c.l.b16 %v58
  %v634 = vunpack.c.l.b16 %v59
  %v635 = vunpack.c.l.b16 %v60
  %v636 = vunpack.c.l.b16 %v61
  %v637 = vunpack.c.l.b16 %v62
  %v638 = vunpack.c.l.b16 %v63
  %v639 = vunpack.c.l.b16 %v64
  %v640 = vunpack.c.l.b16 %v65
  %v641 = vunpack.c.l.b16 %v66
  %v642 = vunpack.c.l.b16 %v67
  %v643 = vunpack.c.l.b16 %v68
  %v644 = vunpack.c.l.b16 %v69
  %v645 = vunpack.c.l.b16 %v70
  %v646 = vunpack.c.l.b16 %v71
  %v647 = vunpack.c.l.b16 %v72
  %v648 = vunpack.c.l.b16 %v73
  %v649 = vunpack.c.l.b16 %v74
  %v650 = vunpack.c.l.b16 %v75
  %v651 = vunpack.c.l.b16 %v76
  %v652 = vunpack.c.l.b16 %v77
  %v653 = vunpack.c.l.b16 %v78
  %v654 = vunpack.c.l.b16 %v79
  %v655 = vunpack.c.l.b16 %v80
  %v656 = vunpack.c.l.b16 %v81
  %v657 = vunpack.c.l.b16 %v82
  %v658 = vunpack.c.l.b16 %v83
  %v659 = vunpack.c.l.b16 %v84
  %v660 = vunpack.c.l.b16 %v85
  %v661 = vunpack.c.l.b16 %v86
  %v662 = vunpack.c.l.b16 %v87
  %v663 = vunpack.c.l.b16 %v88
  %v664 = vunpack.c.l.b16 %v89
  %v665 = vunpack.c.l.b16 %v90
  %v666 = vunpack.c.l.b16 %v91
  %v667 = vunpack.c.l.b16 %v92
  %v668 = vunpack.c.l.b16 %v93
  %v669 = vunpack.c.l.b16 %v94
  %v670 = vunpack.c.l.b16 %v95
  %v671 = vunpack.c.l.b16 %v96
  %v672 = vunpack.c.l.b16 %v97
  %v673 = vunpack.c.l.b16 %v98
  %v674 = vunpack.c.l.b16 %v99
  %v675 = vunpack.c.l.b16 %v100
  %v676 = vunpack.c.l.b16 %v101
  %v677 = vunpack.c.l.b16 %v102
  %v678 = vunpack.c.l.b16 %v103
  %v679 = vunpack.c.l.b16 %v104
  %v680 = vunpack.c.l.b16 %v105
  %v681 = vunpack.c.l.b16 %v106
  %v682 = vunpack.c.l.b16 %v107
  %v683 = vunpack.c.l.b16 %v108
  %v684 = vunpack.c.l.b16 %v109
  %v685 = vunpack.c.l.b16 %v110
  %v686 = vunpack.c.l.b16 %v111
  %v687 = vunpack.c.l.b16 %v112
  %v688 = vunpack.c.l.b16 %v113
  %v689 = vunpack.c.l.b16 %v114
  %v690 = vunpack.c.l.b16 %v115
  %v691 = vunpack.c.l.b16 %v116
  %v692 = vunpack.c.l.b16 %v117
  %v693 = vunpack.c.l.b16 %v118
  %v694 = vunpack.c.l.b16 %v119
  %v695 = vunpack.c.l.b16 %v120
  %v696 = vunpack.c.l.b16 %v121
  %v697 = vunpack.c.l.b16 %v122
  %v698 = vunpack.c.l.b16 %v123
  %v699 = vunpack.c.l.b16 %v124
  %v700 = vunpack.c.l.b16 %v125
  %v701 = vunpack.c.l.b16 %v126
  %v702 = vunpack.c.l.b16 %v127
  %v703 = vunpack.c.l.b16 %v128
  %v704 = vunpack.c.l.b16 %v129
  %v705 = vunpack.c.l.b16 %v130
  %v706 = vunpack.c.l.b16 %v131
  %v707 = vunpack.c.l.b16 %v132
  %v708 = vunpack.c.l.b16 %v133
  %v709 = vunpack.c.l.b16 %v134
  %v710 = vunpack.c.l.b16 %v135
  %v711 = vunpack.c.l.b16 %v136
  %v712 = vunpack.c.l.b16 %v137
  %v713 = vunpack.c.l.b16 %v138
  %v714 = vunpack.c.l.b16 %v139
  %v715 = vunpack.c.l.b16 %v140
  %v716 = vunpack.c.l.b16 %v141
  %v717 = vunpack.c.l.b16 %v142
  %v718 = vunpack.c.l.b16 %v143
  %v719 = vunpack.c.l.b16 %v144
  %v720 = vunpack.c.l.b16 %v145
  %v721 = vunpack.c.l.b16 %v146
  %v722 = vunpack.c.l.b16 %v147
  %v723 = vunpack.c.l.b16 %v148
  %v724 = vunpack.c.l.b16 %v149
  %v725 = vunpack.c.l.b16 %v150
  %v726 = vunpack.c.l.b16 %v151
  %v727 = vunpack.c.l.b16 %v152
  %v728 = vunpack.c.l.b16 %v153
  %v729 = vunpack.c.l.b16 %v154
  %v730 = vunpack.c.l.b16 %v155
  %v731 = vunpack.c.l.b16 %v156
  %v732 = vunpack.c.l.b16 %v157
  %v733 = vunpack.c.l.b16 %v158
  %v734 = vunpack.c.l.b16 %v159
  %v735 = vunpack.c.l.b16 %v160
  %v736 = vunpack.c.l.b16 %v161
  %v737 = vunpack.c.l.b16 %v162
  %v738 = vunpack.c.l.b16 %v163
  %v739 = vunpack.c.l.b16 %v164
  %v740 = vunpack.c.l.b16 %v165
  %v741 = vunpack.c.l.b16 %v166
  %v742 = vunpack.c.l.b16 %v167
  %v743 = vunpack.c.l.b16 %v168
  %v744 = vunpack.c.l.b16 %v169
  %v745 = vunpack.c.l.b16 %v170
  %v746 = vunpack.c.l.b16 %v171
  %v747 = vunpack.c.l.b16 %v172
  %v748 = vunpack.c.l.b16 %v173
  %v749 = vunpack.c.l.b16 %v174
  %v750 = vunpack.c.l.b16 %v175
  %v751 = vunpack.c.l.b16 %v176
  %v752 = vunpack.c.l.b16 %v177
  %v753 = vunpack.c.l.b16 %v178
  %v754 = vunpack.c.l.b16 %v179
  %v755 = vunpack.c.l.b16 %v180
  %v756 = vunpack.c.l.b16 %v181
  %v757 = vunpack.c.l.b16 %v182
  %v758 = vunpack.c.l.b16 %v183
  %v759 = vunpack.c.l.b16 %v184
  %v760 = vunpack.c.l.b16 %v185
  %v761 = vunpack.c.l.b16 %v186
  %v762 = vunpack.c.l.b16 %v187
  %v763 = vunpack.c.l.b16 %v188
  %v764 = vunpack.c.l.b16 %v189
  %v765 = vunpack.c.l.b16 %v190
  %v766 = vunpack.c.l.b16 %v191
  %v767 = vunpack.c.l.b16 %v192
  %v768 = vunpack.c.l.b16 %v193
  %v769 = vunpack.c.l.b16 %v194
  %v770 = vunpack.c.l.b16 %v195
  %v771 = vunpack.c.l.b16 %v196
  %v772 = vunpack.c.l.b16 %v197
  %v773 = vunpack.c.l.b16 %v198
  %v774 = vunpack.c.l.b16 %v199
  %v775 = vunpack.c.l.b16 %v200
  %v776 = vunpack.c.l.b16 %v201
  %v777 = vunpack.c.l.b16 %v202
  %v778 = vunpack.c.l.b16 %v203
  %v779 = vunpack.c.l.b16 %v204
  %v780 = vunpack.c.l.b16 %v205
  %v781 = vunpack.c.l.b16 %v206
  %v782 = vunpack.c.l.b16 %v207
  %v783 = vunpack.c.l.b16 %v208
  %v784 = vunpack.c.l.b16 %v209
  %v785 = vunpack.c.l.b16 %v210
  %v786 = vunpack.c.l.b16 %v211
  %v787 = vunpack.c.l.b16 %v212
  %v788 = vunpack.c.l.b16 %v213
  %v789 = vunpack.c.l.b16 %v214
  %v790 = vunpack.c.l.b16 %v215
  %v791 = vunpack.c.l.b16 %v216
  %v792 = vunpack.c.l.b16 %v217
  %v793 = vunpack.c.l.b16 %v218
  %v794 = vunpack.c.l.b16 %v219
  %v795 = vunpack.c.l.b16 %v220
  %v796 = vunpack.c.l.b16 %v221
  %v797 = vunpack.c.l.b16 %v222
  %v798 = vunpack.c.l.b16 %v223
  %v799 = vunpack.c.l.b16 %v224
  %v800 = vunpack.c.l.b16 %v225
  %v801 = vunpack.c.l.b16 %v226
  %v802 = vunpack.c.l.b16 %v227
  %v803 = vunpack.c.l.b16 %v228
  %v804 = vunpack.c.l.b16 %v229
  %v805 = vunpack.c.l.b16 %v230
  %v806 = vunpack.c.l.b16 %v231
  %v807 = vunpack.c.l.b16 %v232
  %v808 = vunpack.c.l.b16 %v233
  %v809 = vunpack.c.l.b16 %v234
  %v810 = vunpack.c.l.b16 %v235
  %v811 = vunpack.c.l.b16 %v236
  %v812 = vunpack.c.l.b16 %v237
  %v813 = vunpack.c.l.b16 %v238
  %v814 = vunpack.c.l.b16 %v239
  %v815 = vunpack.c.l.b16 %v240
  %v816 = vunpack.c.l.b16 %v241
  %v817 = vunpack.c.l.b16 %v242
  %v818 = vunpack.c.l.b16 %v243
  %v819 = vunpack.c.l.b16 %v244
  %v820 = vunpack.c.l.b16 %v245
  %v821 = vunpack.c.l.b16 %v246
  %v822 = vunpack.c.l.b16 %v247
  %v823 = vunpack.c.l.b16 %v248
  %v824 = vunpack.c.l.b16 %v249
  %v825 = vunpack.c.l.b16 %v250
  %v826 = vunpack.c.l.b16 %v251
  %v827 = vunpack.c.l.b16 %v252
  %v828 = vunpack.c.l.b16 %v253
  %v829 = vunpack.c.l.b16 %v254
  %v830 = vunpack.c.l.b16 %v255
  %v831 = vunpack.c.l.b16 %v256
  %v832 = vunpack.c.l.b16 %v257
  %v833 = vunpack.c.l.b16 %v258
  %v834 = vunpack.c.l.b16 %v259
  %v835 = vunpack.c.l.b16 %v260
  %v836 = vunpack.c.l.b16 %v261
  %v837 = vunpack.c.l.b16 %v262
  %v838 = vunpack.c.l.b16 %v263
  %v839 = vunpack.c.l.b16 %v264
  %v840 = vunpack.c.l.b16 %v265
  %v841 = vunpack.c.l.b16 %v266
  %v842 = vunpack.c.l.b16 %v267
  %v843 = vunpack.c.l.b16 %v268
  %v844 = vunpack.c.l.b16 %v269
  %v845 = vunpack.c.l.b16 %v270
  %v846 = vunpack.c.l.b16 %v271
  %v847 = vunpack.c.l.b16 %v272
  %v848 = vunpack.c.l.b16 %v273
  %v849 = vunpack.c.l.b16 %v274
  %v850 = vunpack.c.l.b16 %v275
  %v851 = vunpack.c.l.b16 %v276
  %v852 = vunpack.c.l.b16 %v277
  %v853 = vunpack.c.l.b16 %v278
  %v854 = vunpack.c.l.b16 %v279
  %v855 = vunpack.c.l.b16 %v280
  %v856 = vunpack.c.l.b16 %v281
  %v857 = vunpack.c.l.b16 %v282
  %v858 = vunpack.c.l.b16 %v283
  %v859 = vunpack.c.l.b16 %v284
  %v860 = vpack.c.b16 %v605, %v604
  %v861 = vpack.c.b16 %v607, %v606
  %v862 = vpack.c.b16 %v609, %v608
  %v863 = vpack.c.b16 %v611, %v610
  %v864 = vpack.c.b16 %v613, %v612
  %v865 = vpack.c.b16 %v615, %v614
  %v866 = vpack.c.b16 %v617, %v616
  %v867 = vpack.c.b16 %v619, %v618
  %v868 = vpack.c.b16 %v621, %v620
  %v869 = vpack.c.b16 %v623, %v622
  %v870 = vpack.c.b16 %v625, %v624
  %v871 = vpack.c.b16 %v627, %v626
  %v872 = vpack.c.b16 %v629, %v628
  %v873 = vpack.c.b16 %v631, %v630
  %v874 = vpack.c.b16 %v633, %v632
  %v875 = vpack.c.b16 %v635, %v634
  %v876 = vpack.c.b16 %v637, %v636
  %v877 = vpack.c.b16 %v639, %v638
  %v878 = vpack.c.b16 %v641, %v640
  %v879 = vpack.c.b16 %v643, %v642
  %v880 = vpack.c.b16 %v645, %v644
  %v881 = vpack.c.b16 %v647, %v646
  %v882 = vpack.c.b16 %v649, %v648
  %v883 = vpack.c.b16 %v651, %v650
  %v884 = vpack.c.b16 %v653, %v652
  %v885 = vpack.c.b16 %v655, %v654
  %v886 = vpack.c.b16 %v657, %v656
  %v887 = vpack.c.b16 %v659, %v658
  %v888 = vpack.c.b16 %v661, %v660
  %v889 = vpack.c.b16 %v663, %v662
  %v890 = vpack.c.b16 %v665, %v664
  %v891 = vpack.c.b16 %v667, %v666
  %v892 = vpack.c.b16 %v669, %v668
  %v893 = vpack.c.b16 %v671, %v670
  %v894 = vpack.c.b16 %v673, %v672
  %v895 = vpack.c.b16 %v675, %v674
  %v896 = vpack.c.b16 %v677, %v676
  %v897 = vpack.c.b16 %v679, %v678
  %v898 = vpack.c.b16 %v681, %v680
  %v899 = vpack.c.b16 %v683, %v682
  %v900 = vpack.c.b16 %v685, %v684
  %v901 = vpack.c.b16 %v687, %v686
  %v902 = vpack.c.b16 %v689, %v688
  %v903 = vpack.c.b16 %v691, %v690
  %v904 = vpack.c.b16 %v693, %v692
  %v905 = vpack.c.b16 %v695, %v694
  %v906 = vpack.c.b16 %v697, %v696
  %v907 = vpack.c.b16 %v699, %v698
  %v908 = vpack.c.b16 %v701, %v700
  %v909 = vpack.c.b16 %v703, %v702
  %v910 = vpack.c.b16 %v705, %v704
  %v911 = vpack.c.b16 %v707, %v706
  %v912 = vpack.c.b16 %v709, %v708
  %v913 = vpack.c.b16 %v711, %v710
  %v914 = vpack.c.b16 %v713, %v712
  %v915 = vpack.c.b16 %v715, %v714
  %v916 = vpack.c.b16 %v717, %v716
  %v917 = vpack.c.b16 %v719, %v718
  %v918 = vpack.c.b16 %v721, %v720
  %v919 = vpack.c.b16 %v723, %v722
  %v920 = vpack.c.b16 %v725, %v724
  %v921 = vpack.c.b16 %v727, %v726
  %v922 = vpack.c.b16 %v729, %v728
  %v923 = vpack.c.b16 %v731, %v730
  %v924 = vpack.c.b16 %v733, %v732
  %v925 = vpack.c.b16 %v735, %v734
  %v926 = vpack.c.b16 %v737, %v736
  %v927 = vpack.c.b16 %v739, %v738
  %v928 = vpack.c.b16 %v741, %v740
  %v929 = vpack.c.b16 %v743, %v742
  %v930 = vpack.c.b16 %v745, %v744
  %v931 = vpack.c.b16 %v747, %v746
  %v932 = vpack.c.b16 %v749, %v748
  %v933 = vpack.c.b16 %v751, %v750
  %v934 = vpack.c.b16 %v753, %v752
  %v935 = vpack.c.b16 %v755, %v754
  %v936 = vpack.c.b16 %v757, %v756
  %v937 = vpack.c.b16 %v759, %v758
  %v938 = vpack.c.b16 %v761, %v760
  %v939 = vpack.c.b16 %v763, %v762
  %v940 = vpack.c.b16 %v765, %v764
  %v941 = vpack.c.b16 %v767, %v766
  %v942 = vpack.c.b16 %v769, %v768
  %v943 = vpack.c.b16 %v771, %v770
  %v944 = vpack.c.b16 %v773, %v772
  %v945 = vpack.c.b16 %v775, %v774
  %v946 = vpack.c.b16 %v777, %v776
  %v947 = vpack.c.b16 %v779, %v778
  %v948 = vpack.c.b16 %v781, %v780
  %v949 = vpack.c.b16 %v783, %v782
  %v950 = vpack.c.b16 %v785, %v784
  %v951 = vpack.c.b16 %v787, %v786
  %v952 = vpack.c.b16 %v789, %v788
  %v953 = vpack.c.b16 %v791, %v790
  %v954 = vpack.c.b16 %v793, %v792
  %v955 = vpack.c.b16 %v795, %v794
  %v956 = vpack.c.b16 %v797, %v796
  %v957 = vpack.c.b16 %v799, %v798
  %v958 = vpack.c.b16 %v801, %v800
  %v959 = vpack.c.b16 %v803, %v802
  %v960 = vpack.c.b16 %v805, %v804
  %v961 = vpack.c.b16 %v807, %v806
  %v962 = vpack.c.b16 %v809, %v808
  %v963 = vpack.c.b16 %v811, %v810
  %v964 = vpack.c.b16 %v813, %v812
  %v965 = vpack.c.b16 %v815, %v814
  %v966 = vpack.c.b16 %v817, %v816
  %v967 = vpack.c.b16 %v819, %v818
  %v968 = vpack.c.b16 %v821, %v820
  %v969 = vpack.c.b16 %v823, %v822
  %v970 = vpack.c.b16 %v825, %v824
  %v971 = vpack.c.b16 %v827, %v826
  %v972 = vpack.c.b16 %v829, %v828
  %v973 = vpack.c.b16 %v831, %v830
  %v974 = vpack.c.b16 %v833, %v832
  %v975 = vpack.c.b16 %v835, %v834
  %v976 = vpack.c.b16 %v837, %v836
  %v977 = vpack.c.b16 %v839, %v838
  %v978 = vpack.c.b16 %v841, %v840
  %v979 = vpack.c.b16 %v843, %v842
  %v980 = vpack.c.b16 %v845, %v844
  %v981 = vpack.c.b16 %v847, %v846
  %v982 = vpack.c.b16 %v849, %v848
  %v983 = vpack.c.b16 %v851, %v850
  %v984 = vpack.c.b16 %v853, %v852
  %v985 = vpack.c.b16 %v855, %v854
  %v986 = vpack.c.b16 %v857, %v856
  %v987 = vpack.c.b16 %v859, %v858
  %1116 = vmatprep.subr.bf16.mxu0 0
  %1117 = vmatpush1.bf16.msra.mxu0 %v860
  %1118 = vmatprep.subr.bf16.mxu0 0
  %1119 = vmatpush1.bf16.msra.mxu0 %v861
  %1120 = vmatprep.subr.bf16.mxu0 0
  %1121 = vmatpush1.bf16.msra.mxu0 %v862
  %1122 = vmatprep.subr.bf16.mxu0 0
  %1123 = vmatpush1.bf16.msra.mxu0 %v863
  %1124 = vmatprep.subr.bf16.mxu0 0
  %1125 = vmatpush1.bf16.msra.mxu0 %v864
  %1126 = vmatprep.subr.bf16.mxu0 0
  %1127 = vmatpush1.bf16.msra.mxu0 %v865
  %1128 = vmatprep.subr.bf16.mxu0 0
  %1129 = vmatpush1.bf16.msra.mxu0 %v866
  %1130 = vmatprep.subr.bf16.mxu0 0
  %1131 = vmatpush1.bf16.msra.mxu0 %v867
  %1132 = vmatprep.subr.bf16.mxu0 0
  %1133 = vmatpush1.bf16.msra.mxu0 %v868
  %1134 = vmatprep.subr.bf16.mxu0 0
  %1135 = vmatpush1.bf16.msra.mxu0 %v869
  %1136 = vmatprep.subr.bf16.mxu0 0
  %1137 = vmatpush1.bf16.msra.mxu0 %v870
  %1138 = vmatprep.subr.bf16.mxu0 0
  %1139 = vmatpush1.bf16.msra.mxu0 %v871
  %1140 = vmatprep.subr.bf16.mxu0 0
  %1141 = vmatpush1.bf16.msra.mxu0 %v872
  %1142 = vmatprep.subr.bf16.mxu0 0
  %1143 = vmatpush1.bf16.msra.mxu0 %v873
  %1144 = vmatprep.subr.bf16.mxu0 0
  %1145 = vmatpush1.bf16.msra.mxu0 %v874
  %1146 = vmatprep.subr.bf16.mxu0 0
  %1147 = vmatpush1.bf16.msra.mxu0 %v875
  %1148 = vmatprep.mubr.bf16.mxu0 %v317
  %1149 = vmatmul.mubr.bf16.gmra.mrb[0].mxu0 %v316
  %v1150 = vpop.f32.mrb[0].mxu0
  %v1151 = vadd.f32 %v290, %v1150
  %v1152 = vpop.f32.mrb[0].mxu0
  %v1153 = vpop.f32.mrb[0].mxu0
  %v1154 = vpop.f32.mrb[0].mxu0
  %1155 = vdwg.mxu0
  %1156 = vmatprep.subr.bf16.mxu0 0
  %1157 = vmatpush1.bf16.msra.mxu0 %v876
  %1158 = vmatprep.subr.bf16.mxu0 0
  %1159 = vmatpush1.bf16.msra.mxu0 %v877
  %1160 = vmatprep.subr.bf16.mxu0 0
  %1161 = vmatpush1.bf16.msra.mxu0 %v878
  %1162 = vmatprep.subr.bf16.mxu0 0
  %1163 = vmatpush1.bf16.msra.mxu0 %v879
  %1164 = vmatprep.subr.bf16.mxu0 0
  %1165 = vmatpush1.bf16.msra.mxu0 %v880
  %1166 = vmatprep.subr.bf16.mxu0 0
  %1167 = vmatpush1.bf16.msra.mxu0 %v881
  %1168 = vmatprep.subr.bf16.mxu0 0
  %1169 = vmatpush1.bf16.msra.mxu0 %v882
  %1170 = vmatprep.subr.bf16.mxu0 0
  %1171 = vmatpush1.bf16.msra.mxu0 %v883
  %1172 = vmatprep.subr.bf16.mxu0 0
  %1173 = vmatpush1.bf16.msra.mxu0 %v884
  %1174 = vmatprep.subr.bf16.mxu0 0
  %1175 = vmatpush1.bf16.msra.mxu0 %v885
  %1176 = vmatprep.subr.bf16.mxu0 0
  %1177 = vmatpush1.bf16.msra.mxu0 %v886
  %1178 = vmatprep.subr.bf16.mxu0 0
  %1179 = vmatpush1.bf16.msra.mxu0 %v887
  %1180 = vmatprep.subr.bf16.mxu0 0
  %1181 = vmatpush1.bf16.msra.mxu0 %v888
  %1182 = vmatprep.subr.bf16.mxu0 0
  %1183 = vmatpush1.bf16.msra.mxu0 %v889
  %1184 = vmatprep.subr.bf16.mxu0 0
  %1185 = vmatpush1.bf16.msra.mxu0 %v890
  %1186 = vmatprep.subr.bf16.mxu0 0
  %1187 = vmatpush1.bf16.msra.mxu0 %v891
  %1188 = vmatprep.mubr.bf16.mxu0 %v319
  %1189 = vmatmul.mubr.bf16.gmra.mrb[0].mxu0 %v318
  %v1190 = vpop.f32.mrb[0].mxu0
  %v1191 = vadd.f32 %v1151, %v1190
  %v1192 = vpop.f32.mrb[0].mxu0
  %v1193 = vpop.f32.mrb[0].mxu0
  %v1194 = vpop.f32.mrb[0].mxu0
  %1195 = vdwg.mxu0
  %1196 = vmatprep.subr.bf16.mxu0 0
  %1197 = vmatpush1.bf16.msra.mxu0 %v892
  %1198 = vmatprep.subr.bf16.mxu0 0
  %1199 = vmatpush1.bf16.msra.mxu0 %v893
  %1200 = vmatprep.subr.bf16.mxu0 0
  %1201 = vmatpush1.bf16.msra.mxu0 %v894
  %1202 = vmatprep.subr.bf16.mxu0 0
  %1203 = vmatpush1.bf16.msra.mxu0 %v895
  %1204 = vmatprep.subr.bf16.mxu0 0
  %1205 = vmatpush1.bf16.msra.mxu0 %v896
  %1206 = vmatprep.subr.bf16.mxu0 0
  %1207 = vmatpush1.bf16.msra.mxu0 %v897
  %1208 = vmatprep.subr.bf16.mxu0 0
  %1209 = vmatpush1.bf16.msra.mxu0 %v898
  %1210 = vmatprep.subr.bf16.mxu0 0
  %1211 = vmatpush1.bf16.msra.mxu0 %v899
  %1212 = vmatprep.subr.bf16.mxu0 0
  %1213 = vmatpush1.bf16.msra.mxu0 %v900
  %1214 = vmatprep.subr.bf16.mxu0 0
  %1215 = vmatpush1.bf16.msra.mxu0 %v901
  %1216 = vmatprep.subr.bf16.mxu0 0
  %1217 = vmatpush1.bf16.msra.mxu0 %v902
  %1218 = vmatprep.subr.bf16.mxu0 0
  %1219 = vmatpush1.bf16.msra.mxu0 %v903
  %1220 = vmatprep.subr.bf16.mxu0 0
  %1221 = vmatpush1.bf16.msra.mxu0 %v904
  %1222 = vmatprep.subr.bf16.mxu0 0
  %1223 = vmatpush1.bf16.msra.mxu0 %v905
  %1224 = vmatprep.subr.bf16.mxu0 0
  %1225 = vmatpush1.bf16.msra.mxu0 %v906
  %1226 = vmatprep.subr.bf16.mxu0 0
  %1227 = vmatpush1.bf16.msra.mxu0 %v907
  %1228 = vmatprep.mubr.bf16.mxu0 %v321
  %1229 = vmatmul.mubr.bf16.gmra.mrb[0].mxu0 %v320
  %v1230 = vpop.f32.mrb[0].mxu0
  %v1231 = vadd.f32 %v1191, %v1230
  %v1232 = vpop.f32.mrb[0].mxu0
  %v1233 = vpop.f32.mrb[0].mxu0
  %v1234 = vpop.f32.mrb[0].mxu0
  %1235 = vdwg.mxu0
  %1236 = vmatprep.subr.bf16.mxu0 0
  %1237 = vmatpush1.bf16.msra.mxu0 %v908
  %1238 = vmatprep.subr.bf16.mxu0 0
  %1239 = vmatpush1.bf16.msra.mxu0 %v909
  %1240 = vmatprep.subr.bf16.mxu0 0
  %1241 = vmatpush1.bf16.msra.mxu0 %v910
  %1242 = vmatprep.subr.bf16.mxu0 0
  %1243 = vmatpush1.bf16.msra.mxu0 %v911
  %1244 = vmatprep.subr.bf16.mxu0 0
  %1245 = vmatpush1.bf16.msra.mxu0 %v912
  %1246 = vmatprep.subr.bf16.mxu0 0
  %1247 = vmatpush1.bf16.msra.mxu0 %v913
  %1248 = vmatprep.subr.bf16.mxu0 0
  %1249 = vmatpush1.bf16.msra.mxu0 %v914
  %1250 = vmatprep.subr.bf16.mxu0 0
  %1251 = vmatpush1.bf16.msra.mxu0 %v915
  %1252 = vmatprep.subr.bf16.mxu0 0
  %1253 = vmatpush1.bf16.msra.mxu0 %v916
  %1254 = vmatprep.subr.bf16.mxu0 0
  %1255 = vmatpush1.bf16.msra.mxu0 %v917
  %1256 = vmatprep.subr.bf16.mxu0 0
  %1257 = vmatpush1.bf16.msra.mxu0 %v918
  %1258 = vmatprep.subr.bf16.mxu0 0
  %1259 = vmatpush1.bf16.msra.mxu0 %v919
  %1260 = vmatprep.subr.bf16.mxu0 0
  %1261 = vmatpush1.bf16.msra.mxu0 %v920
  %1262 = vmatprep.subr.bf16.mxu0 0
  %1263 = vmatpush1.bf16.msra.mxu0 %v921
  %1264 = vmatprep.subr.bf16.mxu0 0
  %1265 = vmatpush1.bf16.msra.mxu0 %v922
  %1266 = vmatprep.subr.bf16.mxu0 0
  %1267 = vmatpush1.bf16.msra.mxu0 %v923
  %1268 = vmatprep.mubr.bf16.mxu0 %v323
  %1269 = vmatmul.mubr.bf16.gmra.mrb[0].mxu0 %v322
  %v1270 = vpop.f32.mrb[0].mxu0
  %v1271 = vadd.f32 %v1231, %v1270
  %v1272 = vpop.f32.mrb[0].mxu0
  %v1273 = vpop.f32.mrb[0].mxu0
  %v1274 = vpop.f32.mrb[0].mxu0
  %1275 = vdwg.mxu0
  %1276 = vmatprep.subr.bf16.mxu0 0
  %1277 = vmatpush1.bf16.msra.mxu0 %v924
  %1278 = vmatprep.subr.bf16.mxu0 0
  %1279 = vmatpush1.bf16.msra.mxu0 %v925
  %1280 = vmatprep.subr.bf16.mxu0 0
  %1281 = vmatpush1.bf16.msra.mxu0 %v926
  %1282 = vmatprep.subr.bf16.mxu0 0
  %1283 = vmatpush1.bf16.msra.mxu0 %v927
  %1284 = vmatprep.subr.bf16.mxu0 0
  %1285 = vmatpush1.bf16.msra.mxu0 %v928
  %1286 = vmatprep.subr.bf16.mxu0 0
  %1287 = vmatpush1.bf16.msra.mxu0 %v929
  %1288 = vmatprep.subr.bf16.mxu0 0
  %1289 = vmatpush1.bf16.msra.mxu0 %v930
  %1290 = vmatprep.subr.bf16.mxu0 0
  %1291 = vmatpush1.bf16.msra.mxu0 %v931
  %1292 = vmatprep.subr.bf16.mxu0 0
  %1293 = vmatpush1.bf16.msra.mxu0 %v932
  %1294 = vmatprep.subr.bf16.mxu0 0
  %1295 = vmatpush1.bf16.msra.mxu0 %v933
  %1296 = vmatprep.subr.bf16.mxu0 0
  %1297 = vmatpush1.bf16.msra.mxu0 %v934
  %1298 = vmatprep.subr.bf16.mxu0 0
  %1299 = vmatpush1.bf16.msra.mxu0 %v935
  %1300 = vmatprep.subr.bf16.mxu0 0
  %1301 = vmatpush1.bf16.msra.mxu0 %v936
  %1302 = vmatprep.subr.bf16.mxu0 0
  %1303 = vmatpush1.bf16.msra.mxu0 %v937
  %1304 = vmatprep.subr.bf16.mxu0 0
  %1305 = vmatpush1.bf16.msra.mxu0 %v938
  %1306 = vmatprep.subr.bf16.mxu0 0
  %1307 = vmatpush1.bf16.msra.mxu0 %v939
  %1308 = vmatprep.mubr.bf16.mxu0 %v325
  %1309 = vmatmul.mubr.bf16.gmra.mrb[0].mxu0 %v324
  %v1310 = vpop.f32.mrb[0].mxu0
  %v1311 = vadd.f32 %v1271, %v1310
  %v1312 = vpop.f32.mrb[0].mxu0
  %v1313 = vpop.f32.mrb[0].mxu0
  %v1314 = vpop.f32.mrb[0].mxu0
  %1315 = vdwg.mxu0
  %1316 = vmatprep.subr.bf16.mxu0 0
  %1317 = vmatpush1.bf16.msra.mxu0 %v940
  %1318 = vmatprep.subr.bf16.mxu0 0
  %1319 = vmatpush1.bf16.msra.mxu0 %v941
  %1320 = vmatprep.subr.bf16.mxu0 0
  %1321 = vmatpush1.bf16.msra.mxu0 %v942
  %1322 = vmatprep.subr.bf16.mxu0 0
  %1323 = vmatpush1.bf16.msra.mxu0 %v943
  %1324 = vmatprep.subr.bf16.mxu0 0
  %1325 = vmatpush1.bf16.msra.mxu0 %v944
  %1326 = vmatprep.subr.bf16.mxu0 0
  %1327 = vmatpush1.bf16.msra.mxu0 %v945
  %1328 = vmatprep.subr.bf16.mxu0 0
  %1329 = vmatpush1.bf16.msra.mxu0 %v946
  %1330 = vmatprep.subr.bf16.mxu0 0
  %1331 = vmatpush1.bf16.msra.mxu0 %v947
  %1332 = vmatprep.subr.bf16.mxu0 0
  %1333 = vmatpush1.bf16.msra.mxu0 %v948
  %1334 = vmatprep.subr.bf16.mxu0 0
  %1335 = vmatpush1.bf16.msra.mxu0 %v949
  %1336 = vmatprep.subr.bf16.mxu0 0
  %1337 = vmatpush1.bf16.msra.mxu0 %v950
  %1338 = vmatprep.subr.bf16.mxu0 0
  %1339 = vmatpush1.bf16.msra.mxu0 %v951
  %1340 = vmatprep.subr.bf16.mxu0 0
  %1341 = vmatpush1.bf16.msra.mxu0 %v952
  %1342 = vmatprep.subr.bf16.mxu0 0
  %1343 = vmatpush1.bf16.msra.mxu0 %v953
  %1344 = vmatprep.subr.bf16.mxu0 0
  %1345 = vmatpush1.bf16.msra.mxu0 %v954
  %1346 = vmatprep.subr.bf16.mxu0 0
  %1347 = vmatpush1.bf16.msra.mxu0 %v955
  %1348 = vmatprep.mubr.bf16.mxu0 %v327
  %1349 = vmatmul.mubr.bf16.gmra.mrb[0].mxu0 %v326
  %v1350 = vpop.f32.mrb[0].mxu0
  %v1351 = vadd.f32 %v1311, %v1350
  %v1352 = vpop.f32.mrb[0].mxu0
  %v1353 = vpop.f32.mrb[0].mxu0
  %v1354 = vpop.f32.mrb[0].mxu0
  %1355 = vdwg.mxu0
  %1356 = vmatprep.subr.bf16.mxu0 0
  %1357 = vmatpush1.bf16.msra.mxu0 %v956
  %1358 = vmatprep.subr.bf16.mxu0 0
  %1359 = vmatpush1.bf16.msra.mxu0 %v957
  %1360 = vmatprep.subr.bf16.mxu0 0
  %1361 = vmatpush1.bf16.msra.mxu0 %v958
  %1362 = vmatprep.subr.bf16.mxu0 0
  %1363 = vmatpush1.bf16.msra.mxu0 %v959
  %1364 = vmatprep.subr.bf16.mxu0 0
  %1365 = vmatpush1.bf16.msra.mxu0 %v960
  %1366 = vmatprep.subr.bf16.mxu0 0
  %1367 = vmatpush1.bf16.msra.mxu0 %v961
  %1368 = vmatprep.subr.bf16.mxu0 0
  %1369 = vmatpush1.bf16.msra.mxu0 %v962
  %1370 = vmatprep.subr.bf16.mxu0 0
  %1371 = vmatpush1.bf16.msra.mxu0 %v963
  %1372 = vmatprep.subr.bf16.mxu0 0
  %1373 = vmatpush1.bf16.msra.mxu0 %v964
  %1374 = vmatprep.subr.bf16.mxu0 0
  %1375 = vmatpush1.bf16.msra.mxu0 %v965
  %1376 = vmatprep.subr.bf16.mxu0 0
  %1377 = vmatpush1.bf16.msra.mxu0 %v966
  %1378 = vmatprep.subr.bf16.mxu0 0
  %1379 = vmatpush1.bf16.msra.mxu0 %v967
  %1380 = vmatprep.subr.bf16.mxu0 0
  %1381 = vmatpush1.bf16.msra.mxu0 %v968
  %1382 = vmatprep.subr.bf16.mxu0 0
  %1383 = vmatpush1.bf16.msra.mxu0 %v969
  %1384 = vmatprep.subr.bf16.mxu0 0
  %1385 = vmatpush1.bf16.msra.mxu0 %v970
  %1386 = vmatprep.subr.bf16.mxu0 0
  %1387 = vmatpush1.bf16.msra.mxu0 %v971
  %1388 = vmatprep.mubr.bf16.mxu0 %v329
  %1389 = vmatmul.mubr.bf16.gmra.mrb[0].mxu0 %v328
  %v1390 = vpop.f32.mrb[0].mxu0
  %v1391 = vadd.f32 %v1351, %v1390
  %v1392 = vpop.f32.mrb[0].mxu0
  %v1393 = vpop.f32.mrb[0].mxu0
  %v1394 = vpop.f32.mrb[0].mxu0
  %1395 = vdwg.mxu0
  %1396 = vmatprep.subr.bf16.mxu0 0
  %1397 = vmatpush1.bf16.msra.mxu0 %v972
  %1398 = vmatprep.subr.bf16.mxu0 0
  %1399 = vmatpush1.bf16.msra.mxu0 %v973
  %1400 = vmatprep.subr.bf16.mxu0 0
  %1401 = vmatpush1.bf16.msra.mxu0 %v974
  %1402 = vmatprep.subr.bf16.mxu0 0
  %1403 = vmatpush1.bf16.msra.mxu0 %v975
  %1404 = vmatprep.subr.bf16.mxu0 0
  %1405 = vmatpush1.bf16.msra.mxu0 %v976
  %1406 = vmatprep.subr.bf16.mxu0 0
  %1407 = vmatpush1.bf16.msra.mxu0 %v977
  %1408 = vmatprep.subr.bf16.mxu0 0
  %1409 = vmatpush1.bf16.msra.mxu0 %v978
  %1410 = vmatprep.subr.bf16.mxu0 0
  %1411 = vmatpush1.bf16.msra.mxu0 %v979
  %1412 = vmatprep.subr.bf16.mxu0 0
  %1413 = vmatpush1.bf16.msra.mxu0 %v980
  %1414 = vmatprep.subr.bf16.mxu0 0
  %1415 = vmatpush1.bf16.msra.mxu0 %v981
  %1416 = vmatprep.subr.bf16.mxu0 0
  %1417 = vmatpush1.bf16.msra.mxu0 %v982
  %1418 = vmatprep.subr.bf16.mxu0 0
  %1419 = vmatpush1.bf16.msra.mxu0 %v983
  %1420 = vmatprep.subr.bf16.mxu0 0
  %1421 = vmatpush1.bf16.msra.mxu0 %v984
  %1422 = vmatprep.subr.bf16.mxu0 0
  %1423 = vmatpush1.bf16.msra.mxu0 %v985
  %1424 = vmatprep.subr.bf16.mxu0 0
  %1425 = vmatpush1.bf16.msra.mxu0 %v986
  %1426 = vmatprep.subr.bf16.mxu0 0
  %1427 = vmatpush1.bf16.msra.mxu0 %v987
  %1428 = vmatprep.mubr.bf16.mxu0 %v331
  %1429 = vmatmul.mubr.bf16.gmra.mrb[0].mxu0 %v330
  %v1430 = vpop.f32.mrb[0].mxu0
  %v1431 = vadd.f32 %v1391, %v1430
  %v1432 = vpop.f32.mrb[0].mxu0
  %v1433 = vpop.f32.mrb[0].mxu0
  %v1434 = vpop.f32.mrb[0].mxu0
  %1435 = vdwg.mxu0
  %v1436 = vpack.c.bf16 %v1431, %v1431
  %v1437 = vld [vmem:[%s3] sm:$0xf]
  %v1438 = vld [vmem:[%s3 + $0x4] sm:$0xf]
  %v1439 = vld [vmem:[%s3 + $0x8] sm:$0xf]
  %v1440 = vld [vmem:[%s3 + $0xc] sm:$0xf]
  %v1441 = vld [vmem:[%s3 + $0x10] sm:$0xf]
  %v1442 = vld [vmem:[%s3 + $0x14] sm:$0xf]
  %v1443 = vld [vmem:[%s3 + $0x18] sm:$0xf]
  %v1444 = vld [vmem:[%s3 + $0x1c] sm:$0xf]
  %v1445 = vld [vmem:[%s3 + $0x20] sm:$0xf]
  %v1446 = vld [vmem:[%s3 + $0x24] sm:$0xf]
  %v1447 = vld [vmem:[%s3 + $0x28] sm:$0xf]
  %v1448 = vld [vmem:[%s3 + $0x2c] sm:$0xf]
  %v1449 = vld [vmem:[%s3 + $0x30] sm:$0xf]
  %v1450 = vld [vmem:[%s3 + $0x34] sm:$0xf]
  %v1451 = vld [vmem:[%s3 + $0x38] sm:$0xf]
  %v1452 = vld [vmem:[%s3 + $0x3c] sm:$0xf]
  %v1453 = vld [vmem:[%s4] sm:$0x1]
  %v1455 = vlaneseq
  %v1456 = vshrl.u32 %v1455, 7
  %v1457 = vsub.s32 0, %v1456
  %v1458 = vrot.slane %v1453, %v1457
  %v1476 = vunpack.c.l.b16 %v1437
  %v1477 = vunpack.c.l.b16 %v1438
  %v1478 = vunpack.c.l.b16 %v1439
  %v1479 = vunpack.c.l.b16 %v1440
  %v1480 = vunpack.c.l.b16 %v1441
  %v1481 = vunpack.c.l.b16 %v1442
  %v1482 = vunpack.c.l.b16 %v1443
  %v1483 = vunpack.c.l.b16 %v1444
  %v1484 = vunpack.c.l.b16 %v1445
  %v1485 = vunpack.c.l.b16 %v1446
  %v1486 = vunpack.c.l.b16 %v1447
  %v1487 = vunpack.c.l.b16 %v1448
  %v1488 = vunpack.c.l.b16 %v1449
  %v1489 = vunpack.c.l.b16 %v1450
  %v1490 = vunpack.c.l.b16 %v1451
  %v1491 = vunpack.c.l.b16 %v1452
  %v1492 = vpack.c.b16 %v1477, %v1476
  %v1493 = vpack.c.b16 %v1479, %v1478
  %v1494 = vpack.c.b16 %v1481, %v1480
  %v1495 = vpack.c.b16 %v1483, %v1482
  %v1496 = vpack.c.b16 %v1485, %v1484
  %v1497 = vpack.c.b16 %v1487, %v1486
  %v1498 = vpack.c.b16 %v1489, %v1488
  %v1499 = vpack.c.b16 %v1491, %v1490
  %1508 = vmatprep.subr.bf16.mxu0 0
  %1509 = vmatpush1.bf16.msra.mxu0 %v1492
  %1510 = vmatprep.subr.bf16.mxu0 0
  %1511 = vmatpush1.bf16.msra.mxu0 %v1493
  %1512 = vmatprep.subr.bf16.mxu0 0
  %1513 = vmatpush1.bf16.msra.mxu0 %v1494
  %1514 = vmatprep.subr.bf16.mxu0 0
  %1515 = vmatpush1.bf16.msra.mxu0 %v1495
  %1516 = vmatprep.subr.bf16.mxu0 0
  %1517 = vmatpush1.bf16.msra.mxu0 %v1496
  %1518 = vmatprep.subr.bf16.mxu0 0
  %1519 = vmatpush1.bf16.msra.mxu0 %v1497
  %1520 = vmatprep.subr.bf16.mxu0 0
  %1521 = vmatpush1.bf16.msra.mxu0 %v1498
  %1522 = vmatprep.subr.bf16.mxu0 0
  %1523 = vmatpush1.bf16.msra.mxu0 %v1499
  %1524 = vmatprep.subr.bf16.mxu0 0
  %1525 = vmatpush1.bf16.msra.mxu0 0
  %1526 = vmatprep.subr.bf16.mxu0 0
  %1527 = vmatpush1.bf16.msra.mxu0 0
  %1528 = vmatprep.subr.bf16.mxu0 0
  %1529 = vmatpush1.bf16.msra.mxu0 0
  %1530 = vmatprep.subr.bf16.mxu0 0
  %1531 = vmatpush1.bf16.msra.mxu0 0
  %1532 = vmatprep.subr.bf16.mxu0 0
  %1533 = vmatpush1.bf16.msra.mxu0 0
  %1534 = vmatprep.subr.bf16.mxu0 0
  %1535 = vmatpush1.bf16.msra.mxu0 0
  %1536 = vmatprep.subr.bf16.mxu0 0
  %1537 = vmatpush1.bf16.msra.mxu0 0
  %1538 = vmatprep.subr.bf16.mxu0 0
  %1539 = vmatpush1.bf16.msra.mxu0 0
  %1540 = vmatprep.mubr.bf16.mxu0 0
  %1541 = vmatmul.mubr.bf16.gmra.mrb[0].mxu0 %v1436
  %v1542 = vpop.f32.mrb[0].mxu0
  %v1543 = vadd.f32 %v1458, %v1542
  %v1544 = vpop.f32.mrb[0].mxu0
  %v1545 = vpop.f32.mrb[0].mxu0
  %v1546 = vpop.f32.mrb[0].mxu0
  %1547 = vdwg.mxu0
  %1548 = vst [vmem:[%s5] sm:$0xff] %v1543
  // Predicated region
  $region22: #{mnist_cnn_forward.7} parent=0 // pred_check
    _
  $region23: #{mnist_cnn_forward.7} parent=0 // pred_check_branch
    %1550 = sbr.rel (0) target = $region25
  $region24: #{mnist_cnn_forward.7} parent=0 // pred_region
    _
  $region25: #{mnist_cnn_forward.7} parent=0 // pred_fallthru
    _
  // Predicated region
  $region26: #{mnist_cnn_forward.7} parent=0 // pred_check
    _
  $region27: #{mnist_cnn_forward.7} parent=0 // pred_check_branch
    %1552 = sbr.rel (0) target = $region29
  $region28: #{mnist_cnn_forward.7} parent=0 // pred_region
    _
  $region29: #{mnist_cnn_forward.7} parent=0 // pred_fallthru
    _

// kernel: mnist_cnn_forward.6
$region0: #{mnist_cnn_forward.6}
  #allocation0 [shape = 'u32[]', space=smem, size = 0x4, offset = 0x4, fixed_abs, tag = 'smem constant byte address 0x4 - core index']
  #allocation1 [shape = 'u32[144,128]{1,0:T(1,128)}', space=vmem, size = 0x12000, scoped, tag = 'internal scratch']
  %s0 = inlined_call_operand.vmem [shape: bf16[32,3200], index: 0, kind: input, shape index: {}]
  %s1 = inlined_call_operand.vmem [shape: bf16[3200,128], index: 1, kind: input, shape index: {}]
  %s2 = inlined_call_operand.vmem [shape: f32[1,128], index: 2, kind: input, shape index: {}]
  %s3 = inlined_call_operand.vmem [shape: bf16[32,128], index: 3, kind: output, shape index: {}]
  %s4 = sld [smem:[#allocation0]]
  $region22: #{mnist_cnn_forward.6} parent=0
    _
  %s6 = ssub.s32 1, %s4
  %s7 = scalar_select 0, %s6, %s4
  // Predicated region
  $region2: #{mnist_cnn_forward.6} parent=0 // pred_check
    _
  $region3: #{mnist_cnn_forward.6} parent=0 // pred_check_branch
    %9 = sbr.rel (0) target = $region5
  $region4: #{mnist_cnn_forward.6} parent=0 // pred_region
    _
  $region5: #{mnist_cnn_forward.6} parent=0 // pred_fallthru
    _
  // Predicated region
  $region6: #{mnist_cnn_forward.6} parent=0 // pred_check
    _
  $region7: #{mnist_cnn_forward.6} parent=0 // pred_check_branch
    %11 = sbr.rel (0) target = $region9
  $region8: #{mnist_cnn_forward.6} parent=0 // pred_region
    _
  $region9: #{mnist_cnn_forward.6} parent=0 // pred_fallthru
    _
  // Predicated region
  $region10: #{mnist_cnn_forward.6} parent=0 // pred_check
    _
  $region11: #{mnist_cnn_forward.6} parent=0 // pred_check_branch
    %13 = sbr.rel (0) target = $region13
  $region12: #{mnist_cnn_forward.6} parent=0 // pred_region
    _
  $region13: #{mnist_cnn_forward.6} parent=0 // pred_fallthru
    _
  %v15 = vld [vmem:[%s0] sm:$0xff]
  %v16 = vld [vmem:[%s0 + $0x8] sm:$0xff]
  %v17 = vld [vmem:[%s0 + $0x10] sm:$0xff]
  %v18 = vld [vmem:[%s0 + $0x18] sm:$0xff]
  %v19 = vld [vmem:[%s0 + $0x20] sm:$0xff]
  %v20 = vld [vmem:[%s0 + $0x28] sm:$0xff]
  %v21 = vld [vmem:[%s0 + $0x30] sm:$0xff]
  %v22 = vld [vmem:[%s0 + $0x38] sm:$0xff]
  %v23 = vld [vmem:[%s0 + $0x40] sm:$0xff]
  %v24 = vld [vmem:[%s0 + $0x48] sm:$0xff]
  %v25 = vld [vmem:[%s0 + $0x50] sm:$0xff]
  %v26 = vld [vmem:[%s0 + $0x58] sm:$0xff]
  %v27 = vld [vmem:[%s0 + $0x60] sm:$0xf]
  %v28 = vld [vmem:[%s0 + $0x64] sm:$0xff]
  %v29 = vld [vmem:[%s0 + $0x6c] sm:$0xff]
  %v30 = vld [vmem:[%s0 + $0x74] sm:$0xff]
  %v31 = vld [vmem:[%s0 + $0x7c] sm:$0xff]
  %v32 = vld [vmem:[%s0 + $0x84] sm:$0xff]
  %v33 = vld [vmem:[%s0 + $0x8c] sm:$0xff]
  %v34 = vld [vmem:[%s0 + $0x94] sm:$0xff]
  %v35 = vld [vmem:[%s0 + $0x9c] sm:$0xff]
  %v36 = vld [vmem:[%s0 + $0xa4] sm:$0xff]
  %v37 = vld [vmem:[%s0 + $0xac] sm:$0xff]
  %v38 = vld [vmem:[%s0 + $0xb4] sm:$0xff]
  %v39 = vld [vmem:[%s0 + $0xbc] sm:$0xff]
  %v40 = vld [vmem:[%s0 + $0xc4] sm:$0xf]
  %v41 = vld [vmem:[%s0 + $0xc8] sm:$0xff]
  %v42 = vld [vmem:[%s0 + $0xd0] sm:$0xff]
  %v43 = vld [vmem:[%s0 + $0xd8] sm:$0xff]
  %v44 = vld [vmem:[%s0 + $0xe0] sm:$0xff]
  %v45 = vld [vmem:[%s0 + $0xe8] sm:$0xff]
  %v46 = vld [vmem:[%s0 + $0xf0] sm:$0xff]
  %v47 = vld [vmem:[%s0 + $0xf8] sm:$0xff]
  %v48 = vld [vmem:[%s0 + $0x100] sm:$0xff]
  %v49 = vld [vmem:[%s0 + $0x108] sm:$0xff]
  %v50 = vld [vmem:[%s0 + $0x110] sm:$0xff]
  %v51 = vld [vmem:[%s0 + $0x118] sm:$0xff]
  %v52 = vld [vmem:[%s0 + $0x120] sm:$0xff]
  %v53 = vld [vmem:[%s0 + $0x128] sm:$0xf]
  %v54 = vld [vmem:[%s0 + $0x12c] sm:$0xff]
  %v55 = vld [vmem:[%s0 + $0x134] sm:$0xff]
  %v56 = vld [vmem:[%s0 + $0x13c] sm:$0xff]
  %v57 = vld [vmem:[%s0 + $0x144] sm:$0xff]
  %v58 = vld [vmem:[%s0 + $0x14c] sm:$0xff]
  %v59 = vld [vmem:[%s0 + $0x154] sm:$0xff]
  %v60 = vld [vmem:[%s0 + $0x15c] sm:$0xff]
  %v61 = vld [vmem:[%s0 + $0x164] sm:$0xff]
  %v62 = vld [vmem:[%s0 + $0x16c] sm:$0xff]
  %v63 = vld [vmem:[%s0 + $0x174] sm:$0xff]
  %v64 = vld [vmem:[%s0 + $0x17c] sm:$0xff]
  %v65 = vld [vmem:[%s0 + $0x184] sm:$0xff]
  %v66 = vld [vmem:[%s0 + $0x18c] sm:$0xf]
  %v67 = vld [vmem:[%s1] sm:$0xf]
  %v68 = vld [vmem:[%s1 + $0x4] sm:$0xf]
  %v69 = vld [vmem:[%s1 + $0x8] sm:$0xf]
  %v70 = vld [vmem:[%s1 + $0xc] sm:$0xf]
  %v71 = vld [vmem:[%s1 + $0x10] sm:$0xf]
  %v72 = vld [vmem:[%s1 + $0x14] sm:$0xf]
  %v73 = vld [vmem:[%s1 + $0x18] sm:$0xf]
  %v74 = vld [vmem:[%s1 + $0x1c] sm:$0xf]
  %v75 = vld [vmem:[%s1 + $0x20] sm:$0xf]
  %v76 = vld [vmem:[%s1 + $0x24] sm:$0xf]
  %v77 = vld [vmem:[%s1 + $0x28] sm:$0xf]
  %v78 = vld [vmem:[%s1 + $0x2c] sm:$0xf]
  %v79 = vld [vmem:[%s1 + $0x30] sm:$0xf]
  %v80 = vld [vmem:[%s1 + $0x34] sm:$0xf]
  %v81 = vld [vmem:[%s1 + $0x38] sm:$0xf]
  %v82 = vld [vmem:[%s1 + $0x3c] sm:$0xf]
  %v83 = vld [vmem:[%s1 + $0x40] sm:$0xf]
  %v84 = vld [vmem:[%s1 + $0x44] sm:$0xf]
  %v85 = vld [vmem:[%s1 + $0x48] sm:$0xf]
  %v86 = vld [vmem:[%s1 + $0x4c] sm:$0xf]
  %v87 = vld [vmem:[%s1 + $0x50] sm:$0xf]
  %v88 = vld [vmem:[%s1 + $0x54] sm:$0xf]
  %v89 = vld [vmem:[%s1 + $0x58] sm:$0xf]
  %v90 = vld [vmem:[%s1 + $0x5c] sm:$0xf]
  %v91 = vld [vmem:[%s1 + $0x60] sm:$0xf]
  %v92 = vld [vmem:[%s1 + $0x64] sm:$0xf]
  %v93 = vld [vmem:[%s1 + $0x68] sm:$0xf]
  %v94 = vld [vmem:[%s1 + $0x6c] sm:$0xf]
  %v95 = vld [vmem:[%s1 + $0x70] sm:$0xf]
  %v96 = vld [vmem:[%s1 + $0x74] sm:$0xf]
  %v97 = vld [vmem:[%s1 + $0x78] sm:$0xf]
  %v98 = vld [vmem:[%s1 + $0x7c] sm:$0xf]
  %v99 = vld [vmem:[%s1 + $0x80] sm:$0xf]
  %v100 = vld [vmem:[%s1 + $0x84] sm:$0xf]
  %v101 = vld [vmem:[%s1 + $0x88] sm:$0xf]
  %v102 = vld [vmem:[%s1 + $0x8c] sm:$0xf]
  %v103 = vld [vmem:[%s1 + $0x90] sm:$0xf]
  %v104 = vld [vmem:[%s1 + $0x94] sm:$0xf]
  %v105 = vld [vmem:[%s1 + $0x98] sm:$0xf]
  %v106 = vld [vmem:[%s1 + $0x9c] sm:$0xf]
  %v107 = vld [vmem:[%s1 + $0xa0] sm:$0xf]
  %v108 = vld [vmem:[%s1 + $0xa4] sm:$0xf]
  %v109 = vld [vmem:[%s1 + $0xa8] sm:$0xf]
  %v110 = vld [vmem:[%s1 + $0xac] sm:$0xf]
  %v111 = vld [vmem:[%s1 + $0xb0] sm:$0xf]
  %v112 = vld [vmem:[%s1 + $0xb4] sm:$0xf]
  %v113 = vld [vmem:[%s1 + $0xb8] sm:$0xf]
  %v114 = vld [vmem:[%s1 + $0xbc] sm:$0xf]
  %v115 = vld [vmem:[%s1 + $0xc0] sm:$0xf]
  %v116 = vld [vmem:[%s1 + $0xc4] sm:$0xf]
  %v117 = vld [vmem:[%s1 + $0xc8] sm:$0xf]
  %v118 = vld [vmem:[%s1 + $0xcc] sm:$0xf]
  %v119 = vld [vmem:[%s1 + $0xd0] sm:$0xf]
  %v120 = vld [vmem:[%s1 + $0xd4] sm:$0xf]
  %v121 = vld [vmem:[%s1 + $0xd8] sm:$0xf]
  %v122 = vld [vmem:[%s1 + $0xdc] sm:$0xf]
  %v123 = vld [vmem:[%s1 + $0xe0] sm:$0xf]
  %v124 = vld [vmem:[%s1 + $0xe4] sm:$0xf]
  %v125 = vld [vmem:[%s1 + $0xe8] sm:$0xf]
  %v126 = vld [vmem:[%s1 + $0xec] sm:$0xf]
  %v127 = vld [vmem:[%s1 + $0xf0] sm:$0xf]
  %v128 = vld [vmem:[%s1 + $0xf4] sm:$0xf]
  %v129 = vld [vmem:[%s1 + $0xf8] sm:$0xf]
  %v130 = vld [vmem:[%s1 + $0xfc] sm:$0xf]
  %v131 = vld [vmem:[%s1 + $0x100] sm:$0xf]
  %v132 = vld [vmem:[%s1 + $0x104] sm:$0xf]
  %v133 = vld [vmem:[%s1 + $0x108] sm:$0xf]
  %v134 = vld [vmem:[%s1 + $0x10c] sm:$0xf]
  %v135 = vld [vmem:[%s1 + $0x110] sm:$0xf]
  %v136 = vld [vmem:[%s1 + $0x114] sm:$0xf]
  %v137 = vld [vmem:[%s1 + $0x118] sm:$0xf]
  %v138 = vld [vmem:[%s1 + $0x11c] sm:$0xf]
  %v139 = vld [vmem:[%s1 + $0x120] sm:$0xf]
  %v140 = vld [vmem:[%s1 + $0x124] sm:$0xf]
  %v141 = vld [vmem:[%s1 + $0x128] sm:$0xf]
  %v142 = vld [vmem:[%s1 + $0x12c] sm:$0xf]
  %v143 = vld [vmem:[%s1 + $0x130] sm:$0xf]
  %v144 = vld [vmem:[%s1 + $0x134] sm:$0xf]
  %v145 = vld [vmem:[%s1 + $0x138] sm:$0xf]
  %v146 = vld [vmem:[%s1 + $0x13c] sm:$0xf]
  %v147 = vld [vmem:[%s1 + $0x140] sm:$0xf]
  %v148 = vld [vmem:[%s1 + $0x144] sm:$0xf]
  %v149 = vld [vmem:[%s1 + $0x148] sm:$0xf]
  %v150 = vld [vmem:[%s1 + $0x14c] sm:$0xf]
  %v151 = vld [vmem:[%s1 + $0x150] sm:$0xf]
  %v152 = vld [vmem:[%s1 + $0x154] sm:$0xf]
  %v153 = vld [vmem:[%s1 + $0x158] sm:$0xf]
  %v154 = vld [vmem:[%s1 + $0x15c] sm:$0xf]
  %v155 = vld [vmem:[%s1 + $0x160] sm:$0xf]
  %v156 = vld [vmem:[%s1 + $0x164] sm:$0xf]
  %v157 = vld [vmem:[%s1 + $0x168] sm:$0xf]
  %v158 = vld [vmem:[%s1 + $0x16c] sm:$0xf]
  %v159 = vld [vmem:[%s1 + $0x170] sm:$0xf]
  %v160 = vld [vmem:[%s1 + $0x174] sm:$0xf]
  %v161 = vld [vmem:[%s1 + $0x178] sm:$0xf]
  %v162 = vld [vmem:[%s1 + $0x17c] sm:$0xf]
  %v163 = vld [vmem:[%s1 + $0x180] sm:$0xf]
  %v164 = vld [vmem:[%s1 + $0x184] sm:$0xf]
  %v165 = vld [vmem:[%s1 + $0x188] sm:$0xf]
  %v166 = vld [vmem:[%s1 + $0x18c] sm:$0xf]
  %v167 = vld [vmem:[%s1 + $0x190] sm:$0xf]
  %v168 = vld [vmem:[%s1 + $0x194] sm:$0xf]
  %v169 = vld [vmem:[%s1 + $0x198] sm:$0xf]
  %v170 = vld [vmem:[%s1 + $0x19c] sm:$0xf]
  %v171 = vld [vmem:[%s1 + $0x1a0] sm:$0xf]
  %v172 = vld [vmem:[%s1 + $0x1a4] sm:$0xf]
  %v173 = vld [vmem:[%s1 + $0x1a8] sm:$0xf]
  %v174 = vld [vmem:[%s1 + $0x1ac] sm:$0xf]
  %v175 = vld [vmem:[%s1 + $0x1b0] sm:$0xf]
  %v176 = vld [vmem:[%s1 + $0x1b4] sm:$0xf]
  %v177 = vld [vmem:[%s1 + $0x1b8] sm:$0xf]
  %v178 = vld [vmem:[%s1 + $0x1bc] sm:$0xf]
  %v179 = vld [vmem:[%s1 + $0x1c0] sm:$0xf]
  %v180 = vld [vmem:[%s1 + $0x1c4] sm:$0xf]
  %v181 = vld [vmem:[%s1 + $0x1c8] sm:$0xf]
  %v182 = vld [vmem:[%s1 + $0x1cc] sm:$0xf]
  %v183 = vld [vmem:[%s1 + $0x1d0] sm:$0xf]
  %v184 = vld [vmem:[%s1 + $0x1d4] sm:$0xf]
  %v185 = vld [vmem:[%s1 + $0x1d8] sm:$0xf]
  %v186 = vld [vmem:[%s1 + $0x1dc] sm:$0xf]
  %v187 = vld [vmem:[%s1 + $0x1e0] sm:$0xf]
  %v188 = vld [vmem:[%s1 + $0x1e4] sm:$0xf]
  %v189 = vld [vmem:[%s1 + $0x1e8] sm:$0xf]
  %v190 = vld [vmem:[%s1 + $0x1ec] sm:$0xf]
  %v191 = vld [vmem:[%s1 + $0x1f0] sm:$0xf]
  %v192 = vld [vmem:[%s1 + $0x1f4] sm:$0xf]
  %v193 = vld [vmem:[%s1 + $0x1f8] sm:$0xf]
  %v194 = vld [vmem:[%s1 + $0x1fc] sm:$0xf]
  %v195 = vld [vmem:[%s1 + $0x200] sm:$0xf]
  %v196 = vld [vmem:[%s1 + $0x204] sm:$0xf]
  %v197 = vld [vmem:[%s1 + $0x208] sm:$0xf]
  %v198 = vld [vmem:[%s1 + $0x20c] sm:$0xf]
  %v199 = vld [vmem:[%s1 + $0x210] sm:$0xf]
  %v200 = vld [vmem:[%s1 + $0x214] sm:$0xf]
  %v201 = vld [vmem:[%s1 + $0x218] sm:$0xf]
  %v202 = vld [vmem:[%s1 + $0x21c] sm:$0xf]
  %v203 = vld [vmem:[%s1 + $0x220] sm:$0xf]
  %v204 = vld [vmem:[%s1 + $0x224] sm:$0xf]
  %v205 = vld [vmem:[%s1 + $0x228] sm:$0xf]
  %v206 = vld [vmem:[%s1 + $0x22c] sm:$0xf]
  %v207 = vld [vmem:[%s1 + $0x230] sm:$0xf]
  %v208 = vld [vmem:[%s1 + $0x234] sm:$0xf]
  %v209 = vld [vmem:[%s1 + $0x238] sm:$0xf]
  %v210 = vld [vmem:[%s1 + $0x23c] sm:$0xf]
  %v211 = vld [vmem:[%s1 + $0x240] sm:$0xf]
  %v212 = vld [vmem:[%s1 + $0x244] sm:$0xf]
  %v213 = vld [vmem:[%s1 + $0x248] sm:$0xf]
  %v214 = vld [vmem:[%s1 + $0x24c] sm:$0xf]
  %v215 = vld [vmem:[%s1 + $0x250] sm:$0xf]
  %v216 = vld [vmem:[%s1 + $0x254] sm:$0xf]
  %v217 = vld [vmem:[%s1 + $0x258] sm:$0xf]
  %v218 = vld [vmem:[%s1 + $0x25c] sm:$0xf]
  %v219 = vld [vmem:[%s1 + $0x260] sm:$0xf]
  %v220 = vld [vmem:[%s1 + $0x264] sm:$0xf]
  %v221 = vld [vmem:[%s1 + $0x268] sm:$0xf]
  %v222 = vld [vmem:[%s1 + $0x26c] sm:$0xf]
  %v223 = vld [vmem:[%s1 + $0x270] sm:$0xf]
  %v224 = vld [vmem:[%s1 + $0x274] sm:$0xf]
  %v225 = vld [vmem:[%s1 + $0x278] sm:$0xf]
  %v226 = vld [vmem:[%s1 + $0x27c] sm:$0xf]
  %v227 = vld [vmem:[%s1 + $0x280] sm:$0xf]
  %v228 = vld [vmem:[%s1 + $0x284] sm:$0xf]
  %v229 = vld [vmem:[%s1 + $0x288] sm:$0xf]
  %v230 = vld [vmem:[%s1 + $0x28c] sm:$0xf]
  %v231 = vld [vmem:[%s1 + $0x290] sm:$0xf]
  %v232 = vld [vmem:[%s1 + $0x294] sm:$0xf]
  %v233 = vld [vmem:[%s1 + $0x298] sm:$0xf]
  %v234 = vld [vmem:[%s1 + $0x29c] sm:$0xf]
  %v235 = vld [vmem:[%s1 + $0x2a0] sm:$0xf]
  %v236 = vld [vmem:[%s1 + $0x2a4] sm:$0xf]
  %v237 = vld [vmem:[%s1 + $0x2a8] sm:$0xf]
  %v238 = vld [vmem:[%s1 + $0x2ac] sm:$0xf]
  %v239 = vld [vmem:[%s1 + $0x2b0] sm:$0xf]
  %v240 = vld [vmem:[%s1 + $0x2b4] sm:$0xf]
  %v241 = vld [vmem:[%s1 + $0x2b8] sm:$0xf]
  %v242 = vld [vmem:[%s1 + $0x2bc] sm:$0xf]
  %v243 = vld [vmem:[%s1 + $0x2c0] sm:$0xf]
  %v244 = vld [vmem:[%s1 + $0x2c4] sm:$0xf]
  %v245 = vld [vmem:[%s1 + $0x2c8] sm:$0xf]
  %v246 = vld [vmem:[%s1 + $0x2cc] sm:$0xf]
  %v247 = vld [vmem:[%s1 + $0x2d0] sm:$0xf]
  %v248 = vld [vmem:[%s1 + $0x2d4] sm:$0xf]
  %v249 = vld [vmem:[%s1 + $0x2d8] sm:$0xf]
  %v250 = vld [vmem:[%s1 + $0x2dc] sm:$0xf]
  %v251 = vld [vmem:[%s1 + $0x2e0] sm:$0xf]
  %v252 = vld [vmem:[%s1 + $0x2e4] sm:$0xf]
  %v253 = vld [vmem:[%s1 + $0x2e8] sm:$0xf]
  %v254 = vld [vmem:[%s1 + $0x2ec] sm:$0xf]
  %v255 = vld [vmem:[%s1 + $0x2f0] sm:$0xf]
  %v256 = vld [vmem:[%s1 + $0x2f4] sm:$0xf]
  %v257 = vld [vmem:[%s1 + $0x2f8] sm:$0xf]
  %v258 = vld [vmem:[%s1 + $0x2fc] sm:$0xf]
  %v259 = vld [vmem:[%s1 + $0x300] sm:$0xf]
  %v260 = vld [vmem:[%s1 + $0x304] sm:$0xf]
  %v261 = vld [vmem:[%s1 + $0x308] sm:$0xf]
  %v262 = vld [vmem:[%s1 + $0x30c] sm:$0xf]
  %v263 = vld [vmem:[%s1 + $0x310] sm:$0xf]
  %v264 = vld [vmem:[%s1 + $0x314] sm:$0xf]
  %v265 = vld [vmem:[%s1 + $0x318] sm:$0xf]
  %v266 = vld [vmem:[%s1 + $0x31c] sm:$0xf]
  %v267 = vld [vmem:[%s1 + $0x320] sm:$0xf]
  %v268 = vld [vmem:[%s1 + $0x324] sm:$0xf]
  %v269 = vld [vmem:[%s1 + $0x328] sm:$0xf]
  %v270 = vld [vmem:[%s1 + $0x32c] sm:$0xf]
  %v271 = vld [vmem:[%s1 + $0x330] sm:$0xf]
  %v272 = vld [vmem:[%s1 + $0x334] sm:$0xf]
  %v273 = vld [vmem:[%s1 + $0x338] sm:$0xf]
  %v274 = vld [vmem:[%s1 + $0x33c] sm:$0xf]
  %v275 = vld [vmem:[%s1 + $0x340] sm:$0xf]
  %v276 = vld [vmem:[%s1 + $0x344] sm:$0xf]
  %v277 = vld [vmem:[%s1 + $0x348] sm:$0xf]
  %v278 = vld [vmem:[%s1 + $0x34c] sm:$0xf]
  %v279 = vld [vmem:[%s1 + $0x350] sm:$0xf]
  %v280 = vld [vmem:[%s1 + $0x354] sm:$0xf]
  %v281 = vld [vmem:[%s1 + $0x358] sm:$0xf]
  %v282 = vld [vmem:[%s1 + $0x35c] sm:$0xf]
  %v283 = vld [vmem:[%s1 + $0x360] sm:$0xf]
  %v284 = vld [vmem:[%s1 + $0x364] sm:$0xf]
  %v285 = vld [vmem:[%s1 + $0x368] sm:$0xf]
  %v286 = vld [vmem:[%s1 + $0x36c] sm:$0xf]
  %v287 = vld [vmem:[%s1 + $0x370] sm:$0xf]
  %v288 = vld [vmem:[%s1 + $0x374] sm:$0xf]
  %v289 = vld [vmem:[%s1 + $0x378] sm:$0xf]
  %v290 = vld [vmem:[%s1 + $0x37c] sm:$0xf]
  %v291 = vld [vmem:[%s1 + $0x380] sm:$0xf]
  %v292 = vld [vmem:[%s1 + $0x384] sm:$0xf]
  %v293 = vld [vmem:[%s1 + $0x388] sm:$0xf]
  %v294 = vld [vmem:[%s1 + $0x38c] sm:$0xf]
  %v295 = vld [vmem:[%s1 + $0x390] sm:$0xf]
  %v296 = vld [vmem:[%s1 + $0x394] sm:$0xf]
  %v297 = vld [vmem:[%s1 + $0x398] sm:$0xf]
  %v298 = vld [vmem:[%s1 + $0x39c] sm:$0xf]
  %v299 = vld [vmem:[%s1 + $0x3a0] sm:$0xf]
  %v300 = vld [vmem:[%s1 + $0x3a4] sm:$0xf]
  %v301 = vld [vmem:[%s1 + $0x3a8] sm:$0xf]
  %v302 = vld [vmem:[%s1 + $0x3ac] sm:$0xf]
  %v303 = vld [vmem:[%s1 + $0x3b0] sm:$0xf]
  %v304 = vld [vmem:[%s1 + $0x3b4] sm:$0xf]
  %v305 = vld [vmem:[%s1 + $0x3b8] sm:$0xf]
  %v306 = vld [vmem:[%s1 + $0x3bc] sm:$0xf]
  %v307 = vld [vmem:[%s1 + $0x3c0] sm:$0xf]
  %v308 = vld [vmem:[%s1 + $0x3c4] sm:$0xf]
  %v309 = vld [vmem:[%s1 + $0x3c8] sm:$0xf]
  %v310 = vld [vmem:[%s1 + $0x3cc] sm:$0xf]
  %v311 = vld [vmem:[%s1 + $0x3d0] sm:$0xf]
  %v312 = vld [vmem:[%s1 + $0x3d4] sm:$0xf]
  %v313 = vld [vmem:[%s1 + $0x3d8] sm:$0xf]
  %v314 = vld [vmem:[%s1 + $0x3dc] sm:$0xf]
  %v315 = vld [vmem:[%s1 + $0x3e0] sm:$0xf]
  %v316 = vld [vmem:[%s1 + $0x3e4] sm:$0xf]
  %v317 = vld [vmem:[%s1 + $0x3e8] sm:$0xf]
  %v318 = vld [vmem:[%s1 + $0x3ec] sm:$0xf]
  %v319 = vld [vmem:[%s1 + $0x3f0] sm:$0xf]
  %v320 = vld [vmem:[%s1 + $0x3f4] sm:$0xf]
  %v321 = vld [vmem:[%s1 + $0x3f8] sm:$0xf]
  %v322 = vld [vmem:[%s1 + $0x3fc] sm:$0xf]
  %v323 = vld [vmem:[%s1 + $0x400] sm:$0xf]
  %v324 = vld [vmem:[%s1 + $0x404] sm:$0xf]
  %v325 = vld [vmem:[%s1 + $0x408] sm:$0xf]
  %v326 = vld [vmem:[%s1 + $0x40c] sm:$0xf]
  %v327 = vld [vmem:[%s1 + $0x410] sm:$0xf]
  %v328 = vld [vmem:[%s1 + $0x414] sm:$0xf]
  %v329 = vld [vmem:[%s1 + $0x418] sm:$0xf]
  %v330 = vld [vmem:[%s1 + $0x41c] sm:$0xf]
  %v331 = vld [vmem:[%s1 + $0x420] sm:$0xf]
  %v332 = vld [vmem:[%s1 + $0x424] sm:$0xf]
  %v333 = vld [vmem:[%s1 + $0x428] sm:$0xf]
  %v334 = vld [vmem:[%s1 + $0x42c] sm:$0xf]
  %v335 = vld [vmem:[%s1 + $0x430] sm:$0xf]
  %v336 = vld [vmem:[%s1 + $0x434] sm:$0xf]
  %v337 = vld [vmem:[%s1 + $0x438] sm:$0xf]
  %v338 = vld [vmem:[%s1 + $0x43c] sm:$0xf]
  %v339 = vld [vmem:[%s1 + $0x440] sm:$0xf]
  %v340 = vld [vmem:[%s1 + $0x444] sm:$0xf]
  %v341 = vld [vmem:[%s1 + $0x448] sm:$0xf]
  %v342 = vld [vmem:[%s1 + $0x44c] sm:$0xf]
  %v343 = vld [vmem:[%s1 + $0x450] sm:$0xf]
  %v344 = vld [vmem:[%s1 + $0x454] sm:$0xf]
  %v345 = vld [vmem:[%s1 + $0x458] sm:$0xf]
  %v346 = vld [vmem:[%s1 + $0x45c] sm:$0xf]
  %v347 = vld [vmem:[%s1 + $0x460] sm:$0xf]
  %v348 = vld [vmem:[%s1 + $0x464] sm:$0xf]
  %v349 = vld [vmem:[%s1 + $0x468] sm:$0xf]
  %v350 = vld [vmem:[%s1 + $0x46c] sm:$0xf]
  %v351 = vld [vmem:[%s1 + $0x470] sm:$0xf]
  %v352 = vld [vmem:[%s1 + $0x474] sm:$0xf]
  %v353 = vld [vmem:[%s1 + $0x478] sm:$0xf]
  %v354 = vld [vmem:[%s1 + $0x47c] sm:$0xf]
  %v355 = vld [vmem:[%s1 + $0x480] sm:$0xf]
  %v356 = vld [vmem:[%s1 + $0x484] sm:$0xf]
  %v357 = vld [vmem:[%s1 + $0x488] sm:$0xf]
  %v358 = vld [vmem:[%s1 + $0x48c] sm:$0xf]
  %v359 = vld [vmem:[%s1 + $0x490] sm:$0xf]
  %v360 = vld [vmem:[%s1 + $0x494] sm:$0xf]
  %v361 = vld [vmem:[%s1 + $0x498] sm:$0xf]
  %v362 = vld [vmem:[%s1 + $0x49c] sm:$0xf]
  %v363 = vld [vmem:[%s1 + $0x4a0] sm:$0xf]
  %v364 = vld [vmem:[%s1 + $0x4a4] sm:$0xf]
  %v365 = vld [vmem:[%s1 + $0x4a8] sm:$0xf]
  %v366 = vld [vmem:[%s1 + $0x4ac] sm:$0xf]
  %v367 = vld [vmem:[%s1 + $0x4b0] sm:$0xf]
  %v368 = vld [vmem:[%s1 + $0x4b4] sm:$0xf]
  %v369 = vld [vmem:[%s1 + $0x4b8] sm:$0xf]
  %v370 = vld [vmem:[%s1 + $0x4bc] sm:$0xf]
  %v371 = vld [vmem:[%s1 + $0x4c0] sm:$0xf]
  %v372 = vld [vmem:[%s1 + $0x4c4] sm:$0xf]
  %v373 = vld [vmem:[%s1 + $0x4c8] sm:$0xf]
  %v374 = vld [vmem:[%s1 + $0x4cc] sm:$0xf]
  %v375 = vld [vmem:[%s1 + $0x4d0] sm:$0xf]
  %v376 = vld [vmem:[%s1 + $0x4d4] sm:$0xf]
  %v377 = vld [vmem:[%s1 + $0x4d8] sm:$0xf]
  %v378 = vld [vmem:[%s1 + $0x4dc] sm:$0xf]
  %v379 = vld [vmem:[%s1 + $0x4e0] sm:$0xf]
  %v380 = vld [vmem:[%s1 + $0x4e4] sm:$0xf]
  %v381 = vld [vmem:[%s1 + $0x4e8] sm:$0xf]
  %v382 = vld [vmem:[%s1 + $0x4ec] sm:$0xf]
  %v383 = vld [vmem:[%s1 + $0x4f0] sm:$0xf]
  %v384 = vld [vmem:[%s1 + $0x4f4] sm:$0xf]
  %v385 = vld [vmem:[%s1 + $0x4f8] sm:$0xf]
  %v386 = vld [vmem:[%s1 + $0x4fc] sm:$0xf]
  %v387 = vld [vmem:[%s1 + $0x500] sm:$0xf]
  %v388 = vld [vmem:[%s1 + $0x504] sm:$0xf]
  %v389 = vld [vmem:[%s1 + $0x508] sm:$0xf]
  %v390 = vld [vmem:[%s1 + $0x50c] sm:$0xf]
  %v391 = vld [vmem:[%s1 + $0x510] sm:$0xf]
  %v392 = vld [vmem:[%s1 + $0x514] sm:$0xf]
  %v393 = vld [vmem:[%s1 + $0x518] sm:$0xf]
  %v394 = vld [vmem:[%s1 + $0x51c] sm:$0xf]
  %v395 = vld [vmem:[%s1 + $0x520] sm:$0xf]
  %v396 = vld [vmem:[%s1 + $0x524] sm:$0xf]
  %v397 = vld [vmem:[%s1 + $0x528] sm:$0xf]
  %v398 = vld [vmem:[%s1 + $0x52c] sm:$0xf]
  %v399 = vld [vmem:[%s1 + $0x530] sm:$0xf]
  %v400 = vld [vmem:[%s1 + $0x534] sm:$0xf]
  %v401 = vld [vmem:[%s1 + $0x538] sm:$0xf]
  %v402 = vld [vmem:[%s1 + $0x53c] sm:$0xf]
  %v403 = vld [vmem:[%s1 + $0x540] sm:$0xf]
  %v404 = vld [vmem:[%s1 + $0x544] sm:$0xf]
  %v405 = vld [vmem:[%s1 + $0x548] sm:$0xf]
  %v406 = vld [vmem:[%s1 + $0x54c] sm:$0xf]
  %v407 = vld [vmem:[%s1 + $0x550] sm:$0xf]
  %v408 = vld [vmem:[%s1 + $0x554] sm:$0xf]
  %v409 = vld [vmem:[%s1 + $0x558] sm:$0xf]
  %v410 = vld [vmem:[%s1 + $0x55c] sm:$0xf]
  %v411 = vld [vmem:[%s1 + $0x560] sm:$0xf]
  %v412 = vld [vmem:[%s1 + $0x564] sm:$0xf]
  %v413 = vld [vmem:[%s1 + $0x568] sm:$0xf]
  %v414 = vld [vmem:[%s1 + $0x56c] sm:$0xf]
  %v415 = vld [vmem:[%s1 + $0x570] sm:$0xf]
  %v416 = vld [vmem:[%s1 + $0x574] sm:$0xf]
  %v417 = vld [vmem:[%s1 + $0x578] sm:$0xf]
  %v418 = vld [vmem:[%s1 + $0x57c] sm:$0xf]
  %v419 = vld [vmem:[%s1 + $0x580] sm:$0xf]
  %v420 = vld [vmem:[%s1 + $0x584] sm:$0xf]
  %v421 = vld [vmem:[%s1 + $0x588] sm:$0xf]
  %v422 = vld [vmem:[%s1 + $0x58c] sm:$0xf]
  %v423 = vld [vmem:[%s1 + $0x590] sm:$0xf]
  %v424 = vld [vmem:[%s1 + $0x594] sm:$0xf]
  %v425 = vld [vmem:[%s1 + $0x598] sm:$0xf]
  %v426 = vld [vmem:[%s1 + $0x59c] sm:$0xf]
  %v427 = vld [vmem:[%s1 + $0x5a0] sm:$0xf]
  %v428 = vld [vmem:[%s1 + $0x5a4] sm:$0xf]
  %v429 = vld [vmem:[%s1 + $0x5a8] sm:$0xf]
  %v430 = vld [vmem:[%s1 + $0x5ac] sm:$0xf]
  %v431 = vld [vmem:[%s1 + $0x5b0] sm:$0xf]
  %v432 = vld [vmem:[%s1 + $0x5b4] sm:$0xf]
  %v433 = vld [vmem:[%s1 + $0x5b8] sm:$0xf]
  %v434 = vld [vmem:[%s1 + $0x5bc] sm:$0xf]
  %v435 = vld [vmem:[%s1 + $0x5c0] sm:$0xf]
  %v436 = vld [vmem:[%s1 + $0x5c4] sm:$0xf]
  %v437 = vld [vmem:[%s1 + $0x5c8] sm:$0xf]
  %v438 = vld [vmem:[%s1 + $0x5cc] sm:$0xf]
  %v439 = vld [vmem:[%s1 + $0x5d0] sm:$0xf]
  %v440 = vld [vmem:[%s1 + $0x5d4] sm:$0xf]
  %v441 = vld [vmem:[%s1 + $0x5d8] sm:$0xf]
  %v442 = vld [vmem:[%s1 + $0x5dc] sm:$0xf]
  %v443 = vld [vmem:[%s1 + $0x5e0] sm:$0xf]
  %v444 = vld [vmem:[%s1 + $0x5e4] sm:$0xf]
  %v445 = vld [vmem:[%s1 + $0x5e8] sm:$0xf]
  %v446 = vld [vmem:[%s1 + $0x5ec] sm:$0xf]
  %v447 = vld [vmem:[%s1 + $0x5f0] sm:$0xf]
  %v448 = vld [vmem:[%s1 + $0x5f4] sm:$0xf]
  %v449 = vld [vmem:[%s1 + $0x5f8] sm:$0xf]
  %v450 = vld [vmem:[%s1 + $0x5fc] sm:$0xf]
  %v451 = vld [vmem:[%s1 + $0x600] sm:$0xf]
  %v452 = vld [vmem:[%s1 + $0x604] sm:$0xf]
  %v453 = vld [vmem:[%s1 + $0x608] sm:$0xf]
  %v454 = vld [vmem:[%s1 + $0x60c] sm:$0xf]
  %v455 = vld [vmem:[%s1 + $0x610] sm:$0xf]
  %v456 = vld [vmem:[%s1 + $0x614] sm:$0xf]
  %v457 = vld [vmem:[%s1 + $0x618] sm:$0xf]
  %v458 = vld [vmem:[%s1 + $0x61c] sm:$0xf]
  %v459 = vld [vmem:[%s1 + $0x620] sm:$0xf]
  %v460 = vld [vmem:[%s1 + $0x624] sm:$0xf]
  %v461 = vld [vmem:[%s1 + $0x628] sm:$0xf]
  %v462 = vld [vmem:[%s1 + $0x62c] sm:$0xf]
  %v463 = vld [vmem:[%s1 + $0x630] sm:$0xf]
  %v464 = vld [vmem:[%s1 + $0x634] sm:$0xf]
  %v465 = vld [vmem:[%s1 + $0x638] sm:$0xf]
  %v466 = vld [vmem:[%s1 + $0x63c] sm:$0xf]
  %v467 = vld [vmem:[%s2] sm:$0x1]
  %v469 = vlaneseq
  %v470 = vshrl.u32 %v469, 7
  %v471 = vsub.s32 0, %v470
  %v472 = vrot.slane %v467, %v471
  %v526 = vunpack.c.l.b16 %v15
  %v527 = vunpack.c.h.b16 %v15
  %v528 = vunpack.c.l.b16 %v16
  %v529 = vunpack.c.h.b16 %v16
  %v530 = vunpack.c.l.b16 %v17
  %v531 = vunpack.c.h.b16 %v17
  %v532 = vunpack.c.l.b16 %v18
  %v533 = vunpack.c.h.b16 %v18
  %v534 = vunpack.c.l.b16 %v19
  %v535 = vunpack.c.h.b16 %v19
  %v536 = vunpack.c.l.b16 %v20
  %v537 = vunpack.c.h.b16 %v20
  %v538 = vunpack.c.l.b16 %v21
  %v539 = vunpack.c.h.b16 %v21
  %v540 = vunpack.c.l.b16 %v22
  %v541 = vunpack.c.h.b16 %v22
  %v542 = vunpack.c.l.b16 %v23
  %v543 = vunpack.c.h.b16 %v23
  %v544 = vunpack.c.l.b16 %v24
  %v545 = vunpack.c.h.b16 %v24
  %v546 = vunpack.c.l.b16 %v25
  %v547 = vunpack.c.h.b16 %v25
  %v548 = vunpack.c.l.b16 %v26
  %v549 = vunpack.c.h.b16 %v26
  %v550 = vunpack.c.l.b16 %v27
  %v551 = vunpack.c.l.b16 %v28
  %v552 = vunpack.c.h.b16 %v28
  %v553 = vunpack.c.l.b16 %v29
  %v554 = vunpack.c.h.b16 %v29
  %v555 = vunpack.c.l.b16 %v30
  %v556 = vunpack.c.h.b16 %v30
  %v557 = vunpack.c.l.b16 %v31
  %v558 = vunpack.c.h.b16 %v31
  %v559 = vunpack.c.l.b16 %v32
  %v560 = vunpack.c.h.b16 %v32
  %v561 = vunpack.c.l.b16 %v33
  %v562 = vunpack.c.h.b16 %v33
  %v563 = vunpack.c.l.b16 %v34
  %v564 = vunpack.c.h.b16 %v34
  %v565 = vunpack.c.l.b16 %v35
  %v566 = vunpack.c.h.b16 %v35
  %v567 = vunpack.c.l.b16 %v36
  %v568 = vunpack.c.h.b16 %v36
  %v569 = vunpack.c.l.b16 %v37
  %v570 = vunpack.c.h.b16 %v37
  %v571 = vunpack.c.l.b16 %v38
  %v572 = vunpack.c.h.b16 %v38
  %v573 = vunpack.c.l.b16 %v39
  %v574 = vunpack.c.h.b16 %v39
  %v575 = vunpack.c.l.b16 %v40
  %v576 = vunpack.c.l.b16 %v41
  %v577 = vunpack.c.h.b16 %v41
  %v578 = vunpack.c.l.b16 %v42
  %v579 = vunpack.c.h.b16 %v42
  %v580 = vunpack.c.l.b16 %v43
  %v581 = vunpack.c.h.b16 %v43
  %v582 = vunpack.c.l.b16 %v44
  %v583 = vunpack.c.h.b16 %v44
  %v584 = vunpack.c.l.b16 %v45
  %v585 = vunpack.c.h.b16 %v45
  %v586 = vunpack.c.l.b16 %v46
  %v587 = vunpack.c.h.b16 %v46
  %v588 = vunpack.c.l.b16 %v47
  %v589 = vunpack.c.h.b16 %v47
  %v590 = vunpack.c.l.b16 %v48
  %v591 = vunpack.c.h.b16 %v48
  %v592 = vunpack.c.l.b16 %v49
  %v593 = vunpack.c.h.b16 %v49
  %v594 = vunpack.c.l.b16 %v50
  %v595 = vunpack.c.h.b16 %v50
  %v596 = vunpack.c.l.b16 %v51
  %v597 = vunpack.c.h.b16 %v51
  %v598 = vunpack.c.l.b16 %v52
  %v599 = vunpack.c.h.b16 %v52
  %v600 = vunpack.c.l.b16 %v53
  %v601 = vunpack.c.l.b16 %v54
  %v602 = vunpack.c.h.b16 %v54
  %v603 = vunpack.c.l.b16 %v55
  %v604 = vunpack.c.h.b16 %v55
  %v605 = vunpack.c.l.b16 %v56
  %v606 = vunpack.c.h.b16 %v56
  %v607 = vunpack.c.l.b16 %v57
  %v608 = vunpack.c.h.b16 %v57
  %v609 = vunpack.c.l.b16 %v58
  %v610 = vunpack.c.h.b16 %v58
  %v611 = vunpack.c.l.b16 %v59
  %v612 = vunpack.c.h.b16 %v59
  %v613 = vunpack.c.l.b16 %v60
  %v614 = vunpack.c.h.b16 %v60
  %v615 = vunpack.c.l.b16 %v61
  %v616 = vunpack.c.h.b16 %v61
  %v617 = vunpack.c.l.b16 %v62
  %v618 = vunpack.c.h.b16 %v62
  %v619 = vunpack.c.l.b16 %v63
  %v620 = vunpack.c.h.b16 %v63
  %v621 = vunpack.c.l.b16 %v64
  %v622 = vunpack.c.h.b16 %v64
  %v623 = vunpack.c.l.b16 %v65
  %v624 = vunpack.c.h.b16 %v65
  %v625 = vunpack.c.l.b16 %v66
  %v626 = vpack.c.b16 %v551, %v526
  %v627 = vpack.c.b16 %v552, %v527
  %v628 = vpack.c.b16 %v553, %v528
  %v629 = vpack.c.b16 %v554, %v529
  %v630 = vpack.c.b16 %v555, %v530
  %v631 = vpack.c.b16 %v556, %v531
  %v632 = vpack.c.b16 %v557, %v532
  %v633 = vpack.c.b16 %v558, %v533
  %v634 = vpack.c.b16 %v559, %v534
  %v635 = vpack.c.b16 %v560, %v535
  %v636 = vpack.c.b16 %v561, %v536
  %v637 = vpack.c.b16 %v562, %v537
  %v638 = vpack.c.b16 %v563, %v538
  %v639 = vpack.c.b16 %v564, %v539
  %v640 = vpack.c.b16 %v565, %v540
  %v641 = vpack.c.b16 %v566, %v541
  %v642 = vpack.c.b16 %v567, %v542
  %v643 = vpack.c.b16 %v568, %v543
  %v644 = vpack.c.b16 %v569, %v544
  %v645 = vpack.c.b16 %v570, %v545
  %v646 = vpack.c.b16 %v571, %v546
  %v647 = vpack.c.b16 %v572, %v547
  %v648 = vpack.c.b16 %v573, %v548
  %v649 = vpack.c.b16 %v574, %v549
  %v650 = vpack.c.b16 %v575, %v550
  %v651 = vpack.c.b16 %v601, %v576
  %v652 = vpack.c.b16 %v602, %v577
  %v653 = vpack.c.b16 %v603, %v578
  %v654 = vpack.c.b16 %v604, %v579
  %v655 = vpack.c.b16 %v605, %v580
  %v656 = vpack.c.b16 %v606, %v581
  %v657 = vpack.c.b16 %v607, %v582
  %v658 = vpack.c.b16 %v608, %v583
  %v659 = vpack.c.b16 %v609, %v584
  %v660 = vpack.c.b16 %v610, %v585
  %v661 = vpack.c.b16 %v611, %v586
  %v662 = vpack.c.b16 %v612, %v587
  %v663 = vpack.c.b16 %v613, %v588
  %v664 = vpack.c.b16 %v614, %v589
  %v665 = vpack.c.b16 %v615, %v590
  %v666 = vpack.c.b16 %v616, %v591
  %v667 = vpack.c.b16 %v617, %v592
  %v668 = vpack.c.b16 %v618, %v593
  %v669 = vpack.c.b16 %v619, %v594
  %v670 = vpack.c.b16 %v620, %v595
  %v671 = vpack.c.b16 %v621, %v596
  %v672 = vpack.c.b16 %v622, %v597
  %v673 = vpack.c.b16 %v623, %v598
  %v674 = vpack.c.b16 %v624, %v599
  %v675 = vpack.c.b16 %v625, %v600
  %v1126 = vunpack.c.l.b16 %v67
  %v1127 = vunpack.c.l.b16 %v68
  %v1128 = vunpack.c.l.b16 %v69
  %v1129 = vunpack.c.l.b16 %v70
  %v1130 = vunpack.c.l.b16 %v71
  %v1131 = vunpack.c.l.b16 %v72
  %v1132 = vunpack.c.l.b16 %v73
  %v1133 = vunpack.c.l.b16 %v74
  %v1134 = vunpack.c.l.b16 %v75
  %v1135 = vunpack.c.l.b16 %v76
  %v1136 = vunpack.c.l.b16 %v77
  %v1137 = vunpack.c.l.b16 %v78
  %v1138 = vunpack.c.l.b16 %v79
  %v1139 = vunpack.c.l.b16 %v80
  %v1140 = vunpack.c.l.b16 %v81
  %v1141 = vunpack.c.l.b16 %v82
  %v1142 = vunpack.c.l.b16 %v83
  %v1143 = vunpack.c.l.b16 %v84
  %v1144 = vunpack.c.l.b16 %v85
  %v1145 = vunpack.c.l.b16 %v86
  %v1146 = vunpack.c.l.b16 %v87
  %v1147 = vunpack.c.l.b16 %v88
  %v1148 = vunpack.c.l.b16 %v89
  %v1149 = vunpack.c.l.b16 %v90
  %v1150 = vunpack.c.l.b16 %v91
  %v1151 = vunpack.c.l.b16 %v92
  %v1152 = vunpack.c.l.b16 %v93
  %v1153 = vunpack.c.l.b16 %v94
  %v1154 = vunpack.c.l.b16 %v95
  %v1155 = vunpack.c.l.b16 %v96
  %v1156 = vunpack.c.l.b16 %v97
  %v1157 = vunpack.c.l.b16 %v98
  %v1158 = vunpack.c.l.b16 %v99
  %v1159 = vunpack.c.l.b16 %v100
  %v1160 = vunpack.c.l.b16 %v101
  %v1161 = vunpack.c.l.b16 %v102
  %v1162 = vunpack.c.l.b16 %v103
  %v1163 = vunpack.c.l.b16 %v104
  %v1164 = vunpack.c.l.b16 %v105
  %v1165 = vunpack.c.l.b16 %v106
  %v1166 = vunpack.c.l.b16 %v107
  %v1167 = vunpack.c.l.b16 %v108
  %v1168 = vunpack.c.l.b16 %v109
  %v1169 = vunpack.c.l.b16 %v110
  %v1170 = vunpack.c.l.b16 %v111
  %v1171 = vunpack.c.l.b16 %v112
  %v1172 = vunpack.c.l.b16 %v113
  %v1173 = vunpack.c.l.b16 %v114
  %v1174 = vunpack.c.l.b16 %v115
  %v1175 = vunpack.c.l.b16 %v116
  %v1176 = vunpack.c.l.b16 %v117
  %v1177 = vunpack.c.l.b16 %v118
  %v1178 = vunpack.c.l.b16 %v119
  %v1179 = vunpack.c.l.b16 %v120
  %v1180 = vunpack.c.l.b16 %v121
  %v1181 = vunpack.c.l.b16 %v122
  %v1182 = vunpack.c.l.b16 %v123
  %v1183 = vunpack.c.l.b16 %v124
  %v1184 = vunpack.c.l.b16 %v125
  %v1185 = vunpack.c.l.b16 %v126
  %v1186 = vunpack.c.l.b16 %v127
  %v1187 = vunpack.c.l.b16 %v128
  %v1188 = vunpack.c.l.b16 %v129
  %v1189 = vunpack.c.l.b16 %v130
  %v1190 = vunpack.c.l.b16 %v131
  %v1191 = vunpack.c.l.b16 %v132
  %v1192 = vunpack.c.l.b16 %v133
  %v1193 = vunpack.c.l.b16 %v134
  %v1194 = vunpack.c.l.b16 %v135
  %v1195 = vunpack.c.l.b16 %v136
  %v1196 = vunpack.c.l.b16 %v137
  %v1197 = vunpack.c.l.b16 %v138
  %v1198 = vunpack.c.l.b16 %v139
  %v1199 = vunpack.c.l.b16 %v140
  %v1200 = vunpack.c.l.b16 %v141
  %v1201 = vunpack.c.l.b16 %v142
  %v1202 = vunpack.c.l.b16 %v143
  %v1203 = vunpack.c.l.b16 %v144
  %v1204 = vunpack.c.l.b16 %v145
  %v1205 = vunpack.c.l.b16 %v146
  %v1206 = vunpack.c.l.b16 %v147
  %v1207 = vunpack.c.l.b16 %v148
  %v1208 = vunpack.c.l.b16 %v149
  %v1209 = vunpack.c.l.b16 %v150
  %v1210 = vunpack.c.l.b16 %v151
  %v1211 = vunpack.c.l.b16 %v152
  %v1212 = vunpack.c.l.b16 %v153
  %v1213 = vunpack.c.l.b16 %v154
  %v1214 = vunpack.c.l.b16 %v155
  %v1215 = vunpack.c.l.b16 %v156
  %v1216 = vunpack.c.l.b16 %v157
  %v1217 = vunpack.c.l.b16 %v158
  %v1218 = vunpack.c.l.b16 %v159
  %v1219 = vunpack.c.l.b16 %v160
  %v1220 = vunpack.c.l.b16 %v161
  %v1221 = vunpack.c.l.b16 %v162
  %v1222 = vunpack.c.l.b16 %v163
  %v1223 = vunpack.c.l.b16 %v164
  %v1224 = vunpack.c.l.b16 %v165
  %v1225 = vunpack.c.l.b16 %v166
  %v1226 = vunpack.c.l.b16 %v167
  %v1227 = vunpack.c.l.b16 %v168
  %v1228 = vunpack.c.l.b16 %v169
  %v1229 = vunpack.c.l.b16 %v170
  %v1230 = vunpack.c.l.b16 %v171
  %v1231 = vunpack.c.l.b16 %v172
  %v1232 = vunpack.c.l.b16 %v173
  %v1233 = vunpack.c.l.b16 %v174
  %v1234 = vunpack.c.l.b16 %v175
  %v1235 = vunpack.c.l.b16 %v176
  %v1236 = vunpack.c.l.b16 %v177
  %v1237 = vunpack.c.l.b16 %v178
  %v1238 = vunpack.c.l.b16 %v179
  %v1239 = vunpack.c.l.b16 %v180
  %v1240 = vunpack.c.l.b16 %v181
  %v1241 = vunpack.c.l.b16 %v182
  %v1242 = vunpack.c.l.b16 %v183
  %v1243 = vunpack.c.l.b16 %v184
  %v1244 = vunpack.c.l.b16 %v185
  %v1245 = vunpack.c.l.b16 %v186
  %v1246 = vunpack.c.l.b16 %v187
  %v1247 = vunpack.c.l.b16 %v188
  %v1248 = vunpack.c.l.b16 %v189
  %v1249 = vunpack.c.l.b16 %v190
  %v1250 = vunpack.c.l.b16 %v191
  %v1251 = vunpack.c.l.b16 %v192
  %v1252 = vunpack.c.l.b16 %v193
  %v1253 = vunpack.c.l.b16 %v194
  %v1254 = vunpack.c.l.b16 %v195
  %v1255 = vunpack.c.l.b16 %v196
  %v1256 = vunpack.c.l.b16 %v197
  %v1257 = vunpack.c.l.b16 %v198
  %v1258 = vunpack.c.l.b16 %v199
  %v1259 = vunpack.c.l.b16 %v200
  %v1260 = vunpack.c.l.b16 %v201
  %v1261 = vunpack.c.l.b16 %v202
  %v1262 = vunpack.c.l.b16 %v203
  %v1263 = vunpack.c.l.b16 %v204
  %v1264 = vunpack.c.l.b16 %v205
  %v1265 = vunpack.c.l.b16 %v206
  %v1266 = vunpack.c.l.b16 %v207
  %v1267 = vunpack.c.l.b16 %v208
  %v1268 = vunpack.c.l.b16 %v209
  %v1269 = vunpack.c.l.b16 %v210
  %v1270 = vunpack.c.l.b16 %v211
  %v1271 = vunpack.c.l.b16 %v212
  %v1272 = vunpack.c.l.b16 %v213
  %v1273 = vunpack.c.l.b16 %v214
  %v1274 = vunpack.c.l.b16 %v215
  %v1275 = vunpack.c.l.b16 %v216
  %v1276 = vunpack.c.l.b16 %v217
  %v1277 = vunpack.c.l.b16 %v218
  %v1278 = vunpack.c.l.b16 %v219
  %v1279 = vunpack.c.l.b16 %v220
  %v1280 = vunpack.c.l.b16 %v221
  %v1281 = vunpack.c.l.b16 %v222
  %v1282 = vunpack.c.l.b16 %v223
  %v1283 = vunpack.c.l.b16 %v224
  %v1284 = vunpack.c.l.b16 %v225
  %v1285 = vunpack.c.l.b16 %v226
  %v1286 = vunpack.c.l.b16 %v227
  %v1287 = vunpack.c.l.b16 %v228
  %v1288 = vunpack.c.l.b16 %v229
  %v1289 = vunpack.c.l.b16 %v230
  %v1290 = vunpack.c.l.b16 %v231
  %v1291 = vunpack.c.l.b16 %v232
  %v1292 = vunpack.c.l.b16 %v233
  %v1293 = vunpack.c.l.b16 %v234
  %v1294 = vunpack.c.l.b16 %v235
  %v1295 = vunpack.c.l.b16 %v236
  %v1296 = vunpack.c.l.b16 %v237
  %v1297 = vunpack.c.l.b16 %v238
  %v1298 = vunpack.c.l.b16 %v239
  %v1299 = vunpack.c.l.b16 %v240
  %v1300 = vunpack.c.l.b16 %v241
  %v1301 = vunpack.c.l.b16 %v242
  %v1302 = vunpack.c.l.b16 %v243
  %v1303 = vunpack.c.l.b16 %v244
  %v1304 = vunpack.c.l.b16 %v245
  %v1305 = vunpack.c.l.b16 %v246
  %v1306 = vunpack.c.l.b16 %v247
  %v1307 = vunpack.c.l.b16 %v248
  %v1308 = vunpack.c.l.b16 %v249
  %v1309 = vunpack.c.l.b16 %v250
  %v1310 = vunpack.c.l.b16 %v251
  %v1311 = vunpack.c.l.b16 %v252
  %v1312 = vunpack.c.l.b16 %v253
  %v1313 = vunpack.c.l.b16 %v254
  %v1314 = vunpack.c.l.b16 %v255
  %v1315 = vunpack.c.l.b16 %v256
  %v1316 = vunpack.c.l.b16 %v257
  %v1317 = vunpack.c.l.b16 %v258
  %v1318 = vunpack.c.l.b16 %v259
  %v1319 = vunpack.c.l.b16 %v260
  %v1320 = vunpack.c.l.b16 %v261
  %v1321 = vunpack.c.l.b16 %v262
  %v1322 = vunpack.c.l.b16 %v263
  %v1323 = vunpack.c.l.b16 %v264
  %v1324 = vunpack.c.l.b16 %v265
  %v1325 = vunpack.c.l.b16 %v266
  %v1326 = vunpack.c.l.b16 %v267
  %v1327 = vunpack.c.l.b16 %v268
  %v1328 = vunpack.c.l.b16 %v269
  %v1329 = vunpack.c.l.b16 %v270
  %v1330 = vunpack.c.l.b16 %v271
  %v1331 = vunpack.c.l.b16 %v272
  %v1332 = vunpack.c.l.b16 %v273
  %v1333 = vunpack.c.l.b16 %v274
  %v1334 = vunpack.c.l.b16 %v275
  %v1335 = vunpack.c.l.b16 %v276
  %v1336 = vunpack.c.l.b16 %v277
  %v1337 = vunpack.c.l.b16 %v278
  %v1338 = vunpack.c.l.b16 %v279
  %v1339 = vunpack.c.l.b16 %v280
  %v1340 = vunpack.c.l.b16 %v281
  %v1341 = vunpack.c.l.b16 %v282
  %v1342 = vunpack.c.l.b16 %v283
  %v1343 = vunpack.c.l.b16 %v284
  %v1344 = vunpack.c.l.b16 %v285
  %v1345 = vunpack.c.l.b16 %v286
  %v1346 = vunpack.c.l.b16 %v287
  %v1347 = vunpack.c.l.b16 %v288
  %v1348 = vunpack.c.l.b16 %v289
  %v1349 = vunpack.c.l.b16 %v290
  %v1350 = vunpack.c.l.b16 %v291
  %v1351 = vunpack.c.l.b16 %v292
  %v1352 = vunpack.c.l.b16 %v293
  %v1353 = vunpack.c.l.b16 %v294
  %v1354 = vunpack.c.l.b16 %v295
  %v1355 = vunpack.c.l.b16 %v296
  %v1356 = vunpack.c.l.b16 %v297
  %v1357 = vunpack.c.l.b16 %v298
  %v1358 = vunpack.c.l.b16 %v299
  %v1359 = vunpack.c.l.b16 %v300
  %v1360 = vunpack.c.l.b16 %v301
  %v1361 = vunpack.c.l.b16 %v302
  %v1362 = vunpack.c.l.b16 %v303
  %v1363 = vunpack.c.l.b16 %v304
  %v1364 = vunpack.c.l.b16 %v305
  %v1365 = vunpack.c.l.b16 %v306
  %v1366 = vunpack.c.l.b16 %v307
  %v1367 = vunpack.c.l.b16 %v308
  %v1368 = vunpack.c.l.b16 %v309
  %v1369 = vunpack.c.l.b16 %v310
  %v1370 = vunpack.c.l.b16 %v311
  %v1371 = vunpack.c.l.b16 %v312
  %v1372 = vunpack.c.l.b16 %v313
  %v1373 = vunpack.c.l.b16 %v314
  %v1374 = vunpack.c.l.b16 %v315
  %v1375 = vunpack.c.l.b16 %v316
  %v1376 = vunpack.c.l.b16 %v317
  %v1377 = vunpack.c.l.b16 %v318
  %v1378 = vunpack.c.l.b16 %v319
  %v1379 = vunpack.c.l.b16 %v320
  %v1380 = vunpack.c.l.b16 %v321
  %v1381 = vunpack.c.l.b16 %v322
  %v1382 = vunpack.c.l.b16 %v323
  %v1383 = vunpack.c.l.b16 %v324
  %v1384 = vunpack.c.l.b16 %v325
  %v1385 = vunpack.c.l.b16 %v326
  %v1386 = vunpack.c.l.b16 %v327
  %v1387 = vunpack.c.l.b16 %v328
  %v1388 = vunpack.c.l.b16 %v329
  %v1389 = vunpack.c.l.b16 %v330
  %v1390 = vunpack.c.l.b16 %v331
  %v1391 = vunpack.c.l.b16 %v332
  %v1392 = vunpack.c.l.b16 %v333
  %v1393 = vunpack.c.l.b16 %v334
  %v1394 = vunpack.c.l.b16 %v335
  %v1395 = vunpack.c.l.b16 %v336
  %v1396 = vunpack.c.l.b16 %v337
  %v1397 = vunpack.c.l.b16 %v338
  %v1398 = vunpack.c.l.b16 %v339
  %v1399 = vunpack.c.l.b16 %v340
  %v1400 = vunpack.c.l.b16 %v341
  %v1401 = vunpack.c.l.b16 %v342
  %v1402 = vunpack.c.l.b16 %v343
  %v1403 = vunpack.c.l.b16 %v344
  %v1404 = vunpack.c.l.b16 %v345
  %v1405 = vunpack.c.l.b16 %v346
  %v1406 = vunpack.c.l.b16 %v347
  %v1407 = vunpack.c.l.b16 %v348
  %v1408 = vunpack.c.l.b16 %v349
  %v1409 = vunpack.c.l.b16 %v350
  %v1410 = vunpack.c.l.b16 %v351
  %v1411 = vunpack.c.l.b16 %v352
  %v1412 = vunpack.c.l.b16 %v353
  %v1413 = vunpack.c.l.b16 %v354
  %v1414 = vunpack.c.l.b16 %v355
  %v1415 = vunpack.c.l.b16 %v356
  %v1416 = vunpack.c.l.b16 %v357
  %v1417 = vunpack.c.l.b16 %v358
  %v1418 = vunpack.c.l.b16 %v359
  %v1419 = vunpack.c.l.b16 %v360
  %v1420 = vunpack.c.l.b16 %v361
  %v1421 = vunpack.c.l.b16 %v362
  %v1422 = vunpack.c.l.b16 %v363
  %v1423 = vunpack.c.l.b16 %v364
  %v1424 = vunpack.c.l.b16 %v365
  %v1425 = vunpack.c.l.b16 %v366
  %v1426 = vunpack.c.l.b16 %v367
  %v1427 = vunpack.c.l.b16 %v368
  %v1428 = vunpack.c.l.b16 %v369
  %v1429 = vunpack.c.l.b16 %v370
  %v1430 = vunpack.c.l.b16 %v371
  %v1431 = vunpack.c.l.b16 %v372
  %v1432 = vunpack.c.l.b16 %v373
  %v1433 = vunpack.c.l.b16 %v374
  %v1434 = vunpack.c.l.b16 %v375
  %v1435 = vunpack.c.l.b16 %v376
  %v1436 = vunpack.c.l.b16 %v377
  %v1437 = vunpack.c.l.b16 %v378
  %v1438 = vunpack.c.l.b16 %v379
  %v1439 = vunpack.c.l.b16 %v380
  %v1440 = vunpack.c.l.b16 %v381
  %v1441 = vunpack.c.l.b16 %v382
  %v1442 = vunpack.c.l.b16 %v383
  %v1443 = vunpack.c.l.b16 %v384
  %v1444 = vunpack.c.l.b16 %v385
  %v1445 = vunpack.c.l.b16 %v386
  %v1446 = vunpack.c.l.b16 %v387
  %v1447 = vunpack.c.l.b16 %v388
  %v1448 = vunpack.c.l.b16 %v389
  %v1449 = vunpack.c.l.b16 %v390
  %v1450 = vunpack.c.l.b16 %v391
  %v1451 = vunpack.c.l.b16 %v392
  %v1452 = vunpack.c.l.b16 %v393
  %v1453 = vunpack.c.l.b16 %v394
  %v1454 = vunpack.c.l.b16 %v395
  %v1455 = vunpack.c.l.b16 %v396
  %v1456 = vunpack.c.l.b16 %v397
  %v1457 = vunpack.c.l.b16 %v398
  %v1458 = vunpack.c.l.b16 %v399
  %v1459 = vunpack.c.l.b16 %v400
  %v1460 = vunpack.c.l.b16 %v401
  %v1461 = vunpack.c.l.b16 %v402
  %v1462 = vunpack.c.l.b16 %v403
  %v1463 = vunpack.c.l.b16 %v404
  %v1464 = vunpack.c.l.b16 %v405
  %v1465 = vunpack.c.l.b16 %v406
  %v1466 = vunpack.c.l.b16 %v407
  %v1467 = vunpack.c.l.b16 %v408
  %v1468 = vunpack.c.l.b16 %v409
  %v1469 = vunpack.c.l.b16 %v410
  %v1470 = vunpack.c.l.b16 %v411
  %v1471 = vunpack.c.l.b16 %v412
  %v1472 = vunpack.c.l.b16 %v413
  %v1473 = vunpack.c.l.b16 %v414
  %v1474 = vunpack.c.l.b16 %v415
  %v1475 = vunpack.c.l.b16 %v416
  %v1476 = vunpack.c.l.b16 %v417
  %v1477 = vunpack.c.l.b16 %v418
  %v1478 = vunpack.c.l.b16 %v419
  %v1479 = vunpack.c.l.b16 %v420
  %v1480 = vunpack.c.l.b16 %v421
  %v1481 = vunpack.c.l.b16 %v422
  %v1482 = vunpack.c.l.b16 %v423
  %v1483 = vunpack.c.l.b16 %v424
  %v1484 = vunpack.c.l.b16 %v425
  %v1485 = vunpack.c.l.b16 %v426
  %v1486 = vunpack.c.l.b16 %v427
  %v1487 = vunpack.c.l.b16 %v428
  %v1488 = vunpack.c.l.b16 %v429
  %v1489 = vunpack.c.l.b16 %v430
  %v1490 = vunpack.c.l.b16 %v431
  %v1491 = vunpack.c.l.b16 %v432
  %v1492 = vunpack.c.l.b16 %v433
  %v1493 = vunpack.c.l.b16 %v434
  %v1494 = vunpack.c.l.b16 %v435
  %v1495 = vunpack.c.l.b16 %v436
  %v1496 = vunpack.c.l.b16 %v437
  %v1497 = vunpack.c.l.b16 %v438
  %v1498 = vunpack.c.l.b16 %v439
  %v1499 = vunpack.c.l.b16 %v440
  %v1500 = vunpack.c.l.b16 %v441
  %v1501 = vunpack.c.l.b16 %v442
  %v1502 = vunpack.c.l.b16 %v443
  %v1503 = vunpack.c.l.b16 %v444
  %v1504 = vunpack.c.l.b16 %v445
  %v1505 = vunpack.c.l.b16 %v446
  %v1506 = vunpack.c.l.b16 %v447
  %v1507 = vunpack.c.l.b16 %v448
  %v1508 = vunpack.c.l.b16 %v449
  %v1509 = vunpack.c.l.b16 %v450
  %v1510 = vunpack.c.l.b16 %v451
  %v1511 = vunpack.c.l.b16 %v452
  %v1512 = vunpack.c.l.b16 %v453
  %v1513 = vunpack.c.l.b16 %v454
  %v1514 = vunpack.c.l.b16 %v455
  %v1515 = vunpack.c.l.b16 %v456
  %v1516 = vunpack.c.l.b16 %v457
  %v1517 = vunpack.c.l.b16 %v458
  %v1518 = vunpack.c.l.b16 %v459
  %v1519 = vunpack.c.l.b16 %v460
  %v1520 = vunpack.c.l.b16 %v461
  %v1521 = vunpack.c.l.b16 %v462
  %v1522 = vunpack.c.l.b16 %v463
  %v1523 = vunpack.c.l.b16 %v464
  %v1524 = vunpack.c.l.b16 %v465
  %v1525 = vunpack.c.l.b16 %v466
  %v1526 = vpack.c.b16 %v1127, %v1126
  %v1527 = vpack.c.b16 %v1129, %v1128
  %v1528 = vpack.c.b16 %v1131, %v1130
  %v1529 = vpack.c.b16 %v1133, %v1132
  %v1530 = vpack.c.b16 %v1135, %v1134
  %v1531 = vpack.c.b16 %v1137, %v1136
  %v1532 = vpack.c.b16 %v1139, %v1138
  %v1533 = vpack.c.b16 %v1141, %v1140
  %v1534 = vpack.c.b16 %v1143, %v1142
  %v1535 = vpack.c.b16 %v1145, %v1144
  %v1536 = vpack.c.b16 %v1147, %v1146
  %v1537 = vpack.c.b16 %v1149, %v1148
  %v1538 = vpack.c.b16 %v1151, %v1150
  %v1539 = vpack.c.b16 %v1153, %v1152
  %v1540 = vpack.c.b16 %v1155, %v1154
  %v1541 = vpack.c.b16 %v1157, %v1156
  %v1542 = vpack.c.b16 %v1159, %v1158
  %v1543 = vpack.c.b16 %v1161, %v1160
  %v1544 = vpack.c.b16 %v1163, %v1162
  %v1545 = vpack.c.b16 %v1165, %v1164
  %v1546 = vpack.c.b16 %v1167, %v1166
  %v1547 = vpack.c.b16 %v1169, %v1168
  %v1548 = vpack.c.b16 %v1171, %v1170
  %v1549 = vpack.c.b16 %v1173, %v1172
  %v1550 = vpack.c.b16 %v1175, %v1174
  %v1551 = vpack.c.b16 %v1177, %v1176
  %v1552 = vpack.c.b16 %v1179, %v1178
  %v1553 = vpack.c.b16 %v1181, %v1180
  %v1554 = vpack.c.b16 %v1183, %v1182
  %v1555 = vpack.c.b16 %v1185, %v1184
  %v1556 = vpack.c.b16 %v1187, %v1186
  %v1557 = vpack.c.b16 %v1189, %v1188
  %v1558 = vpack.c.b16 %v1191, %v1190
  %v1559 = vpack.c.b16 %v1193, %v1192
  %v1560 = vpack.c.b16 %v1195, %v1194
  %v1561 = vpack.c.b16 %v1197, %v1196
  %v1562 = vpack.c.b16 %v1199, %v1198
  %v1563 = vpack.c.b16 %v1201, %v1200
  %v1564 = vpack.c.b16 %v1203, %v1202
  %v1565 = vpack.c.b16 %v1205, %v1204
  %v1566 = vpack.c.b16 %v1207, %v1206
  %v1567 = vpack.c.b16 %v1209, %v1208
  %v1568 = vpack.c.b16 %v1211, %v1210
  %v1569 = vpack.c.b16 %v1213, %v1212
  %v1570 = vpack.c.b16 %v1215, %v1214
  %v1571 = vpack.c.b16 %v1217, %v1216
  %v1572 = vpack.c.b16 %v1219, %v1218
  %v1573 = vpack.c.b16 %v1221, %v1220
  %v1574 = vpack.c.b16 %v1223, %v1222
  %v1575 = vpack.c.b16 %v1225, %v1224
  %v1576 = vpack.c.b16 %v1227, %v1226
  %v1577 = vpack.c.b16 %v1229, %v1228
  %v1578 = vpack.c.b16 %v1231, %v1230
  %v1579 = vpack.c.b16 %v1233, %v1232
  %v1580 = vpack.c.b16 %v1235, %v1234
  %v1581 = vpack.c.b16 %v1237, %v1236
  %v1582 = vpack.c.b16 %v1239, %v1238
  %v1583 = vpack.c.b16 %v1241, %v1240
  %v1584 = vpack.c.b16 %v1243, %v1242
  %v1585 = vpack.c.b16 %v1245, %v1244
  %v1586 = vpack.c.b16 %v1247, %v1246
  %v1587 = vpack.c.b16 %v1249, %v1248
  %v1588 = vpack.c.b16 %v1251, %v1250
  %v1589 = vpack.c.b16 %v1253, %v1252
  %v1590 = vpack.c.b16 %v1255, %v1254
  %v1591 = vpack.c.b16 %v1257, %v1256
  %v1592 = vpack.c.b16 %v1259, %v1258
  %v1593 = vpack.c.b16 %v1261, %v1260
  %v1594 = vpack.c.b16 %v1263, %v1262
  %v1595 = vpack.c.b16 %v1265, %v1264
  %v1596 = vpack.c.b16 %v1267, %v1266
  %v1597 = vpack.c.b16 %v1269, %v1268
  %v1598 = vpack.c.b16 %v1271, %v1270
  %v1599 = vpack.c.b16 %v1273, %v1272
  %v1600 = vpack.c.b16 %v1275, %v1274
  %v1601 = vpack.c.b16 %v1277, %v1276
  %v1602 = vpack.c.b16 %v1279, %v1278
  %v1603 = vpack.c.b16 %v1281, %v1280
  %v1604 = vpack.c.b16 %v1283, %v1282
  %v1605 = vpack.c.b16 %v1285, %v1284
  %v1606 = vpack.c.b16 %v1287, %v1286
  %v1607 = vpack.c.b16 %v1289, %v1288
  %v1608 = vpack.c.b16 %v1291, %v1290
  %v1609 = vpack.c.b16 %v1293, %v1292
  %v1610 = vpack.c.b16 %v1295, %v1294
  %v1611 = vpack.c.b16 %v1297, %v1296
  %v1612 = vpack.c.b16 %v1299, %v1298
  %v1613 = vpack.c.b16 %v1301, %v1300
  %v1614 = vpack.c.b16 %v1303, %v1302
  %v1615 = vpack.c.b16 %v1305, %v1304
  %v1616 = vpack.c.b16 %v1307, %v1306
  %v1617 = vpack.c.b16 %v1309, %v1308
  %v1618 = vpack.c.b16 %v1311, %v1310
  %v1619 = vpack.c.b16 %v1313, %v1312
  %v1620 = vpack.c.b16 %v1315, %v1314
  %v1621 = vpack.c.b16 %v1317, %v1316
  %v1622 = vpack.c.b16 %v1319, %v1318
  %v1623 = vpack.c.b16 %v1321, %v1320
  %v1624 = vpack.c.b16 %v1323, %v1322
  %v1625 = vpack.c.b16 %v1325, %v1324
  %v1626 = vpack.c.b16 %v1327, %v1326
  %v1627 = vpack.c.b16 %v1329, %v1328
  %v1628 = vpack.c.b16 %v1331, %v1330
  %v1629 = vpack.c.b16 %v1333, %v1332
  %v1630 = vpack.c.b16 %v1335, %v1334
  %v1631 = vpack.c.b16 %v1337, %v1336
  %v1632 = vpack.c.b16 %v1339, %v1338
  %v1633 = vpack.c.b16 %v1341, %v1340
  %v1634 = vpack.c.b16 %v1343, %v1342
  %v1635 = vpack.c.b16 %v1345, %v1344
  %v1636 = vpack.c.b16 %v1347, %v1346
  %v1637 = vpack.c.b16 %v1349, %v1348
  %v1638 = vpack.c.b16 %v1351, %v1350
  %v1639 = vpack.c.b16 %v1353, %v1352
  %v1640 = vpack.c.b16 %v1355, %v1354
  %v1641 = vpack.c.b16 %v1357, %v1356
  %v1642 = vpack.c.b16 %v1359, %v1358
  %v1643 = vpack.c.b16 %v1361, %v1360
  %v1644 = vpack.c.b16 %v1363, %v1362
  %v1645 = vpack.c.b16 %v1365, %v1364
  %v1646 = vpack.c.b16 %v1367, %v1366
  %v1647 = vpack.c.b16 %v1369, %v1368
  %v1648 = vpack.c.b16 %v1371, %v1370
  %v1649 = vpack.c.b16 %v1373, %v1372
  %v1650 = vpack.c.b16 %v1375, %v1374
  %v1651 = vpack.c.b16 %v1377, %v1376
  %v1652 = vpack.c.b16 %v1379, %v1378
  %v1653 = vpack.c.b16 %v1381, %v1380
  %v1654 = vpack.c.b16 %v1383, %v1382
  %v1655 = vpack.c.b16 %v1385, %v1384
  %v1656 = vpack.c.b16 %v1387, %v1386
  %v1657 = vpack.c.b16 %v1389, %v1388
  %v1658 = vpack.c.b16 %v1391, %v1390
  %v1659 = vpack.c.b16 %v1393, %v1392
  %v1660 = vpack.c.b16 %v1395, %v1394
  %v1661 = vpack.c.b16 %v1397, %v1396
  %v1662 = vpack.c.b16 %v1399, %v1398
  %v1663 = vpack.c.b16 %v1401, %v1400
  %v1664 = vpack.c.b16 %v1403, %v1402
  %v1665 = vpack.c.b16 %v1405, %v1404
  %v1666 = vpack.c.b16 %v1407, %v1406
  %v1667 = vpack.c.b16 %v1409, %v1408
  %v1668 = vpack.c.b16 %v1411, %v1410
  %v1669 = vpack.c.b16 %v1413, %v1412
  %v1670 = vpack.c.b16 %v1415, %v1414
  %v1671 = vpack.c.b16 %v1417, %v1416
  %v1672 = vpack.c.b16 %v1419, %v1418
  %v1673 = vpack.c.b16 %v1421, %v1420
  %v1674 = vpack.c.b16 %v1423, %v1422
  %v1675 = vpack.c.b16 %v1425, %v1424
  %v1676 = vpack.c.b16 %v1427, %v1426
  %v1677 = vpack.c.b16 %v1429, %v1428
  %v1678 = vpack.c.b16 %v1431, %v1430
  %v1679 = vpack.c.b16 %v1433, %v1432
  %v1680 = vpack.c.b16 %v1435, %v1434
  %v1681 = vpack.c.b16 %v1437, %v1436
  %v1682 = vpack.c.b16 %v1439, %v1438
  %v1683 = vpack.c.b16 %v1441, %v1440
  %v1684 = vpack.c.b16 %v1443, %v1442
  %v1685 = vpack.c.b16 %v1445, %v1444
  %v1686 = vpack.c.b16 %v1447, %v1446
  %v1687 = vpack.c.b16 %v1449, %v1448
  %v1688 = vpack.c.b16 %v1451, %v1450
  %v1689 = vpack.c.b16 %v1453, %v1452
  %v1690 = vpack.c.b16 %v1455, %v1454
  %v1691 = vpack.c.b16 %v1457, %v1456
  %v1692 = vpack.c.b16 %v1459, %v1458
  %v1693 = vpack.c.b16 %v1461, %v1460
  %v1694 = vpack.c.b16 %v1463, %v1462
  %v1695 = vpack.c.b16 %v1465, %v1464
  %v1696 = vpack.c.b16 %v1467, %v1466
  %v1697 = vpack.c.b16 %v1469, %v1468
  %v1698 = vpack.c.b16 %v1471, %v1470
  %v1699 = vpack.c.b16 %v1473, %v1472
  %v1700 = vpack.c.b16 %v1475, %v1474
  %v1701 = vpack.c.b16 %v1477, %v1476
  %v1702 = vpack.c.b16 %v1479, %v1478
  %v1703 = vpack.c.b16 %v1481, %v1480
  %v1704 = vpack.c.b16 %v1483, %v1482
  %v1705 = vpack.c.b16 %v1485, %v1484
  %v1706 = vpack.c.b16 %v1487, %v1486
  %v1707 = vpack.c.b16 %v1489, %v1488
  %v1708 = vpack.c.b16 %v1491, %v1490
  %v1709 = vpack.c.b16 %v1493, %v1492
  %v1710 = vpack.c.b16 %v1495, %v1494
  %v1711 = vpack.c.b16 %v1497, %v1496
  %v1712 = vpack.c.b16 %v1499, %v1498
  %v1713 = vpack.c.b16 %v1501, %v1500
  %v1714 = vpack.c.b16 %v1503, %v1502
  %v1715 = vpack.c.b16 %v1505, %v1504
  %v1716 = vpack.c.b16 %v1507, %v1506
  %v1717 = vpack.c.b16 %v1509, %v1508
  %v1718 = vpack.c.b16 %v1511, %v1510
  %v1719 = vpack.c.b16 %v1513, %v1512
  %v1720 = vpack.c.b16 %v1515, %v1514
  %v1721 = vpack.c.b16 %v1517, %v1516
  %v1722 = vpack.c.b16 %v1519, %v1518
  %v1723 = vpack.c.b16 %v1521, %v1520
  %v1724 = vpack.c.b16 %v1523, %v1522
  %v1725 = vpack.c.b16 %v1525, %v1524
  %1926 = vmatprep.subr.bf16.mxu0 0
  %1927 = vmatpush1.bf16.msra.mxu0 %v1526
  %1928 = vmatprep.subr.bf16.mxu0 0
  %1929 = vmatpush1.bf16.msra.mxu0 %v1527
  %1930 = vmatprep.subr.bf16.mxu0 0
  %1931 = vmatpush1.bf16.msra.mxu0 %v1528
  %1932 = vmatprep.subr.bf16.mxu0 0
  %1933 = vmatpush1.bf16.msra.mxu0 %v1529
  %1934 = vmatprep.subr.bf16.mxu0 0
  %1935 = vmatpush1.bf16.msra.mxu0 %v1530
  %1936 = vmatprep.subr.bf16.mxu0 0
  %1937 = vmatpush1.bf16.msra.mxu0 %v1531
  %1938 = vmatprep.subr.bf16.mxu0 0
  %1939 = vmatpush1.bf16.msra.mxu0 %v1532
  %1940 = vmatprep.subr.bf16.mxu0 0
  %1941 = vmatpush1.bf16.msra.mxu0 %v1533
  %1942 = vmatprep.subr.bf16.mxu0 0
  %1943 = vmatpush1.bf16.msra.mxu0 %v1534
  %1944 = vmatprep.subr.bf16.mxu0 0
  %1945 = vmatpush1.bf16.msra.mxu0 %v1535
  %1946 = vmatprep.subr.bf16.mxu0 0
  %1947 = vmatpush1.bf16.msra.mxu0 %v1536
  %1948 = vmatprep.subr.bf16.mxu0 0
  %1949 = vmatpush1.bf16.msra.mxu0 %v1537
  %1950 = vmatprep.subr.bf16.mxu0 0
  %1951 = vmatpush1.bf16.msra.mxu0 %v1538
  %1952 = vmatprep.subr.bf16.mxu0 0
  %1953 = vmatpush1.bf16.msra.mxu0 %v1539
  %1954 = vmatprep.subr.bf16.mxu0 0
  %1955 = vmatpush1.bf16.msra.mxu0 %v1540
  %1956 = vmatprep.subr.bf16.mxu0 0
  %1957 = vmatpush1.bf16.msra.mxu0 %v1541
  %1958 = vmatprep.mubr.bf16.mxu0 %v627
  %1959 = vmatmul.mubr.bf16.gmra.mrb[0].mxu0 %v626
  %v1960 = vpop.f32.mrb[0].mxu0
  %v1961 = vadd.f32 %v472, %v1960
  %v1962 = vpop.f32.mrb[0].mxu0
  %v1963 = vpop.f32.mrb[0].mxu0
  %v1964 = vadd.f32 %v472, %v1963
  %v1965 = vpop.f32.mrb[0].mxu0
  %1966 = vmatprep.mubr.bf16.mxu0 %v652
  %1967 = vmatmul.mubr.bf16.gmra.mrb[0].mxu0 %v651
  %v1968 = vpop.f32.mrb[0].mxu0
  %v1969 = vadd.f32 %v472, %v1968
  %v1970 = vpop.f32.mrb[0].mxu0
  %v1971 = vpop.f32.mrb[0].mxu0
  %v1972 = vadd.f32 %v472, %v1971
  %v1973 = vpop.f32.mrb[0].mxu0
  %1974 = vdwg.mxu0
  %1975 = vmatprep.subr.bf16.mxu0 0
  %1976 = vmatpush1.bf16.msra.mxu0 %v1542
  %1977 = vmatprep.subr.bf16.mxu0 0
  %1978 = vmatpush1.bf16.msra.mxu0 %v1543
  %1979 = vmatprep.subr.bf16.mxu0 0
  %1980 = vmatpush1.bf16.msra.mxu0 %v1544
  %1981 = vmatprep.subr.bf16.mxu0 0
  %1982 = vmatpush1.bf16.msra.mxu0 %v1545
  %1983 = vmatprep.subr.bf16.mxu0 0
  %1984 = vmatpush1.bf16.msra.mxu0 %v1546
  %1985 = vmatprep.subr.bf16.mxu0 0
  %1986 = vmatpush1.bf16.msra.mxu0 %v1547
  %1987 = vmatprep.subr.bf16.mxu0 0
  %1988 = vmatpush1.bf16.msra.mxu0 %v1548
  %1989 = vmatprep.subr.bf16.mxu0 0
  %1990 = vmatpush1.bf16.msra.mxu0 %v1549
  %1991 = vmatprep.subr.bf16.mxu0 0
  %1992 = vmatpush1.bf16.msra.mxu0 %v1550
  %1993 = vmatprep.subr.bf16.mxu0 0
  %1994 = vmatpush1.bf16.msra.mxu0 %v1551
  %1995 = vmatprep.subr.bf16.mxu0 0
  %1996 = vmatpush1.bf16.msra.mxu0 %v1552
  %1997 = vmatprep.subr.bf16.mxu0 0
  %1998 = vmatpush1.bf16.msra.mxu0 %v1553
  %1999 = vmatprep.subr.bf16.mxu0 0
  %2000 = vmatpush1.bf16.msra.mxu0 %v1554
  %2001 = vmatprep.subr.bf16.mxu0 0
  %2002 = vmatpush1.bf16.msra.mxu0 %v1555
  %2003 = vmatprep.subr.bf16.mxu0 0
  %2004 = vmatpush1.bf16.msra.mxu0 %v1556
  %2005 = vmatprep.subr.bf16.mxu0 0
  %2006 = vmatpush1.bf16.msra.mxu0 %v1557
  %2007 = vmatprep.mubr.bf16.mxu0 %v629
  %2008 = vmatmul.mubr.bf16.gmra.mrb[0].mxu0 %v628
  %v2009 = vpop.f32.mrb[0].mxu0
  %v2010 = vadd.f32 %v1961, %v2009
  %v2011 = vpop.f32.mrb[0].mxu0
  %v2012 = vpop.f32.mrb[0].mxu0
  %v2013 = vadd.f32 %v1964, %v2012
  %v2014 = vpop.f32.mrb[0].mxu0
  %2015 = vmatprep.mubr.bf16.mxu0 %v654
  %2016 = vmatmul.mubr.bf16.gmra.mrb[0].mxu0 %v653
  %v2017 = vpop.f32.mrb[0].mxu0
  %v2018 = vadd.f32 %v1969, %v2017
  %v2019 = vpop.f32.mrb[0].mxu0
  %v2020 = vpop.f32.mrb[0].mxu0
  %v2021 = vadd.f32 %v1972, %v2020
  %v2022 = vpop.f32.mrb[0].mxu0
  %2023 = vdwg.mxu0
  %2024 = vmatprep.subr.bf16.mxu0 0
  %2025 = vmatpush1.bf16.msra.mxu0 %v1558
  %2026 = vmatprep.subr.bf16.mxu0 0
  %2027 = vmatpush1.bf16.msra.mxu0 %v1559
  %2028 = vmatprep.subr.bf16.mxu0 0
  %2029 = vmatpush1.bf16.msra.mxu0 %v1560
  %2030 = vmatprep.subr.bf16.mxu0 0
  %2031 = vmatpush1.bf16.msra.mxu0 %v1561
  %2032 = vmatprep.subr.bf16.mxu0 0
  %2033 = vmatpush1.bf16.msra.mxu0 %v1562
  %2034 = vmatprep.subr.bf16.mxu0 0
  %2035 = vmatpush1.bf16.msra.mxu0 %v1563
  %2036 = vmatprep.subr.bf16.mxu0 0
  %2037 = vmatpush1.bf16.msra.mxu0 %v1564
  %2038 = vmatprep.subr.bf16.mxu0 0
  %2039 = vmatpush1.bf16.msra.mxu0 %v1565
  %2040 = vmatprep.subr.bf16.mxu0 0
  %2041 = vmatpush1.bf16.msra.mxu0 %v1566
  %2042 = vmatprep.subr.bf16.mxu0 0
  %2043 = vmatpush1.bf16.msra.mxu0 %v1567
  %2044 = vmatprep.subr.bf16.mxu0 0
  %2045 = vmatpush1.bf16.msra.mxu0 %v1568
  %2046 = vmatprep.subr.bf16.mxu0 0
  %2047 = vmatpush1.bf16.msra.mxu0 %v1569
  %2048 = vmatprep.subr.bf16.mxu0 0
  %2049 = vmatpush1.bf16.msra.mxu0 %v1570
  %2050 = vmatprep.subr.bf16.mxu0 0
  %2051 = vmatpush1.bf16.msra.mxu0 %v1571
  %2052 = vmatprep.subr.bf16.mxu0 0
  %2053 = vmatpush1.bf16.msra.mxu0 %v1572
  %2054 = vmatprep.subr.bf16.mxu0 0
  %2055 = vmatpush1.bf16.msra.mxu0 %v1573
  %2056 = vmatprep.mubr.bf16.mxu0 %v631
  %2057 = vmatmul.mubr.bf16.gmra.mrb[0].mxu0 %v630
  %v2058 = vpop.f32.mrb[0].mxu0
  %v2059 = vadd.f32 %v2010, %v2058
  %v2060 = vpop.f32.mrb[0].mxu0
  %v2061 = vpop.f32.mrb[0].mxu0
  %v2062 = vadd.f32 %v2013, %v2061
  %v2063 = vpop.f32.mrb[0].mxu0
  %2064 = vmatprep.mubr.bf16.mxu0 %v656
  %2065 = vmatmul.mubr.bf16.gmra.mrb[0].mxu0 %v655
  %v2066 = vpop.f32.mrb[0].mxu0
  %v2067 = vadd.f32 %v2018, %v2066
  %v2068 = vpop.f32.mrb[0].mxu0
  %v2069 = vpop.f32.mrb[0].mxu0
  %v2070 = vadd.f32 %v2021, %v2069
  %v2071 = vpop.f32.mrb[0].mxu0
  %2072 = vdwg.mxu0
  %2073 = vmatprep.subr.bf16.mxu0 0
  %2074 = vmatpush1.bf16.msra.mxu0 %v1574
  %2075 = vmatprep.subr.bf16.mxu0 0
  %2076 = vmatpush1.bf16.msra.mxu0 %v1575
  %2077 = vmatprep.subr.bf16.mxu0 0
  %2078 = vmatpush1.bf16.msra.mxu0 %v1576
  %2079 = vmatprep.subr.bf16.mxu0 0
  %2080 = vmatpush1.bf16.msra.mxu0 %v1577
  %2081 = vmatprep.subr.bf16.mxu0 0
  %2082 = vmatpush1.bf16.msra.mxu0 %v1578
  %2083 = vmatprep.subr.bf16.mxu0 0
  %2084 = vmatpush1.bf16.msra.mxu0 %v1579
  %2085 = vmatprep.subr.bf16.mxu0 0
  %2086 = vmatpush1.bf16.msra.mxu0 %v1580
  %2087 = vmatprep.subr.bf16.mxu0 0
  %2088 = vmatpush1.bf16.msra.mxu0 %v1581
  %2089 = vmatprep.subr.bf16.mxu0 0
  %2090 = vmatpush1.bf16.msra.mxu0 %v1582
  %2091 = vmatprep.subr.bf16.mxu0 0
  %2092 = vmatpush1.bf16.msra.mxu0 %v1583
  %2093 = vmatprep.subr.bf16.mxu0 0
  %2094 = vmatpush1.bf16.msra.mxu0 %v1584
  %2095 = vmatprep.subr.bf16.mxu0 0
  %2096 = vmatpush1.bf16.msra.mxu0 %v1585
  %2097 = vmatprep.subr.bf16.mxu0 0
  %2098 = vmatpush1.bf16.msra.mxu0 %v1586
  %2099 = vmatprep.subr.bf16.mxu0 0
  %2100 = vmatpush1.bf16.msra.mxu0 %v1587
  %2101 = vmatprep.subr.bf16.mxu0 0
  %2102 = vmatpush1.bf16.msra.mxu0 %v1588
  %2103 = vmatprep.subr.bf16.mxu0 0
  %2104 = vmatpush1.bf16.msra.mxu0 %v1589
  %2105 = vmatprep.mubr.bf16.mxu0 %v633
  %2106 = vmatmul.mubr.bf16.gmra.mrb[0].mxu0 %v632
  %v2107 = vpop.f32.mrb[0].mxu0
  %v2108 = vadd.f32 %v2059, %v2107
  %v2109 = vpop.f32.mrb[0].mxu0
  %v2110 = vpop.f32.mrb[0].mxu0
  %v2111 = vadd.f32 %v2062, %v2110
  %v2112 = vpop.f32.mrb[0].mxu0
  %2113 = vmatprep.mubr.bf16.mxu0 %v658
  %2114 = vmatmul.mubr.bf16.gmra.mrb[0].mxu0 %v657
  %v2115 = vpop.f32.mrb[0].mxu0
  %v2116 = vadd.f32 %v2067, %v2115
  %v2117 = vpop.f32.mrb[0].mxu0
  %v2118 = vpop.f32.mrb[0].mxu0
  %v2119 = vadd.f32 %v2070, %v2118
  %v2120 = vpop.f32.mrb[0].mxu0
  %2121 = vdwg.mxu0
  %2122 = vmatprep.subr.bf16.mxu0 0
  %2123 = vmatpush1.bf16.msra.mxu0 %v1590
  %2124 = vmatprep.subr.bf16.mxu0 0
  %2125 = vmatpush1.bf16.msra.mxu0 %v1591
  %2126 = vmatprep.subr.bf16.mxu0 0
  %2127 = vmatpush1.bf16.msra.mxu0 %v1592
  %2128 = vmatprep.subr.bf16.mxu0 0
  %2129 = vmatpush1.bf16.msra.mxu0 %v1593
  %2130 = vmatprep.subr.bf16.mxu0 0
  %2131 = vmatpush1.bf16.msra.mxu0 %v1594
  %2132 = vmatprep.subr.bf16.mxu0 0
  %2133 = vmatpush1.bf16.msra.mxu0 %v1595
  %2134 = vmatprep.subr.bf16.mxu0 0
  %2135 = vmatpush1.bf16.msra.mxu0 %v1596
  %2136 = vmatprep.subr.bf16.mxu0 0
  %2137 = vmatpush1.bf16.msra.mxu0 %v1597
  %2138 = vmatprep.subr.bf16.mxu0 0
  %2139 = vmatpush1.bf16.msra.mxu0 %v1598
  %2140 = vmatprep.subr.bf16.mxu0 0
  %2141 = vmatpush1.bf16.msra.mxu0 %v1599
  %2142 = vmatprep.subr.bf16.mxu0 0
  %2143 = vmatpush1.bf16.msra.mxu0 %v1600
  %2144 = vmatprep.subr.bf16.mxu0 0
  %2145 = vmatpush1.bf16.msra.mxu0 %v1601
  %2146 = vmatprep.subr.bf16.mxu0 0
  %2147 = vmatpush1.bf16.msra.mxu0 %v1602
  %2148 = vmatprep.subr.bf16.mxu0 0
  %2149 = vmatpush1.bf16.msra.mxu0 %v1603
  %2150 = vmatprep.subr.bf16.mxu0 0
  %2151 = vmatpush1.bf16.msra.mxu0 %v1604
  %2152 = vmatprep.subr.bf16.mxu0 0
  %2153 = vmatpush1.bf16.msra.mxu0 %v1605
  %2154 = vmatprep.mubr.bf16.mxu0 %v635
  %2155 = vmatmul.mubr.bf16.gmra.mrb[0].mxu0 %v634
  %v2156 = vpop.f32.mrb[0].mxu0
  %v2157 = vadd.f32 %v2108, %v2156
  %v2158 = vpop.f32.mrb[0].mxu0
  %v2159 = vpop.f32.mrb[0].mxu0
  %v2160 = vadd.f32 %v2111, %v2159
  %v2161 = vpop.f32.mrb[0].mxu0
  %2162 = vmatprep.mubr.bf16.mxu0 %v660
  %2163 = vmatmul.mubr.bf16.gmra.mrb[0].mxu0 %v659
  %v2164 = vpop.f32.mrb[0].mxu0
  %v2165 = vadd.f32 %v2116, %v2164
  %v2166 = vpop.f32.mrb[0].mxu0
  %v2167 = vpop.f32.mrb[0].mxu0
  %v2168 = vadd.f32 %v2119, %v2167
  %v2169 = vpop.f32.mrb[0].mxu0
  %2170 = vdwg.mxu0
  %2171 = vmatprep.subr.bf16.mxu0 0
  %2172 = vmatpush1.bf16.msra.mxu0 %v1606
  %2173 = vmatprep.subr.bf16.mxu0 0
  %2174 = vmatpush1.bf16.msra.mxu0 %v1607
  %2175 = vmatprep.subr.bf16.mxu0 0
  %2176 = vmatpush1.bf16.msra.mxu0 %v1608
  %2177 = vmatprep.subr.bf16.mxu0 0
  %2178 = vmatpush1.bf16.msra.mxu0 %v1609
  %2179 = vmatprep.subr.bf16.mxu0 0
  %2180 = vmatpush1.bf16.msra.mxu0 %v1610
  %2181 = vmatprep.subr.bf16.mxu0 0
  %2182 = vmatpush1.bf16.msra.mxu0 %v1611
  %2183 = vmatprep.subr.bf16.mxu0 0
  %2184 = vmatpush1.bf16.msra.mxu0 %v1612
  %2185 = vmatprep.subr.bf16.mxu0 0
  %2186 = vmatpush1.bf16.msra.mxu0 %v1613
  %2187 = vmatprep.subr.bf16.mxu0 0
  %2188 = vmatpush1.bf16.msra.mxu0 %v1614
  %2189 = vmatprep.subr.bf16.mxu0 0
  %2190 = vmatpush1.bf16.msra.mxu0 %v1615
  %2191 = vmatprep.subr.bf16.mxu0 0
  %2192 = vmatpush1.bf16.msra.mxu0 %v1616
  %2193 = vmatprep.subr.bf16.mxu0 0
  %2194 = vmatpush1.bf16.msra.mxu0 %v1617
  %2195 = vmatprep.subr.bf16.mxu0 0
  %2196 = vmatpush1.bf16.msra.mxu0 %v1618
  %2197 = vmatprep.subr.bf16.mxu0 0
  %2198 = vmatpush1.bf16.msra.mxu0 %v1619
  %2199 = vmatprep.subr.bf16.mxu0 0
  %2200 = vmatpush1.bf16.msra.mxu0 %v1620
  %2201 = vmatprep.subr.bf16.mxu0 0
  %2202 = vmatpush1.bf16.msra.mxu0 %v1621
  %2203 = vmatprep.mubr.bf16.mxu0 %v637
  %2204 = vmatmul.mubr.bf16.gmra.mrb[0].mxu0 %v636
  %v2205 = vpop.f32.mrb[0].mxu0
  %v2206 = vadd.f32 %v2157, %v2205
  %v2207 = vpop.f32.mrb[0].mxu0
  %v2208 = vpop.f32.mrb[0].mxu0
  %v2209 = vadd.f32 %v2160, %v2208
  %v2210 = vpop.f32.mrb[0].mxu0
  %2211 = vmatprep.mubr.bf16.mxu0 %v662
  %2212 = vmatmul.mubr.bf16.gmra.mrb[0].mxu0 %v661
  %v2213 = vpop.f32.mrb[0].mxu0
  %v2214 = vadd.f32 %v2165, %v2213
  %v2215 = vpop.f32.mrb[0].mxu0
  %v2216 = vpop.f32.mrb[0].mxu0
  %v2217 = vadd.f32 %v2168, %v2216
  %v2218 = vpop.f32.mrb[0].mxu0
  %2219 = vdwg.mxu0
  %2220 = vmatprep.subr.bf16.mxu0 0
  %2221 = vmatpush1.bf16.msra.mxu0 %v1622
  %2222 = vmatprep.subr.bf16.mxu0 0
  %2223 = vmatpush1.bf16.msra.mxu0 %v1623
  %2224 = vmatprep.subr.bf16.mxu0 0
  %2225 = vmatpush1.bf16.msra.mxu0 %v1624
  %2226 = vmatprep.subr.bf16.mxu0 0
  %2227 = vmatpush1.bf16.msra.mxu0 %v1625
  %2228 = vmatprep.subr.bf16.mxu0 0
  %2229 = vmatpush1.bf16.msra.mxu0 %v1626
  %2230 = vmatprep.subr.bf16.mxu0 0
  %2231 = vmatpush1.bf16.msra.mxu0 %v1627
  %2232 = vmatprep.subr.bf16.mxu0 0
  %2233 = vmatpush1.bf16.msra.mxu0 %v1628
  %2234 = vmatprep.subr.bf16.mxu0 0
  %2235 = vmatpush1.bf16.msra.mxu0 %v1629
  %2236 = vmatprep.subr.bf16.mxu0 0
  %2237 = vmatpush1.bf16.msra.mxu0 %v1630
  %2238 = vmatprep.subr.bf16.mxu0 0
  %2239 = vmatpush1.bf16.msra.mxu0 %v1631
  %2240 = vmatprep.subr.bf16.mxu0 0
  %2241 = vmatpush1.bf16.msra.mxu0 %v1632
  %2242 = vmatprep.subr.bf16.mxu0 0
  %2243 = vmatpush1.bf16.msra.mxu0 %v1633
  %2244 = vmatprep.subr.bf16.mxu0 0
  %2245 = vmatpush1.bf16.msra.mxu0 %v1634
  %2246 = vmatprep.subr.bf16.mxu0 0
  %2247 = vmatpush1.bf16.msra.mxu0 %v1635
  %2248 = vmatprep.subr.bf16.mxu0 0
  %2249 = vmatpush1.bf16.msra.mxu0 %v1636
  %2250 = vmatprep.subr.bf16.mxu0 0
  %2251 = vmatpush1.bf16.msra.mxu0 %v1637
  %2252 = vmatprep.mubr.bf16.mxu0 %v639
  %2253 = vmatmul.mubr.bf16.gmra.mrb[0].mxu0 %v638
  %v2254 = vpop.f32.mrb[0].mxu0
  %v2255 = vadd.f32 %v2206, %v2254
  %v2256 = vpop.f32.mrb[0].mxu0
  %v2257 = vpop.f32.mrb[0].mxu0
  %v2258 = vadd.f32 %v2209, %v2257
  %v2259 = vpop.f32.mrb[0].mxu0
  %2260 = vmatprep.mubr.bf16.mxu0 %v664
  %2261 = vmatmul.mubr.bf16.gmra.mrb[0].mxu0 %v663
  %v2262 = vpop.f32.mrb[0].mxu0
  %v2263 = vadd.f32 %v2214, %v2262
  %v2264 = vpop.f32.mrb[0].mxu0
  %v2265 = vpop.f32.mrb[0].mxu0
  %v2266 = vadd.f32 %v2217, %v2265
  %v2267 = vpop.f32.mrb[0].mxu0
  %2268 = vdwg.mxu0
  %2269 = vmatprep.subr.bf16.mxu0 0
  %2270 = vmatpush1.bf16.msra.mxu0 %v1638
  %2271 = vmatprep.subr.bf16.mxu0 0
  %2272 = vmatpush1.bf16.msra.mxu0 %v1639
  %2273 = vmatprep.subr.bf16.mxu0 0
  %2274 = vmatpush1.bf16.msra.mxu0 %v1640
  %2275 = vmatprep.subr.bf16.mxu0 0
  %2276 = vmatpush1.bf16.msra.mxu0 %v1641
  %2277 = vmatprep.subr.bf16.mxu0 0
  %2278 = vmatpush1.bf16.msra.mxu0 %v1642
  %2279 = vmatprep.subr.bf16.mxu0 0
  %2280 = vmatpush1.bf16.msra.mxu0 %v1643
  %2281 = vmatprep.subr.bf16.mxu0 0
  %2282 = vmatpush1.bf16.msra.mxu0 %v1644
  %2283 = vmatprep.subr.bf16.mxu0 0
  %2284 = vmatpush1.bf16.msra.mxu0 %v1645
  %2285 = vmatprep.subr.bf16.mxu0 0
  %2286 = vmatpush1.bf16.msra.mxu0 %v1646
  %2287 = vmatprep.subr.bf16.mxu0 0
  %2288 = vmatpush1.bf16.msra.mxu0 %v1647
  %2289 = vmatprep.subr.bf16.mxu0 0
  %2290 = vmatpush1.bf16.msra.mxu0 %v1648
  %2291 = vmatprep.subr.bf16.mxu0 0
  %2292 = vmatpush1.bf16.msra.mxu0 %v1649
  %2293 = vmatprep.subr.bf16.mxu0 0
  %2294 = vmatpush1.bf16.msra.mxu0 %v1650
  %2295 = vmatprep.subr.bf16.mxu0 0
  %2296 = vmatpush1.bf16.msra.mxu0 %v1651
  %2297 = vmatprep.subr.bf16.mxu0 0
  %2298 = vmatpush1.bf16.msra.mxu0 %v1652
  %2299 = vmatprep.subr.bf16.mxu0 0
  %2300 = vmatpush1.bf16.msra.mxu0 %v1653
  %2301 = vmatprep.mubr.bf16.mxu0 %v641
  %2302 = vmatmul.mubr.bf16.gmra.mrb[0].mxu0 %v640
  %v2303 = vpop.f32.mrb[0].mxu0
  %v2304 = vadd.f32 %v2255, %v2303
  %v2305 = vpop.f32.mrb[0].mxu0
  %v2306 = vpop.f32.mrb[0].mxu0
  %v2307 = vadd.f32 %v2258, %v2306
  %v2308 = vpop.f32.mrb[0].mxu0
  %2309 = vmatprep.mubr.bf16.mxu0 %v666
  %2310 = vmatmul.mubr.bf16.gmra.mrb[0].mxu0 %v665
  %v2311 = vpop.f32.mrb[0].mxu0
  %v2312 = vadd.f32 %v2263, %v2311
  %v2313 = vpop.f32.mrb[0].mxu0
  %v2314 = vpop.f32.mrb[0].mxu0
  %v2315 = vadd.f32 %v2266, %v2314
  %v2316 = vpop.f32.mrb[0].mxu0
  %2317 = vdwg.mxu0
  %2318 = vmatprep.subr.bf16.mxu0 0
  %2319 = vmatpush1.bf16.msra.mxu0 %v1654
  %2320 = vmatprep.subr.bf16.mxu0 0
  %2321 = vmatpush1.bf16.msra.mxu0 %v1655
  %2322 = vmatprep.subr.bf16.mxu0 0
  %2323 = vmatpush1.bf16.msra.mxu0 %v1656
  %2324 = vmatprep.subr.bf16.mxu0 0
  %2325 = vmatpush1.bf16.msra.mxu0 %v1657
  %2326 = vmatprep.subr.bf16.mxu0 0
  %2327 = vmatpush1.bf16.msra.mxu0 %v1658
  %2328 = vmatprep.subr.bf16.mxu0 0
  %2329 = vmatpush1.bf16.msra.mxu0 %v1659
  %2330 = vmatprep.subr.bf16.mxu0 0
  %2331 = vmatpush1.bf16.msra.mxu0 %v1660
  %2332 = vmatprep.subr.bf16.mxu0 0
  %2333 = vmatpush1.bf16.msra.mxu0 %v1661
  %2334 = vmatprep.subr.bf16.mxu0 0
  %2335 = vmatpush1.bf16.msra.mxu0 %v1662
  %2336 = vmatprep.subr.bf16.mxu0 0
  %2337 = vmatpush1.bf16.msra.mxu0 %v1663
  %2338 = vmatprep.subr.bf16.mxu0 0
  %2339 = vmatpush1.bf16.msra.mxu0 %v1664
  %2340 = vmatprep.subr.bf16.mxu0 0
  %2341 = vmatpush1.bf16.msra.mxu0 %v1665
  %2342 = vmatprep.subr.bf16.mxu0 0
  %2343 = vmatpush1.bf16.msra.mxu0 %v1666
  %2344 = vmatprep.subr.bf16.mxu0 0
  %2345 = vmatpush1.bf16.msra.mxu0 %v1667
  %2346 = vmatprep.subr.bf16.mxu0 0
  %2347 = vmatpush1.bf16.msra.mxu0 %v1668
  %2348 = vmatprep.subr.bf16.mxu0 0
  %2349 = vmatpush1.bf16.msra.mxu0 %v1669
  %2350 = vmatprep.mubr.bf16.mxu0 %v643
  %2351 = vmatmul.mubr.bf16.gmra.mrb[0].mxu0 %v642
  %v2352 = vpop.f32.mrb[0].mxu0
  %v2353 = vadd.f32 %v2304, %v2352
  %v2354 = vpop.f32.mrb[0].mxu0
  %v2355 = vpop.f32.mrb[0].mxu0
  %v2356 = vadd.f32 %v2307, %v2355
  %v2357 = vpop.f32.mrb[0].mxu0
  %2358 = vmatprep.mubr.bf16.mxu0 %v668
  %2359 = vmatmul.mubr.bf16.gmra.mrb[0].mxu0 %v667
  %v2360 = vpop.f32.mrb[0].mxu0
  %v2361 = vadd.f32 %v2312, %v2360
  %v2362 = vpop.f32.mrb[0].mxu0
  %v2363 = vpop.f32.mrb[0].mxu0
  %v2364 = vadd.f32 %v2315, %v2363
  %v2365 = vpop.f32.mrb[0].mxu0
  %2366 = vdwg.mxu0
  %2367 = vmatprep.subr.bf16.mxu0 0
  %2368 = vmatpush1.bf16.msra.mxu0 %v1670
  %2369 = vmatprep.subr.bf16.mxu0 0
  %2370 = vmatpush1.bf16.msra.mxu0 %v1671
  %2371 = vmatprep.subr.bf16.mxu0 0
  %2372 = vmatpush1.bf16.msra.mxu0 %v1672
  %2373 = vmatprep.subr.bf16.mxu0 0
  %2374 = vmatpush1.bf16.msra.mxu0 %v1673
  %2375 = vmatprep.subr.bf16.mxu0 0
  %2376 = vmatpush1.bf16.msra.mxu0 %v1674
  %2377 = vmatprep.subr.bf16.mxu0 0
  %2378 = vmatpush1.bf16.msra.mxu0 %v1675
  %2379 = vmatprep.subr.bf16.mxu0 0
  %2380 = vmatpush1.bf16.msra.mxu0 %v1676
  %2381 = vmatprep.subr.bf16.mxu0 0
  %2382 = vmatpush1.bf16.msra.mxu0 %v1677
  %2383 = vmatprep.subr.bf16.mxu0 0
  %2384 = vmatpush1.bf16.msra.mxu0 %v1678
  %2385 = vmatprep.subr.bf16.mxu0 0
  %2386 = vmatpush1.bf16.msra.mxu0 %v1679
  %2387 = vmatprep.subr.bf16.mxu0 0
  %2388 = vmatpush1.bf16.msra.mxu0 %v1680
  %2389 = vmatprep.subr.bf16.mxu0 0
  %2390 = vmatpush1.bf16.msra.mxu0 %v1681
  %2391 = vmatprep.subr.bf16.mxu0 0
  %2392 = vmatpush1.bf16.msra.mxu0 %v1682
  %2393 = vmatprep.subr.bf16.mxu0 0
  %2394 = vmatpush1.bf16.msra.mxu0 %v1683
  %2395 = vmatprep.subr.bf16.mxu0 0
  %2396 = vmatpush1.bf16.msra.mxu0 %v1684
  %2397 = vmatprep.subr.bf16.mxu0 0
  %2398 = vmatpush1.bf16.msra.mxu0 %v1685
  %2399 = vmatprep.mubr.bf16.mxu0 %v645
  %2400 = vmatmul.mubr.bf16.gmra.mrb[0].mxu0 %v644
  %v2401 = vpop.f32.mrb[0].mxu0
  %v2402 = vadd.f32 %v2353, %v2401
  %v2403 = vpop.f32.mrb[0].mxu0
  %v2404 = vpop.f32.mrb[0].mxu0
  %v2405 = vadd.f32 %v2356, %v2404
  %v2406 = vpop.f32.mrb[0].mxu0
  %2407 = vmatprep.mubr.bf16.mxu0 %v670
  %2408 = vmatmul.mubr.bf16.gmra.mrb[0].mxu0 %v669
  %v2409 = vpop.f32.mrb[0].mxu0
  %v2410 = vadd.f32 %v2361, %v2409
  %v2411 = vpop.f32.mrb[0].mxu0
  %v2412 = vpop.f32.mrb[0].mxu0
  %v2413 = vadd.f32 %v2364, %v2412
  %v2414 = vpop.f32.mrb[0].mxu0
  %2415 = vdwg.mxu0
  %2416 = vmatprep.subr.bf16.mxu0 0
  %2417 = vmatpush1.bf16.msra.mxu0 %v1686
  %2418 = vmatprep.subr.bf16.mxu0 0
  %2419 = vmatpush1.bf16.msra.mxu0 %v1687
  %2420 = vmatprep.subr.bf16.mxu0 0
  %2421 = vmatpush1.bf16.msra.mxu0 %v1688
  %2422 = vmatprep.subr.bf16.mxu0 0
  %2423 = vmatpush1.bf16.msra.mxu0 %v1689
  %2424 = vmatprep.subr.bf16.mxu0 0
  %2425 = vmatpush1.bf16.msra.mxu0 %v1690
  %2426 = vmatprep.subr.bf16.mxu0 0
  %2427 = vmatpush1.bf16.msra.mxu0 %v1691
  %2428 = vmatprep.subr.bf16.mxu0 0
  %2429 = vmatpush1.bf16.msra.mxu0 %v1692
  %2430 = vmatprep.subr.bf16.mxu0 0
  %2431 = vmatpush1.bf16.msra.mxu0 %v1693
  %2432 = vmatprep.subr.bf16.mxu0 0
  %2433 = vmatpush1.bf16.msra.mxu0 %v1694
  %2434 = vmatprep.subr.bf16.mxu0 0
  %2435 = vmatpush1.bf16.msra.mxu0 %v1695
  %2436 = vmatprep.subr.bf16.mxu0 0
  %2437 = vmatpush1.bf16.msra.mxu0 %v1696
  %2438 = vmatprep.subr.bf16.mxu0 0
  %2439 = vmatpush1.bf16.msra.mxu0 %v1697
  %2440 = vmatprep.subr.bf16.mxu0 0
  %2441 = vmatpush1.bf16.msra.mxu0 %v1698
  %2442 = vmatprep.subr.bf16.mxu0 0
  %2443 = vmatpush1.bf16.msra.mxu0 %v1699
  %2444 = vmatprep.subr.bf16.mxu0 0
  %2445 = vmatpush1.bf16.msra.mxu0 %v1700
  %2446 = vmatprep.subr.bf16.mxu0 0
  %2447 = vmatpush1.bf16.msra.mxu0 %v1701
  %2448 = vmatprep.mubr.bf16.mxu0 %v647
  %2449 = vmatmul.mubr.bf16.gmra.mrb[0].mxu0 %v646
  %v2450 = vpop.f32.mrb[0].mxu0
  %v2451 = vadd.f32 %v2402, %v2450
  %v2452 = vpop.f32.mrb[0].mxu0
  %v2453 = vpop.f32.mrb[0].mxu0
  %v2454 = vadd.f32 %v2405, %v2453
  %v2455 = vpop.f32.mrb[0].mxu0
  %2456 = vmatprep.mubr.bf16.mxu0 %v672
  %2457 = vmatmul.mubr.bf16.gmra.mrb[0].mxu0 %v671
  %v2458 = vpop.f32.mrb[0].mxu0
  %v2459 = vadd.f32 %v2410, %v2458
  %v2460 = vpop.f32.mrb[0].mxu0
  %v2461 = vpop.f32.mrb[0].mxu0
  %v2462 = vadd.f32 %v2413, %v2461
  %v2463 = vpop.f32.mrb[0].mxu0
  %2464 = vdwg.mxu0
  %2465 = vmatprep.subr.bf16.mxu0 0
  %2466 = vmatpush1.bf16.msra.mxu0 %v1702
  %2467 = vmatprep.subr.bf16.mxu0 0
  %2468 = vmatpush1.bf16.msra.mxu0 %v1703
  %2469 = vmatprep.subr.bf16.mxu0 0
  %2470 = vmatpush1.bf16.msra.mxu0 %v1704
  %2471 = vmatprep.subr.bf16.mxu0 0
  %2472 = vmatpush1.bf16.msra.mxu0 %v1705
  %2473 = vmatprep.subr.bf16.mxu0 0
  %2474 = vmatpush1.bf16.msra.mxu0 %v1706
  %2475 = vmatprep.subr.bf16.mxu0 0
  %2476 = vmatpush1.bf16.msra.mxu0 %v1707
  %2477 = vmatprep.subr.bf16.mxu0 0
  %2478 = vmatpush1.bf16.msra.mxu0 %v1708
  %2479 = vmatprep.subr.bf16.mxu0 0
  %2480 = vmatpush1.bf16.msra.mxu0 %v1709
  %2481 = vmatprep.subr.bf16.mxu0 0
  %2482 = vmatpush1.bf16.msra.mxu0 %v1710
  %2483 = vmatprep.subr.bf16.mxu0 0
  %2484 = vmatpush1.bf16.msra.mxu0 %v1711
  %2485 = vmatprep.subr.bf16.mxu0 0
  %2486 = vmatpush1.bf16.msra.mxu0 %v1712
  %2487 = vmatprep.subr.bf16.mxu0 0
  %2488 = vmatpush1.bf16.msra.mxu0 %v1713
  %2489 = vmatprep.subr.bf16.mxu0 0
  %2490 = vmatpush1.bf16.msra.mxu0 %v1714
  %2491 = vmatprep.subr.bf16.mxu0 0
  %2492 = vmatpush1.bf16.msra.mxu0 %v1715
  %2493 = vmatprep.subr.bf16.mxu0 0
  %2494 = vmatpush1.bf16.msra.mxu0 %v1716
  %2495 = vmatprep.subr.bf16.mxu0 0
  %2496 = vmatpush1.bf16.msra.mxu0 %v1717
  %2497 = vmatprep.mubr.bf16.mxu0 %v649
  %2498 = vmatmul.mubr.bf16.gmra.mrb[0].mxu0 %v648
  %v2499 = vpop.f32.mrb[0].mxu0
  %v2500 = vadd.f32 %v2451, %v2499
  %v2501 = vpop.f32.mrb[0].mxu0
  %v2502 = vpop.f32.mrb[0].mxu0
  %v2503 = vadd.f32 %v2454, %v2502
  %v2504 = vpop.f32.mrb[0].mxu0
  %2505 = vmatprep.mubr.bf16.mxu0 %v674
  %2506 = vmatmul.mubr.bf16.gmra.mrb[0].mxu0 %v673
  %v2507 = vpop.f32.mrb[0].mxu0
  %v2508 = vadd.f32 %v2459, %v2507
  %v2509 = vpop.f32.mrb[0].mxu0
  %v2510 = vpop.f32.mrb[0].mxu0
  %v2511 = vadd.f32 %v2462, %v2510
  %v2512 = vpop.f32.mrb[0].mxu0
  %2513 = vdwg.mxu0
  %2514 = vmatprep.subr.bf16.mxu0 0
  %2515 = vmatpush1.bf16.msra.mxu0 %v1718
  %2516 = vmatprep.subr.bf16.mxu0 0
  %2517 = vmatpush1.bf16.msra.mxu0 %v1719
  %2518 = vmatprep.subr.bf16.mxu0 0
  %2519 = vmatpush1.bf16.msra.mxu0 %v1720
  %2520 = vmatprep.subr.bf16.mxu0 0
  %2521 = vmatpush1.bf16.msra.mxu0 %v1721
  %2522 = vmatprep.subr.bf16.mxu0 0
  %2523 = vmatpush1.bf16.msra.mxu0 %v1722
  %2524 = vmatprep.subr.bf16.mxu0 0
  %2525 = vmatpush1.bf16.msra.mxu0 %v1723
  %2526 = vmatprep.subr.bf16.mxu0 0
  %2527 = vmatpush1.bf16.msra.mxu0 %v1724
  %2528 = vmatprep.subr.bf16.mxu0 0
  %2529 = vmatpush1.bf16.msra.mxu0 %v1725
  %2530 = vmatprep.subr.bf16.mxu0 0
  %2531 = vmatpush1.bf16.msra.mxu0 0
  %2532 = vmatprep.subr.bf16.mxu0 0
  %2533 = vmatpush1.bf16.msra.mxu0 0
  %2534 = vmatprep.subr.bf16.mxu0 0
  %2535 = vmatpush1.bf16.msra.mxu0 0
  %2536 = vmatprep.subr.bf16.mxu0 0
  %2537 = vmatpush1.bf16.msra.mxu0 0
  %2538 = vmatprep.subr.bf16.mxu0 0
  %2539 = vmatpush1.bf16.msra.mxu0 0
  %2540 = vmatprep.subr.bf16.mxu0 0
  %2541 = vmatpush1.bf16.msra.mxu0 0
  %2542 = vmatprep.subr.bf16.mxu0 0
  %2543 = vmatpush1.bf16.msra.mxu0 0
  %2544 = vmatprep.subr.bf16.mxu0 0
  %2545 = vmatpush1.bf16.msra.mxu0 0
  %2546 = vmatprep.mubr.bf16.mxu0 0
  %2547 = vmatmul.mubr.bf16.gmra.mrb[0].mxu0 %v650
  %v2548 = vpop.f32.mrb[0].mxu0
  %v2549 = vadd.f32 %v2500, %v2548
  %v2550 = vpop.f32.mrb[0].mxu0
  %v2551 = vpop.f32.mrb[0].mxu0
  %v2552 = vadd.f32 %v2503, %v2551
  %v2553 = vpop.f32.mrb[0].mxu0
  %2554 = vmatprep.mubr.bf16.mxu0 0
  %2555 = vmatmul.mubr.bf16.gmra.mrb[0].mxu0 %v675
  %v2556 = vpop.f32.mrb[0].mxu0
  %v2557 = vadd.f32 %v2508, %v2556
  %v2558 = vpop.f32.mrb[0].mxu0
  %v2559 = vpop.f32.mrb[0].mxu0
  %v2560 = vadd.f32 %v2511, %v2559
  %v2561 = vpop.f32.mrb[0].mxu0
  %2562 = vdwg.mxu0
  %v2563 = vmax.f32 %v2549, 0.0
  %v2564 = vmax.f32 %v2552, 0.0
  %v2565 = vmax.f32 %v2557, 0.0
  %v2566 = vmax.f32 %v2560, 0.0
  %v2567 = vpack.c.bf16 %v2564, %v2563
  %v2568 = vpack.c.bf16 %v2566, %v2565
  %v2571 = vunpack.c.l.b16 %v2567
  %v2572 = vunpack.c.h.b16 %v2567
  %v2573 = vunpack.c.l.b16 %v2568
  %v2574 = vunpack.c.h.b16 %v2568
  %v2575 = vpack.c.b16 %v2571, %v2571
  %v2576 = vpack.c.b16 %v2572, %v2572
  %v2577 = vpack.c.b16 %v2573, %v2573
  %v2578 = vpack.c.b16 %v2574, %v2574
  %2583 = vst [vmem:[%s3] sm:$0xf] %v2575
  %2584 = vst [vmem:[%s3 + $0x4] sm:$0xf] %v2576
  %2585 = vst [vmem:[%s3 + $0x8] sm:$0xf] %v2577
  %2586 = vst [vmem:[%s3 + $0xc] sm:$0xf] %v2578
  // Predicated region
  $region14: #{mnist_cnn_forward.6} parent=0 // pred_check
    _
  $region15: #{mnist_cnn_forward.6} parent=0 // pred_check_branch
    %2588 = sbr.rel (0) target = $region17
  $region16: #{mnist_cnn_forward.6} parent=0 // pred_region
    _
  $region17: #{mnist_cnn_forward.6} parent=0 // pred_fallthru
    _
  // Predicated region
  $region18: #{mnist_cnn_forward.6} parent=0 // pred_check
    _
  $region19: #{mnist_cnn_forward.6} parent=0 // pred_check_branch
    %2590 = sbr.rel (0) target = $region21
  $region20: #{mnist_cnn_forward.6} parent=0 // pred_region
    _
  $region21: #{mnist_cnn_forward.6} parent=0 // pred_fallthru
    _

</llo_original>
